<compile_context>
chip_gen: v7x
topology: tpu7x:2x2x1
jax: 0.10.0
libtpu: 0.0.40
codegen_flags: <defaults>
</compile_context>

<pallas_src>
import math

import jax
import jax.numpy as jnp
from jax.experimental import pallas as pl
from jax.experimental.pallas import tpu as pltpu

EPS = 1e-5


def _vmem_limit_bytes():
    # v7x has 64 MiB physical VMEM per core -> stay around 48 MiB there;
    # v5e/v6e have 128 MiB -> allow up to 96 MiB for bigger tiles / buffering.
    cap = 64 * 1024 * 1024
    try:
        cap = int(pltpu.get_tpu_info().vmem_capacity_bytes)
    except Exception:
        pass
    return int(min(cap * 3 // 4, 96 * 1024 * 1024))


_COMPILER_PARAMS = pltpu.CompilerParams(
    dimension_semantics=("parallel",),
    vmem_limit_bytes=_vmem_limit_bytes(),
)


def _pick_tile(m, cap=1024):
    """Largest divisor of m (multiple of 16, else 8) <= cap.

    The cap is also limited to ~m/2 so that there are >= 2 grid steps whenever
    possible (keeps double-buffering alive and gives both v7x cores work).
    """
    if m <= 16:
        return m
    cap = max(8, min(cap, (m // 2) // 8 * 8))
    for step in (16, 8):
        t = cap // step * step
        while t >= step:
            if m % t == 0:
                return t
            t -= step
    # TODO(synk): for awkward M with no small divisor, switch to a cdiv grid
    # with masked partial-stat sums instead of one full-size block.
    return m


# --------------------------------------------------------------------------- #
# Kernels
# --------------------------------------------------------------------------- #
def _stage1_kernel(x_ref, w1_ref, ws_ref, y1_ref, ys_ref,
                   s1_ref, ss1_ref, ss_ref, sss_ref):
    # Two 1x1 convs (blocks[0] and shortcut) sharing the same input tile.
    # Separate dots keep both stores lane-dense; the x tile is loaded once.
    xb = x_ref[...].astype(jnp.bfloat16)
    y1 = jnp.dot(xb, w1_ref[...], preferred_element_type=jnp.float32)   # (TM, Cmid)
    ys = jnp.dot(xb, ws_ref[...], preferred_element_type=jnp.float32)   # (TM, Cout)
    # bf16 intermediates in HBM; BN partial stats from the f32 accumulators.
    y1_ref[...] = y1.astype(jnp.bfloat16)
    ys_ref[...] = ys.astype(jnp.bfloat16)
    s1_ref[0] = jnp.sum(y1, axis=0, keepdims=True)
    ss1_ref[0] = jnp.sum(y1 * y1, axis=0, keepdims=True)
    ss_ref[0] = jnp.sum(ys, axis=0, keepdims=True)
    sss_ref[0] = jnp.sum(ys * ys, axis=0, keepdims=True)


def _stage2_kernel(y1_ref, sc_ref, sh_ref, w2k_ref, y2_ref, s_ref, ss_ref):
    # Folded BN+ReLU of blocks[0], then the 3x3 conv (stride 1, pad 1).
    # The zero halo is built once into a padded bf16 buffer; the nine taps are
    # static slices of it.  When Cmid is lane-aligned the three kx taps of each
    # kernel row are concatenated along K (contraction depth 3*Cmid per MXU
    # matmul, 3 matmuls instead of 9 shallow ones).
    y1 = y1_ref[0]                                              # (H, W, Cmid) bf16
    h, w, c = y1.shape
    a1 = jnp.maximum(y1.astype(jnp.float32) * sc_ref[...] + sh_ref[...], 0.0)
    a1 = a1.astype(jnp.bfloat16)

    # Single padded buffer (built once, not per tap).
    zc = jnp.zeros((h, 1, c), jnp.bfloat16)
    zr = jnp.zeros((1, w + 2, c), jnp.bfloat16)
    ap = jnp.concatenate([zr, jnp.concatenate([zc, a1, zc], axis=1), zr], axis=0)

    acc = jnp.zeros((h * w, c), jnp.float32)
    for ky in range(3):
        wk = w2k_ref[ky]                                        # (3*Cmid, Cmid) bf16
        if c % 128 == 0:
            # Lane-aligned channels: deep-K contraction (3*Cmid per matmul).
            a_cat = jnp.concatenate(
                [ap[ky:ky + h, kx:kx + w, :] for kx in range(3)], axis=-1)
            acc = acc + jnp.dot(a_cat.reshape(h * w, 3 * c), wk,
                                preferred_element_type=jnp.float32)
        else:
            # Narrow / unaligned channels: three shallow taps per kernel row.
            for kx in range(3):
                tap = ap[ky:ky + h, kx:kx + w, :].reshape(h * w, c)
                acc = acc + jnp.dot(tap, wk[kx * c:(kx + 1) * c],
                                    preferred_element_type=jnp.float32)

    y2_ref[0] = acc.reshape(h, w, c).astype(jnp.bfloat16)
    s_ref[0] = jnp.sum(acc, axis=0, keepdims=True)
    ss_ref[0] = jnp.sum(acc * acc, axis=0, keepdims=True)


def _stage3_kernel(y2_ref, sc_ref, sh_ref, w3_ref, y3_ref, s_ref, ss_ref):
    # BN+ReLU of blocks[1], then the final 1x1 conv of blocks[2] + partial stats.
    a2 = jnp.maximum(y2_ref[...].astype(jnp.float32) * sc_ref[...] + sh_ref[...],
                     0.0).astype(jnp.bfloat16)
    y3 = jnp.dot(a2, w3_ref[...], preferred_element_type=jnp.float32)
    y3_ref[...] = y3.astype(jnp.bfloat16)
    s_ref[0] = jnp.sum(y3, axis=0, keepdims=True)
    ss_ref[0] = jnp.sum(y3 * y3, axis=0, keepdims=True)


def _stage4_kernel(y3_ref, ys_ref, sc3_ref, sh3_ref, scs_ref, shs_ref, o_ref):
    # BN(blocks[2]) + BN(shortcut) + residual add + ReLU.
    a3 = y3_ref[...].astype(jnp.float32) * sc3_ref[...] + sh3_ref[...]
    sc = ys_ref[...].astype(jnp.float32) * scs_ref[...] + shs_ref[...]
    o_ref[...] = jnp.maximum(a3 + sc, 0.0)


# --------------------------------------------------------------------------- #
# Wrapper
# --------------------------------------------------------------------------- #
def _fold_bn(s, ss, count, gamma, beta):
    """Fold train-mode BN into a single scale/shift: bn(y) = y*scale + shift."""
    mean = s / count
    var = jnp.maximum(ss / count - mean * mean, 0.0)
    rstd = jax.lax.rsqrt(var + EPS)
    scale = gamma * rstd
    shift = beta - mean * scale
    return scale, shift


@jax.jit
def resnet_bottleneck_block_nhwc(x, params):
    """x: (N, H, W, Cin) float32, NHWC.  Returns (N, H, W, Cout) float32."""
    n, h, w, cin = x.shape
    cmid = params["w1"].shape[1]
    cout = params["w3"].shape[1]
    m = n * h * w
    tm = _pick_tile(m)
    nm = m // tm

    x2 = x.reshape(m, cin)
    w1 = params["w1"].astype(jnp.bfloat16)
    ws = params["ws"].astype(jnp.bfloat16)
    w2k = params["w2"].astype(jnp.bfloat16).reshape(3, 3 * cmid, cmid)
    w3 = params["w3"].astype(jnp.bfloat16)
    count = jnp.float32(m)

    # ---- stage 1: 1x1 convs (blocks[0] + shortcut) + BN partial stats --------
    y1, ys, s1p, ss1p, ssp, sssp = pl.pallas_call(
        _stage1_kernel,
        grid=(nm,),
        in_specs=[
            pl.BlockSpec((tm, cin), lambda i: (i, 0)),
            pl.BlockSpec((cin, cmid), lambda i: (0, 0)),
            pl.BlockSpec((cin, cout), lambda i: (0, 0)),
        ],
        out_specs=(
            pl.BlockSpec((tm, cmid), lambda i: (i, 0)),
            pl.BlockSpec((tm, cout), lambda i: (i, 0)),
            pl.BlockSpec((1, 1, cmid), lambda i: (i, 0, 0)),
            pl.BlockSpec((1, 1, cmid), lambda i: (i, 0, 0)),
            pl.BlockSpec((1, 1, cout), lambda i: (i, 0, 0)),
            pl.BlockSpec((1, 1, cout), lambda i: (i, 0, 0)),
        ),
        out_shape=(
            jax.ShapeDtypeStruct((m, cmid), jnp.bfloat16),
            jax.ShapeDtypeStruct((m, cout), jnp.bfloat16),
            jax.ShapeDtypeStruct((nm, 1, cmid), jnp.float32),
            jax.ShapeDtypeStruct((nm, 1, cmid), jnp.float32),
            jax.ShapeDtypeStruct((nm, 1, cout), jnp.float32),
            jax.ShapeDtypeStruct((nm, 1, cout), jnp.float32),
        ),
        compiler_params=_COMPILER_PARAMS,
    )(x2, w1, ws)

    sc1, sh1 = _fold_bn(jnp.sum(s1p, axis=0), jnp.sum(ss1p, axis=0), count,
                        params["g1"], params["be1"])
    scs, shs = _fold_bn(jnp.sum(ssp, axis=0), jnp.sum(sssp, axis=0), count,
                        params["gs"], params["bes"])

    # ---- stage 2: BN+ReLU(y1) -> 3x3 conv + partial stats (grid over images) -
    y2, s2p, ss2p = pl.pallas_call(
        _stage2_kernel,
        grid=(n,),
        in_specs=[
            pl.BlockSpec((1, h, w, cmid), lambda i: (i, 0, 0, 0)),
            pl.BlockSpec((1, cmid), lambda i: (0, 0)),
            pl.BlockSpec((1, cmid), lambda i: (0, 0)),
            pl.BlockSpec((3, 3 * cmid, cmid), lambda i: (0, 0, 0)),
        ],
        out_specs=(
            pl.BlockSpec((1, h, w, cmid), lambda i: (i, 0, 0, 0)),
            pl.BlockSpec((1, 1, cmid), lambda i: (i, 0, 0)),
            pl.BlockSpec((1, 1, cmid), lambda i: (i, 0, 0)),
        ),
        out_shape=(
            jax.ShapeDtypeStruct((n, h, w, cmid), jnp.bfloat16),
            jax.ShapeDtypeStruct((n, 1, cmid), jnp.float32),
            jax.ShapeDtypeStruct((n, 1, cmid), jnp.float32),
        ),
        compiler_params=_COMPILER_PARAMS,
    )(y1.reshape(n, h, w, cmid), sc1, sh1, w2k)

    sc2, sh2 = _fold_bn(jnp.sum(s2p, axis=0), jnp.sum(ss2p, axis=0), count,
                        params["g2"], params["be2"])

    # ---- stage 3: BN+ReLU(y2) -> 1x1 conv (blocks[2]) + partial stats --------
    y3, s3p, ss3p = pl.pallas_call(
        _stage3_kernel,
        grid=(nm,),
        in_specs=[
            pl.BlockSpec((tm, cmid), lambda i: (i, 0)),
            pl.BlockSpec((1, cmid), lambda i: (0, 0)),
            pl.BlockSpec((1, cmid), lambda i: (0, 0)),
            pl.BlockSpec((cmid, cout), lambda i: (0, 0)),
        ],
        out_specs=(
            pl.BlockSpec((tm, cout), lambda i: (i, 0)),
            pl.BlockSpec((1, 1, cout), lambda i: (i, 0, 0)),
            pl.BlockSpec((1, 1, cout), lambda i: (i, 0, 0)),
        ),
        out_shape=(
            jax.ShapeDtypeStruct((m, cout), jnp.bfloat16),
            jax.ShapeDtypeStruct((nm, 1, cout), jnp.float32),
            jax.ShapeDtypeStruct((nm, 1, cout), jnp.float32),
        ),
        compiler_params=_COMPILER_PARAMS,
    )(y2.reshape(m, cmid), sc2, sh2, w3)

    sc3, sh3 = _fold_bn(jnp.sum(s3p, axis=0), jnp.sum(ss3p, axis=0), count,
                        params["g3"], params["be3"])

    # ---- stage 4: BN(y3) + BN(shortcut) + residual add + ReLU ----------------
    out2d = pl.pallas_call(
        _stage4_kernel,
        grid=(nm,),
        in_specs=[
            pl.BlockSpec((tm, cout), lambda i: (i, 0)),
            pl.BlockSpec((tm, cout), lambda i: (i, 0)),
            pl.BlockSpec((1, cout), lambda i: (0, 0)),
            pl.BlockSpec((1, cout), lambda i: (0, 0)),
            pl.BlockSpec((1, cout), lambda i: (0, 0)),
            pl.BlockSpec((1, cout), lambda i: (0, 0)),
        ],
        out_specs=pl.BlockSpec((tm, cout), lambda i: (i, 0)),
        out_shape=jax.ShapeDtypeStruct((m, cout), jnp.float32),
        compiler_params=_COMPILER_PARAMS,
    )(y3, ys, sc3, sh3, scs, shs)

    return out2d.reshape(n, h, w, cout)


def resnet_bottleneck_block_nchw(x_nchw, params):
    """PyTorch-layout convenience wrapper (prefer the NHWC entry point)."""
    x = jnp.transpose(x_nchw, (0, 2, 3, 1))
    out = resnet_bottleneck_block_nhwc(x, params)
    return jnp.transpose(out, (0, 3, 1, 2))


# --------------------------------------------------------------------------- #
# Parameters and pure-JAX reference
# --------------------------------------------------------------------------- #
def make_params(key, in_channels, out_channels):
    cmid = in_channels // 4
    ks = jax.random.split(key, 16)

    def rnd(k, shape, scale):
        return (scale * jax.random.normal(k, shape)).astype(jnp.float32)

    s1 = math.sqrt(2.0 / in_channels)
    s2 = math.sqrt(2.0 / (9 * cmid))
    s3 = math.sqrt(2.0 / cmid)
    ssh = math.sqrt(2.0 / in_channels)

    return dict(
        # conv weights stored as (Cin, Cout) / (kh, kw, Cin, Cout) for NHWC matmuls
        w1=rnd(ks[0], (in_channels, cmid), s1), b1=rnd(ks[1], (1, cmid), 0.1),
        g1=1.0 + rnd(ks[2], (1, cmid), 0.1), be1=rnd(ks[3], (1, cmid), 0.1),
        w2=rnd(ks[4], (3, 3, cmid, cmid), s2), b2=rnd(ks[5], (1, cmid), 0.1),
        g2=1.0 + rnd(ks[6], (1, cmid), 0.1), be2=rnd(ks[7], (1, cmid), 0.1),
        w3=rnd(ks[8], (cmid, out_channels), s3), b3=rnd(ks[9], (1, out_channels), 0.1),
        g3=1.0 + rnd(ks[10], (1, out_channels), 0.1), be3=rnd(ks[11], (1, out_channels), 0.1),
        ws=rnd(ks[12], (in_channels, out_channels), ssh), bs=rnd(ks[13], (1, out_channels), 0.1),
        gs=1.0 + rnd(ks[14], (1, out_channels), 0.1), bes=rnd(ks[15], (1, out_channels), 0.1),
    )


def reference_forward_nhwc(x, p):
    """Pure-JAX f32 reference (same math, plain XLA ops, conv biases included)."""
    n, h, w, _ = x.shape

    def bn(y, g, b):
        mu = jnp.mean(y, axis=(0, 1, 2), keepdims=True)
        var = jnp.mean((y - mu) ** 2, axis=(0, 1, 2), keepdims=True)
        return (y - mu) * jax.lax.rsqrt(var + EPS) * g + b

    a1 = jax.nn.relu(bn(jnp.einsum("nhwc,cd->nhwd", x, p["w1"]) + p["b1"],
                        p["g1"], p["be1"]))
    ap = jnp.pad(a1, ((0, 0), (1, 1), (1, 1), (0, 0)))
    y2 = jnp.zeros(a1.shape[:3] + (p["w2"].shape[-1],), jnp.float32) + p["b2"]
    for ky in range(3):
        for kx in range(3):
            y2 = y2 + jnp.einsum("nhwc,cd->nhwd",
                                 ap[:, ky:ky + h, kx:kx + w, :], p["w2"][ky, kx])
    a2 = jax.nn.relu(bn(y2, p["g2"], p["be2"]))
    a3 = bn(jnp.einsum("nhwc,cd->nhwd", a2, p["w3"]) + p["b3"], p["g3"], p["be3"])
    sc = bn(jnp.einsum("nhwc,cd->nhwd", x, p["ws"]) + p["bs"], p["gs"], p["bes"])
    return jax.nn.relu(a3 + sc)


if __name__ == "__main__":
    key = jax.random.PRNGKey(0)
    k_x, k_p = jax.random.split(key)

    # NHWC activations (channels on the TPU lane axis).
    n, h, w, cin = 2, 16, 16, 32
    cout = 32
    x = jax.random.normal(k_x, (n, h, w, cin), dtype=jnp.float32)
    params = make_params(k_p, cin, cout)

    out = jax.block_until_ready(resnet_bottleneck_block_nhwc(x, params))
    ref = jax.block_until_ready(reference_forward_nhwc(x, params))

    assert out.shape == (n, h, w, cout), out.shape
    max_err = float(jnp.max(jnp.abs(out - ref)))
    # bf16 MXU inputs AND bf16 inter-stage activations (f32 accumulation, f32 BN
    # statistics) against an all-f32 reference: tolerance is correspondingly
    # looser than a pure-f32 check.
    assert max_err < 1.5e-1, f"max abs error too large: {max_err}"

    print("KERNEL_OK")
</pallas_src>

<mosaic_0001>
module attributes {stable_mosaic.version = 11 : i64} {
  func.func @_stage1_kernel(%arg0: i32, %arg1: memref<256x32xf32, #tpu.memory_space<vmem>>, %arg2: memref<32x8xbf16, #tpu.memory_space<vmem>>, %arg3: memref<32x32xbf16, #tpu.memory_space<vmem>>, %arg4: memref<256x8xbf16, #tpu.memory_space<vmem>>, %arg5: memref<256x32xbf16, #tpu.memory_space<vmem>>, %arg6: memref<1x1x8xf32, #tpu.memory_space<vmem>>, %arg7: memref<1x1x8xf32, #tpu.memory_space<vmem>>, %arg8: memref<1x1x32xf32, #tpu.memory_space<vmem>>, %arg9: memref<1x1x32xf32, #tpu.memory_space<vmem>>) attributes {dimension_semantics = [#tpu.dimension_semantics<parallel>], iteration_bounds = array<i64: 2>, scalar_prefetch = 0 : i64, scratch_operands = 0 : i64, tpu.core_type = #tpu.core_type<tc>, window_params = [{transform_indices = @transform_0, window_bounds = array<i64: 256, 32>}, {pipeline_mode = #tpu.pipeline_mode<synchronous>, transform_indices = @transform_1, window_bounds = array<i64: 32, 8>}, {pipeline_mode = #tpu.pipeline_mode<synchronous>, transform_indices = @transform_2, window_bounds = array<i64: 32, 32>}, {transform_indices = @transform_3, window_bounds = array<i64: 256, 8>}, {transform_indices = @transform_4, window_bounds = array<i64: 256, 32>}, {transform_indices = @transform_5, window_bounds = array<i64: 1, 1, 8>}, {transform_indices = @transform_6, window_bounds = array<i64: 1, 1, 8>}, {transform_indices = @transform_7, window_bounds = array<i64: 1, 1, 32>}, {transform_indices = @transform_8, window_bounds = array<i64: 1, 1, 32>}]} {
    %c0 = arith.constant 0 : index
    %c0_0 = arith.constant 0 : index
    %0 = vector.load %arg1[%c0, %c0_0] : memref<256x32xf32, #tpu.memory_space<vmem>>, vector<256x32xf32>
    %1 = arith.truncf %0 : vector<256x32xf32> to vector<256x32xbf16>
    %c0_1 = arith.constant 0 : index
    %c0_2 = arith.constant 0 : index
    %2 = vector.load %arg2[%c0_1, %c0_2] : memref<32x8xbf16, #tpu.memory_space<vmem>>, vector<32x8xbf16>
    %cst = arith.constant dense<0.000000e+00> : vector<256x8xf32>
    %3 = tpu.matmul %1, %2, %cst {dimension_numbers = #tpu.dot_dimension_numbers<[1], [0], [0], [1], [0, 0, 1, 1], [], []>} : vector<256x32xbf16>, vector<32x8xbf16>, vector<256x8xf32> -> vector<256x8xf32>
    %c0_3 = arith.constant 0 : index
    %c0_4 = arith.constant 0 : index
    %4 = vector.load %arg3[%c0_3, %c0_4] : memref<32x32xbf16, #tpu.memory_space<vmem>>, vector<32x32xbf16>
    %cst_5 = arith.constant dense<0.000000e+00> : vector<256x32xf32>
    %5 = tpu.matmul %1, %4, %cst_5 {dimension_numbers = #tpu.dot_dimension_numbers<[1], [0], [0], [1], [0, 0, 1, 1], [], []>} : vector<256x32xbf16>, vector<32x32xbf16>, vector<256x32xf32> -> vector<256x32xf32>
    %6 = arith.truncf %3 : vector<256x8xf32> to vector<256x8xbf16>
    %c0_6 = arith.constant 0 : index
    %c0_7 = arith.constant 0 : index
    %7 = vector.load %arg4[%c0_6, %c0_7] : memref<256x8xbf16, #tpu.memory_space<vmem>>, vector<256x8xbf16>
    tpu.vector_store %arg4[%c0_6, %c0_7], %6 {strides = array<i32>} : memref<256x8xbf16, #tpu.memory_space<vmem>>, vector<256x8xbf16>,
    %8 = arith.truncf %5 : vector<256x32xf32> to vector<256x32xbf16>
    %c0_8 = arith.constant 0 : index
    %c0_9 = arith.constant 0 : index
    %9 = vector.load %arg5[%c0_8, %c0_9] : memref<256x32xbf16, #tpu.memory_space<vmem>>, vector<256x32xbf16>
    tpu.vector_store %arg5[%c0_8, %c0_9], %8 {strides = array<i32>} : memref<256x32xbf16, #tpu.memory_space<vmem>>, vector<256x32xbf16>,
    %cst_10 = arith.constant dense<0.000000e+00> : vector<8xf32>
    %10 = vector.multi_reduction <add>, %3, %cst_10 [0] : vector<256x8xf32> to vector<8xf32>
    %11 = vector.shape_cast %10 : vector<8xf32> to vector<1x8xf32>
    %c0_11 = arith.constant 0 : index
    %c0_12 = arith.constant 0 : index
    %c0_13 = arith.constant 0 : index
    %12 = vector.load %arg6[%c0_11, %c0_12, %c0_13] : memref<1x1x8xf32, #tpu.memory_space<vmem>>, vector<1x1x8xf32>
    %13 = vector.shape_cast %12 : vector<1x1x8xf32> to vector<1x8xf32>
    %14 = vector.shape_cast %11 : vector<1x8xf32> to vector<1x1x8xf32>
    tpu.vector_store %arg6[%c0_11, %c0_12, %c0_13], %14 {strides = array<i32>} : memref<1x1x8xf32, #tpu.memory_space<vmem>>, vector<1x1x8xf32>,
    %15 = arith.mulf %3, %3 : vector<256x8xf32>
    %cst_14 = arith.constant dense<0.000000e+00> : vector<8xf32>
    %16 = vector.multi_reduction <add>, %15, %cst_14 [0] : vector<256x8xf32> to vector<8xf32>
    %17 = vector.shape_cast %16 : vector<8xf32> to vector<1x8xf32>
    %c0_15 = arith.constant 0 : index
    %c0_16 = arith.constant 0 : index
    %c0_17 = arith.constant 0 : index
    %18 = vector.load %arg7[%c0_15, %c0_16, %c0_17] : memref<1x1x8xf32, #tpu.memory_space<vmem>>, vector<1x1x8xf32>
    %19 = vector.shape_cast %18 : vector<1x1x8xf32> to vector<1x8xf32>
    %20 = vector.shape_cast %17 : vector<1x8xf32> to vector<1x1x8xf32>
    tpu.vector_store %arg7[%c0_15, %c0_16, %c0_17], %20 {strides = array<i32>} : memref<1x1x8xf32, #tpu.memory_space<vmem>>, vector<1x1x8xf32>,
    %cst_18 = arith.constant dense<0.000000e+00> : vector<32xf32>
    %21 = vector.multi_reduction <add>, %5, %cst_18 [0] : vector<256x32xf32> to vector<32xf32>
    %22 = vector.shape_cast %21 : vector<32xf32> to vector<1x32xf32>
    %c0_19 = arith.constant 0 : index
    %c0_20 = arith.constant 0 : index
    %c0_21 = arith.constant 0 : index
    %23 = vector.load %arg8[%c0_19, %c0_20, %c0_21] : memref<1x1x32xf32, #tpu.memory_space<vmem>>, vector<1x1x32xf32>
    %24 = vector.shape_cast %23 : vector<1x1x32xf32> to vector<1x32xf32>
    %25 = vector.shape_cast %22 : vector<1x32xf32> to vector<1x1x32xf32>
    tpu.vector_store %arg8[%c0_19, %c0_20, %c0_21], %25 {strides = array<i32>} : memref<1x1x32xf32, #tpu.memory_space<vmem>>, vector<1x1x32xf32>,
    %26 = arith.mulf %5, %5 : vector<256x32xf32>
    %cst_22 = arith.constant dense<0.000000e+00> : vector<32xf32>
    %27 = vector.multi_reduction <add>, %26, %cst_22 [0] : vector<256x32xf32> to vector<32xf32>
    %28 = vector.shape_cast %27 : vector<32xf32> to vector<1x32xf32>
    %c0_23 = arith.constant 0 : index
    %c0_24 = arith.constant 0 : index
    %c0_25 = arith.constant 0 : index
    %29 = vector.load %arg9[%c0_23, %c0_24, %c0_25] : memref<1x1x32xf32, #tpu.memory_space<vmem>>, vector<1x1x32xf32>
    %30 = vector.shape_cast %29 : vector<1x1x32xf32> to vector<1x32xf32>
    %31 = vector.shape_cast %28 : vector<1x32xf32> to vector<1x1x32xf32>
    tpu.vector_store %arg9[%c0_23, %c0_24, %c0_25], %31 {strides = array<i32>} : memref<1x1x32xf32, #tpu.memory_space<vmem>>, vector<1x1x32xf32>,
    return
  }
  func.func @transform_0(%arg0: i32) -> (i32, i32) {
    %c0_i32 = arith.constant 0 : i32
    %c0_i32_0 = arith.constant 0 : i32
    return %arg0, %c0_i32 : i32, i32
  }
  func.func @transform_1(%arg0: i32) -> (i32, i32) {
    %c0_i32 = arith.constant 0 : i32
    %c0_i32_0 = arith.constant 0 : i32
    %c0_i32_1 = arith.constant 0 : i32
    return %c0_i32, %c0_i32_0 : i32, i32
  }
  func.func @transform_2(%arg0: i32) -> (i32, i32) {
    %c0_i32 = arith.constant 0 : i32
    %c0_i32_0 = arith.constant 0 : i32
    %c0_i32_1 = arith.constant 0 : i32
    return %c0_i32, %c0_i32_0 : i32, i32
  }
  func.func @transform_3(%arg0: i32) -> (i32, i32) {
    %c0_i32 = arith.constant 0 : i32
    %c0_i32_0 = arith.constant 0 : i32
    return %arg0, %c0_i32 : i32, i32
  }
  func.func @transform_4(%arg0: i32) -> (i32, i32) {
    %c0_i32 = arith.constant 0 : i32
    %c0_i32_0 = arith.constant 0 : i32
    return %arg0, %c0_i32 : i32, i32
  }
  func.func @transform_5(%arg0: i32) -> (i32, i32, i32) {
    %c0_i32 = arith.constant 0 : i32
    %c0_i32_0 = arith.constant 0 : i32
    %c0_i32_1 = arith.constant 0 : i32
    return %arg0, %c0_i32, %c0_i32_0 : i32, i32, i32
  }
  func.func @transform_6(%arg0: i32) -> (i32, i32, i32) {
    %c0_i32 = arith.constant 0 : i32
    %c0_i32_0 = arith.constant 0 : i32
    %c0_i32_1 = arith.constant 0 : i32
    return %arg0, %c0_i32, %c0_i32_0 : i32, i32, i32
  }
  func.func @transform_7(%arg0: i32) -> (i32, i32, i32) {
    %c0_i32 = arith.constant 0 : i32
    %c0_i32_0 = arith.constant 0 : i32
    %c0_i32_1 = arith.constant 0 : i32
    return %arg0, %c0_i32, %c0_i32_0 : i32, i32, i32
  }
  func.func @transform_8(%arg0: i32) -> (i32, i32, i32) {
    %c0_i32 = arith.constant 0 : i32
    %c0_i32_0 = arith.constant 0 : i32
    %c0_i32_1 = arith.constant 0 : i32
    return %arg0, %c0_i32, %c0_i32_0 : i32, i32, i32
  }
}

module attributes {stable_mosaic.version = 11 : i64} {
  func.func @_stage3_kernel(%arg0: i32, %arg1: memref<256x8xbf16, #tpu.memory_space<vmem>>, %arg2: memref<1x8xf32, #tpu.memory_space<vmem>>, %arg3: memref<1x8xf32, #tpu.memory_space<vmem>>, %arg4: memref<8x32xbf16, #tpu.memory_space<vmem>>, %arg5: memref<256x32xbf16, #tpu.memory_space<vmem>>, %arg6: memref<1x1x32xf32, #tpu.memory_space<vmem>>, %arg7: memref<1x1x32xf32, #tpu.memory_space<vmem>>) attributes {dimension_semantics = [#tpu.dimension_semantics<parallel>], iteration_bounds = array<i64: 2>, scalar_prefetch = 0 : i64, scratch_operands = 0 : i64, tpu.core_type = #tpu.core_type<tc>, window_params = [{transform_indices = @transform_0, window_bounds = array<i64: 256, 8>}, {pipeline_mode = #tpu.pipeline_mode<synchronous>, transform_indices = @transform_1, window_bounds = array<i64: 1, 8>}, {pipeline_mode = #tpu.pipeline_mode<synchronous>, transform_indices = @transform_2, window_bounds = array<i64: 1, 8>}, {pipeline_mode = #tpu.pipeline_mode<synchronous>, transform_indices = @transform_3, window_bounds = array<i64: 8, 32>}, {transform_indices = @transform_4, window_bounds = array<i64: 256, 32>}, {transform_indices = @transform_5, window_bounds = array<i64: 1, 1, 32>}, {transform_indices = @transform_6, window_bounds = array<i64: 1, 1, 32>}]} {
    %c0 = arith.constant 0 : index
    %c0_0 = arith.constant 0 : index
    %0 = vector.load %arg1[%c0, %c0_0] : memref<256x8xbf16, #tpu.memory_space<vmem>>, vector<256x8xbf16>
    %1 = arith.extf %0 : vector<256x8xbf16> to vector<256x8xf32>
    %c0_1 = arith.constant 0 : index
    %c0_2 = arith.constant 0 : index
    %2 = vector.load %arg2[%c0_1, %c0_2] : memref<1x8xf32, #tpu.memory_space<vmem>>, vector<1x8xf32>
    %3 = vector.broadcast %2 : vector<1x8xf32> to vector<256x8xf32>
    %4 = arith.mulf %1, %3 : vector<256x8xf32>
    %c0_3 = arith.constant 0 : index
    %c0_4 = arith.constant 0 : index
    %5 = vector.load %arg3[%c0_3, %c0_4] : memref<1x8xf32, #tpu.memory_space<vmem>>, vector<1x8xf32>
    %6 = vector.broadcast %5 : vector<1x8xf32> to vector<256x8xf32>
    %7 = arith.addf %4, %6 : vector<256x8xf32>
    %cst = arith.constant 0.000000e+00 : f32
    %8 = vector.broadcast %cst : f32 to vector<256x8xf32>
    %9 = arith.maximumf %7, %8 : vector<256x8xf32>
    %10 = arith.truncf %9 : vector<256x8xf32> to vector<256x8xbf16>
    %c0_5 = arith.constant 0 : index
    %c0_6 = arith.constant 0 : index
    %11 = vector.load %arg4[%c0_5, %c0_6] : memref<8x32xbf16, #tpu.memory_space<vmem>>, vector<8x32xbf16>
    %cst_7 = arith.constant dense<0.000000e+00> : vector<256x32xf32>
    %12 = tpu.matmul %10, %11, %cst_7 {dimension_numbers = #tpu.dot_dimension_numbers<[1], [0], [0], [1], [0, 0, 1, 1], [], []>} : vector<256x8xbf16>, vector<8x32xbf16>, vector<256x32xf32> -> vector<256x32xf32>
    %13 = arith.truncf %12 : vector<256x32xf32> to vector<256x32xbf16>
    %c0_8 = arith.constant 0 : index
    %c0_9 = arith.constant 0 : index
    %14 = vector.load %arg5[%c0_8, %c0_9] : memref<256x32xbf16, #tpu.memory_space<vmem>>, vector<256x32xbf16>
    tpu.vector_store %arg5[%c0_8, %c0_9], %13 {strides = array<i32>} : memref<256x32xbf16, #tpu.memory_space<vmem>>, vector<256x32xbf16>,
    %cst_10 = arith.constant dense<0.000000e+00> : vector<32xf32>
    %15 = vector.multi_reduction <add>, %12, %cst_10 [0] : vector<256x32xf32> to vector<32xf32>
    %16 = vector.shape_cast %15 : vector<32xf32> to vector<1x32xf32>
    %c0_11 = arith.constant 0 : index
    %c0_12 = arith.constant 0 : index
    %c0_13 = arith.constant 0 : index
    %17 = vector.load %arg6[%c0_11, %c0_12, %c0_13] : memref<1x1x32xf32, #tpu.memory_space<vmem>>, vector<1x1x32xf32>
    %18 = vector.shape_cast %17 : vector<1x1x32xf32> to vector<1x32xf32>
    %19 = vector.shape_cast %16 : vector<1x32xf32> to vector<1x1x32xf32>
    tpu.vector_store %arg6[%c0_11, %c0_12, %c0_13], %19 {strides = array<i32>} : memref<1x1x32xf32, #tpu.memory_space<vmem>>, vector<1x1x32xf32>,
    %20 = arith.mulf %12, %12 : vector<256x32xf32>
    %cst_14 = arith.constant dense<0.000000e+00> : vector<32xf32>
    %21 = vector.multi_reduction <add>, %20, %cst_14 [0] : vector<256x32xf32> to vector<32xf32>
    %22 = vector.shape_cast %21 : vector<32xf32> to vector<1x32xf32>
    %c0_15 = arith.constant 0 : index
    %c0_16 = arith.constant 0 : index
    %c0_17 = arith.constant 0 : index
    %23 = vector.load %arg7[%c0_15, %c0_16, %c0_17] : memref<1x1x32xf32, #tpu.memory_space<vmem>>, vector<1x1x32xf32>
    %24 = vector.shape_cast %23 : vector<1x1x32xf32> to vector<1x32xf32>
    %25 = vector.shape_cast %22 : vector<1x32xf32> to vector<1x1x32xf32>
    tpu.vector_store %arg7[%c0_15, %c0_16, %c0_17], %25 {strides = array<i32>} : memref<1x1x32xf32, #tpu.memory_space<vmem>>, vector<1x1x32xf32>,
    return
  }
  func.func @transform_0(%arg0: i32) -> (i32, i32) {
    %c0_i32 = arith.constant 0 : i32
    %c0_i32_0 = arith.constant 0 : i32
    return %arg0, %c0_i32 : i32, i32
  }
  func.func @transform_1(%arg0: i32) -> (i32, i32) {
    %c0_i32 = arith.constant 0 : i32
    %c0_i32_0 = arith.constant 0 : i32
    %c0_i32_1 = arith.constant 0 : i32
    return %c0_i32, %c0_i32_0 : i32, i32
  }
  func.func @transform_2(%arg0: i32) -> (i32, i32) {
    %c0_i32 = arith.constant 0 : i32
    %c0_i32_0 = arith.constant 0 : i32
    %c0_i32_1 = arith.constant 0 : i32
    return %c0_i32, %c0_i32_0 : i32, i32
  }
  func.func @transform_3(%arg0: i32) -> (i32, i32) {
    %c0_i32 = arith.constant 0 : i32
    %c0_i32_0 = arith.constant 0 : i32
    %c0_i32_1 = arith.constant 0 : i32
    return %c0_i32, %c0_i32_0 : i32, i32
  }
  func.func @transform_4(%arg0: i32) -> (i32, i32) {
    %c0_i32 = arith.constant 0 : i32
    %c0_i32_0 = arith.constant 0 : i32
    return %arg0, %c0_i32 : i32, i32
  }
  func.func @transform_5(%arg0: i32) -> (i32, i32, i32) {
    %c0_i32 = arith.constant 0 : i32
    %c0_i32_0 = arith.constant 0 : i32
    %c0_i32_1 = arith.constant 0 : i32
    return %arg0, %c0_i32, %c0_i32_0 : i32, i32, i32
  }
  func.func @transform_6(%arg0: i32) -> (i32, i32, i32) {
    %c0_i32 = arith.constant 0 : i32
    %c0_i32_0 = arith.constant 0 : i32
    %c0_i32_1 = arith.constant 0 : i32
    return %arg0, %c0_i32, %c0_i32_0 : i32, i32, i32
  }
}

module attributes {stable_mosaic.version = 11 : i64} {
  func.func @_stage2_kernel(%arg0: i32, %arg1: memref<1x16x16x8xbf16, #tpu.memory_space<vmem>>, %arg2: memref<1x8xf32, #tpu.memory_space<vmem>>, %arg3: memref<1x8xf32, #tpu.memory_space<vmem>>, %arg4: memref<3x24x8xbf16, #tpu.memory_space<vmem>>, %arg5: memref<1x16x16x8xbf16, #tpu.memory_space<vmem>>, %arg6: memref<1x1x8xf32, #tpu.memory_space<vmem>>, %arg7: memref<1x1x8xf32, #tpu.memory_space<vmem>>) attributes {dimension_semantics = [#tpu.dimension_semantics<parallel>], iteration_bounds = array<i64: 2>, scalar_prefetch = 0 : i64, scratch_operands = 0 : i64, tpu.core_type = #tpu.core_type<tc>, window_params = [{transform_indices = @transform_0, window_bounds = array<i64: 1, 16, 16, 8>}, {pipeline_mode = #tpu.pipeline_mode<synchronous>, transform_indices = @transform_1, window_bounds = array<i64: 1, 8>}, {pipeline_mode = #tpu.pipeline_mode<synchronous>, transform_indices = @transform_2, window_bounds = array<i64: 1, 8>}, {pipeline_mode = #tpu.pipeline_mode<synchronous>, transform_indices = @transform_3, window_bounds = array<i64: 3, 24, 8>}, {transform_indices = @transform_4, window_bounds = array<i64: 1, 16, 16, 8>}, {transform_indices = @transform_5, window_bounds = array<i64: 1, 1, 8>}, {transform_indices = @transform_6, window_bounds = array<i64: 1, 1, 8>}]} {
    %c0 = arith.constant 0 : index
    %c0_0 = arith.constant 0 : index
    %c0_1 = arith.constant 0 : index
    %c0_2 = arith.constant 0 : index
    %0 = vector.load %arg1[%c0, %c0_0, %c0_1, %c0_2] : memref<1x16x16x8xbf16, #tpu.memory_space<vmem>>, vector<1x16x16x8xbf16>
    %1 = vector.shape_cast %0 : vector<1x16x16x8xbf16> to vector<16x16x8xbf16>
    %2 = arith.extf %1 : vector<16x16x8xbf16> to vector<16x16x8xf32>
    %c0_3 = arith.constant 0 : index
    %c0_4 = arith.constant 0 : index
    %3 = vector.load %arg2[%c0_3, %c0_4] : memref<1x8xf32, #tpu.memory_space<vmem>>, vector<1x8xf32>
    %4 = vector.shape_cast %3 : vector<1x8xf32> to vector<1x1x8xf32>
    %5 = vector.broadcast %4 : vector<1x1x8xf32> to vector<16x16x8xf32>
    %6 = arith.mulf %2, %5 : vector<16x16x8xf32>
    %c0_5 = arith.constant 0 : index
    %c0_6 = arith.constant 0 : index
    %7 = vector.load %arg3[%c0_5, %c0_6] : memref<1x8xf32, #tpu.memory_space<vmem>>, vector<1x8xf32>
    %8 = vector.shape_cast %7 : vector<1x8xf32> to vector<1x1x8xf32>
    %9 = vector.broadcast %8 : vector<1x1x8xf32> to vector<16x16x8xf32>
    %10 = arith.addf %6, %9 : vector<16x16x8xf32>
    %cst = arith.constant 0.000000e+00 : f32
    %11 = vector.broadcast %cst : f32 to vector<16x16x8xf32>
    %12 = arith.maximumf %10, %11 : vector<16x16x8xf32>
    %13 = arith.truncf %12 : vector<16x16x8xf32> to vector<16x16x8xbf16>
    %cst_7 = arith.constant 0.000000e+00 : bf16
    %14 = vector.broadcast %cst_7 : bf16 to vector<16x1x8xbf16>
    %cst_8 = arith.constant 0.000000e+00 : bf16
    %15 = vector.broadcast %cst_8 : bf16 to vector<1x18x8xbf16>
    %16 = tpu.concatenate %14, %13, %14 in 1 : vector<16x1x8xbf16>, vector<16x16x8xbf16>, vector<16x1x8xbf16> -> vector<16x18x8xbf16>
    %17 = tpu.concatenate %15, %16, %15 in 0 : vector<1x18x8xbf16>, vector<16x18x8xbf16>, vector<1x18x8xbf16> -> vector<18x18x8xbf16>
    %cst_9 = arith.constant 0.000000e+00 : f32
    %18 = vector.broadcast %cst_9 : f32 to vector<256x8xf32>
    %c0_10 = arith.constant 0 : index
    %c0_11 = arith.constant 0 : index
    %c0_12 = arith.constant 0 : index
    %19 = vector.load %arg4[%c0_10, %c0_11, %c0_12] : memref<3x24x8xbf16, #tpu.memory_space<vmem>>, vector<1x24x8xbf16>
    %20 = vector.shape_cast %19 : vector<1x24x8xbf16> to vector<24x8xbf16>
    %21 = vector.extract_strided_slice %17 {offsets = [0, 0, 0], sizes = [16, 16, 8], strides = [1, 1, 1]} : vector<18x18x8xbf16> to vector<16x16x8xbf16>
    %22 = vector.shape_cast %21 : vector<16x16x8xbf16> to vector<256x8xbf16>
    %23 = vector.extract_strided_slice %20 {offsets = [0, 0], sizes = [8, 8], strides = [1, 1]} : vector<24x8xbf16> to vector<8x8xbf16>
    %cst_13 = arith.constant dense<0.000000e+00> : vector<256x8xf32>
    %24 = tpu.matmul %22, %23, %cst_13 {dimension_numbers = #tpu.dot_dimension_numbers<[1], [0], [0], [1], [0, 0, 1, 1], [], []>} : vector<256x8xbf16>, vector<8x8xbf16>, vector<256x8xf32> -> vector<256x8xf32>
    %25 = arith.addf %18, %24 : vector<256x8xf32>
    %26 = vector.extract_strided_slice %17 {offsets = [0, 1, 0], sizes = [16, 16, 8], strides = [1, 1, 1]} : vector<18x18x8xbf16> to vector<16x16x8xbf16>
    %27 = vector.shape_cast %26 : vector<16x16x8xbf16> to vector<256x8xbf16>
    %28 = vector.extract_strided_slice %20 {offsets = [8, 0], sizes = [8, 8], strides = [1, 1]} : vector<24x8xbf16> to vector<8x8xbf16>
    %cst_14 = arith.constant dense<0.000000e+00> : vector<256x8xf32>
    %29 = tpu.matmul %27, %28, %cst_14 {dimension_numbers = #tpu.dot_dimension_numbers<[1], [0], [0], [1], [0, 0, 1, 1], [], []>} : vector<256x8xbf16>, vector<8x8xbf16>, vector<256x8xf32> -> vector<256x8xf32>
    %30 = arith.addf %25, %29 : vector<256x8xf32>
    %31 = vector.extract_strided_slice %17 {offsets = [0, 2, 0], sizes = [16, 16, 8], strides = [1, 1, 1]} : vector<18x18x8xbf16> to vector<16x16x8xbf16>
    %32 = vector.shape_cast %31 : vector<16x16x8xbf16> to vector<256x8xbf16>
    %33 = vector.extract_strided_slice %20 {offsets = [16, 0], sizes = [8, 8], strides = [1, 1]} : vector<24x8xbf16> to vector<8x8xbf16>
    %cst_15 = arith.constant dense<0.000000e+00> : vector<256x8xf32>
    %34 = tpu.matmul %32, %33, %cst_15 {dimension_numbers = #tpu.dot_dimension_numbers<[1], [0], [0], [1], [0, 0, 1, 1], [], []>} : vector<256x8xbf16>, vector<8x8xbf16>, vector<256x8xf32> -> vector<256x8xf32>
    %35 = arith.addf %30, %34 : vector<256x8xf32>
    %c1 = arith.constant 1 : index
    %c0_16 = arith.constant 0 : index
    %c0_17 = arith.constant 0 : index
    %36 = vector.load %arg4[%c1, %c0_16, %c0_17] : memref<3x24x8xbf16, #tpu.memory_space<vmem>>, vector<1x24x8xbf16>
    %37 = vector.shape_cast %36 : vector<1x24x8xbf16> to vector<24x8xbf16>
    %38 = vector.extract_strided_slice %17 {offsets = [1, 0, 0], sizes = [16, 16, 8], strides = [1, 1, 1]} : vector<18x18x8xbf16> to vector<16x16x8xbf16>
    %39 = vector.shape_cast %38 : vector<16x16x8xbf16> to vector<256x8xbf16>
    %40 = vector.extract_strided_slice %37 {offsets = [0, 0], sizes = [8, 8], strides = [1, 1]} : vector<24x8xbf16> to vector<8x8xbf16>
    %cst_18 = arith.constant dense<0.000000e+00> : vector<256x8xf32>
    %41 = tpu.matmul %39, %40, %cst_18 {dimension_numbers = #tpu.dot_dimension_numbers<[1], [0], [0], [1], [0, 0, 1, 1], [], []>} : vector<256x8xbf16>, vector<8x8xbf16>, vector<256x8xf32> -> vector<256x8xf32>
    %42 = arith.addf %35, %41 : vector<256x8xf32>
    %43 = vector.extract_strided_slice %17 {offsets = [1, 1, 0], sizes = [16, 16, 8], strides = [1, 1, 1]} : vector<18x18x8xbf16> to vector<16x16x8xbf16>
    %44 = vector.shape_cast %43 : vector<16x16x8xbf16> to vector<256x8xbf16>
    %45 = vector.extract_strided_slice %37 {offsets = [8, 0], sizes = [8, 8], strides = [1, 1]} : vector<24x8xbf16> to vector<8x8xbf16>
    %cst_19 = arith.constant dense<0.000000e+00> : vector<256x8xf32>
    %46 = tpu.matmul %44, %45, %cst_19 {dimension_numbers = #tpu.dot_dimension_numbers<[1], [0], [0], [1], [0, 0, 1, 1], [], []>} : vector<256x8xbf16>, vector<8x8xbf16>, vector<256x8xf32> -> vector<256x8xf32>
    %47 = arith.addf %42, %46 : vector<256x8xf32>
    %48 = vector.extract_strided_slice %17 {offsets = [1, 2, 0], sizes = [16, 16, 8], strides = [1, 1, 1]} : vector<18x18x8xbf16> to vector<16x16x8xbf16>
    %49 = vector.shape_cast %48 : vector<16x16x8xbf16> to vector<256x8xbf16>
    %50 = vector.extract_strided_slice %37 {offsets = [16, 0], sizes = [8, 8], strides = [1, 1]} : vector<24x8xbf16> to vector<8x8xbf16>
    %cst_20 = arith.constant dense<0.000000e+00> : vector<256x8xf32>
    %51 = tpu.matmul %49, %50, %cst_20 {dimension_numbers = #tpu.dot_dimension_numbers<[1], [0], [0], [1], [0, 0, 1, 1], [], []>} : vector<256x8xbf16>, vector<8x8xbf16>, vector<256x8xf32> -> vector<256x8xf32>
    %52 = arith.addf %47, %51 : vector<256x8xf32>
    %c2 = arith.constant 2 : index
    %c0_21 = arith.constant 0 : index
    %c0_22 = arith.constant 0 : index
    %53 = vector.load %arg4[%c2, %c0_21, %c0_22] : memref<3x24x8xbf16, #tpu.memory_space<vmem>>, vector<1x24x8xbf16>
    %54 = vector.shape_cast %53 : vector<1x24x8xbf16> to vector<24x8xbf16>
    %55 = vector.extract_strided_slice %17 {offsets = [2, 0, 0], sizes = [16, 16, 8], strides = [1, 1, 1]} : vector<18x18x8xbf16> to vector<16x16x8xbf16>
    %56 = vector.shape_cast %55 : vector<16x16x8xbf16> to vector<256x8xbf16>
    %57 = vector.extract_strided_slice %54 {offsets = [0, 0], sizes = [8, 8], strides = [1, 1]} : vector<24x8xbf16> to vector<8x8xbf16>
    %cst_23 = arith.constant dense<0.000000e+00> : vector<256x8xf32>
    %58 = tpu.matmul %56, %57, %cst_23 {dimension_numbers = #tpu.dot_dimension_numbers<[1], [0], [0], [1], [0, 0, 1, 1], [], []>} : vector<256x8xbf16>, vector<8x8xbf16>, vector<256x8xf32> -> vector<256x8xf32>
    %59 = arith.addf %52, %58 : vector<256x8xf32>
    %60 = vector.extract_strided_slice %17 {offsets = [2, 1, 0], sizes = [16, 16, 8], strides = [1, 1, 1]} : vector<18x18x8xbf16> to vector<16x16x8xbf16>
    %61 = vector.shape_cast %60 : vector<16x16x8xbf16> to vector<256x8xbf16>
    %62 = vector.extract_strided_slice %54 {offsets = [8, 0], sizes = [8, 8], strides = [1, 1]} : vector<24x8xbf16> to vector<8x8xbf16>
    %cst_24 = arith.constant dense<0.000000e+00> : vector<256x8xf32>
    %63 = tpu.matmul %61, %62, %cst_24 {dimension_numbers = #tpu.dot_dimension_numbers<[1], [0], [0], [1], [0, 0, 1, 1], [], []>} : vector<256x8xbf16>, vector<8x8xbf16>, vector<256x8xf32> -> vector<256x8xf32>
    %64 = arith.addf %59, %63 : vector<256x8xf32>
    %65 = vector.extract_strided_slice %17 {offsets = [2, 2, 0], sizes = [16, 16, 8], strides = [1, 1, 1]} : vector<18x18x8xbf16> to vector<16x16x8xbf16>
    %66 = vector.shape_cast %65 : vector<16x16x8xbf16> to vector<256x8xbf16>
    %67 = vector.extract_strided_slice %54 {offsets = [16, 0], sizes = [8, 8], strides = [1, 1]} : vector<24x8xbf16> to vector<8x8xbf16>
    %cst_25 = arith.constant dense<0.000000e+00> : vector<256x8xf32>
    %68 = tpu.matmul %66, %67, %cst_25 {dimension_numbers = #tpu.dot_dimension_numbers<[1], [0], [0], [1], [0, 0, 1, 1], [], []>} : vector<256x8xbf16>, vector<8x8xbf16>, vector<256x8xf32> -> vector<256x8xf32>
    %69 = arith.addf %64, %68 : vector<256x8xf32>
    %70 = vector.shape_cast %69 : vector<256x8xf32> to vector<16x16x8xf32>
    %71 = arith.truncf %70 : vector<16x16x8xf32> to vector<16x16x8xbf16>
    %c0_26 = arith.constant 0 : index
    %c0_27 = arith.constant 0 : index
    %c0_28 = arith.constant 0 : index
    %c0_29 = arith.constant 0 : index
    %72 = vector.load %arg5[%c0_26, %c0_27, %c0_28, %c0_29] : memref<1x16x16x8xbf16, #tpu.memory_space<vmem>>, vector<1x16x16x8xbf16>
    %73 = vector.shape_cast %72 : vector<1x16x16x8xbf16> to vector<16x16x8xbf16>
    %74 = vector.shape_cast %71 : vector<16x16x8xbf16> to vector<1x16x16x8xbf16>
    tpu.vector_store %arg5[%c0_26, %c0_27, %c0_28, %c0_29], %74 {strides = array<i32>} : memref<1x16x16x8xbf16, #tpu.memory_space<vmem>>, vector<1x16x16x8xbf16>,
    %cst_30 = arith.constant dense<0.000000e+00> : vector<8xf32>
    %75 = vector.multi_reduction <add>, %69, %cst_30 [0] : vector<256x8xf32> to vector<8xf32>
    %76 = vector.shape_cast %75 : vector<8xf32> to vector<1x8xf32>
    %c0_31 = arith.constant 0 : index
    %c0_32 = arith.constant 0 : index
    %c0_33 = arith.constant 0 : index
    %77 = vector.load %arg6[%c0_31, %c0_32, %c0_33] : memref<1x1x8xf32, #tpu.memory_space<vmem>>, vector<1x1x8xf32>
    %78 = vector.shape_cast %77 : vector<1x1x8xf32> to vector<1x8xf32>
    %79 = vector.shape_cast %76 : vector<1x8xf32> to vector<1x1x8xf32>
    tpu.vector_store %arg6[%c0_31, %c0_32, %c0_33], %79 {strides = array<i32>} : memref<1x1x8xf32, #tpu.memory_space<vmem>>, vector<1x1x8xf32>,
    %80 = arith.mulf %69, %69 : vector<256x8xf32>
    %cst_34 = arith.constant dense<0.000000e+00> : vector<8xf32>
    %81 = vector.multi_reduction <add>, %80, %cst_34 [0] : vector<256x8xf32> to vector<8xf32>
    %82 = vector.shape_cast %81 : vector<8xf32> to vector<1x8xf32>
    %c0_35 = arith.constant 0 : index
    %c0_36 = arith.constant 0 : index
    %c0_37 = arith.constant 0 : index
    %83 = vector.load %arg7[%c0_35, %c0_36, %c0_37] : memref<1x1x8xf32, #tpu.memory_space<vmem>>, vector<1x1x8xf32>
    %84 = vector.shape_cast %83 : vector<1x1x8xf32> to vector<1x8xf32>
    %85 = vector.shape_cast %82 : vector<1x8xf32> to vector<1x1x8xf32>
    tpu.vector_store %arg7[%c0_35, %c0_36, %c0_37], %85 {strides = array<i32>} : memref<1x1x8xf32, #tpu.memory_space<vmem>>, vector<1x1x8xf32>,
    return
  }
  func.func @transform_0(%arg0: i32) -> (i32, i32, i32, i32) {
    %c0_i32 = arith.constant 0 : i32
    %c0_i32_0 = arith.constant 0 : i32
    %c0_i32_1 = arith.constant 0 : i32
    %c0_i32_2 = arith.constant 0 : i32
    return %arg0, %c0_i32, %c0_i32_0, %c0_i32_1 : i32, i32, i32, i32
  }
  func.func @transform_1(%arg0: i32) -> (i32, i32) {
    %c0_i32 = arith.constant 0 : i32
    %c0_i32_0 = arith.constant 0 : i32
    %c0_i32_1 = arith.constant 0 : i32
    return %c0_i32, %c0_i32_0 : i32, i32
  }
  func.func @transform_2(%arg0: i32) -> (i32, i32) {
    %c0_i32 = arith.constant 0 : i32
    %c0_i32_0 = arith.constant 0 : i32
    %c0_i32_1 = arith.constant 0 : i32
    return %c0_i32, %c0_i32_0 : i32, i32
  }
  func.func @transform_3(%arg0: i32) -> (i32, i32, i32) {
    %c0_i32 = arith.constant 0 : i32
    %c0_i32_0 = arith.constant 0 : i32
    %c0_i32_1 = arith.constant 0 : i32
    %c0_i32_2 = arith.constant 0 : i32
    return %c0_i32, %c0_i32_0, %c0_i32_1 : i32, i32, i32
  }
  func.func @transform_4(%arg0: i32) -> (i32, i32, i32, i32) {
    %c0_i32 = arith.constant 0 : i32
    %c0_i32_0 = arith.constant 0 : i32
    %c0_i32_1 = arith.constant 0 : i32
    %c0_i32_2 = arith.constant 0 : i32
    return %arg0, %c0_i32, %c0_i32_0, %c0_i32_1 : i32, i32, i32, i32
  }
  func.func @transform_5(%arg0: i32) -> (i32, i32, i32) {
    %c0_i32 = arith.constant 0 : i32
    %c0_i32_0 = arith.constant 0 : i32
    %c0_i32_1 = arith.constant 0 : i32
    return %arg0, %c0_i32, %c0_i32_0 : i32, i32, i32
  }
  func.func @transform_6(%arg0: i32) -> (i32, i32, i32) {
    %c0_i32 = arith.constant 0 : i32
    %c0_i32_0 = arith.constant 0 : i32
    %c0_i32_1 = arith.constant 0 : i32
    return %arg0, %c0_i32, %c0_i32_0 : i32, i32, i32
  }
}

module attributes {stable_mosaic.version = 11 : i64} {
  func.func @_stage4_kernel(%arg0: i32, %arg1: memref<256x32xbf16, #tpu.memory_space<vmem>>, %arg2: memref<256x32xbf16, #tpu.memory_space<vmem>>, %arg3: memref<1x32xf32, #tpu.memory_space<vmem>>, %arg4: memref<1x32xf32, #tpu.memory_space<vmem>>, %arg5: memref<1x32xf32, #tpu.memory_space<vmem>>, %arg6: memref<1x32xf32, #tpu.memory_space<vmem>>, %arg7: memref<256x32xf32, #tpu.memory_space<vmem>>) attributes {dimension_semantics = [#tpu.dimension_semantics<parallel>], iteration_bounds = array<i64: 2>, scalar_prefetch = 0 : i64, scratch_operands = 0 : i64, tpu.core_type = #tpu.core_type<tc>, window_params = [{transform_indices = @transform_0, window_bounds = array<i64: 256, 32>}, {transform_indices = @transform_1, window_bounds = array<i64: 256, 32>}, {pipeline_mode = #tpu.pipeline_mode<synchronous>, transform_indices = @transform_2, window_bounds = array<i64: 1, 32>}, {pipeline_mode = #tpu.pipeline_mode<synchronous>, transform_indices = @transform_3, window_bounds = array<i64: 1, 32>}, {pipeline_mode = #tpu.pipeline_mode<synchronous>, transform_indices = @transform_4, window_bounds = array<i64: 1, 32>}, {pipeline_mode = #tpu.pipeline_mode<synchronous>, transform_indices = @transform_5, window_bounds = array<i64: 1, 32>}, {transform_indices = @transform_6, window_bounds = array<i64: 256, 32>}]} {
    %c0 = arith.constant 0 : index
    %c0_0 = arith.constant 0 : index
    %0 = vector.load %arg1[%c0, %c0_0] : memref<256x32xbf16, #tpu.memory_space<vmem>>, vector<256x32xbf16>
    %1 = arith.extf %0 : vector<256x32xbf16> to vector<256x32xf32>
    %c0_1 = arith.constant 0 : index
    %c0_2 = arith.constant 0 : index
    %2 = vector.load %arg3[%c0_1, %c0_2] : memref<1x32xf32, #tpu.memory_space<vmem>>, vector<1x32xf32>
    %3 = vector.broadcast %2 : vector<1x32xf32> to vector<256x32xf32>
    %4 = arith.mulf %1, %3 : vector<256x32xf32>
    %c0_3 = arith.constant 0 : index
    %c0_4 = arith.constant 0 : index
    %5 = vector.load %arg4[%c0_3, %c0_4] : memref<1x32xf32, #tpu.memory_space<vmem>>, vector<1x32xf32>
    %6 = vector.broadcast %5 : vector<1x32xf32> to vector<256x32xf32>
    %7 = arith.addf %4, %6 : vector<256x32xf32>
    %c0_5 = arith.constant 0 : index
    %c0_6 = arith.constant 0 : index
    %8 = vector.load %arg2[%c0_5, %c0_6] : memref<256x32xbf16, #tpu.memory_space<vmem>>, vector<256x32xbf16>
    %9 = arith.extf %8 : vector<256x32xbf16> to vector<256x32xf32>
    %c0_7 = arith.constant 0 : index
    %c0_8 = arith.constant 0 : index
    %10 = vector.load %arg5[%c0_7, %c0_8] : memref<1x32xf32, #tpu.memory_space<vmem>>, vector<1x32xf32>
    %11 = vector.broadcast %10 : vector<1x32xf32> to vector<256x32xf32>
    %12 = arith.mulf %9, %11 : vector<256x32xf32>
    %c0_9 = arith.constant 0 : index
    %c0_10 = arith.constant 0 : index
    %13 = vector.load %arg6[%c0_9, %c0_10] : memref<1x32xf32, #tpu.memory_space<vmem>>, vector<1x32xf32>
    %14 = vector.broadcast %13 : vector<1x32xf32> to vector<256x32xf32>
    %15 = arith.addf %12, %14 : vector<256x32xf32>
    %16 = arith.addf %7, %15 : vector<256x32xf32>
    %cst = arith.constant 0.000000e+00 : f32
    %17 = vector.broadcast %cst : f32 to vector<256x32xf32>
    %18 = arith.maximumf %16, %17 : vector<256x32xf32>
    %c0_11 = arith.constant 0 : index
    %c0_12 = arith.constant 0 : index
    %19 = vector.load %arg7[%c0_11, %c0_12] : memref<256x32xf32, #tpu.memory_space<vmem>>, vector<256x32xf32>
    tpu.vector_store %arg7[%c0_11, %c0_12], %18 {strides = array<i32>} : memref<256x32xf32, #tpu.memory_space<vmem>>, vector<256x32xf32>,
    return
  }
  func.func @transform_0(%arg0: i32) -> (i32, i32) {
    %c0_i32 = arith.constant 0 : i32
    %c0_i32_0 = arith.constant 0 : i32
    return %arg0, %c0_i32 : i32, i32
  }
  func.func @transform_1(%arg0: i32) -> (i32, i32) {
    %c0_i32 = arith.constant 0 : i32
    %c0_i32_0 = arith.constant 0 : i32
    return %arg0, %c0_i32 : i32, i32
  }
  func.func @transform_2(%arg0: i32) -> (i32, i32) {
    %c0_i32 = arith.constant 0 : i32
    %c0_i32_0 = arith.constant 0 : i32
    %c0_i32_1 = arith.constant 0 : i32
    return %c0_i32, %c0_i32_0 : i32, i32
  }
  func.func @transform_3(%arg0: i32) -> (i32, i32) {
    %c0_i32 = arith.constant 0 : i32
    %c0_i32_0 = arith.constant 0 : i32
    %c0_i32_1 = arith.constant 0 : i32
    return %c0_i32, %c0_i32_0 : i32, i32
  }
  func.func @transform_4(%arg0: i32) -> (i32, i32) {
    %c0_i32 = arith.constant 0 : i32
    %c0_i32_0 = arith.constant 0 : i32
    %c0_i32_1 = arith.constant 0 : i32
    return %c0_i32, %c0_i32_0 : i32, i32
  }
  func.func @transform_5(%arg0: i32) -> (i32, i32) {
    %c0_i32 = arith.constant 0 : i32
    %c0_i32_0 = arith.constant 0 : i32
    %c0_i32_1 = arith.constant 0 : i32
    return %c0_i32, %c0_i32_0 : i32, i32
  }
  func.func @transform_6(%arg0: i32) -> (i32, i32) {
    %c0_i32 = arith.constant 0 : i32
    %c0_i32_0 = arith.constant 0 : i32
    return %arg0, %c0_i32 : i32, i32
  }
}

</mosaic_0001>

<llo_original>
// kernel: resnet_bottleneck_block_nhwc.7
$region0: #{resnet_bottleneck_block_nhwc.7}
  #allocation0 [shape = 'u32[]', space=smem, size = 0x4, offset = 0x4, fixed_abs, tag = 'smem constant byte address 0x4 - core index']
  #allocation1 [shape = 'u32[144,128]{1,0:T(1,128)}', space=vmem, size = 0x12000, scoped, tag = 'internal scratch']
  %s0 = inlined_call_operand.vmem [shape: bf16[512,32], index: 0, kind: input, shape index: {}]
  %s1 = inlined_call_operand.vmem [shape: bf16[512,32], index: 1, kind: input, shape index: {}]
  %s2 = inlined_call_operand.vmem [shape: f32[1,32], index: 2, kind: input, shape index: {}]
  %s3 = inlined_call_operand.vmem [shape: f32[1,32], index: 3, kind: input, shape index: {}]
  %s4 = inlined_call_operand.vmem [shape: f32[1,32], index: 4, kind: input, shape index: {}]
  %s5 = inlined_call_operand.vmem [shape: f32[1,32], index: 5, kind: input, shape index: {}]
  %s6 = inlined_call_operand.hbm [shape: f32[512,32], index: 6, kind: output, shape index: {}]
  %s7 = sld [smem:[#allocation0]]
  $region57: #{resnet_bottleneck_block_nhwc.7} parent=0
    _
  %s9 = ssub.s32 1, %s7
  %s10 = scalar_select 0, %s9, %s7
  $region1: #{resnet_bottleneck_block_nhwc.7} parent=0
    #allocation2 [shape = 'u8[262144]{0}', space=vmem, size = 0x40000, scoped, tag = 'output window, operand 0']
    #allocation3 [shape = 's32[2]{0}', space=sflag, size = 0x8, scoped, tag = 'scoped memory for resnet_bottleneck_block_nhwc.7']
    %11 = vsyncpa [#allocation3], 0
    %s12 = scalar_lea.sflag [#allocation3], 1
    %13 = vsyncpa %s12, 0
    loop: start=0, step=1, limit=4
    $region2: #{resnet_bottleneck_block_nhwc.7} parent=1 // loop_pre_header
      _
    $region3: #{resnet_bottleneck_block_nhwc.7} parent=1 // loop_header
      %s15 = sphi 0, %s19
      %p16 = scmp.ge.s32.totalorder %s15, 4
      %s25 = sphi 0, %s27
      %s28 = sphi 0, %s25
      %s29 = sphi 0, %s28
      %s45 = sphi 0, %s29
      %s51 = sphi 0, %s53
      %s54 = sphi 0, %s51
      %s55 = sphi 0, %s54
      %s71 = sphi 0, %s55
      %s75 = sphi 0, %s75
      %s77 = sphi 0, %s75
      %s78 = sphi 0, %s77
      %s92 = sphi 0, %s78
      %s96 = sphi 0, %s96
      %s98 = sphi 0, %s96
      %s99 = sphi 0, %s98
      %s113 = sphi 0, %s99
      %s117 = sphi 0, %s117
      %s119 = sphi 0, %s117
      %s120 = sphi 0, %s119
      %s134 = sphi 0, %s120
      %s138 = sphi 0, %s138
      %s140 = sphi 0, %s138
      %s141 = sphi 0, %s140
      %s155 = sphi 0, %s141
      %s161 = sphi 0, %s163
      %s164 = sphi 0, %s161
      %s165 = sphi 0, %s164
      %s181 = sphi 0, %s165
    $region4: #{resnet_bottleneck_block_nhwc.7} parent=1 // loop_header_branch
      %18 = sbr.rel (%p16) target = $region8
    $region5: #{resnet_bottleneck_block_nhwc.7} parent=1 // loop_body
      %s20 = ssub.s32 %s15, 1
      %s21 = ssub.s32 %s15, 2
      %s22 = sadd.s32 %s15, 1
      %s23 = ssub.s32 %s15, %s22
      %p24 = scmp.eq.s32.totalorder %s23, 0
      %s26 = sadd.s32 %s25, 1
      %s27 = scalar_select %p24, %s25, %s26
      %p30 = pneg %p24
      %p31 = scmp.eq.s32.totalorder %s15, 1
      %p32 = por %p30, %p31
      %p33 = scmp.ne.s32.totalorder %s25, %s28
      %p34 = scmp.eq.s32.totalorder %s15, 0
      %p35 = por %p33, %p34
      %p36 = scmp.ne.s32.totalorder %s25, %s28
      %p37 = scmp.eq.s32.totalorder %s20, 1
      %p38 = por %p36, %p37
      %p39 = scmp.ne.s32.totalorder %s28, %s29
      %p40 = scmp.eq.s32.totalorder %s20, 0
      %p41 = por %p39, %p40
      %p42 = scmp.ne.s32.totalorder %s28, %s29
      %p43 = scmp.eq.s32.totalorder %s21, 1
      %p44 = por %p42, %p43
      %p46 = scmp.ne.s32.totalorder %s29, %s45
      %p47 = scmp.eq.s32.totalorder %s21, 0
      %p48 = por %p46, %p47
      %s49 = ssub.s32 %s15, %s22
      %p50 = scmp.eq.s32.totalorder %s49, 0
      %s52 = sadd.s32 %s51, 1
      %s53 = scalar_select %p50, %s51, %s52
      %p56 = pneg %p50
      %p57 = scmp.eq.s32.totalorder %s15, 1
      %p58 = por %p56, %p57
      %p59 = scmp.ne.s32.totalorder %s51, %s54
      %p60 = scmp.eq.s32.totalorder %s15, 0
      %p61 = por %p59, %p60
      %p62 = scmp.ne.s32.totalorder %s51, %s54
      %p63 = scmp.eq.s32.totalorder %s20, 1
      %p64 = por %p62, %p63
      %p65 = scmp.ne.s32.totalorder %s54, %s55
      %p66 = scmp.eq.s32.totalorder %s20, 0
      %p67 = por %p65, %p66
      %p68 = scmp.ne.s32.totalorder %s54, %s55
      %p69 = scmp.eq.s32.totalorder %s21, 1
      %p70 = por %p68, %p69
      %p72 = scmp.ne.s32.totalorder %s55, %s71
      %p73 = scmp.eq.s32.totalorder %s21, 0
      %p74 = por %p72, %p73
      %s76 = sadd.s32 %s75, 1
      %p79 = scmp.eq.s32.totalorder %s15, 1
      %p80 = scmp.ne.s32.totalorder %s75, %s77
      %p81 = scmp.eq.s32.totalorder %s15, 0
      %p82 = por %p80, %p81
      %p83 = scmp.ne.s32.totalorder %s75, %s77
      %p84 = scmp.eq.s32.totalorder %s20, 1
      %p85 = por %p83, %p84
      %p86 = scmp.ne.s32.totalorder %s77, %s78
      %p87 = scmp.eq.s32.totalorder %s20, 0
      %p88 = por %p86, %p87
      %p89 = scmp.ne.s32.totalorder %s77, %s78
      %p90 = scmp.eq.s32.totalorder %s21, 1
      %p91 = por %p89, %p90
      %p93 = scmp.ne.s32.totalorder %s78, %s92
      %p94 = scmp.eq.s32.totalorder %s21, 0
      %p95 = por %p93, %p94
      %s97 = sadd.s32 %s96, 1
      %p100 = scmp.eq.s32.totalorder %s15, 1
      %p101 = scmp.ne.s32.totalorder %s96, %s98
      %p102 = scmp.eq.s32.totalorder %s15, 0
      %p103 = por %p101, %p102
      %p104 = scmp.ne.s32.totalorder %s96, %s98
      %p105 = scmp.eq.s32.totalorder %s20, 1
      %p106 = por %p104, %p105
      %p107 = scmp.ne.s32.totalorder %s98, %s99
      %p108 = scmp.eq.s32.totalorder %s20, 0
      %p109 = por %p107, %p108
      %p110 = scmp.ne.s32.totalorder %s98, %s99
      %p111 = scmp.eq.s32.totalorder %s21, 1
      %p112 = por %p110, %p111
      %p114 = scmp.ne.s32.totalorder %s99, %s113
      %p115 = scmp.eq.s32.totalorder %s21, 0
      %p116 = por %p114, %p115
      %s118 = sadd.s32 %s117, 1
      %p121 = scmp.eq.s32.totalorder %s15, 1
      %p122 = scmp.ne.s32.totalorder %s117, %s119
      %p123 = scmp.eq.s32.totalorder %s15, 0
      %p124 = por %p122, %p123
      %p125 = scmp.ne.s32.totalorder %s117, %s119
      %p126 = scmp.eq.s32.totalorder %s20, 1
      %p127 = por %p125, %p126
      %p128 = scmp.ne.s32.totalorder %s119, %s120
      %p129 = scmp.eq.s32.totalorder %s20, 0
      %p130 = por %p128, %p129
      %p131 = scmp.ne.s32.totalorder %s119, %s120
      %p132 = scmp.eq.s32.totalorder %s21, 1
      %p133 = por %p131, %p132
      %p135 = scmp.ne.s32.totalorder %s120, %s134
      %p136 = scmp.eq.s32.totalorder %s21, 0
      %p137 = por %p135, %p136
      %s139 = sadd.s32 %s138, 1
      %p142 = scmp.eq.s32.totalorder %s15, 1
      %p143 = scmp.ne.s32.totalorder %s138, %s140
      %p144 = scmp.eq.s32.totalorder %s15, 0
      %p145 = por %p143, %p144
      %p146 = scmp.ne.s32.totalorder %s138, %s140
      %p147 = scmp.eq.s32.totalorder %s20, 1
      %p148 = por %p146, %p147
      %p149 = scmp.ne.s32.totalorder %s140, %s141
      %p150 = scmp.eq.s32.totalorder %s20, 0
      %p151 = por %p149, %p150
      %p152 = scmp.ne.s32.totalorder %s140, %s141
      %p153 = scmp.eq.s32.totalorder %s21, 1
      %p154 = por %p152, %p153
      %p156 = scmp.ne.s32.totalorder %s141, %s155
      %p157 = scmp.eq.s32.totalorder %s21, 0
      %p158 = por %p156, %p157
      %s159 = ssub.s32 %s15, %s22
      %p160 = scmp.eq.s32.totalorder %s159, 0
      %s162 = sadd.s32 %s161, 1
      %s163 = scalar_select %p160, %s161, %s162
      %p166 = pneg %p160
      %p167 = scmp.eq.s32.totalorder %s15, 1
      %p168 = por %p166, %p167
      %p169 = scmp.ne.s32.totalorder %s161, %s164
      %p170 = scmp.eq.s32.totalorder %s15, 0
      %p171 = por %p169, %p170
      %p172 = scmp.ne.s32.totalorder %s161, %s164
      %p173 = scmp.eq.s32.totalorder %s20, 1
      %p174 = por %p172, %p173
      %p175 = scmp.ne.s32.totalorder %s164, %s165
      %p176 = scmp.eq.s32.totalorder %s20, 0
      %p177 = por %p175, %p176
      %p178 = scmp.ne.s32.totalorder %s164, %s165
      %p179 = scmp.eq.s32.totalorder %s21, 1
      %p180 = por %p178, %p179
      %p182 = scmp.ne.s32.totalorder %s165, %s181
      %p183 = scmp.eq.s32.totalorder %s21, 0
      %p184 = por %p182, %p183
      %p185 = scmp.le.s32.totalorder 1, %s15
      %p186 = scmp.lt.s32.totalorder %s15, 3
      %p187 = pnand %p185, %p186
      %p188 = pneg %p187
      // Predicated region
      $region9: #{resnet_bottleneck_block_nhwc.7} parent=5 // pred_check
        _
      $region10: #{resnet_bottleneck_block_nhwc.7} parent=5 // pred_check_branch
        %190 = sbr.rel (%p187) target = $region12
      $region11: #{resnet_bottleneck_block_nhwc.7} parent=5 // pred_region
        %s191 = ssub.s32 %s15, 1
        // Predicated region
        $region13: #{resnet_bottleneck_block_nhwc.7} parent=11 // pred_check
          %p192 = pneg %p88
        $region14: #{resnet_bottleneck_block_nhwc.7} parent=11 // pred_check_branch
          %194 = sbr.rel (%p192) target = $region16
        $region15: #{resnet_bottleneck_block_nhwc.7} parent=11 // pred_region
          _
        $region16: #{resnet_bottleneck_block_nhwc.7} parent=11 // pred_fallthru
          _
        // Predicated region
        $region17: #{resnet_bottleneck_block_nhwc.7} parent=11 // pred_check
          %p195 = pneg %p109
        $region18: #{resnet_bottleneck_block_nhwc.7} parent=11 // pred_check_branch
          %197 = sbr.rel (%p195) target = $region20
        $region19: #{resnet_bottleneck_block_nhwc.7} parent=11 // pred_region
          _
        $region20: #{resnet_bottleneck_block_nhwc.7} parent=11 // pred_fallthru
          _
        // Predicated region
        $region21: #{resnet_bottleneck_block_nhwc.7} parent=11 // pred_check
          %p198 = pneg %p130
        $region22: #{resnet_bottleneck_block_nhwc.7} parent=11 // pred_check_branch
          %200 = sbr.rel (%p198) target = $region24
        $region23: #{resnet_bottleneck_block_nhwc.7} parent=11 // pred_region
          _
        $region24: #{resnet_bottleneck_block_nhwc.7} parent=11 // pred_fallthru
          _
        // Predicated region
        $region25: #{resnet_bottleneck_block_nhwc.7} parent=11 // pred_check
          %p201 = pneg %p151
        $region26: #{resnet_bottleneck_block_nhwc.7} parent=11 // pred_check_branch
          %203 = sbr.rel (%p201) target = $region28
        $region27: #{resnet_bottleneck_block_nhwc.7} parent=11 // pred_region
          _
        $region28: #{resnet_bottleneck_block_nhwc.7} parent=11 // pred_fallthru
          _
      $region12: #{resnet_bottleneck_block_nhwc.7} parent=5 // pred_fallthru
        _
      %p204 = scmp.lt.s32.totalorder %s15, 2
      // Predicated region
      $region29: #{resnet_bottleneck_block_nhwc.7} parent=5 // pred_check
        %p205 = pneg %p204
      $region30: #{resnet_bottleneck_block_nhwc.7} parent=5 // pred_check_branch
        %207 = sbr.rel (%p205) target = $region32
      $region31: #{resnet_bottleneck_block_nhwc.7} parent=5 // pred_region
        // Predicated region
        $region33: #{resnet_bottleneck_block_nhwc.7} parent=31 // pred_check
          %p208 = pneg %p35
        $region34: #{resnet_bottleneck_block_nhwc.7} parent=31 // pred_check_branch
          %210 = sbr.rel (%p208) target = $region36
        $region35: #{resnet_bottleneck_block_nhwc.7} parent=31 // pred_region
          %s211 = smul.u32 32, %s15
          %p212 = scmp.lt.s32.totalorder %s211, 63
          %s213 = scalar_select %p212, %s211, 63
          %s214 = smul.addr %s213, 4
          %s215 = scalar_lea.vmem %s0, %s214
          %s216 = smul.u32 32, %s15
        $region36: #{resnet_bottleneck_block_nhwc.7} parent=31 // pred_fallthru
          _
        // Predicated region
        $region37: #{resnet_bottleneck_block_nhwc.7} parent=31 // pred_check
          %p217 = pneg %p61
        $region38: #{resnet_bottleneck_block_nhwc.7} parent=31 // pred_check_branch
          %219 = sbr.rel (%p217) target = $region40
        $region39: #{resnet_bottleneck_block_nhwc.7} parent=31 // pred_region
          %s220 = smul.u32 32, %s15
          %p221 = scmp.lt.s32.totalorder %s220, 63
          %s222 = scalar_select %p221, %s220, 63
          %s223 = smul.addr %s222, 4
          %s224 = scalar_lea.vmem %s1, %s223
          %s225 = smul.u32 32, %s15
        $region40: #{resnet_bottleneck_block_nhwc.7} parent=31 // pred_fallthru
          _
      $region32: #{resnet_bottleneck_block_nhwc.7} parent=5 // pred_fallthru
        _
      %p226 = scmp.le.s32.totalorder 1, %s15
      %p227 = scmp.lt.s32.totalorder %s15, 3
      %p228 = pnand %p226, %p227
      %p229 = pneg %p228
      // Predicated region
      $region41: #{resnet_bottleneck_block_nhwc.7} parent=5 // pred_check
        _
      $region42: #{resnet_bottleneck_block_nhwc.7} parent=5 // pred_check_branch
        %231 = sbr.rel (%p228) target = $region44
      $region43: #{resnet_bottleneck_block_nhwc.7} parent=5 // pred_region
        %s232 = ssub.s32 %s15, 1
        %s233 = smul.u32 32, %s20
        %p234 = scmp.lt.s32.totalorder %s233, 63
        %s235 = scalar_select %p234, %s233, 63
        %s236 = smul.addr %s235, 4
        %s237 = scalar_lea.vmem %s0, %s236
        %p238 = pneg %p41
        %p239 = pneg %p38
        %s240 = smul.u32 32, %s20
        %p241 = scmp.lt.s32.totalorder %s240, 63
        %s242 = scalar_select %p241, %s240, 63
        %s243 = smul.addr %s242, 4
        %s244 = scalar_lea.vmem %s1, %s243
        %p245 = pneg %p67
        %p246 = pneg %p64
        %p247 = pneg %p88
        %p248 = pneg %p85
        %p249 = pneg %p109
        %p250 = pneg %p106
        %p251 = pneg %p130
        %p252 = pneg %p127
        %p253 = pneg %p151
        %p254 = pneg %p148
        %p255 = pneg %p177
        %p256 = pneg %p174
        %s257 = sand.u32 %s164, 1
        %s258 = scalar_lea.sflag [#allocation3], %s257
        %s259 = sand.u32 %s164, 1
        %s260 = smul.addr %s259, 256
        %s261 = scalar_lea.vmem [#allocation2], %s260
        %s262 = smul.u32 32, %s20
        %p263 = scmp.lt.s32.totalorder %s262, 63
        %s264 = scalar_select %p263, %s262, 63
        %s265 = smul.addr %s264, 4
        %s266 = scalar_lea.vmem %s0, %s265
        %s267 = smul.u32 32, %s20
        %s268 = smul.u32 32, %s20
        %p269 = scmp.lt.s32.totalorder %s268, 63
        %s270 = scalar_select %p269, %s268, 63
        %s271 = smul.addr %s270, 4
        %s272 = scalar_lea.vmem %s1, %s271
        %s273 = smul.u32 32, %s20
        %s274 = smul.u32 32, %s20
        %v275 = vld [vmem:[%s266] sm:$0xf]
        %v276 = vld [vmem:[%s266 + $0x4] sm:$0xf]
        %v277 = vld [vmem:[%s266 + $0x8] sm:$0xf]
        %v278 = vld [vmem:[%s266 + $0xc] sm:$0xf]
        %v279 = vld [vmem:[%s266 + $0x10] sm:$0xf]
        %v280 = vld [vmem:[%s266 + $0x14] sm:$0xf]
        %v281 = vld [vmem:[%s266 + $0x18] sm:$0xf]
        %v282 = vld [vmem:[%s266 + $0x1c] sm:$0xf]
        %v283 = vld [vmem:[%s266 + $0x20] sm:$0xf]
        %v284 = vld [vmem:[%s266 + $0x24] sm:$0xf]
        %v285 = vld [vmem:[%s266 + $0x28] sm:$0xf]
        %v286 = vld [vmem:[%s266 + $0x2c] sm:$0xf]
        %v287 = vld [vmem:[%s266 + $0x30] sm:$0xf]
        %v288 = vld [vmem:[%s266 + $0x34] sm:$0xf]
        %v289 = vld [vmem:[%s266 + $0x38] sm:$0xf]
        %v290 = vld [vmem:[%s266 + $0x3c] sm:$0xf]
        %v291 = vld [vmem:[%s266 + $0x40] sm:$0xf]
        %v292 = vld [vmem:[%s266 + $0x44] sm:$0xf]
        %v293 = vld [vmem:[%s266 + $0x48] sm:$0xf]
        %v294 = vld [vmem:[%s266 + $0x4c] sm:$0xf]
        %v295 = vld [vmem:[%s266 + $0x50] sm:$0xf]
        %v296 = vld [vmem:[%s266 + $0x54] sm:$0xf]
        %v297 = vld [vmem:[%s266 + $0x58] sm:$0xf]
        %v298 = vld [vmem:[%s266 + $0x5c] sm:$0xf]
        %v299 = vld [vmem:[%s266 + $0x60] sm:$0xf]
        %v300 = vld [vmem:[%s266 + $0x64] sm:$0xf]
        %v301 = vld [vmem:[%s266 + $0x68] sm:$0xf]
        %v302 = vld [vmem:[%s266 + $0x6c] sm:$0xf]
        %v303 = vld [vmem:[%s266 + $0x70] sm:$0xf]
        %v304 = vld [vmem:[%s266 + $0x74] sm:$0xf]
        %v305 = vld [vmem:[%s266 + $0x78] sm:$0xf]
        %v306 = vld [vmem:[%s266 + $0x7c] sm:$0xf]
        %v307 = vunpack.c.l.bf16 %v275
        %v308 = vunpack.c.l.bf16 %v276
        %v309 = vunpack.c.l.bf16 %v277
        %v310 = vunpack.c.l.bf16 %v278
        %v311 = vunpack.c.l.bf16 %v279
        %v312 = vunpack.c.l.bf16 %v280
        %v313 = vunpack.c.l.bf16 %v281
        %v314 = vunpack.c.l.bf16 %v282
        %v315 = vunpack.c.l.bf16 %v283
        %v316 = vunpack.c.l.bf16 %v284
        %v317 = vunpack.c.l.bf16 %v285
        %v318 = vunpack.c.l.bf16 %v286
        %v319 = vunpack.c.l.bf16 %v287
        %v320 = vunpack.c.l.bf16 %v288
        %v321 = vunpack.c.l.bf16 %v289
        %v322 = vunpack.c.l.bf16 %v290
        %v323 = vunpack.c.l.bf16 %v291
        %v324 = vunpack.c.l.bf16 %v292
        %v325 = vunpack.c.l.bf16 %v293
        %v326 = vunpack.c.l.bf16 %v294
        %v327 = vunpack.c.l.bf16 %v295
        %v328 = vunpack.c.l.bf16 %v296
        %v329 = vunpack.c.l.bf16 %v297
        %v330 = vunpack.c.l.bf16 %v298
        %v331 = vunpack.c.l.bf16 %v299
        %v332 = vunpack.c.l.bf16 %v300
        %v333 = vunpack.c.l.bf16 %v301
        %v334 = vunpack.c.l.bf16 %v302
        %v335 = vunpack.c.l.bf16 %v303
        %v336 = vunpack.c.l.bf16 %v304
        %v337 = vunpack.c.l.bf16 %v305
        %v338 = vunpack.c.l.bf16 %v306
        %v339 = vld [vmem:[%s2] sm:$0x1]
        %v341 = vlaneseq
        %v342 = vshrl.u32 %v341, 7
        %v343 = vsub.s32 0, %v342
        %v344 = vrot.slane %v339, %v343
        %v346 = vmul.f32 %v307, %v344
        %v347 = vmul.f32 %v308, %v344
        %v348 = vmul.f32 %v309, %v344
        %v349 = vmul.f32 %v310, %v344
        %v350 = vmul.f32 %v311, %v344
        %v351 = vmul.f32 %v312, %v344
        %v352 = vmul.f32 %v313, %v344
        %v353 = vmul.f32 %v314, %v344
        %v354 = vmul.f32 %v315, %v344
        %v355 = vmul.f32 %v316, %v344
        %v356 = vmul.f32 %v317, %v344
        %v357 = vmul.f32 %v318, %v344
        %v358 = vmul.f32 %v319, %v344
        %v359 = vmul.f32 %v320, %v344
        %v360 = vmul.f32 %v321, %v344
        %v361 = vmul.f32 %v322, %v344
        %v362 = vmul.f32 %v323, %v344
        %v363 = vmul.f32 %v324, %v344
        %v364 = vmul.f32 %v325, %v344
        %v365 = vmul.f32 %v326, %v344
        %v366 = vmul.f32 %v327, %v344
        %v367 = vmul.f32 %v328, %v344
        %v368 = vmul.f32 %v329, %v344
        %v369 = vmul.f32 %v330, %v344
        %v370 = vmul.f32 %v331, %v344
        %v371 = vmul.f32 %v332, %v344
        %v372 = vmul.f32 %v333, %v344
        %v373 = vmul.f32 %v334, %v344
        %v374 = vmul.f32 %v335, %v344
        %v375 = vmul.f32 %v336, %v344
        %v376 = vmul.f32 %v337, %v344
        %v377 = vmul.f32 %v338, %v344
        %v378 = vld [vmem:[%s3] sm:$0x1]
        %v380 = vlaneseq
        %v381 = vshrl.u32 %v380, 7
        %v382 = vsub.s32 0, %v381
        %v383 = vrot.slane %v378, %v382
        %v385 = vadd.f32 %v346, %v383
        %v386 = vadd.f32 %v347, %v383
        %v387 = vadd.f32 %v348, %v383
        %v388 = vadd.f32 %v349, %v383
        %v389 = vadd.f32 %v350, %v383
        %v390 = vadd.f32 %v351, %v383
        %v391 = vadd.f32 %v352, %v383
        %v392 = vadd.f32 %v353, %v383
        %v393 = vadd.f32 %v354, %v383
        %v394 = vadd.f32 %v355, %v383
        %v395 = vadd.f32 %v356, %v383
        %v396 = vadd.f32 %v357, %v383
        %v397 = vadd.f32 %v358, %v383
        %v398 = vadd.f32 %v359, %v383
        %v399 = vadd.f32 %v360, %v383
        %v400 = vadd.f32 %v361, %v383
        %v401 = vadd.f32 %v362, %v383
        %v402 = vadd.f32 %v363, %v383
        %v403 = vadd.f32 %v364, %v383
        %v404 = vadd.f32 %v365, %v383
        %v405 = vadd.f32 %v366, %v383
        %v406 = vadd.f32 %v367, %v383
        %v407 = vadd.f32 %v368, %v383
        %v408 = vadd.f32 %v369, %v383
        %v409 = vadd.f32 %v370, %v383
        %v410 = vadd.f32 %v371, %v383
        %v411 = vadd.f32 %v372, %v383
        %v412 = vadd.f32 %v373, %v383
        %v413 = vadd.f32 %v374, %v383
        %v414 = vadd.f32 %v375, %v383
        %v415 = vadd.f32 %v376, %v383
        %v416 = vadd.f32 %v377, %v383
        %v417 = vld [vmem:[%s272] sm:$0xf]
        %v418 = vld [vmem:[%s272 + $0x4] sm:$0xf]
        %v419 = vld [vmem:[%s272 + $0x8] sm:$0xf]
        %v420 = vld [vmem:[%s272 + $0xc] sm:$0xf]
        %v421 = vld [vmem:[%s272 + $0x10] sm:$0xf]
        %v422 = vld [vmem:[%s272 + $0x14] sm:$0xf]
        %v423 = vld [vmem:[%s272 + $0x18] sm:$0xf]
        %v424 = vld [vmem:[%s272 + $0x1c] sm:$0xf]
        %v425 = vld [vmem:[%s272 + $0x20] sm:$0xf]
        %v426 = vld [vmem:[%s272 + $0x24] sm:$0xf]
        %v427 = vld [vmem:[%s272 + $0x28] sm:$0xf]
        %v428 = vld [vmem:[%s272 + $0x2c] sm:$0xf]
        %v429 = vld [vmem:[%s272 + $0x30] sm:$0xf]
        %v430 = vld [vmem:[%s272 + $0x34] sm:$0xf]
        %v431 = vld [vmem:[%s272 + $0x38] sm:$0xf]
        %v432 = vld [vmem:[%s272 + $0x3c] sm:$0xf]
        %v433 = vld [vmem:[%s272 + $0x40] sm:$0xf]
        %v434 = vld [vmem:[%s272 + $0x44] sm:$0xf]
        %v435 = vld [vmem:[%s272 + $0x48] sm:$0xf]
        %v436 = vld [vmem:[%s272 + $0x4c] sm:$0xf]
        %v437 = vld [vmem:[%s272 + $0x50] sm:$0xf]
        %v438 = vld [vmem:[%s272 + $0x54] sm:$0xf]
        %v439 = vld [vmem:[%s272 + $0x58] sm:$0xf]
        %v440 = vld [vmem:[%s272 + $0x5c] sm:$0xf]
        %v441 = vld [vmem:[%s272 + $0x60] sm:$0xf]
        %v442 = vld [vmem:[%s272 + $0x64] sm:$0xf]
        %v443 = vld [vmem:[%s272 + $0x68] sm:$0xf]
        %v444 = vld [vmem:[%s272 + $0x6c] sm:$0xf]
        %v445 = vld [vmem:[%s272 + $0x70] sm:$0xf]
        %v446 = vld [vmem:[%s272 + $0x74] sm:$0xf]
        %v447 = vld [vmem:[%s272 + $0x78] sm:$0xf]
        %v448 = vld [vmem:[%s272 + $0x7c] sm:$0xf]
        %v449 = vunpack.c.l.bf16 %v417
        %v450 = vunpack.c.l.bf16 %v418
        %v451 = vunpack.c.l.bf16 %v419
        %v452 = vunpack.c.l.bf16 %v420
        %v453 = vunpack.c.l.bf16 %v421
        %v454 = vunpack.c.l.bf16 %v422
        %v455 = vunpack.c.l.bf16 %v423
        %v456 = vunpack.c.l.bf16 %v424
        %v457 = vunpack.c.l.bf16 %v425
        %v458 = vunpack.c.l.bf16 %v426
        %v459 = vunpack.c.l.bf16 %v427
        %v460 = vunpack.c.l.bf16 %v428
        %v461 = vunpack.c.l.bf16 %v429
        %v462 = vunpack.c.l.bf16 %v430
        %v463 = vunpack.c.l.bf16 %v431
        %v464 = vunpack.c.l.bf16 %v432
        %v465 = vunpack.c.l.bf16 %v433
        %v466 = vunpack.c.l.bf16 %v434
        %v467 = vunpack.c.l.bf16 %v435
        %v468 = vunpack.c.l.bf16 %v436
        %v469 = vunpack.c.l.bf16 %v437
        %v470 = vunpack.c.l.bf16 %v438
        %v471 = vunpack.c.l.bf16 %v439
        %v472 = vunpack.c.l.bf16 %v440
        %v473 = vunpack.c.l.bf16 %v441
        %v474 = vunpack.c.l.bf16 %v442
        %v475 = vunpack.c.l.bf16 %v443
        %v476 = vunpack.c.l.bf16 %v444
        %v477 = vunpack.c.l.bf16 %v445
        %v478 = vunpack.c.l.bf16 %v446
        %v479 = vunpack.c.l.bf16 %v447
        %v480 = vunpack.c.l.bf16 %v448
        %v481 = vld [vmem:[%s4] sm:$0x1]
        %v483 = vlaneseq
        %v484 = vshrl.u32 %v483, 7
        %v485 = vsub.s32 0, %v484
        %v486 = vrot.slane %v481, %v485
        %v488 = vmul.f32 %v449, %v486
        %v489 = vmul.f32 %v450, %v486
        %v490 = vmul.f32 %v451, %v486
        %v491 = vmul.f32 %v452, %v486
        %v492 = vmul.f32 %v453, %v486
        %v493 = vmul.f32 %v454, %v486
        %v494 = vmul.f32 %v455, %v486
        %v495 = vmul.f32 %v456, %v486
        %v496 = vmul.f32 %v457, %v486
        %v497 = vmul.f32 %v458, %v486
        %v498 = vmul.f32 %v459, %v486
        %v499 = vmul.f32 %v460, %v486
        %v500 = vmul.f32 %v461, %v486
        %v501 = vmul.f32 %v462, %v486
        %v502 = vmul.f32 %v463, %v486
        %v503 = vmul.f32 %v464, %v486
        %v504 = vmul.f32 %v465, %v486
        %v505 = vmul.f32 %v466, %v486
        %v506 = vmul.f32 %v467, %v486
        %v507 = vmul.f32 %v468, %v486
        %v508 = vmul.f32 %v469, %v486
        %v509 = vmul.f32 %v470, %v486
        %v510 = vmul.f32 %v471, %v486
        %v511 = vmul.f32 %v472, %v486
        %v512 = vmul.f32 %v473, %v486
        %v513 = vmul.f32 %v474, %v486
        %v514 = vmul.f32 %v475, %v486
        %v515 = vmul.f32 %v476, %v486
        %v516 = vmul.f32 %v477, %v486
        %v517 = vmul.f32 %v478, %v486
        %v518 = vmul.f32 %v479, %v486
        %v519 = vmul.f32 %v480, %v486
        %v520 = vld [vmem:[%s5] sm:$0x1]
        %v522 = vlaneseq
        %v523 = vshrl.u32 %v522, 7
        %v524 = vsub.s32 0, %v523
        %v525 = vrot.slane %v520, %v524
        %v527 = vadd.f32 %v488, %v525
        %v528 = vadd.f32 %v489, %v525
        %v529 = vadd.f32 %v490, %v525
        %v530 = vadd.f32 %v491, %v525
        %v531 = vadd.f32 %v492, %v525
        %v532 = vadd.f32 %v493, %v525
        %v533 = vadd.f32 %v494, %v525
        %v534 = vadd.f32 %v495, %v525
        %v535 = vadd.f32 %v496, %v525
        %v536 = vadd.f32 %v497, %v525
        %v537 = vadd.f32 %v498, %v525
        %v538 = vadd.f32 %v499, %v525
        %v539 = vadd.f32 %v500, %v525
        %v540 = vadd.f32 %v501, %v525
        %v541 = vadd.f32 %v502, %v525
        %v542 = vadd.f32 %v503, %v525
        %v543 = vadd.f32 %v504, %v525
        %v544 = vadd.f32 %v505, %v525
        %v545 = vadd.f32 %v506, %v525
        %v546 = vadd.f32 %v507, %v525
        %v547 = vadd.f32 %v508, %v525
        %v548 = vadd.f32 %v509, %v525
        %v549 = vadd.f32 %v510, %v525
        %v550 = vadd.f32 %v511, %v525
        %v551 = vadd.f32 %v512, %v525
        %v552 = vadd.f32 %v513, %v525
        %v553 = vadd.f32 %v514, %v525
        %v554 = vadd.f32 %v515, %v525
        %v555 = vadd.f32 %v516, %v525
        %v556 = vadd.f32 %v517, %v525
        %v557 = vadd.f32 %v518, %v525
        %v558 = vadd.f32 %v519, %v525
        %v559 = vadd.f32 %v385, %v527
        %v560 = vadd.f32 %v386, %v528
        %v561 = vadd.f32 %v387, %v529
        %v562 = vadd.f32 %v388, %v530
        %v563 = vadd.f32 %v389, %v531
        %v564 = vadd.f32 %v390, %v532
        %v565 = vadd.f32 %v391, %v533
        %v566 = vadd.f32 %v392, %v534
        %v567 = vadd.f32 %v393, %v535
        %v568 = vadd.f32 %v394, %v536
        %v569 = vadd.f32 %v395, %v537
        %v570 = vadd.f32 %v396, %v538
        %v571 = vadd.f32 %v397, %v539
        %v572 = vadd.f32 %v398, %v540
        %v573 = vadd.f32 %v399, %v541
        %v574 = vadd.f32 %v400, %v542
        %v575 = vadd.f32 %v401, %v543
        %v576 = vadd.f32 %v402, %v544
        %v577 = vadd.f32 %v403, %v545
        %v578 = vadd.f32 %v404, %v546
        %v579 = vadd.f32 %v405, %v547
        %v580 = vadd.f32 %v406, %v548
        %v581 = vadd.f32 %v407, %v549
        %v582 = vadd.f32 %v408, %v550
        %v583 = vadd.f32 %v409, %v551
        %v584 = vadd.f32 %v410, %v552
        %v585 = vadd.f32 %v411, %v553
        %v586 = vadd.f32 %v412, %v554
        %v587 = vadd.f32 %v413, %v555
        %v588 = vadd.f32 %v414, %v556
        %v589 = vadd.f32 %v415, %v557
        %v590 = vadd.f32 %v416, %v558
        %v591 = vmax.f32 %v559, 0.0
        %v592 = vmax.f32 %v560, 0.0
        %v593 = vmax.f32 %v561, 0.0
        %v594 = vmax.f32 %v562, 0.0
        %v595 = vmax.f32 %v563, 0.0
        %v596 = vmax.f32 %v564, 0.0
        %v597 = vmax.f32 %v565, 0.0
        %v598 = vmax.f32 %v566, 0.0
        %v599 = vmax.f32 %v567, 0.0
        %v600 = vmax.f32 %v568, 0.0
        %v601 = vmax.f32 %v569, 0.0
        %v602 = vmax.f32 %v570, 0.0
        %v603 = vmax.f32 %v571, 0.0
        %v604 = vmax.f32 %v572, 0.0
        %v605 = vmax.f32 %v573, 0.0
        %v606 = vmax.f32 %v574, 0.0
        %v607 = vmax.f32 %v575, 0.0
        %v608 = vmax.f32 %v576, 0.0
        %v609 = vmax.f32 %v577, 0.0
        %v610 = vmax.f32 %v578, 0.0
        %v611 = vmax.f32 %v579, 0.0
        %v612 = vmax.f32 %v580, 0.0
        %v613 = vmax.f32 %v581, 0.0
        %v614 = vmax.f32 %v582, 0.0
        %v615 = vmax.f32 %v583, 0.0
        %v616 = vmax.f32 %v584, 0.0
        %v617 = vmax.f32 %v585, 0.0
        %v618 = vmax.f32 %v586, 0.0
        %v619 = vmax.f32 %v587, 0.0
        %v620 = vmax.f32 %v588, 0.0
        %v621 = vmax.f32 %v589, 0.0
        %v622 = vmax.f32 %v590, 0.0
        %vm623 = vcmask 261120
        %624 = vst.msk [vmem:[%s261] sm:$0xff] %vm623, %v591
        %625 = vst.msk [vmem:[%s261 + $0x8] sm:$0xff] %vm623, %v592
        %626 = vst.msk [vmem:[%s261 + $0x10] sm:$0xff] %vm623, %v593
        %627 = vst.msk [vmem:[%s261 + $0x18] sm:$0xff] %vm623, %v594
        %628 = vst.msk [vmem:[%s261 + $0x20] sm:$0xff] %vm623, %v595
        %629 = vst.msk [vmem:[%s261 + $0x28] sm:$0xff] %vm623, %v596
        %630 = vst.msk [vmem:[%s261 + $0x30] sm:$0xff] %vm623, %v597
        %631 = vst.msk [vmem:[%s261 + $0x38] sm:$0xff] %vm623, %v598
        %632 = vst.msk [vmem:[%s261 + $0x40] sm:$0xff] %vm623, %v599
        %633 = vst.msk [vmem:[%s261 + $0x48] sm:$0xff] %vm623, %v600
        %634 = vst.msk [vmem:[%s261 + $0x50] sm:$0xff] %vm623, %v601
        %635 = vst.msk [vmem:[%s261 + $0x58] sm:$0xff] %vm623, %v602
        %636 = vst.msk [vmem:[%s261 + $0x60] sm:$0xff] %vm623, %v603
        %637 = vst.msk [vmem:[%s261 + $0x68] sm:$0xff] %vm623, %v604
        %638 = vst.msk [vmem:[%s261 + $0x70] sm:$0xff] %vm623, %v605
        %639 = vst.msk [vmem:[%s261 + $0x78] sm:$0xff] %vm623, %v606
        %640 = vst.msk [vmem:[%s261 + $0x80] sm:$0xff] %vm623, %v607
        %641 = vst.msk [vmem:[%s261 + $0x88] sm:$0xff] %vm623, %v608
        %642 = vst.msk [vmem:[%s261 + $0x90] sm:$0xff] %vm623, %v609
        %643 = vst.msk [vmem:[%s261 + $0x98] sm:$0xff] %vm623, %v610
        %644 = vst.msk [vmem:[%s261 + $0xa0] sm:$0xff] %vm623, %v611
        %645 = vst.msk [vmem:[%s261 + $0xa8] sm:$0xff] %vm623, %v612
        %646 = vst.msk [vmem:[%s261 + $0xb0] sm:$0xff] %vm623, %v613
        %647 = vst.msk [vmem:[%s261 + $0xb8] sm:$0xff] %vm623, %v614
        %648 = vst.msk [vmem:[%s261 + $0xc0] sm:$0xff] %vm623, %v615
        %649 = vst.msk [vmem:[%s261 + $0xc8] sm:$0xff] %vm623, %v616
        %650 = vst.msk [vmem:[%s261 + $0xd0] sm:$0xff] %vm623, %v617
        %651 = vst.msk [vmem:[%s261 + $0xd8] sm:$0xff] %vm623, %v618
        %652 = vst.msk [vmem:[%s261 + $0xe0] sm:$0xff] %vm623, %v619
        %653 = vst.msk [vmem:[%s261 + $0xe8] sm:$0xff] %vm623, %v620
        %654 = vst.msk [vmem:[%s261 + $0xf0] sm:$0xff] %vm623, %v621
        %655 = vst.msk [vmem:[%s261 + $0xf8] sm:$0xff] %vm623, %v622
        %s656 = sand.u32 %s164, 1
        %s657 = scalar_lea.sflag [#allocation3], %s656
        %s658 = sand.u32 %s164, 1
        %s659 = smul.addr %s658, 256
        %s660 = scalar_lea.vmem [#allocation2], %s659
        // Predicated region
        $region45: #{resnet_bottleneck_block_nhwc.7} parent=43 // pred_check
          %p661 = pneg %p174
        $region46: #{resnet_bottleneck_block_nhwc.7} parent=43 // pred_check_branch
          %663 = sbr.rel (%p661) target = $region48
        $region47: #{resnet_bottleneck_block_nhwc.7} parent=43 // pred_region
          %s664 = smul.u32 32, %s20
          %s666 = ssub.s32 4096, 4096
          %667 = vsyncadd %s657, %s666
          %s668 = smul.addr %s664, 128
          %s669 = scalar_lea.hbm %s6, %s668
          %s670 = sshll.u32 %s660, 4
          %s671 = int_to_ptr.vmem [resolvable:$true] %s670
          %676 = dma.vmem_to_hbm [thread:$0]  %s671, 4096, %s669, %s657, 128, 128, 8
        $region48: #{resnet_bottleneck_block_nhwc.7} parent=43 // pred_fallthru
          _
      $region44: #{resnet_bottleneck_block_nhwc.7} parent=5 // pred_fallthru
        _
      %p677 = scmp.le.s32.totalorder 2, %s15
      // Predicated region
      $region49: #{resnet_bottleneck_block_nhwc.7} parent=5 // pred_check
        %p678 = pneg %p677
      $region50: #{resnet_bottleneck_block_nhwc.7} parent=5 // pred_check_branch
        %680 = sbr.rel (%p678) target = $region52
      $region51: #{resnet_bottleneck_block_nhwc.7} parent=5 // pred_region
        %s681 = ssub.s32 %s15, 2
        // Predicated region
        $region53: #{resnet_bottleneck_block_nhwc.7} parent=51 // pred_check
          %p682 = pneg %p180
        $region54: #{resnet_bottleneck_block_nhwc.7} parent=51 // pred_check_branch
          %684 = sbr.rel (%p682) target = $region56
        $region55: #{resnet_bottleneck_block_nhwc.7} parent=51 // pred_region
          %s685 = sand.u32 %s165, 1
          %s686 = scalar_lea.sflag [#allocation3], %s685
          %s687 = sand.u32 %s165, 1
          %s688 = smul.addr %s687, 256
          %s689 = scalar_lea.vmem [#allocation2], %s688
          %690 = dma.done %s686, 4096
        $region56: #{resnet_bottleneck_block_nhwc.7} parent=51 // pred_fallthru
          _
      $region52: #{resnet_bottleneck_block_nhwc.7} parent=5 // pred_fallthru
        _
    $region6: #{resnet_bottleneck_block_nhwc.7} parent=1 // loop_footer
      %s19 = sadd.s32 1, %s15
    $region7: #{resnet_bottleneck_block_nhwc.7} parent=1 // loop_footer_branch
      %14 = sbr.rel target = $region3
    $region8: #{resnet_bottleneck_block_nhwc.7} parent=1 // loop_exit
      _
    %691 = vsyncpa [#allocation3], 1
    %s692 = scalar_lea.sflag [#allocation3], 1
    %693 = vsyncpa %s692, 1

// kernel: resnet_bottleneck_block_nhwc.6
$region0: #{resnet_bottleneck_block_nhwc.6}
  #allocation0 [shape = 'u32[]', space=smem, size = 0x4, offset = 0x4, fixed_abs, tag = 'smem constant byte address 0x4 - core index']
  #allocation1 [shape = 'u32[144,128]{1,0:T(1,128)}', space=vmem, size = 0x12000, scoped, tag = 'internal scratch']
  %s0 = inlined_call_operand.vmem [shape: bf16[512,8], index: 0, kind: input, shape index: {}]
  %s1 = inlined_call_operand.vmem [shape: f32[1,8], index: 1, kind: input, shape index: {}]
  %s2 = inlined_call_operand.vmem [shape: f32[1,8], index: 2, kind: input, shape index: {}]
  %s3 = inlined_call_operand.vmem [shape: bf16[8,32], index: 3, kind: input, shape index: {}]
  %s4 = inlined_call_operand.vmem [shape: bf16[512,32], index: 4, kind: output, shape index: {0}]
  %s5 = inlined_call_operand.vmem [shape: f32[2,1,32], index: 5, kind: output, shape index: {1}]
  %s6 = inlined_call_operand.vmem [shape: f32[2,1,32], index: 6, kind: output, shape index: {2}]
  %7 = xla_tuple %s4, %s5, %s6
  %s8 = sld [smem:[#allocation0]]
  $region65: #{resnet_bottleneck_block_nhwc.6} parent=0
    _
  %s10 = ssub.s32 1, %s8
  %s11 = scalar_select 0, %s10, %s8
  loop: start=0, step=1, limit=4
  $region2: #{resnet_bottleneck_block_nhwc.6} parent=0 // loop_pre_header
    _
  $region3: #{resnet_bottleneck_block_nhwc.6} parent=0 // loop_header
    %s13 = sphi 0, %s17
    %p14 = scmp.ge.s32.totalorder %s13, 4
    %s23 = sphi 0, %s25
    %s26 = sphi 0, %s23
    %s27 = sphi 0, %s26
    %s43 = sphi 0, %s27
    %s47 = sphi 0, %s47
    %s49 = sphi 0, %s47
    %s50 = sphi 0, %s49
    %s64 = sphi 0, %s50
    %s68 = sphi 0, %s68
    %s70 = sphi 0, %s68
    %s71 = sphi 0, %s70
    %s85 = sphi 0, %s71
    %s89 = sphi 0, %s89
    %s91 = sphi 0, %s89
    %s92 = sphi 0, %s91
    %s106 = sphi 0, %s92
    %s112 = sphi 0, %s114
    %s115 = sphi 0, %s112
    %s116 = sphi 0, %s115
    %s132 = sphi 0, %s116
    %s138 = sphi 0, %s140
    %s141 = sphi 0, %s138
    %s142 = sphi 0, %s141
    %s158 = sphi 0, %s142
    %s164 = sphi 0, %s166
    %s167 = sphi 0, %s164
    %s168 = sphi 0, %s167
    %s184 = sphi 0, %s168
  $region4: #{resnet_bottleneck_block_nhwc.6} parent=0 // loop_header_branch
    %16 = sbr.rel (%p14) target = $region8
  $region5: #{resnet_bottleneck_block_nhwc.6} parent=0 // loop_body
    %s18 = ssub.s32 %s13, 1
    %s19 = ssub.s32 %s13, 2
    %s20 = sadd.s32 %s13, 1
    %s21 = ssub.s32 %s13, %s20
    %p22 = scmp.eq.s32.totalorder %s21, 0
    %s24 = sadd.s32 %s23, 1
    %s25 = scalar_select %p22, %s23, %s24
    %p28 = pneg %p22
    %p29 = scmp.eq.s32.totalorder %s13, 1
    %p30 = por %p28, %p29
    %p31 = scmp.ne.s32.totalorder %s23, %s26
    %p32 = scmp.eq.s32.totalorder %s13, 0
    %p33 = por %p31, %p32
    %p34 = scmp.ne.s32.totalorder %s23, %s26
    %p35 = scmp.eq.s32.totalorder %s18, 1
    %p36 = por %p34, %p35
    %p37 = scmp.ne.s32.totalorder %s26, %s27
    %p38 = scmp.eq.s32.totalorder %s18, 0
    %p39 = por %p37, %p38
    %p40 = scmp.ne.s32.totalorder %s26, %s27
    %p41 = scmp.eq.s32.totalorder %s19, 1
    %p42 = por %p40, %p41
    %p44 = scmp.ne.s32.totalorder %s27, %s43
    %p45 = scmp.eq.s32.totalorder %s19, 0
    %p46 = por %p44, %p45
    %s48 = sadd.s32 %s47, 1
    %p51 = scmp.eq.s32.totalorder %s13, 1
    %p52 = scmp.ne.s32.totalorder %s47, %s49
    %p53 = scmp.eq.s32.totalorder %s13, 0
    %p54 = por %p52, %p53
    %p55 = scmp.ne.s32.totalorder %s47, %s49
    %p56 = scmp.eq.s32.totalorder %s18, 1
    %p57 = por %p55, %p56
    %p58 = scmp.ne.s32.totalorder %s49, %s50
    %p59 = scmp.eq.s32.totalorder %s18, 0
    %p60 = por %p58, %p59
    %p61 = scmp.ne.s32.totalorder %s49, %s50
    %p62 = scmp.eq.s32.totalorder %s19, 1
    %p63 = por %p61, %p62
    %p65 = scmp.ne.s32.totalorder %s50, %s64
    %p66 = scmp.eq.s32.totalorder %s19, 0
    %p67 = por %p65, %p66
    %s69 = sadd.s32 %s68, 1
    %p72 = scmp.eq.s32.totalorder %s13, 1
    %p73 = scmp.ne.s32.totalorder %s68, %s70
    %p74 = scmp.eq.s32.totalorder %s13, 0
    %p75 = por %p73, %p74
    %p76 = scmp.ne.s32.totalorder %s68, %s70
    %p77 = scmp.eq.s32.totalorder %s18, 1
    %p78 = por %p76, %p77
    %p79 = scmp.ne.s32.totalorder %s70, %s71
    %p80 = scmp.eq.s32.totalorder %s18, 0
    %p81 = por %p79, %p80
    %p82 = scmp.ne.s32.totalorder %s70, %s71
    %p83 = scmp.eq.s32.totalorder %s19, 1
    %p84 = por %p82, %p83
    %p86 = scmp.ne.s32.totalorder %s71, %s85
    %p87 = scmp.eq.s32.totalorder %s19, 0
    %p88 = por %p86, %p87
    %s90 = sadd.s32 %s89, 1
    %p93 = scmp.eq.s32.totalorder %s13, 1
    %p94 = scmp.ne.s32.totalorder %s89, %s91
    %p95 = scmp.eq.s32.totalorder %s13, 0
    %p96 = por %p94, %p95
    %p97 = scmp.ne.s32.totalorder %s89, %s91
    %p98 = scmp.eq.s32.totalorder %s18, 1
    %p99 = por %p97, %p98
    %p100 = scmp.ne.s32.totalorder %s91, %s92
    %p101 = scmp.eq.s32.totalorder %s18, 0
    %p102 = por %p100, %p101
    %p103 = scmp.ne.s32.totalorder %s91, %s92
    %p104 = scmp.eq.s32.totalorder %s19, 1
    %p105 = por %p103, %p104
    %p107 = scmp.ne.s32.totalorder %s92, %s106
    %p108 = scmp.eq.s32.totalorder %s19, 0
    %p109 = por %p107, %p108
    %s110 = ssub.s32 %s13, %s20
    %p111 = scmp.eq.s32.totalorder %s110, 0
    %s113 = sadd.s32 %s112, 1
    %s114 = scalar_select %p111, %s112, %s113
    %p117 = pneg %p111
    %p118 = scmp.eq.s32.totalorder %s13, 1
    %p119 = por %p117, %p118
    %p120 = scmp.ne.s32.totalorder %s112, %s115
    %p121 = scmp.eq.s32.totalorder %s13, 0
    %p122 = por %p120, %p121
    %p123 = scmp.ne.s32.totalorder %s112, %s115
    %p124 = scmp.eq.s32.totalorder %s18, 1
    %p125 = por %p123, %p124
    %p126 = scmp.ne.s32.totalorder %s115, %s116
    %p127 = scmp.eq.s32.totalorder %s18, 0
    %p128 = por %p126, %p127
    %p129 = scmp.ne.s32.totalorder %s115, %s116
    %p130 = scmp.eq.s32.totalorder %s19, 1
    %p131 = por %p129, %p130
    %p133 = scmp.ne.s32.totalorder %s116, %s132
    %p134 = scmp.eq.s32.totalorder %s19, 0
    %p135 = por %p133, %p134
    %s136 = ssub.s32 %s13, %s20
    %p137 = scmp.eq.s32.totalorder %s136, 0
    %s139 = sadd.s32 %s138, 1
    %s140 = scalar_select %p137, %s138, %s139
    %p143 = pneg %p137
    %p144 = scmp.eq.s32.totalorder %s13, 1
    %p145 = por %p143, %p144
    %p146 = scmp.ne.s32.totalorder %s138, %s141
    %p147 = scmp.eq.s32.totalorder %s13, 0
    %p148 = por %p146, %p147
    %p149 = scmp.ne.s32.totalorder %s138, %s141
    %p150 = scmp.eq.s32.totalorder %s18, 1
    %p151 = por %p149, %p150
    %p152 = scmp.ne.s32.totalorder %s141, %s142
    %p153 = scmp.eq.s32.totalorder %s18, 0
    %p154 = por %p152, %p153
    %p155 = scmp.ne.s32.totalorder %s141, %s142
    %p156 = scmp.eq.s32.totalorder %s19, 1
    %p157 = por %p155, %p156
    %p159 = scmp.ne.s32.totalorder %s142, %s158
    %p160 = scmp.eq.s32.totalorder %s19, 0
    %p161 = por %p159, %p160
    %s162 = ssub.s32 %s13, %s20
    %p163 = scmp.eq.s32.totalorder %s162, 0
    %s165 = sadd.s32 %s164, 1
    %s166 = scalar_select %p163, %s164, %s165
    %p169 = pneg %p163
    %p170 = scmp.eq.s32.totalorder %s13, 1
    %p171 = por %p169, %p170
    %p172 = scmp.ne.s32.totalorder %s164, %s167
    %p173 = scmp.eq.s32.totalorder %s13, 0
    %p174 = por %p172, %p173
    %p175 = scmp.ne.s32.totalorder %s164, %s167
    %p176 = scmp.eq.s32.totalorder %s18, 1
    %p177 = por %p175, %p176
    %p178 = scmp.ne.s32.totalorder %s167, %s168
    %p179 = scmp.eq.s32.totalorder %s18, 0
    %p180 = por %p178, %p179
    %p181 = scmp.ne.s32.totalorder %s167, %s168
    %p182 = scmp.eq.s32.totalorder %s19, 1
    %p183 = por %p181, %p182
    %p185 = scmp.ne.s32.totalorder %s168, %s184
    %p186 = scmp.eq.s32.totalorder %s19, 0
    %p187 = por %p185, %p186
    %p188 = scmp.le.s32.totalorder 1, %s13
    %p189 = scmp.lt.s32.totalorder %s13, 3
    %p190 = pnand %p188, %p189
    %p191 = pneg %p190
    // Predicated region
    $region9: #{resnet_bottleneck_block_nhwc.6} parent=5 // pred_check
      _
    $region10: #{resnet_bottleneck_block_nhwc.6} parent=5 // pred_check_branch
      %193 = sbr.rel (%p190) target = $region12
    $region11: #{resnet_bottleneck_block_nhwc.6} parent=5 // pred_region
      %s194 = ssub.s32 %s13, 1
      // Predicated region
      $region13: #{resnet_bottleneck_block_nhwc.6} parent=11 // pred_check
        %p195 = pneg %p60
      $region14: #{resnet_bottleneck_block_nhwc.6} parent=11 // pred_check_branch
        %197 = sbr.rel (%p195) target = $region16
      $region15: #{resnet_bottleneck_block_nhwc.6} parent=11 // pred_region
        _
      $region16: #{resnet_bottleneck_block_nhwc.6} parent=11 // pred_fallthru
        _
      // Predicated region
      $region17: #{resnet_bottleneck_block_nhwc.6} parent=11 // pred_check
        %p198 = pneg %p81
      $region18: #{resnet_bottleneck_block_nhwc.6} parent=11 // pred_check_branch
        %200 = sbr.rel (%p198) target = $region20
      $region19: #{resnet_bottleneck_block_nhwc.6} parent=11 // pred_region
        _
      $region20: #{resnet_bottleneck_block_nhwc.6} parent=11 // pred_fallthru
        _
      // Predicated region
      $region21: #{resnet_bottleneck_block_nhwc.6} parent=11 // pred_check
        %p201 = pneg %p102
      $region22: #{resnet_bottleneck_block_nhwc.6} parent=11 // pred_check_branch
        %203 = sbr.rel (%p201) target = $region24
      $region23: #{resnet_bottleneck_block_nhwc.6} parent=11 // pred_region
        _
      $region24: #{resnet_bottleneck_block_nhwc.6} parent=11 // pred_fallthru
        _
    $region12: #{resnet_bottleneck_block_nhwc.6} parent=5 // pred_fallthru
      _
    %p204 = scmp.lt.s32.totalorder %s13, 2
    // Predicated region
    $region25: #{resnet_bottleneck_block_nhwc.6} parent=5 // pred_check
      %p205 = pneg %p204
    $region26: #{resnet_bottleneck_block_nhwc.6} parent=5 // pred_check_branch
      %207 = sbr.rel (%p205) target = $region28
    $region27: #{resnet_bottleneck_block_nhwc.6} parent=5 // pred_region
      // Predicated region
      $region29: #{resnet_bottleneck_block_nhwc.6} parent=27 // pred_check
        %p208 = pneg %p33
      $region30: #{resnet_bottleneck_block_nhwc.6} parent=27 // pred_check_branch
        %210 = sbr.rel (%p208) target = $region32
      $region31: #{resnet_bottleneck_block_nhwc.6} parent=27 // pred_region
        %s211 = smul.u32 32, %s13
        %p212 = scmp.lt.s32.totalorder %s211, 63
        %s213 = scalar_select %p212, %s211, 63
        %s214 = smul.addr %s213, 4
        %s215 = scalar_lea.vmem %s0, %s214
        %s216 = smul.u32 32, %s13
      $region32: #{resnet_bottleneck_block_nhwc.6} parent=27 // pred_fallthru
        _
    $region28: #{resnet_bottleneck_block_nhwc.6} parent=5 // pred_fallthru
      _
    %p217 = scmp.le.s32.totalorder 1, %s13
    %p218 = scmp.lt.s32.totalorder %s13, 3
    %p219 = pnand %p217, %p218
    %p220 = pneg %p219
    // Predicated region
    $region33: #{resnet_bottleneck_block_nhwc.6} parent=5 // pred_check
      _
    $region34: #{resnet_bottleneck_block_nhwc.6} parent=5 // pred_check_branch
      %222 = sbr.rel (%p219) target = $region36
    $region35: #{resnet_bottleneck_block_nhwc.6} parent=5 // pred_region
      %s223 = ssub.s32 %s13, 1
      %s224 = smul.u32 32, %s18
      %p225 = scmp.lt.s32.totalorder %s224, 63
      %s226 = scalar_select %p225, %s224, 63
      %s227 = smul.addr %s226, 4
      %s228 = scalar_lea.vmem %s0, %s227
      %p229 = pneg %p39
      %p230 = pneg %p36
      %p231 = pneg %p60
      %p232 = pneg %p57
      %p233 = pneg %p81
      %p234 = pneg %p78
      %p235 = pneg %p102
      %p236 = pneg %p99
      %p237 = pneg %p128
      %p238 = pneg %p125
      %s239 = smul.u32 32, %s18
      %p240 = scmp.lt.s32.totalorder %s239, 63
      %s241 = scalar_select %p240, %s239, 63
      %s242 = smul.addr %s241, 4
      %s243 = scalar_lea.vmem %s4, %s242
      %p244 = pneg %p154
      %p245 = pneg %p151
      %p246 = scmp.lt.s32.totalorder %s18, 1
      %s247 = scalar_select %p246, %s18, 1
      %s248 = scalar_lea.vmem %s5, %s247
      %p249 = pneg %p180
      %p250 = pneg %p177
      %p251 = scmp.lt.s32.totalorder %s18, 1
      %s252 = scalar_select %p251, %s18, 1
      %s253 = scalar_lea.vmem %s6, %s252
      %s254 = smul.u32 32, %s18
      %p255 = scmp.lt.s32.totalorder %s254, 63
      %s256 = scalar_select %p255, %s254, 63
      %s257 = smul.addr %s256, 4
      %s258 = scalar_lea.vmem %s0, %s257
      %s259 = smul.u32 32, %s18
      %s260 = smul.u32 32, %s18
      %p261 = scmp.lt.s32.totalorder %s260, 63
      %s262 = scalar_select %p261, %s260, 63
      %s263 = smul.addr %s262, 4
      %s264 = scalar_lea.vmem %s4, %s263
      %s265 = smul.u32 32, %s18
      %p266 = scmp.lt.s32.totalorder %s18, 1
      %s267 = scalar_select %p266, %s18, 1
      %s268 = scalar_lea.vmem %s5, %s267
      %p269 = scmp.lt.s32.totalorder %s18, 1
      %s270 = scalar_select %p269, %s18, 1
      %s271 = scalar_lea.vmem %s6, %s270
      %v273 = vld [vmem:[%s258] sm:$0xf]
      %v274 = vld [vmem:[%s258 + $0x4] sm:$0xf]
      %v275 = vld [vmem:[%s258 + $0x8] sm:$0xf]
      %v276 = vld [vmem:[%s258 + $0xc] sm:$0xf]
      %v277 = vld [vmem:[%s258 + $0x10] sm:$0xf]
      %v278 = vld [vmem:[%s258 + $0x14] sm:$0xf]
      %v279 = vld [vmem:[%s258 + $0x18] sm:$0xf]
      %v280 = vld [vmem:[%s258 + $0x1c] sm:$0xf]
      %v281 = vld [vmem:[%s258 + $0x20] sm:$0xf]
      %v282 = vld [vmem:[%s258 + $0x24] sm:$0xf]
      %v283 = vld [vmem:[%s258 + $0x28] sm:$0xf]
      %v284 = vld [vmem:[%s258 + $0x2c] sm:$0xf]
      %v285 = vld [vmem:[%s258 + $0x30] sm:$0xf]
      %v286 = vld [vmem:[%s258 + $0x34] sm:$0xf]
      %v287 = vld [vmem:[%s258 + $0x38] sm:$0xf]
      %v288 = vld [vmem:[%s258 + $0x3c] sm:$0xf]
      %v289 = vld [vmem:[%s258 + $0x40] sm:$0xf]
      %v290 = vld [vmem:[%s258 + $0x44] sm:$0xf]
      %v291 = vld [vmem:[%s258 + $0x48] sm:$0xf]
      %v292 = vld [vmem:[%s258 + $0x4c] sm:$0xf]
      %v293 = vld [vmem:[%s258 + $0x50] sm:$0xf]
      %v294 = vld [vmem:[%s258 + $0x54] sm:$0xf]
      %v295 = vld [vmem:[%s258 + $0x58] sm:$0xf]
      %v296 = vld [vmem:[%s258 + $0x5c] sm:$0xf]
      %v297 = vld [vmem:[%s258 + $0x60] sm:$0xf]
      %v298 = vld [vmem:[%s258 + $0x64] sm:$0xf]
      %v299 = vld [vmem:[%s258 + $0x68] sm:$0xf]
      %v300 = vld [vmem:[%s258 + $0x6c] sm:$0xf]
      %v301 = vld [vmem:[%s258 + $0x70] sm:$0xf]
      %v302 = vld [vmem:[%s258 + $0x74] sm:$0xf]
      %v303 = vld [vmem:[%s258 + $0x78] sm:$0xf]
      %v304 = vld [vmem:[%s258 + $0x7c] sm:$0xf]
      %v305 = vunpack.c.l.bf16 %v273
      %v306 = vunpack.c.l.bf16 %v274
      %v307 = vunpack.c.l.bf16 %v275
      %v308 = vunpack.c.l.bf16 %v276
      %v309 = vunpack.c.l.bf16 %v277
      %v310 = vunpack.c.l.bf16 %v278
      %v311 = vunpack.c.l.bf16 %v279
      %v312 = vunpack.c.l.bf16 %v280
      %v313 = vunpack.c.l.bf16 %v281
      %v314 = vunpack.c.l.bf16 %v282
      %v315 = vunpack.c.l.bf16 %v283
      %v316 = vunpack.c.l.bf16 %v284
      %v317 = vunpack.c.l.bf16 %v285
      %v318 = vunpack.c.l.bf16 %v286
      %v319 = vunpack.c.l.bf16 %v287
      %v320 = vunpack.c.l.bf16 %v288
      %v321 = vunpack.c.l.bf16 %v289
      %v322 = vunpack.c.l.bf16 %v290
      %v323 = vunpack.c.l.bf16 %v291
      %v324 = vunpack.c.l.bf16 %v292
      %v325 = vunpack.c.l.bf16 %v293
      %v326 = vunpack.c.l.bf16 %v294
      %v327 = vunpack.c.l.bf16 %v295
      %v328 = vunpack.c.l.bf16 %v296
      %v329 = vunpack.c.l.bf16 %v297
      %v330 = vunpack.c.l.bf16 %v298
      %v331 = vunpack.c.l.bf16 %v299
      %v332 = vunpack.c.l.bf16 %v300
      %v333 = vunpack.c.l.bf16 %v301
      %v334 = vunpack.c.l.bf16 %v302
      %v335 = vunpack.c.l.bf16 %v303
      %v336 = vunpack.c.l.bf16 %v304
      %v337 = vld [vmem:[%s1] sm:$0x1]
      %v339 = vlaneseq
      %v340 = vshrl.u32 %v339, 7
      %v341 = vsub.s32 0, %v340
      %v342 = vrot.slane %v337, %v341
      %v344 = vmul.f32 %v305, %v342
      %v345 = vmul.f32 %v306, %v342
      %v346 = vmul.f32 %v307, %v342
      %v347 = vmul.f32 %v308, %v342
      %v348 = vmul.f32 %v309, %v342
      %v349 = vmul.f32 %v310, %v342
      %v350 = vmul.f32 %v311, %v342
      %v351 = vmul.f32 %v312, %v342
      %v352 = vmul.f32 %v313, %v342
      %v353 = vmul.f32 %v314, %v342
      %v354 = vmul.f32 %v315, %v342
      %v355 = vmul.f32 %v316, %v342
      %v356 = vmul.f32 %v317, %v342
      %v357 = vmul.f32 %v318, %v342
      %v358 = vmul.f32 %v319, %v342
      %v359 = vmul.f32 %v320, %v342
      %v360 = vmul.f32 %v321, %v342
      %v361 = vmul.f32 %v322, %v342
      %v362 = vmul.f32 %v323, %v342
      %v363 = vmul.f32 %v324, %v342
      %v364 = vmul.f32 %v325, %v342
      %v365 = vmul.f32 %v326, %v342
      %v366 = vmul.f32 %v327, %v342
      %v367 = vmul.f32 %v328, %v342
      %v368 = vmul.f32 %v329, %v342
      %v369 = vmul.f32 %v330, %v342
      %v370 = vmul.f32 %v331, %v342
      %v371 = vmul.f32 %v332, %v342
      %v372 = vmul.f32 %v333, %v342
      %v373 = vmul.f32 %v334, %v342
      %v374 = vmul.f32 %v335, %v342
      %v375 = vmul.f32 %v336, %v342
      %v376 = vld [vmem:[%s2] sm:$0x1]
      %v378 = vlaneseq
      %v379 = vshrl.u32 %v378, 7
      %v380 = vsub.s32 0, %v379
      %v381 = vrot.slane %v376, %v380
      %v383 = vadd.f32 %v344, %v381
      %v384 = vadd.f32 %v345, %v381
      %v385 = vadd.f32 %v346, %v381
      %v386 = vadd.f32 %v347, %v381
      %v387 = vadd.f32 %v348, %v381
      %v388 = vadd.f32 %v349, %v381
      %v389 = vadd.f32 %v350, %v381
      %v390 = vadd.f32 %v351, %v381
      %v391 = vadd.f32 %v352, %v381
      %v392 = vadd.f32 %v353, %v381
      %v393 = vadd.f32 %v354, %v381
      %v394 = vadd.f32 %v355, %v381
      %v395 = vadd.f32 %v356, %v381
      %v396 = vadd.f32 %v357, %v381
      %v397 = vadd.f32 %v358, %v381
      %v398 = vadd.f32 %v359, %v381
      %v399 = vadd.f32 %v360, %v381
      %v400 = vadd.f32 %v361, %v381
      %v401 = vadd.f32 %v362, %v381
      %v402 = vadd.f32 %v363, %v381
      %v403 = vadd.f32 %v364, %v381
      %v404 = vadd.f32 %v365, %v381
      %v405 = vadd.f32 %v366, %v381
      %v406 = vadd.f32 %v367, %v381
      %v407 = vadd.f32 %v368, %v381
      %v408 = vadd.f32 %v369, %v381
      %v409 = vadd.f32 %v370, %v381
      %v410 = vadd.f32 %v371, %v381
      %v411 = vadd.f32 %v372, %v381
      %v412 = vadd.f32 %v373, %v381
      %v413 = vadd.f32 %v374, %v381
      %v414 = vadd.f32 %v375, %v381
      %v415 = vmax.f32 %v383, 0.0
      %v416 = vmax.f32 %v384, 0.0
      %v417 = vmax.f32 %v385, 0.0
      %v418 = vmax.f32 %v386, 0.0
      %v419 = vmax.f32 %v387, 0.0
      %v420 = vmax.f32 %v388, 0.0
      %v421 = vmax.f32 %v389, 0.0
      %v422 = vmax.f32 %v390, 0.0
      %v423 = vmax.f32 %v391, 0.0
      %v424 = vmax.f32 %v392, 0.0
      %v425 = vmax.f32 %v393, 0.0
      %v426 = vmax.f32 %v394, 0.0
      %v427 = vmax.f32 %v395, 0.0
      %v428 = vmax.f32 %v396, 0.0
      %v429 = vmax.f32 %v397, 0.0
      %v430 = vmax.f32 %v398, 0.0
      %v431 = vmax.f32 %v399, 0.0
      %v432 = vmax.f32 %v400, 0.0
      %v433 = vmax.f32 %v401, 0.0
      %v434 = vmax.f32 %v402, 0.0
      %v435 = vmax.f32 %v403, 0.0
      %v436 = vmax.f32 %v404, 0.0
      %v437 = vmax.f32 %v405, 0.0
      %v438 = vmax.f32 %v406, 0.0
      %v439 = vmax.f32 %v407, 0.0
      %v440 = vmax.f32 %v408, 0.0
      %v441 = vmax.f32 %v409, 0.0
      %v442 = vmax.f32 %v410, 0.0
      %v443 = vmax.f32 %v411, 0.0
      %v444 = vmax.f32 %v412, 0.0
      %v445 = vmax.f32 %v413, 0.0
      %v446 = vmax.f32 %v414, 0.0
      %v447 = vpack.c.bf16 %v416, %v415
      %v448 = vpack.c.bf16 %v418, %v417
      %v449 = vpack.c.bf16 %v420, %v419
      %v450 = vpack.c.bf16 %v422, %v421
      %v451 = vpack.c.bf16 %v424, %v423
      %v452 = vpack.c.bf16 %v426, %v425
      %v453 = vpack.c.bf16 %v428, %v427
      %v454 = vpack.c.bf16 %v430, %v429
      %v455 = vpack.c.bf16 %v432, %v431
      %v456 = vpack.c.bf16 %v434, %v433
      %v457 = vpack.c.bf16 %v436, %v435
      %v458 = vpack.c.bf16 %v438, %v437
      %v459 = vpack.c.bf16 %v440, %v439
      %v460 = vpack.c.bf16 %v442, %v441
      %v461 = vpack.c.bf16 %v444, %v443
      %v462 = vpack.c.bf16 %v446, %v445
      %v463 = vld [vmem:[%s3] sm:$0xf]
      %vm464 = vcmask 64512
      %v466 = vsel %vm464, %v447, 0
      %v469 = vsel %vm464, %v448, 0
      %v472 = vsel %vm464, %v449, 0
      %v475 = vsel %vm464, %v450, 0
      %v478 = vsel %vm464, %v451, 0
      %v481 = vsel %vm464, %v452, 0
      %v484 = vsel %vm464, %v453, 0
      %v487 = vsel %vm464, %v454, 0
      %v490 = vsel %vm464, %v455, 0
      %v493 = vsel %vm464, %v456, 0
      %v496 = vsel %vm464, %v457, 0
      %v499 = vsel %vm464, %v458, 0
      %v502 = vsel %vm464, %v459, 0
      %v505 = vsel %vm464, %v460, 0
      %v508 = vsel %vm464, %v461, 0
      %v511 = vsel %vm464, %v462, 0
      %vm513 = vcmask 1043456
      %v515 = vsel %vm513, %v463, 0
      %517 = vmatprep.subr.bf16.mxu0 0
      %518 = vmatpush1.bf16.msra.mxu0 %v515
      %519 = vmatprep.subr.bf16.mxu0 0
      %520 = vmatpush1.bf16.msra.mxu0 0
      %521 = vmatprep.subr.bf16.mxu0 0
      %522 = vmatpush1.bf16.msra.mxu0 0
      %523 = vmatprep.subr.bf16.mxu0 0
      %524 = vmatpush1.bf16.msra.mxu0 0
      %525 = vmatprep.subr.bf16.mxu0 0
      %526 = vmatpush1.bf16.msra.mxu0 0
      %527 = vmatprep.subr.bf16.mxu0 0
      %528 = vmatpush1.bf16.msra.mxu0 0
      %529 = vmatprep.subr.bf16.mxu0 0
      %530 = vmatpush1.bf16.msra.mxu0 0
      %531 = vmatprep.subr.bf16.mxu0 0
      %532 = vmatpush1.bf16.msra.mxu0 0
      %533 = vmatprep.subr.bf16.mxu0 0
      %534 = vmatpush1.bf16.msra.mxu0 0
      %535 = vmatprep.subr.bf16.mxu0 0
      %536 = vmatpush1.bf16.msra.mxu0 0
      %537 = vmatprep.subr.bf16.mxu0 0
      %538 = vmatpush1.bf16.msra.mxu0 0
      %539 = vmatprep.subr.bf16.mxu0 0
      %540 = vmatpush1.bf16.msra.mxu0 0
      %541 = vmatprep.subr.bf16.mxu0 0
      %542 = vmatpush1.bf16.msra.mxu0 0
      %543 = vmatprep.subr.bf16.mxu0 0
      %544 = vmatpush1.bf16.msra.mxu0 0
      %545 = vmatprep.subr.bf16.mxu0 0
      %546 = vmatpush1.bf16.msra.mxu0 0
      %547 = vmatprep.subr.bf16.mxu0 0
      %548 = vmatpush1.bf16.msra.mxu0 0
      %549 = vmatprep.mubr.bf16.mxu0 0
      %550 = vmatmul.mubr.bf16.gmra.mrb[0].mxu0 %v466
      %v551 = vpop.f32.mrb[0].mxu0
      %v552 = vadd.f32 0.0, %v551
      %v553 = vpop.f32.mrb[0].mxu0
      %v554 = vpop.f32.mrb[0].mxu0
      %v555 = vadd.f32 0.0, %v554
      %v556 = vpop.f32.mrb[0].mxu0
      %557 = vmatprep.mubr.bf16.mxu0 0
      %558 = vmatmul.mubr.bf16.gmra.mrb[0].mxu0 %v469
      %v559 = vpop.f32.mrb[0].mxu0
      %v560 = vadd.f32 0.0, %v559
      %v561 = vpop.f32.mrb[0].mxu0
      %v562 = vpop.f32.mrb[0].mxu0
      %v563 = vadd.f32 0.0, %v562
      %v564 = vpop.f32.mrb[0].mxu0
      %565 = vmatprep.mubr.bf16.mxu0 0
      %566 = vmatmul.mubr.bf16.gmra.mrb[0].mxu0 %v472
      %v567 = vpop.f32.mrb[0].mxu0
      %v568 = vadd.f32 0.0, %v567
      %v569 = vpop.f32.mrb[0].mxu0
      %v570 = vpop.f32.mrb[0].mxu0
      %v571 = vadd.f32 0.0, %v570
      %v572 = vpop.f32.mrb[0].mxu0
      %573 = vmatprep.mubr.bf16.mxu0 0
      %574 = vmatmul.mubr.bf16.gmra.mrb[0].mxu0 %v475
      %v575 = vpop.f32.mrb[0].mxu0
      %v576 = vadd.f32 0.0, %v575
      %v577 = vpop.f32.mrb[0].mxu0
      %v578 = vpop.f32.mrb[0].mxu0
      %v579 = vadd.f32 0.0, %v578
      %v580 = vpop.f32.mrb[0].mxu0
      %581 = vmatprep.mubr.bf16.mxu0 0
      %582 = vmatmul.mubr.bf16.gmra.mrb[0].mxu0 %v478
      %v583 = vpop.f32.mrb[0].mxu0
      %v584 = vadd.f32 0.0, %v583
      %v585 = vpop.f32.mrb[0].mxu0
      %v586 = vpop.f32.mrb[0].mxu0
      %v587 = vadd.f32 0.0, %v586
      %v588 = vpop.f32.mrb[0].mxu0
      %589 = vmatprep.mubr.bf16.mxu0 0
      %590 = vmatmul.mubr.bf16.gmra.mrb[0].mxu0 %v481
      %v591 = vpop.f32.mrb[0].mxu0
      %v592 = vadd.f32 0.0, %v591
      %v593 = vpop.f32.mrb[0].mxu0
      %v594 = vpop.f32.mrb[0].mxu0
      %v595 = vadd.f32 0.0, %v594
      %v596 = vpop.f32.mrb[0].mxu0
      %597 = vmatprep.mubr.bf16.mxu0 0
      %598 = vmatmul.mubr.bf16.gmra.mrb[0].mxu0 %v484
      %v599 = vpop.f32.mrb[0].mxu0
      %v600 = vadd.f32 0.0, %v599
      %v601 = vpop.f32.mrb[0].mxu0
      %v602 = vpop.f32.mrb[0].mxu0
      %v603 = vadd.f32 0.0, %v602
      %v604 = vpop.f32.mrb[0].mxu0
      %605 = vmatprep.mubr.bf16.mxu0 0
      %606 = vmatmul.mubr.bf16.gmra.mrb[0].mxu0 %v487
      %v607 = vpop.f32.mrb[0].mxu0
      %v608 = vadd.f32 0.0, %v607
      %v609 = vpop.f32.mrb[0].mxu0
      %v610 = vpop.f32.mrb[0].mxu0
      %v611 = vadd.f32 0.0, %v610
      %v612 = vpop.f32.mrb[0].mxu0
      %613 = vmatprep.mubr.bf16.mxu0 0
      %614 = vmatmul.mubr.bf16.gmra.mrb[0].mxu0 %v490
      %v615 = vpop.f32.mrb[0].mxu0
      %v616 = vadd.f32 0.0, %v615
      %v617 = vpop.f32.mrb[0].mxu0
      %v618 = vpop.f32.mrb[0].mxu0
      %v619 = vadd.f32 0.0, %v618
      %v620 = vpop.f32.mrb[0].mxu0
      %621 = vmatprep.mubr.bf16.mxu0 0
      %622 = vmatmul.mubr.bf16.gmra.mrb[0].mxu0 %v493
      %v623 = vpop.f32.mrb[0].mxu0
      %v624 = vadd.f32 0.0, %v623
      %v625 = vpop.f32.mrb[0].mxu0
      %v626 = vpop.f32.mrb[0].mxu0
      %v627 = vadd.f32 0.0, %v626
      %v628 = vpop.f32.mrb[0].mxu0
      %629 = vmatprep.mubr.bf16.mxu0 0
      %630 = vmatmul.mubr.bf16.gmra.mrb[0].mxu0 %v496
      %v631 = vpop.f32.mrb[0].mxu0
      %v632 = vadd.f32 0.0, %v631
      %v633 = vpop.f32.mrb[0].mxu0
      %v634 = vpop.f32.mrb[0].mxu0
      %v635 = vadd.f32 0.0, %v634
      %v636 = vpop.f32.mrb[0].mxu0
      %637 = vmatprep.mubr.bf16.mxu0 0
      %638 = vmatmul.mubr.bf16.gmra.mrb[0].mxu0 %v499
      %v639 = vpop.f32.mrb[0].mxu0
      %v640 = vadd.f32 0.0, %v639
      %v641 = vpop.f32.mrb[0].mxu0
      %v642 = vpop.f32.mrb[0].mxu0
      %v643 = vadd.f32 0.0, %v642
      %v644 = vpop.f32.mrb[0].mxu0
      %645 = vmatprep.mubr.bf16.mxu0 0
      %646 = vmatmul.mubr.bf16.gmra.mrb[0].mxu0 %v502
      %v647 = vpop.f32.mrb[0].mxu0
      %v648 = vadd.f32 0.0, %v647
      %v649 = vpop.f32.mrb[0].mxu0
      %v650 = vpop.f32.mrb[0].mxu0
      %v651 = vadd.f32 0.0, %v650
      %v652 = vpop.f32.mrb[0].mxu0
      %653 = vmatprep.mubr.bf16.mxu0 0
      %654 = vmatmul.mubr.bf16.gmra.mrb[0].mxu0 %v505
      %v655 = vpop.f32.mrb[0].mxu0
      %v656 = vadd.f32 0.0, %v655
      %v657 = vpop.f32.mrb[0].mxu0
      %v658 = vpop.f32.mrb[0].mxu0
      %v659 = vadd.f32 0.0, %v658
      %v660 = vpop.f32.mrb[0].mxu0
      %661 = vmatprep.mubr.bf16.mxu0 0
      %662 = vmatmul.mubr.bf16.gmra.mrb[0].mxu0 %v508
      %v663 = vpop.f32.mrb[0].mxu0
      %v664 = vadd.f32 0.0, %v663
      %v665 = vpop.f32.mrb[0].mxu0
      %v666 = vpop.f32.mrb[0].mxu0
      %v667 = vadd.f32 0.0, %v666
      %v668 = vpop.f32.mrb[0].mxu0
      %669 = vmatprep.mubr.bf16.mxu0 0
      %670 = vmatmul.mubr.bf16.gmra.mrb[0].mxu0 %v511
      %v671 = vpop.f32.mrb[0].mxu0
      %v672 = vadd.f32 0.0, %v671
      %v673 = vpop.f32.mrb[0].mxu0
      %v674 = vpop.f32.mrb[0].mxu0
      %v675 = vadd.f32 0.0, %v674
      %v676 = vpop.f32.mrb[0].mxu0
      %677 = vdwg.mxu0
      %v678 = vpack.c.bf16 %v555, %v552
      %v679 = vpack.c.bf16 %v563, %v560
      %v680 = vpack.c.bf16 %v571, %v568
      %v681 = vpack.c.bf16 %v579, %v576
      %v682 = vpack.c.bf16 %v587, %v584
      %v683 = vpack.c.bf16 %v595, %v592
      %v684 = vpack.c.bf16 %v603, %v600
      %v685 = vpack.c.bf16 %v611, %v608
      %v686 = vpack.c.bf16 %v619, %v616
      %v687 = vpack.c.bf16 %v627, %v624
      %v688 = vpack.c.bf16 %v635, %v632
      %v689 = vpack.c.bf16 %v643, %v640
      %v690 = vpack.c.bf16 %v651, %v648
      %v691 = vpack.c.bf16 %v659, %v656
      %v692 = vpack.c.bf16 %v667, %v664
      %v693 = vpack.c.bf16 %v675, %v672
      %v710 = vunpack.c.l.b16 %v678
      %v711 = vunpack.c.h.b16 %v678
      %v712 = vunpack.c.l.b16 %v679
      %v713 = vunpack.c.h.b16 %v679
      %v714 = vunpack.c.l.b16 %v680
      %v715 = vunpack.c.h.b16 %v680
      %v716 = vunpack.c.l.b16 %v681
      %v717 = vunpack.c.h.b16 %v681
      %v718 = vunpack.c.l.b16 %v682
      %v719 = vunpack.c.h.b16 %v682
      %v720 = vunpack.c.l.b16 %v683
      %v721 = vunpack.c.h.b16 %v683
      %v722 = vunpack.c.l.b16 %v684
      %v723 = vunpack.c.h.b16 %v684
      %v724 = vunpack.c.l.b16 %v685
      %v725 = vunpack.c.h.b16 %v685
      %v726 = vunpack.c.l.b16 %v686
      %v727 = vunpack.c.h.b16 %v686
      %v728 = vunpack.c.l.b16 %v687
      %v729 = vunpack.c.h.b16 %v687
      %v730 = vunpack.c.l.b16 %v688
      %v731 = vunpack.c.h.b16 %v688
      %v732 = vunpack.c.l.b16 %v689
      %v733 = vunpack.c.h.b16 %v689
      %v734 = vunpack.c.l.b16 %v690
      %v735 = vunpack.c.h.b16 %v690
      %v736 = vunpack.c.l.b16 %v691
      %v737 = vunpack.c.h.b16 %v691
      %v738 = vunpack.c.l.b16 %v692
      %v739 = vunpack.c.h.b16 %v692
      %v740 = vunpack.c.l.b16 %v693
      %v741 = vunpack.c.h.b16 %v693
      %v742 = vpack.c.b16 %v710, %v710
      %v743 = vpack.c.b16 %v711, %v711
      %v744 = vpack.c.b16 %v712, %v712
      %v745 = vpack.c.b16 %v713, %v713
      %v746 = vpack.c.b16 %v714, %v714
      %v747 = vpack.c.b16 %v715, %v715
      %v748 = vpack.c.b16 %v716, %v716
      %v749 = vpack.c.b16 %v717, %v717
      %v750 = vpack.c.b16 %v718, %v718
      %v751 = vpack.c.b16 %v719, %v719
      %v752 = vpack.c.b16 %v720, %v720
      %v753 = vpack.c.b16 %v721, %v721
      %v754 = vpack.c.b16 %v722, %v722
      %v755 = vpack.c.b16 %v723, %v723
      %v756 = vpack.c.b16 %v724, %v724
      %v757 = vpack.c.b16 %v725, %v725
      %v758 = vpack.c.b16 %v726, %v726
      %v759 = vpack.c.b16 %v727, %v727
      %v760 = vpack.c.b16 %v728, %v728
      %v761 = vpack.c.b16 %v729, %v729
      %v762 = vpack.c.b16 %v730, %v730
      %v763 = vpack.c.b16 %v731, %v731
      %v764 = vpack.c.b16 %v732, %v732
      %v765 = vpack.c.b16 %v733, %v733
      %v766 = vpack.c.b16 %v734, %v734
      %v767 = vpack.c.b16 %v735, %v735
      %v768 = vpack.c.b16 %v736, %v736
      %v769 = vpack.c.b16 %v737, %v737
      %v770 = vpack.c.b16 %v738, %v738
      %v771 = vpack.c.b16 %v739, %v739
      %v772 = vpack.c.b16 %v740, %v740
      %v773 = vpack.c.b16 %v741, %v741
      %vm806 = vcmask 257024
      %807 = vst.msk [vmem:[%s264] sm:$0xf] %vm806, %v742
      %808 = vst.msk [vmem:[%s264 + $0x4] sm:$0xf] %vm806, %v743
      %809 = vst.msk [vmem:[%s264 + $0x8] sm:$0xf] %vm806, %v744
      %810 = vst.msk [vmem:[%s264 + $0xc] sm:$0xf] %vm806, %v745
      %811 = vst.msk [vmem:[%s264 + $0x10] sm:$0xf] %vm806, %v746
      %812 = vst.msk [vmem:[%s264 + $0x14] sm:$0xf] %vm806, %v747
      %813 = vst.msk [vmem:[%s264 + $0x18] sm:$0xf] %vm806, %v748
      %814 = vst.msk [vmem:[%s264 + $0x1c] sm:$0xf] %vm806, %v749
      %815 = vst.msk [vmem:[%s264 + $0x20] sm:$0xf] %vm806, %v750
      %816 = vst.msk [vmem:[%s264 + $0x24] sm:$0xf] %vm806, %v751
      %817 = vst.msk [vmem:[%s264 + $0x28] sm:$0xf] %vm806, %v752
      %818 = vst.msk [vmem:[%s264 + $0x2c] sm:$0xf] %vm806, %v753
      %819 = vst.msk [vmem:[%s264 + $0x30] sm:$0xf] %vm806, %v754
      %820 = vst.msk [vmem:[%s264 + $0x34] sm:$0xf] %vm806, %v755
      %821 = vst.msk [vmem:[%s264 + $0x38] sm:$0xf] %vm806, %v756
      %822 = vst.msk [vmem:[%s264 + $0x3c] sm:$0xf] %vm806, %v757
      %823 = vst.msk [vmem:[%s264 + $0x40] sm:$0xf] %vm806, %v758
      %824 = vst.msk [vmem:[%s264 + $0x44] sm:$0xf] %vm806, %v759
      %825 = vst.msk [vmem:[%s264 + $0x48] sm:$0xf] %vm806, %v760
      %826 = vst.msk [vmem:[%s264 + $0x4c] sm:$0xf] %vm806, %v761
      %827 = vst.msk [vmem:[%s264 + $0x50] sm:$0xf] %vm806, %v762
      %828 = vst.msk [vmem:[%s264 + $0x54] sm:$0xf] %vm806, %v763
      %829 = vst.msk [vmem:[%s264 + $0x58] sm:$0xf] %vm806, %v764
      %830 = vst.msk [vmem:[%s264 + $0x5c] sm:$0xf] %vm806, %v765
      %831 = vst.msk [vmem:[%s264 + $0x60] sm:$0xf] %vm806, %v766
      %832 = vst.msk [vmem:[%s264 + $0x64] sm:$0xf] %vm806, %v767
      %833 = vst.msk [vmem:[%s264 + $0x68] sm:$0xf] %vm806, %v768
      %834 = vst.msk [vmem:[%s264 + $0x6c] sm:$0xf] %vm806, %v769
      %835 = vst.msk [vmem:[%s264 + $0x70] sm:$0xf] %vm806, %v770
      %836 = vst.msk [vmem:[%s264 + $0x74] sm:$0xf] %vm806, %v771
      %837 = vst.msk [vmem:[%s264 + $0x78] sm:$0xf] %vm806, %v772
      %838 = vst.msk [vmem:[%s264 + $0x7c] sm:$0xf] %vm806, %v773
      %vm839 = vcmask 261120
      %v840 = vsel %vm839, %v552, 0.0
      %v841 = vsel %vm839, %v555, 0.0
      %v842 = vadd.f32 %v840, %v841
      %v843 = vsel %vm839, %v560, 0.0
      %v844 = vadd.f32 %v842, %v843
      %v845 = vsel %vm839, %v563, 0.0
      %v846 = vadd.f32 %v844, %v845
      %v847 = vsel %vm839, %v568, 0.0
      %v848 = vadd.f32 %v846, %v847
      %v849 = vsel %vm839, %v571, 0.0
      %v850 = vadd.f32 %v848, %v849
      %v851 = vsel %vm839, %v576, 0.0
      %v852 = vadd.f32 %v850, %v851
      %v853 = vsel %vm839, %v579, 0.0
      %v854 = vadd.f32 %v852, %v853
      %v855 = vsel %vm839, %v584, 0.0
      %v856 = vadd.f32 %v854, %v855
      %v857 = vsel %vm839, %v587, 0.0
      %v858 = vadd.f32 %v856, %v857
      %v859 = vsel %vm839, %v592, 0.0
      %v860 = vadd.f32 %v858, %v859
      %v861 = vsel %vm839, %v595, 0.0
      %v862 = vadd.f32 %v860, %v861
      %v863 = vsel %vm839, %v600, 0.0
      %v864 = vadd.f32 %v862, %v863
      %v865 = vsel %vm839, %v603, 0.0
      %v866 = vadd.f32 %v864, %v865
      %v867 = vsel %vm839, %v608, 0.0
      %v868 = vadd.f32 %v866, %v867
      %v869 = vsel %vm839, %v611, 0.0
      %v870 = vadd.f32 %v868, %v869
      %v871 = vsel %vm839, %v616, 0.0
      %v872 = vadd.f32 %v870, %v871
      %v873 = vsel %vm839, %v619, 0.0
      %v874 = vadd.f32 %v872, %v873
      %v875 = vsel %vm839, %v624, 0.0
      %v876 = vadd.f32 %v874, %v875
      %v877 = vsel %vm839, %v627, 0.0
      %v878 = vadd.f32 %v876, %v877
      %v879 = vsel %vm839, %v632, 0.0
      %v880 = vadd.f32 %v878, %v879
      %v881 = vsel %vm839, %v635, 0.0
      %v882 = vadd.f32 %v880, %v881
      %v883 = vsel %vm839, %v640, 0.0
      %v884 = vadd.f32 %v882, %v883
      %v885 = vsel %vm839, %v643, 0.0
      %v886 = vadd.f32 %v884, %v885
      %v887 = vsel %vm839, %v648, 0.0
      %v888 = vadd.f32 %v886, %v887
      %v889 = vsel %vm839, %v651, 0.0
      %v890 = vadd.f32 %v888, %v889
      %v891 = vsel %vm839, %v656, 0.0
      %v892 = vadd.f32 %v890, %v891
      %v893 = vsel %vm839, %v659, 0.0
      %v894 = vadd.f32 %v892, %v893
      %v895 = vsel %vm839, %v664, 0.0
      %v896 = vadd.f32 %v894, %v895
      %v897 = vsel %vm839, %v667, 0.0
      %v898 = vadd.f32 %v896, %v897
      %v899 = vsel %vm839, %v672, 0.0
      %v900 = vadd.f32 %v898, %v899
      %v901 = vsel %vm839, %v675, 0.0
      %v902 = vadd.f32 %v900, %v901
      %v903 = vrot.slane %v902, 4
      %v904 = vadd.f32 %v902, %v903
      %v905 = vrot.slane %v904, 2
      %v906 = vadd.f32 %v904, %v905
      %v907 = vrot.slane %v906, 1
      %v908 = vadd.f32 %v906, %v907
      %vm909 = vcmask 253952
      %910 = vst.msk [vmem:[%s268] sm:$0x1] %vm909, %v908
      %v911 = vmul.f32 %v552, %v552
      %v912 = vmul.f32 %v555, %v555
      %v913 = vmul.f32 %v560, %v560
      %v914 = vmul.f32 %v563, %v563
      %v915 = vmul.f32 %v568, %v568
      %v916 = vmul.f32 %v571, %v571
      %v917 = vmul.f32 %v576, %v576
      %v918 = vmul.f32 %v579, %v579
      %v919 = vmul.f32 %v584, %v584
      %v920 = vmul.f32 %v587, %v587
      %v921 = vmul.f32 %v592, %v592
      %v922 = vmul.f32 %v595, %v595
      %v923 = vmul.f32 %v600, %v600
      %v924 = vmul.f32 %v603, %v603
      %v925 = vmul.f32 %v608, %v608
      %v926 = vmul.f32 %v611, %v611
      %v927 = vmul.f32 %v616, %v616
      %v928 = vmul.f32 %v619, %v619
      %v929 = vmul.f32 %v624, %v624
      %v930 = vmul.f32 %v627, %v627
      %v931 = vmul.f32 %v632, %v632
      %v932 = vmul.f32 %v635, %v635
      %v933 = vmul.f32 %v640, %v640
      %v934 = vmul.f32 %v643, %v643
      %v935 = vmul.f32 %v648, %v648
      %v936 = vmul.f32 %v651, %v651
      %v937 = vmul.f32 %v656, %v656
      %v938 = vmul.f32 %v659, %v659
      %v939 = vmul.f32 %v664, %v664
      %v940 = vmul.f32 %v667, %v667
      %v941 = vmul.f32 %v672, %v672
      %v942 = vmul.f32 %v675, %v675
      %v943 = vsel %vm839, %v911, 0.0
      %v944 = vsel %vm839, %v912, 0.0
      %v945 = vadd.f32 %v943, %v944
      %v946 = vsel %vm839, %v913, 0.0
      %v947 = vadd.f32 %v945, %v946
      %v948 = vsel %vm839, %v914, 0.0
      %v949 = vadd.f32 %v947, %v948
      %v950 = vsel %vm839, %v915, 0.0
      %v951 = vadd.f32 %v949, %v950
      %v952 = vsel %vm839, %v916, 0.0
      %v953 = vadd.f32 %v951, %v952
      %v954 = vsel %vm839, %v917, 0.0
      %v955 = vadd.f32 %v953, %v954
      %v956 = vsel %vm839, %v918, 0.0
      %v957 = vadd.f32 %v955, %v956
      %v958 = vsel %vm839, %v919, 0.0
      %v959 = vadd.f32 %v957, %v958
      %v960 = vsel %vm839, %v920, 0.0
      %v961 = vadd.f32 %v959, %v960
      %v962 = vsel %vm839, %v921, 0.0
      %v963 = vadd.f32 %v961, %v962
      %v964 = vsel %vm839, %v922, 0.0
      %v965 = vadd.f32 %v963, %v964
      %v966 = vsel %vm839, %v923, 0.0
      %v967 = vadd.f32 %v965, %v966
      %v968 = vsel %vm839, %v924, 0.0
      %v969 = vadd.f32 %v967, %v968
      %v970 = vsel %vm839, %v925, 0.0
      %v971 = vadd.f32 %v969, %v970
      %v972 = vsel %vm839, %v926, 0.0
      %v973 = vadd.f32 %v971, %v972
      %v974 = vsel %vm839, %v927, 0.0
      %v975 = vadd.f32 %v973, %v974
      %v976 = vsel %vm839, %v928, 0.0
      %v977 = vadd.f32 %v975, %v976
      %v978 = vsel %vm839, %v929, 0.0
      %v979 = vadd.f32 %v977, %v978
      %v980 = vsel %vm839, %v930, 0.0
      %v981 = vadd.f32 %v979, %v980
      %v982 = vsel %vm839, %v931, 0.0
      %v983 = vadd.f32 %v981, %v982
      %v984 = vsel %vm839, %v932, 0.0
      %v985 = vadd.f32 %v983, %v984
      %v986 = vsel %vm839, %v933, 0.0
      %v987 = vadd.f32 %v985, %v986
      %v988 = vsel %vm839, %v934, 0.0
      %v989 = vadd.f32 %v987, %v988
      %v990 = vsel %vm839, %v935, 0.0
      %v991 = vadd.f32 %v989, %v990
      %v992 = vsel %vm839, %v936, 0.0
      %v993 = vadd.f32 %v991, %v992
      %v994 = vsel %vm839, %v937, 0.0
      %v995 = vadd.f32 %v993, %v994
      %v996 = vsel %vm839, %v938, 0.0
      %v997 = vadd.f32 %v995, %v996
      %v998 = vsel %vm839, %v939, 0.0
      %v999 = vadd.f32 %v997, %v998
      %v1000 = vsel %vm839, %v940, 0.0
      %v1001 = vadd.f32 %v999, %v1000
      %v1002 = vsel %vm839, %v941, 0.0
      %v1003 = vadd.f32 %v1001, %v1002
      %v1004 = vsel %vm839, %v942, 0.0
      %v1005 = vadd.f32 %v1003, %v1004
      %v1006 = vrot.slane %v1005, 4
      %v1007 = vadd.f32 %v1005, %v1006
      %v1008 = vrot.slane %v1007, 2
      %v1009 = vadd.f32 %v1007, %v1008
      %v1010 = vrot.slane %v1009, 1
      %v1011 = vadd.f32 %v1009, %v1010
      %1012 = vst.msk [vmem:[%s271] sm:$0x1] %vm909, %v1011
      %s1013 = smul.u32 32, %s18
      %p1014 = scmp.lt.s32.totalorder %s1013, 63
      %s1015 = scalar_select %p1014, %s1013, 63
      %s1016 = smul.addr %s1015, 4
      %s1017 = scalar_lea.vmem %s4, %s1016
      %p1018 = scmp.lt.s32.totalorder %s18, 1
      %s1019 = scalar_select %p1018, %s18, 1
      %s1020 = scalar_lea.vmem %s5, %s1019
      %p1021 = scmp.lt.s32.totalorder %s18, 1
      %s1022 = scalar_select %p1021, %s18, 1
      %s1023 = scalar_lea.vmem %s6, %s1022
      // Predicated region
      $region37: #{resnet_bottleneck_block_nhwc.6} parent=35 // pred_check
        %p1024 = pneg %p125
      $region38: #{resnet_bottleneck_block_nhwc.6} parent=35 // pred_check_branch
        %1026 = sbr.rel (%p1024) target = $region40
      $region39: #{resnet_bottleneck_block_nhwc.6} parent=35 // pred_region
        %s1027 = smul.u32 32, %s18
      $region40: #{resnet_bottleneck_block_nhwc.6} parent=35 // pred_fallthru
        _
      // Predicated region
      $region41: #{resnet_bottleneck_block_nhwc.6} parent=35 // pred_check
        %p1028 = pneg %p151
      $region42: #{resnet_bottleneck_block_nhwc.6} parent=35 // pred_check_branch
        %1030 = sbr.rel (%p1028) target = $region44
      $region43: #{resnet_bottleneck_block_nhwc.6} parent=35 // pred_region
        _
      $region44: #{resnet_bottleneck_block_nhwc.6} parent=35 // pred_fallthru
        _
      // Predicated region
      $region45: #{resnet_bottleneck_block_nhwc.6} parent=35 // pred_check
        %p1031 = pneg %p177
      $region46: #{resnet_bottleneck_block_nhwc.6} parent=35 // pred_check_branch
        %1033 = sbr.rel (%p1031) target = $region48
      $region47: #{resnet_bottleneck_block_nhwc.6} parent=35 // pred_region
        _
      $region48: #{resnet_bottleneck_block_nhwc.6} parent=35 // pred_fallthru
        _
    $region36: #{resnet_bottleneck_block_nhwc.6} parent=5 // pred_fallthru
      _
    %p1034 = scmp.le.s32.totalorder 2, %s13
    // Predicated region
    $region49: #{resnet_bottleneck_block_nhwc.6} parent=5 // pred_check
      %p1035 = pneg %p1034
    $region50: #{resnet_bottleneck_block_nhwc.6} parent=5 // pred_check_branch
      %1037 = sbr.rel (%p1035) target = $region52
    $region51: #{resnet_bottleneck_block_nhwc.6} parent=5 // pred_region
      %s1038 = ssub.s32 %s13, 2
      // Predicated region
      $region53: #{resnet_bottleneck_block_nhwc.6} parent=51 // pred_check
        %p1039 = pneg %p131
      $region54: #{resnet_bottleneck_block_nhwc.6} parent=51 // pred_check_branch
        %1041 = sbr.rel (%p1039) target = $region56
      $region55: #{resnet_bottleneck_block_nhwc.6} parent=51 // pred_region
        %s1042 = smul.u32 32, %s19
        %p1043 = scmp.lt.s32.totalorder %s1042, 63
        %s1044 = scalar_select %p1043, %s1042, 63
        %s1045 = smul.addr %s1044, 4
        %s1046 = scalar_lea.vmem %s4, %s1045
      $region56: #{resnet_bottleneck_block_nhwc.6} parent=51 // pred_fallthru
        _
      // Predicated region
      $region57: #{resnet_bottleneck_block_nhwc.6} parent=51 // pred_check
        %p1047 = pneg %p157
      $region58: #{resnet_bottleneck_block_nhwc.6} parent=51 // pred_check_branch
        %1049 = sbr.rel (%p1047) target = $region60
      $region59: #{resnet_bottleneck_block_nhwc.6} parent=51 // pred_region
        %p1050 = scmp.lt.s32.totalorder %s19, 1
        %s1051 = scalar_select %p1050, %s19, 1
        %s1052 = scalar_lea.vmem %s5, %s1051
      $region60: #{resnet_bottleneck_block_nhwc.6} parent=51 // pred_fallthru
        _
      // Predicated region
      $region61: #{resnet_bottleneck_block_nhwc.6} parent=51 // pred_check
        %p1053 = pneg %p183
      $region62: #{resnet_bottleneck_block_nhwc.6} parent=51 // pred_check_branch
        %1055 = sbr.rel (%p1053) target = $region64
      $region63: #{resnet_bottleneck_block_nhwc.6} parent=51 // pred_region
        %p1056 = scmp.lt.s32.totalorder %s19, 1
        %s1057 = scalar_select %p1056, %s19, 1
        %s1058 = scalar_lea.vmem %s6, %s1057
      $region64: #{resnet_bottleneck_block_nhwc.6} parent=51 // pred_fallthru
        _
    $region52: #{resnet_bottleneck_block_nhwc.6} parent=5 // pred_fallthru
      _
  $region6: #{resnet_bottleneck_block_nhwc.6} parent=0 // loop_footer
    %s17 = sadd.s32 1, %s13
  $region7: #{resnet_bottleneck_block_nhwc.6} parent=0 // loop_footer_branch
    %12 = sbr.rel target = $region3
  $region8: #{resnet_bottleneck_block_nhwc.6} parent=0 // loop_exit
    _

// kernel: resnet_bottleneck_block_nhwc.4
$region0: #{resnet_bottleneck_block_nhwc.4}
  #allocation0 [shape = 'u32[]', space=smem, size = 0x4, offset = 0x4, fixed_abs, tag = 'smem constant byte address 0x4 - core index']
  #allocation1 [shape = 'u32[144,128]{1,0:T(1,128)}', space=vmem, size = 0x12000, scoped, tag = 'internal scratch']
  %s0 = inlined_call_operand.hbm [shape: f32[512,32], index: 0, kind: input, shape index: {}]
  %s1 = inlined_call_operand.vmem [shape: bf16[32,8], index: 1, kind: input, shape index: {}]
  %s2 = inlined_call_operand.vmem [shape: bf16[32,32], index: 2, kind: input, shape index: {}]
  %s3 = inlined_call_operand.vmem [shape: bf16[512,8], index: 3, kind: output, shape index: {0}]
  %s4 = inlined_call_operand.vmem [shape: bf16[512,32], index: 4, kind: output, shape index: {1}]
  %s5 = inlined_call_operand.vmem [shape: f32[2,1,8], index: 5, kind: output, shape index: {2}]
  %s6 = inlined_call_operand.vmem [shape: f32[2,1,8], index: 6, kind: output, shape index: {3}]
  %s7 = inlined_call_operand.vmem [shape: f32[2,1,32], index: 7, kind: output, shape index: {4}]
  %s8 = inlined_call_operand.vmem [shape: f32[2,1,32], index: 8, kind: output, shape index: {5}]
  %9 = xla_tuple %s3, %s4, %s5, %s6, %s7, %s8
  %s10 = sld [smem:[#allocation0]]
  $region89: #{resnet_bottleneck_block_nhwc.4} parent=0
    _
  %s12 = ssub.s32 1, %s10
  %s13 = scalar_select 0, %s12, %s10
  $region1: #{resnet_bottleneck_block_nhwc.4} parent=0
    #allocation2 [shape = 'u8[262144]{0}', space=vmem, size = 0x40000, scoped, tag = 'input window, operand 0']
    #allocation3 [shape = 's32[2]{0}', space=sflag, size = 0x8, scoped, tag = 'scoped memory for resnet_bottleneck_block_nhwc.4']
    %14 = vsyncpa [#allocation3], 0
    %s15 = scalar_lea.sflag [#allocation3], 1
    %16 = vsyncpa %s15, 0
    loop: start=0, step=1, limit=4
    $region2: #{resnet_bottleneck_block_nhwc.4} parent=1 // loop_pre_header
      _
    $region3: #{resnet_bottleneck_block_nhwc.4} parent=1 // loop_header
      %s18 = sphi 0, %s22
      %p19 = scmp.ge.s32.totalorder %s18, 4
      %s28 = sphi 0, %s30
      %s31 = sphi 0, %s28
      %s32 = sphi 0, %s31
      %s48 = sphi 0, %s32
      %s52 = sphi 0, %s52
      %s54 = sphi 0, %s52
      %s55 = sphi 0, %s54
      %s69 = sphi 0, %s55
      %s73 = sphi 0, %s73
      %s75 = sphi 0, %s73
      %s76 = sphi 0, %s75
      %s90 = sphi 0, %s76
      %s96 = sphi 0, %s98
      %s99 = sphi 0, %s96
      %s100 = sphi 0, %s99
      %s116 = sphi 0, %s100
      %s122 = sphi 0, %s124
      %s125 = sphi 0, %s122
      %s126 = sphi 0, %s125
      %s142 = sphi 0, %s126
      %s148 = sphi 0, %s150
      %s151 = sphi 0, %s148
      %s152 = sphi 0, %s151
      %s168 = sphi 0, %s152
      %s174 = sphi 0, %s176
      %s177 = sphi 0, %s174
      %s178 = sphi 0, %s177
      %s194 = sphi 0, %s178
      %s200 = sphi 0, %s202
      %s203 = sphi 0, %s200
      %s204 = sphi 0, %s203
      %s220 = sphi 0, %s204
      %s226 = sphi 0, %s228
      %s229 = sphi 0, %s226
      %s230 = sphi 0, %s229
      %s246 = sphi 0, %s230
    $region4: #{resnet_bottleneck_block_nhwc.4} parent=1 // loop_header_branch
      %21 = sbr.rel (%p19) target = $region8
    $region5: #{resnet_bottleneck_block_nhwc.4} parent=1 // loop_body
      %s23 = ssub.s32 %s18, 1
      %s24 = ssub.s32 %s18, 2
      %s25 = sadd.s32 %s18, 1
      %s26 = ssub.s32 %s18, %s25
      %p27 = scmp.eq.s32.totalorder %s26, 0
      %s29 = sadd.s32 %s28, 1
      %s30 = scalar_select %p27, %s28, %s29
      %p33 = pneg %p27
      %p34 = scmp.eq.s32.totalorder %s18, 1
      %p35 = por %p33, %p34
      %p36 = scmp.ne.s32.totalorder %s28, %s31
      %p37 = scmp.eq.s32.totalorder %s18, 0
      %p38 = por %p36, %p37
      %p39 = scmp.ne.s32.totalorder %s28, %s31
      %p40 = scmp.eq.s32.totalorder %s23, 1
      %p41 = por %p39, %p40
      %p42 = scmp.ne.s32.totalorder %s31, %s32
      %p43 = scmp.eq.s32.totalorder %s23, 0
      %p44 = por %p42, %p43
      %p45 = scmp.ne.s32.totalorder %s31, %s32
      %p46 = scmp.eq.s32.totalorder %s24, 1
      %p47 = por %p45, %p46
      %p49 = scmp.ne.s32.totalorder %s32, %s48
      %p50 = scmp.eq.s32.totalorder %s24, 0
      %p51 = por %p49, %p50
      %s53 = sadd.s32 %s52, 1
      %p56 = scmp.eq.s32.totalorder %s18, 1
      %p57 = scmp.ne.s32.totalorder %s52, %s54
      %p58 = scmp.eq.s32.totalorder %s18, 0
      %p59 = por %p57, %p58
      %p60 = scmp.ne.s32.totalorder %s52, %s54
      %p61 = scmp.eq.s32.totalorder %s23, 1
      %p62 = por %p60, %p61
      %p63 = scmp.ne.s32.totalorder %s54, %s55
      %p64 = scmp.eq.s32.totalorder %s23, 0
      %p65 = por %p63, %p64
      %p66 = scmp.ne.s32.totalorder %s54, %s55
      %p67 = scmp.eq.s32.totalorder %s24, 1
      %p68 = por %p66, %p67
      %p70 = scmp.ne.s32.totalorder %s55, %s69
      %p71 = scmp.eq.s32.totalorder %s24, 0
      %p72 = por %p70, %p71
      %s74 = sadd.s32 %s73, 1
      %p77 = scmp.eq.s32.totalorder %s18, 1
      %p78 = scmp.ne.s32.totalorder %s73, %s75
      %p79 = scmp.eq.s32.totalorder %s18, 0
      %p80 = por %p78, %p79
      %p81 = scmp.ne.s32.totalorder %s73, %s75
      %p82 = scmp.eq.s32.totalorder %s23, 1
      %p83 = por %p81, %p82
      %p84 = scmp.ne.s32.totalorder %s75, %s76
      %p85 = scmp.eq.s32.totalorder %s23, 0
      %p86 = por %p84, %p85
      %p87 = scmp.ne.s32.totalorder %s75, %s76
      %p88 = scmp.eq.s32.totalorder %s24, 1
      %p89 = por %p87, %p88
      %p91 = scmp.ne.s32.totalorder %s76, %s90
      %p92 = scmp.eq.s32.totalorder %s24, 0
      %p93 = por %p91, %p92
      %s94 = ssub.s32 %s18, %s25
      %p95 = scmp.eq.s32.totalorder %s94, 0
      %s97 = sadd.s32 %s96, 1
      %s98 = scalar_select %p95, %s96, %s97
      %p101 = pneg %p95
      %p102 = scmp.eq.s32.totalorder %s18, 1
      %p103 = por %p101, %p102
      %p104 = scmp.ne.s32.totalorder %s96, %s99
      %p105 = scmp.eq.s32.totalorder %s18, 0
      %p106 = por %p104, %p105
      %p107 = scmp.ne.s32.totalorder %s96, %s99
      %p108 = scmp.eq.s32.totalorder %s23, 1
      %p109 = por %p107, %p108
      %p110 = scmp.ne.s32.totalorder %s99, %s100
      %p111 = scmp.eq.s32.totalorder %s23, 0
      %p112 = por %p110, %p111
      %p113 = scmp.ne.s32.totalorder %s99, %s100
      %p114 = scmp.eq.s32.totalorder %s24, 1
      %p115 = por %p113, %p114
      %p117 = scmp.ne.s32.totalorder %s100, %s116
      %p118 = scmp.eq.s32.totalorder %s24, 0
      %p119 = por %p117, %p118
      %s120 = ssub.s32 %s18, %s25
      %p121 = scmp.eq.s32.totalorder %s120, 0
      %s123 = sadd.s32 %s122, 1
      %s124 = scalar_select %p121, %s122, %s123
      %p127 = pneg %p121
      %p128 = scmp.eq.s32.totalorder %s18, 1
      %p129 = por %p127, %p128
      %p130 = scmp.ne.s32.totalorder %s122, %s125
      %p131 = scmp.eq.s32.totalorder %s18, 0
      %p132 = por %p130, %p131
      %p133 = scmp.ne.s32.totalorder %s122, %s125
      %p134 = scmp.eq.s32.totalorder %s23, 1
      %p135 = por %p133, %p134
      %p136 = scmp.ne.s32.totalorder %s125, %s126
      %p137 = scmp.eq.s32.totalorder %s23, 0
      %p138 = por %p136, %p137
      %p139 = scmp.ne.s32.totalorder %s125, %s126
      %p140 = scmp.eq.s32.totalorder %s24, 1
      %p141 = por %p139, %p140
      %p143 = scmp.ne.s32.totalorder %s126, %s142
      %p144 = scmp.eq.s32.totalorder %s24, 0
      %p145 = por %p143, %p144
      %s146 = ssub.s32 %s18, %s25
      %p147 = scmp.eq.s32.totalorder %s146, 0
      %s149 = sadd.s32 %s148, 1
      %s150 = scalar_select %p147, %s148, %s149
      %p153 = pneg %p147
      %p154 = scmp.eq.s32.totalorder %s18, 1
      %p155 = por %p153, %p154
      %p156 = scmp.ne.s32.totalorder %s148, %s151
      %p157 = scmp.eq.s32.totalorder %s18, 0
      %p158 = por %p156, %p157
      %p159 = scmp.ne.s32.totalorder %s148, %s151
      %p160 = scmp.eq.s32.totalorder %s23, 1
      %p161 = por %p159, %p160
      %p162 = scmp.ne.s32.totalorder %s151, %s152
      %p163 = scmp.eq.s32.totalorder %s23, 0
      %p164 = por %p162, %p163
      %p165 = scmp.ne.s32.totalorder %s151, %s152
      %p166 = scmp.eq.s32.totalorder %s24, 1
      %p167 = por %p165, %p166
      %p169 = scmp.ne.s32.totalorder %s152, %s168
      %p170 = scmp.eq.s32.totalorder %s24, 0
      %p171 = por %p169, %p170
      %s172 = ssub.s32 %s18, %s25
      %p173 = scmp.eq.s32.totalorder %s172, 0
      %s175 = sadd.s32 %s174, 1
      %s176 = scalar_select %p173, %s174, %s175
      %p179 = pneg %p173
      %p180 = scmp.eq.s32.totalorder %s18, 1
      %p181 = por %p179, %p180
      %p182 = scmp.ne.s32.totalorder %s174, %s177
      %p183 = scmp.eq.s32.totalorder %s18, 0
      %p184 = por %p182, %p183
      %p185 = scmp.ne.s32.totalorder %s174, %s177
      %p186 = scmp.eq.s32.totalorder %s23, 1
      %p187 = por %p185, %p186
      %p188 = scmp.ne.s32.totalorder %s177, %s178
      %p189 = scmp.eq.s32.totalorder %s23, 0
      %p190 = por %p188, %p189
      %p191 = scmp.ne.s32.totalorder %s177, %s178
      %p192 = scmp.eq.s32.totalorder %s24, 1
      %p193 = por %p191, %p192
      %p195 = scmp.ne.s32.totalorder %s178, %s194
      %p196 = scmp.eq.s32.totalorder %s24, 0
      %p197 = por %p195, %p196
      %s198 = ssub.s32 %s18, %s25
      %p199 = scmp.eq.s32.totalorder %s198, 0
      %s201 = sadd.s32 %s200, 1
      %s202 = scalar_select %p199, %s200, %s201
      %p205 = pneg %p199
      %p206 = scmp.eq.s32.totalorder %s18, 1
      %p207 = por %p205, %p206
      %p208 = scmp.ne.s32.totalorder %s200, %s203
      %p209 = scmp.eq.s32.totalorder %s18, 0
      %p210 = por %p208, %p209
      %p211 = scmp.ne.s32.totalorder %s200, %s203
      %p212 = scmp.eq.s32.totalorder %s23, 1
      %p213 = por %p211, %p212
      %p214 = scmp.ne.s32.totalorder %s203, %s204
      %p215 = scmp.eq.s32.totalorder %s23, 0
      %p216 = por %p214, %p215
      %p217 = scmp.ne.s32.totalorder %s203, %s204
      %p218 = scmp.eq.s32.totalorder %s24, 1
      %p219 = por %p217, %p218
      %p221 = scmp.ne.s32.totalorder %s204, %s220
      %p222 = scmp.eq.s32.totalorder %s24, 0
      %p223 = por %p221, %p222
      %s224 = ssub.s32 %s18, %s25
      %p225 = scmp.eq.s32.totalorder %s224, 0
      %s227 = sadd.s32 %s226, 1
      %s228 = scalar_select %p225, %s226, %s227
      %p231 = pneg %p225
      %p232 = scmp.eq.s32.totalorder %s18, 1
      %p233 = por %p231, %p232
      %p234 = scmp.ne.s32.totalorder %s226, %s229
      %p235 = scmp.eq.s32.totalorder %s18, 0
      %p236 = por %p234, %p235
      %p237 = scmp.ne.s32.totalorder %s226, %s229
      %p238 = scmp.eq.s32.totalorder %s23, 1
      %p239 = por %p237, %p238
      %p240 = scmp.ne.s32.totalorder %s229, %s230
      %p241 = scmp.eq.s32.totalorder %s23, 0
      %p242 = por %p240, %p241
      %p243 = scmp.ne.s32.totalorder %s229, %s230
      %p244 = scmp.eq.s32.totalorder %s24, 1
      %p245 = por %p243, %p244
      %p247 = scmp.ne.s32.totalorder %s230, %s246
      %p248 = scmp.eq.s32.totalorder %s24, 0
      %p249 = por %p247, %p248
      %p250 = scmp.le.s32.totalorder 1, %s18
      %p251 = scmp.lt.s32.totalorder %s18, 3
      %p252 = pnand %p250, %p251
      %p253 = pneg %p252
      // Predicated region
      $region9: #{resnet_bottleneck_block_nhwc.4} parent=5 // pred_check
        _
      $region10: #{resnet_bottleneck_block_nhwc.4} parent=5 // pred_check_branch
        %255 = sbr.rel (%p252) target = $region12
      $region11: #{resnet_bottleneck_block_nhwc.4} parent=5 // pred_region
        %s256 = ssub.s32 %s18, 1
        // Predicated region
        $region13: #{resnet_bottleneck_block_nhwc.4} parent=11 // pred_check
          %p257 = pneg %p65
        $region14: #{resnet_bottleneck_block_nhwc.4} parent=11 // pred_check_branch
          %259 = sbr.rel (%p257) target = $region16
        $region15: #{resnet_bottleneck_block_nhwc.4} parent=11 // pred_region
          _
        $region16: #{resnet_bottleneck_block_nhwc.4} parent=11 // pred_fallthru
          _
        // Predicated region
        $region17: #{resnet_bottleneck_block_nhwc.4} parent=11 // pred_check
          %p260 = pneg %p86
        $region18: #{resnet_bottleneck_block_nhwc.4} parent=11 // pred_check_branch
          %262 = sbr.rel (%p260) target = $region20
        $region19: #{resnet_bottleneck_block_nhwc.4} parent=11 // pred_region
          _
        $region20: #{resnet_bottleneck_block_nhwc.4} parent=11 // pred_fallthru
          _
      $region12: #{resnet_bottleneck_block_nhwc.4} parent=5 // pred_fallthru
        _
      %p263 = scmp.lt.s32.totalorder %s18, 2
      // Predicated region
      $region21: #{resnet_bottleneck_block_nhwc.4} parent=5 // pred_check
        %p264 = pneg %p263
      $region22: #{resnet_bottleneck_block_nhwc.4} parent=5 // pred_check_branch
        %266 = sbr.rel (%p264) target = $region24
      $region23: #{resnet_bottleneck_block_nhwc.4} parent=5 // pred_region
        // Predicated region
        $region25: #{resnet_bottleneck_block_nhwc.4} parent=23 // pred_check
          %p267 = pneg %p38
        $region26: #{resnet_bottleneck_block_nhwc.4} parent=23 // pred_check_branch
          %269 = sbr.rel (%p267) target = $region28
        $region27: #{resnet_bottleneck_block_nhwc.4} parent=23 // pred_region
          %s270 = sand.u32 %s28, 1
          %s271 = scalar_lea.sflag [#allocation3], %s270
          %s272 = sand.u32 %s28, 1
          %s273 = smul.addr %s272, 256
          %s274 = scalar_lea.vmem [#allocation2], %s273
          %s275 = smul.u32 32, %s18
          %s277 = ssub.s32 4096, 4096
          %278 = vsyncadd %s271, %s277
          %s279 = smul.addr %s275, 128
          %s280 = scalar_lea.hbm %s0, %s279
          %s281 = sshll.u32 %s274, 4
          %s282 = int_to_ptr.vmem [resolvable:$true] %s281
          %287 = dma.hbm_to_vmem [thread:$0]  %s280, 4096, %s282, %s271, 128, 128, 8
        $region28: #{resnet_bottleneck_block_nhwc.4} parent=23 // pred_fallthru
          _
      $region24: #{resnet_bottleneck_block_nhwc.4} parent=5 // pred_fallthru
        _
      %p288 = scmp.le.s32.totalorder 1, %s18
      %p289 = scmp.lt.s32.totalorder %s18, 3
      %p290 = pnand %p288, %p289
      %p291 = pneg %p290
      // Predicated region
      $region29: #{resnet_bottleneck_block_nhwc.4} parent=5 // pred_check
        _
      $region30: #{resnet_bottleneck_block_nhwc.4} parent=5 // pred_check_branch
        %293 = sbr.rel (%p290) target = $region32
      $region31: #{resnet_bottleneck_block_nhwc.4} parent=5 // pred_region
        %s294 = ssub.s32 %s18, 1
        %s295 = sand.u32 %s31, 1
        %s296 = scalar_lea.sflag [#allocation3], %s295
        %s297 = sand.u32 %s31, 1
        %s298 = smul.addr %s297, 256
        %s299 = scalar_lea.vmem [#allocation2], %s298
        // Predicated region
        $region33: #{resnet_bottleneck_block_nhwc.4} parent=31 // pred_check
          %p300 = pneg %p44
        $region34: #{resnet_bottleneck_block_nhwc.4} parent=31 // pred_check_branch
          %302 = sbr.rel (%p300) target = $region36
        $region35: #{resnet_bottleneck_block_nhwc.4} parent=31 // pred_region
          %303 = dma.done %s296, 4096
        $region36: #{resnet_bottleneck_block_nhwc.4} parent=31 // pred_fallthru
          _
        %s304 = sand.u32 %s31, 1
        %s305 = scalar_lea.sflag [#allocation3], %s304
        %s306 = sand.u32 %s31, 1
        %s307 = smul.addr %s306, 256
        %s308 = scalar_lea.vmem [#allocation2], %s307
        %p309 = pneg %p44
        %p310 = pneg %p41
        %p311 = pneg %p65
        %p312 = pneg %p62
        %p313 = pneg %p86
        %p314 = pneg %p83
        %p315 = pneg %p112
        %p316 = pneg %p109
        %s317 = smul.u32 32, %s23
        %p318 = scmp.lt.s32.totalorder %s317, 63
        %s319 = scalar_select %p318, %s317, 63
        %s320 = smul.addr %s319, 4
        %s321 = scalar_lea.vmem %s3, %s320
        %p322 = pneg %p138
        %p323 = pneg %p135
        %s324 = smul.u32 32, %s23
        %p325 = scmp.lt.s32.totalorder %s324, 63
        %s326 = scalar_select %p325, %s324, 63
        %s327 = smul.addr %s326, 4
        %s328 = scalar_lea.vmem %s4, %s327
        %p329 = pneg %p164
        %p330 = pneg %p161
        %p331 = scmp.lt.s32.totalorder %s23, 1
        %s332 = scalar_select %p331, %s23, 1
        %s333 = scalar_lea.vmem %s5, %s332
        %p334 = pneg %p190
        %p335 = pneg %p187
        %p336 = scmp.lt.s32.totalorder %s23, 1
        %s337 = scalar_select %p336, %s23, 1
        %s338 = scalar_lea.vmem %s6, %s337
        %p339 = pneg %p216
        %p340 = pneg %p213
        %p341 = scmp.lt.s32.totalorder %s23, 1
        %s342 = scalar_select %p341, %s23, 1
        %s343 = scalar_lea.vmem %s7, %s342
        %p344 = pneg %p242
        %p345 = pneg %p239
        %p346 = scmp.lt.s32.totalorder %s23, 1
        %s347 = scalar_select %p346, %s23, 1
        %s348 = scalar_lea.vmem %s8, %s347
        %s349 = smul.u32 32, %s23
        %s350 = smul.u32 32, %s23
        %p351 = scmp.lt.s32.totalorder %s350, 63
        %s352 = scalar_select %p351, %s350, 63
        %s353 = smul.addr %s352, 4
        %s354 = scalar_lea.vmem %s3, %s353
        %s355 = smul.u32 32, %s23
        %s356 = smul.u32 32, %s23
        %p357 = scmp.lt.s32.totalorder %s356, 63
        %s358 = scalar_select %p357, %s356, 63
        %s359 = smul.addr %s358, 4
        %s360 = scalar_lea.vmem %s4, %s359
        %s361 = smul.u32 32, %s23
        %p362 = scmp.lt.s32.totalorder %s23, 1
        %s363 = scalar_select %p362, %s23, 1
        %s364 = scalar_lea.vmem %s5, %s363
        %p365 = scmp.lt.s32.totalorder %s23, 1
        %s366 = scalar_select %p365, %s23, 1
        %s367 = scalar_lea.vmem %s6, %s366
        %p368 = scmp.lt.s32.totalorder %s23, 1
        %s369 = scalar_select %p368, %s23, 1
        %s370 = scalar_lea.vmem %s7, %s369
        %p371 = scmp.lt.s32.totalorder %s23, 1
        %s372 = scalar_select %p371, %s23, 1
        %s373 = scalar_lea.vmem %s8, %s372
        %v375 = vld [vmem:[%s299] sm:$0xff]
        %v376 = vld [vmem:[%s299 + $0x8] sm:$0xff]
        %v377 = vld [vmem:[%s299 + $0x10] sm:$0xff]
        %v378 = vld [vmem:[%s299 + $0x18] sm:$0xff]
        %v379 = vld [vmem:[%s299 + $0x20] sm:$0xff]
        %v380 = vld [vmem:[%s299 + $0x28] sm:$0xff]
        %v381 = vld [vmem:[%s299 + $0x30] sm:$0xff]
        %v382 = vld [vmem:[%s299 + $0x38] sm:$0xff]
        %v383 = vld [vmem:[%s299 + $0x40] sm:$0xff]
        %v384 = vld [vmem:[%s299 + $0x48] sm:$0xff]
        %v385 = vld [vmem:[%s299 + $0x50] sm:$0xff]
        %v386 = vld [vmem:[%s299 + $0x58] sm:$0xff]
        %v387 = vld [vmem:[%s299 + $0x60] sm:$0xff]
        %v388 = vld [vmem:[%s299 + $0x68] sm:$0xff]
        %v389 = vld [vmem:[%s299 + $0x70] sm:$0xff]
        %v390 = vld [vmem:[%s299 + $0x78] sm:$0xff]
        %v391 = vld [vmem:[%s299 + $0x80] sm:$0xff]
        %v392 = vld [vmem:[%s299 + $0x88] sm:$0xff]
        %v393 = vld [vmem:[%s299 + $0x90] sm:$0xff]
        %v394 = vld [vmem:[%s299 + $0x98] sm:$0xff]
        %v395 = vld [vmem:[%s299 + $0xa0] sm:$0xff]
        %v396 = vld [vmem:[%s299 + $0xa8] sm:$0xff]
        %v397 = vld [vmem:[%s299 + $0xb0] sm:$0xff]
        %v398 = vld [vmem:[%s299 + $0xb8] sm:$0xff]
        %v399 = vld [vmem:[%s299 + $0xc0] sm:$0xff]
        %v400 = vld [vmem:[%s299 + $0xc8] sm:$0xff]
        %v401 = vld [vmem:[%s299 + $0xd0] sm:$0xff]
        %v402 = vld [vmem:[%s299 + $0xd8] sm:$0xff]
        %v403 = vld [vmem:[%s299 + $0xe0] sm:$0xff]
        %v404 = vld [vmem:[%s299 + $0xe8] sm:$0xff]
        %v405 = vld [vmem:[%s299 + $0xf0] sm:$0xff]
        %v406 = vld [vmem:[%s299 + $0xf8] sm:$0xff]
        %v407 = vpack.c.bf16 %v376, %v375
        %v408 = vpack.c.bf16 %v378, %v377
        %v409 = vpack.c.bf16 %v380, %v379
        %v410 = vpack.c.bf16 %v382, %v381
        %v411 = vpack.c.bf16 %v384, %v383
        %v412 = vpack.c.bf16 %v386, %v385
        %v413 = vpack.c.bf16 %v388, %v387
        %v414 = vpack.c.bf16 %v390, %v389
        %v415 = vpack.c.bf16 %v392, %v391
        %v416 = vpack.c.bf16 %v394, %v393
        %v417 = vpack.c.bf16 %v396, %v395
        %v418 = vpack.c.bf16 %v398, %v397
        %v419 = vpack.c.bf16 %v400, %v399
        %v420 = vpack.c.bf16 %v402, %v401
        %v421 = vpack.c.bf16 %v404, %v403
        %v422 = vpack.c.bf16 %v406, %v405
        %v423 = vld [vmem:[%s1] sm:$0xf]
        %v424 = vld [vmem:[%s1 + $0x4] sm:$0xf]
        %v425 = vld [vmem:[%s1 + $0x8] sm:$0xf]
        %v426 = vld [vmem:[%s1 + $0xc] sm:$0xf]
        %v431 = vunpack.c.l.b16 %v423
        %v432 = vunpack.c.l.b16 %v424
        %v433 = vunpack.c.l.b16 %v425
        %v434 = vunpack.c.l.b16 %v426
        %v435 = vpack.c.b16 %v432, %v431
        %v436 = vpack.c.b16 %v434, %v433
        %vm439 = vcmask 261120
        %v441 = vsel %vm439, %v407, 0
        %v444 = vsel %vm439, %v408, 0
        %v447 = vsel %vm439, %v409, 0
        %v450 = vsel %vm439, %v410, 0
        %v453 = vsel %vm439, %v411, 0
        %v456 = vsel %vm439, %v412, 0
        %v459 = vsel %vm439, %v413, 0
        %v462 = vsel %vm439, %v414, 0
        %v465 = vsel %vm439, %v415, 0
        %v468 = vsel %vm439, %v416, 0
        %v471 = vsel %vm439, %v417, 0
        %v474 = vsel %vm439, %v418, 0
        %v477 = vsel %vm439, %v419, 0
        %v480 = vsel %vm439, %v420, 0
        %v483 = vsel %vm439, %v421, 0
        %v486 = vsel %vm439, %v422, 0
        %488 = vmatprep.subr.bf16.mxu0 0
        %489 = vmatpush1.bf16.msra.mxu0 %v435
        %490 = vmatprep.subr.bf16.mxu0 0
        %491 = vmatpush1.bf16.msra.mxu0 %v436
        %492 = vmatprep.subr.bf16.mxu0 0
        %493 = vmatpush1.bf16.msra.mxu0 0
        %494 = vmatprep.subr.bf16.mxu0 0
        %495 = vmatpush1.bf16.msra.mxu0 0
        %496 = vmatprep.subr.bf16.mxu0 0
        %497 = vmatpush1.bf16.msra.mxu0 0
        %498 = vmatprep.subr.bf16.mxu0 0
        %499 = vmatpush1.bf16.msra.mxu0 0
        %500 = vmatprep.subr.bf16.mxu0 0
        %501 = vmatpush1.bf16.msra.mxu0 0
        %502 = vmatprep.subr.bf16.mxu0 0
        %503 = vmatpush1.bf16.msra.mxu0 0
        %504 = vmatprep.subr.bf16.mxu0 0
        %505 = vmatpush1.bf16.msra.mxu0 0
        %506 = vmatprep.subr.bf16.mxu0 0
        %507 = vmatpush1.bf16.msra.mxu0 0
        %508 = vmatprep.subr.bf16.mxu0 0
        %509 = vmatpush1.bf16.msra.mxu0 0
        %510 = vmatprep.subr.bf16.mxu0 0
        %511 = vmatpush1.bf16.msra.mxu0 0
        %512 = vmatprep.subr.bf16.mxu0 0
        %513 = vmatpush1.bf16.msra.mxu0 0
        %514 = vmatprep.subr.bf16.mxu0 0
        %515 = vmatpush1.bf16.msra.mxu0 0
        %516 = vmatprep.subr.bf16.mxu0 0
        %517 = vmatpush1.bf16.msra.mxu0 0
        %518 = vmatprep.subr.bf16.mxu0 0
        %519 = vmatpush1.bf16.msra.mxu0 0
        %520 = vmatprep.mubr.bf16.mxu0 0
        %521 = vmatmul.mubr.bf16.gmra.mrb[0].mxu0 %v441
        %v522 = vpop.f32.mrb[0].mxu0
        %v523 = vadd.f32 0.0, %v522
        %v524 = vpop.f32.mrb[0].mxu0
        %v525 = vpop.f32.mrb[0].mxu0
        %v526 = vadd.f32 0.0, %v525
        %v527 = vpop.f32.mrb[0].mxu0
        %528 = vmatprep.mubr.bf16.mxu0 0
        %529 = vmatmul.mubr.bf16.gmra.mrb[0].mxu0 %v444
        %v530 = vpop.f32.mrb[0].mxu0
        %v531 = vadd.f32 0.0, %v530
        %v532 = vpop.f32.mrb[0].mxu0
        %v533 = vpop.f32.mrb[0].mxu0
        %v534 = vadd.f32 0.0, %v533
        %v535 = vpop.f32.mrb[0].mxu0
        %536 = vmatprep.mubr.bf16.mxu0 0
        %537 = vmatmul.mubr.bf16.gmra.mrb[0].mxu0 %v447
        %v538 = vpop.f32.mrb[0].mxu0
        %v539 = vadd.f32 0.0, %v538
        %v540 = vpop.f32.mrb[0].mxu0
        %v541 = vpop.f32.mrb[0].mxu0
        %v542 = vadd.f32 0.0, %v541
        %v543 = vpop.f32.mrb[0].mxu0
        %544 = vmatprep.mubr.bf16.mxu0 0
        %545 = vmatmul.mubr.bf16.gmra.mrb[0].mxu0 %v450
        %v546 = vpop.f32.mrb[0].mxu0
        %v547 = vadd.f32 0.0, %v546
        %v548 = vpop.f32.mrb[0].mxu0
        %v549 = vpop.f32.mrb[0].mxu0
        %v550 = vadd.f32 0.0, %v549
        %v551 = vpop.f32.mrb[0].mxu0
        %552 = vmatprep.mubr.bf16.mxu0 0
        %553 = vmatmul.mubr.bf16.gmra.mrb[0].mxu0 %v453
        %v554 = vpop.f32.mrb[0].mxu0
        %v555 = vadd.f32 0.0, %v554
        %v556 = vpop.f32.mrb[0].mxu0
        %v557 = vpop.f32.mrb[0].mxu0
        %v558 = vadd.f32 0.0, %v557
        %v559 = vpop.f32.mrb[0].mxu0
        %560 = vmatprep.mubr.bf16.mxu0 0
        %561 = vmatmul.mubr.bf16.gmra.mrb[0].mxu0 %v456
        %v562 = vpop.f32.mrb[0].mxu0
        %v563 = vadd.f32 0.0, %v562
        %v564 = vpop.f32.mrb[0].mxu0
        %v565 = vpop.f32.mrb[0].mxu0
        %v566 = vadd.f32 0.0, %v565
        %v567 = vpop.f32.mrb[0].mxu0
        %568 = vmatprep.mubr.bf16.mxu0 0
        %569 = vmatmul.mubr.bf16.gmra.mrb[0].mxu0 %v459
        %v570 = vpop.f32.mrb[0].mxu0
        %v571 = vadd.f32 0.0, %v570
        %v572 = vpop.f32.mrb[0].mxu0
        %v573 = vpop.f32.mrb[0].mxu0
        %v574 = vadd.f32 0.0, %v573
        %v575 = vpop.f32.mrb[0].mxu0
        %576 = vmatprep.mubr.bf16.mxu0 0
        %577 = vmatmul.mubr.bf16.gmra.mrb[0].mxu0 %v462
        %v578 = vpop.f32.mrb[0].mxu0
        %v579 = vadd.f32 0.0, %v578
        %v580 = vpop.f32.mrb[0].mxu0
        %v581 = vpop.f32.mrb[0].mxu0
        %v582 = vadd.f32 0.0, %v581
        %v583 = vpop.f32.mrb[0].mxu0
        %584 = vmatprep.mubr.bf16.mxu0 0
        %585 = vmatmul.mubr.bf16.gmra.mrb[0].mxu0 %v465
        %v586 = vpop.f32.mrb[0].mxu0
        %v587 = vadd.f32 0.0, %v586
        %v588 = vpop.f32.mrb[0].mxu0
        %v589 = vpop.f32.mrb[0].mxu0
        %v590 = vadd.f32 0.0, %v589
        %v591 = vpop.f32.mrb[0].mxu0
        %592 = vmatprep.mubr.bf16.mxu0 0
        %593 = vmatmul.mubr.bf16.gmra.mrb[0].mxu0 %v468
        %v594 = vpop.f32.mrb[0].mxu0
        %v595 = vadd.f32 0.0, %v594
        %v596 = vpop.f32.mrb[0].mxu0
        %v597 = vpop.f32.mrb[0].mxu0
        %v598 = vadd.f32 0.0, %v597
        %v599 = vpop.f32.mrb[0].mxu0
        %600 = vmatprep.mubr.bf16.mxu0 0
        %601 = vmatmul.mubr.bf16.gmra.mrb[0].mxu0 %v471
        %v602 = vpop.f32.mrb[0].mxu0
        %v603 = vadd.f32 0.0, %v602
        %v604 = vpop.f32.mrb[0].mxu0
        %v605 = vpop.f32.mrb[0].mxu0
        %v606 = vadd.f32 0.0, %v605
        %v607 = vpop.f32.mrb[0].mxu0
        %608 = vmatprep.mubr.bf16.mxu0 0
        %609 = vmatmul.mubr.bf16.gmra.mrb[0].mxu0 %v474
        %v610 = vpop.f32.mrb[0].mxu0
        %v611 = vadd.f32 0.0, %v610
        %v612 = vpop.f32.mrb[0].mxu0
        %v613 = vpop.f32.mrb[0].mxu0
        %v614 = vadd.f32 0.0, %v613
        %v615 = vpop.f32.mrb[0].mxu0
        %616 = vmatprep.mubr.bf16.mxu0 0
        %617 = vmatmul.mubr.bf16.gmra.mrb[0].mxu0 %v477
        %v618 = vpop.f32.mrb[0].mxu0
        %v619 = vadd.f32 0.0, %v618
        %v620 = vpop.f32.mrb[0].mxu0
        %v621 = vpop.f32.mrb[0].mxu0
        %v622 = vadd.f32 0.0, %v621
        %v623 = vpop.f32.mrb[0].mxu0
        %624 = vmatprep.mubr.bf16.mxu0 0
        %625 = vmatmul.mubr.bf16.gmra.mrb[0].mxu0 %v480
        %v626 = vpop.f32.mrb[0].mxu0
        %v627 = vadd.f32 0.0, %v626
        %v628 = vpop.f32.mrb[0].mxu0
        %v629 = vpop.f32.mrb[0].mxu0
        %v630 = vadd.f32 0.0, %v629
        %v631 = vpop.f32.mrb[0].mxu0
        %632 = vmatprep.mubr.bf16.mxu0 0
        %633 = vmatmul.mubr.bf16.gmra.mrb[0].mxu0 %v483
        %v634 = vpop.f32.mrb[0].mxu0
        %v635 = vadd.f32 0.0, %v634
        %v636 = vpop.f32.mrb[0].mxu0
        %v637 = vpop.f32.mrb[0].mxu0
        %v638 = vadd.f32 0.0, %v637
        %v639 = vpop.f32.mrb[0].mxu0
        %640 = vmatprep.mubr.bf16.mxu0 0
        %641 = vmatmul.mubr.bf16.gmra.mrb[0].mxu0 %v486
        %v642 = vpop.f32.mrb[0].mxu0
        %v643 = vadd.f32 0.0, %v642
        %v644 = vpop.f32.mrb[0].mxu0
        %v645 = vpop.f32.mrb[0].mxu0
        %v646 = vadd.f32 0.0, %v645
        %v647 = vpop.f32.mrb[0].mxu0
        %648 = vdwg.mxu0
        %v649 = vld [vmem:[%s2] sm:$0xf]
        %v650 = vld [vmem:[%s2 + $0x4] sm:$0xf]
        %v651 = vld [vmem:[%s2 + $0x8] sm:$0xf]
        %v652 = vld [vmem:[%s2 + $0xc] sm:$0xf]
        %v657 = vunpack.c.l.b16 %v649
        %v658 = vunpack.c.l.b16 %v650
        %v659 = vunpack.c.l.b16 %v651
        %v660 = vunpack.c.l.b16 %v652
        %v661 = vpack.c.b16 %v658, %v657
        %v662 = vpack.c.b16 %v660, %v659
        %665 = vmatprep.subr.bf16.mxu0 0
        %666 = vmatpush1.bf16.msra.mxu0 %v661
        %667 = vmatprep.subr.bf16.mxu0 0
        %668 = vmatpush1.bf16.msra.mxu0 %v662
        %669 = vmatprep.subr.bf16.mxu0 0
        %670 = vmatpush1.bf16.msra.mxu0 0
        %671 = vmatprep.subr.bf16.mxu0 0
        %672 = vmatpush1.bf16.msra.mxu0 0
        %673 = vmatprep.subr.bf16.mxu0 0
        %674 = vmatpush1.bf16.msra.mxu0 0
        %675 = vmatprep.subr.bf16.mxu0 0
        %676 = vmatpush1.bf16.msra.mxu0 0
        %677 = vmatprep.subr.bf16.mxu0 0
        %678 = vmatpush1.bf16.msra.mxu0 0
        %679 = vmatprep.subr.bf16.mxu0 0
        %680 = vmatpush1.bf16.msra.mxu0 0
        %681 = vmatprep.subr.bf16.mxu0 0
        %682 = vmatpush1.bf16.msra.mxu0 0
        %683 = vmatprep.subr.bf16.mxu0 0
        %684 = vmatpush1.bf16.msra.mxu0 0
        %685 = vmatprep.subr.bf16.mxu0 0
        %686 = vmatpush1.bf16.msra.mxu0 0
        %687 = vmatprep.subr.bf16.mxu0 0
        %688 = vmatpush1.bf16.msra.mxu0 0
        %689 = vmatprep.subr.bf16.mxu0 0
        %690 = vmatpush1.bf16.msra.mxu0 0
        %691 = vmatprep.subr.bf16.mxu0 0
        %692 = vmatpush1.bf16.msra.mxu0 0
        %693 = vmatprep.subr.bf16.mxu0 0
        %694 = vmatpush1.bf16.msra.mxu0 0
        %695 = vmatprep.subr.bf16.mxu0 0
        %696 = vmatpush1.bf16.msra.mxu0 0
        %697 = vmatprep.mubr.bf16.mxu0 0
        %698 = vmatmul.mubr.bf16.gmra.mrb[0].mxu0 %v441
        %v699 = vpop.f32.mrb[0].mxu0
        %v700 = vadd.f32 0.0, %v699
        %v701 = vpop.f32.mrb[0].mxu0
        %v702 = vpop.f32.mrb[0].mxu0
        %v703 = vadd.f32 0.0, %v702
        %v704 = vpop.f32.mrb[0].mxu0
        %705 = vmatprep.mubr.bf16.mxu0 0
        %706 = vmatmul.mubr.bf16.gmra.mrb[0].mxu0 %v444
        %v707 = vpop.f32.mrb[0].mxu0
        %v708 = vadd.f32 0.0, %v707
        %v709 = vpop.f32.mrb[0].mxu0
        %v710 = vpop.f32.mrb[0].mxu0
        %v711 = vadd.f32 0.0, %v710
        %v712 = vpop.f32.mrb[0].mxu0
        %713 = vmatprep.mubr.bf16.mxu0 0
        %714 = vmatmul.mubr.bf16.gmra.mrb[0].mxu0 %v447
        %v715 = vpop.f32.mrb[0].mxu0
        %v716 = vadd.f32 0.0, %v715
        %v717 = vpop.f32.mrb[0].mxu0
        %v718 = vpop.f32.mrb[0].mxu0
        %v719 = vadd.f32 0.0, %v718
        %v720 = vpop.f32.mrb[0].mxu0
        %721 = vmatprep.mubr.bf16.mxu0 0
        %722 = vmatmul.mubr.bf16.gmra.mrb[0].mxu0 %v450
        %v723 = vpop.f32.mrb[0].mxu0
        %v724 = vadd.f32 0.0, %v723
        %v725 = vpop.f32.mrb[0].mxu0
        %v726 = vpop.f32.mrb[0].mxu0
        %v727 = vadd.f32 0.0, %v726
        %v728 = vpop.f32.mrb[0].mxu0
        %729 = vmatprep.mubr.bf16.mxu0 0
        %730 = vmatmul.mubr.bf16.gmra.mrb[0].mxu0 %v453
        %v731 = vpop.f32.mrb[0].mxu0
        %v732 = vadd.f32 0.0, %v731
        %v733 = vpop.f32.mrb[0].mxu0
        %v734 = vpop.f32.mrb[0].mxu0
        %v735 = vadd.f32 0.0, %v734
        %v736 = vpop.f32.mrb[0].mxu0
        %737 = vmatprep.mubr.bf16.mxu0 0
        %738 = vmatmul.mubr.bf16.gmra.mrb[0].mxu0 %v456
        %v739 = vpop.f32.mrb[0].mxu0
        %v740 = vadd.f32 0.0, %v739
        %v741 = vpop.f32.mrb[0].mxu0
        %v742 = vpop.f32.mrb[0].mxu0
        %v743 = vadd.f32 0.0, %v742
        %v744 = vpop.f32.mrb[0].mxu0
        %745 = vmatprep.mubr.bf16.mxu0 0
        %746 = vmatmul.mubr.bf16.gmra.mrb[0].mxu0 %v459
        %v747 = vpop.f32.mrb[0].mxu0
        %v748 = vadd.f32 0.0, %v747
        %v749 = vpop.f32.mrb[0].mxu0
        %v750 = vpop.f32.mrb[0].mxu0
        %v751 = vadd.f32 0.0, %v750
        %v752 = vpop.f32.mrb[0].mxu0
        %753 = vmatprep.mubr.bf16.mxu0 0
        %754 = vmatmul.mubr.bf16.gmra.mrb[0].mxu0 %v462
        %v755 = vpop.f32.mrb[0].mxu0
        %v756 = vadd.f32 0.0, %v755
        %v757 = vpop.f32.mrb[0].mxu0
        %v758 = vpop.f32.mrb[0].mxu0
        %v759 = vadd.f32 0.0, %v758
        %v760 = vpop.f32.mrb[0].mxu0
        %761 = vmatprep.mubr.bf16.mxu0 0
        %762 = vmatmul.mubr.bf16.gmra.mrb[0].mxu0 %v465
        %v763 = vpop.f32.mrb[0].mxu0
        %v764 = vadd.f32 0.0, %v763
        %v765 = vpop.f32.mrb[0].mxu0
        %v766 = vpop.f32.mrb[0].mxu0
        %v767 = vadd.f32 0.0, %v766
        %v768 = vpop.f32.mrb[0].mxu0
        %769 = vmatprep.mubr.bf16.mxu0 0
        %770 = vmatmul.mubr.bf16.gmra.mrb[0].mxu0 %v468
        %v771 = vpop.f32.mrb[0].mxu0
        %v772 = vadd.f32 0.0, %v771
        %v773 = vpop.f32.mrb[0].mxu0
        %v774 = vpop.f32.mrb[0].mxu0
        %v775 = vadd.f32 0.0, %v774
        %v776 = vpop.f32.mrb[0].mxu0
        %777 = vmatprep.mubr.bf16.mxu0 0
        %778 = vmatmul.mubr.bf16.gmra.mrb[0].mxu0 %v471
        %v779 = vpop.f32.mrb[0].mxu0
        %v780 = vadd.f32 0.0, %v779
        %v781 = vpop.f32.mrb[0].mxu0
        %v782 = vpop.f32.mrb[0].mxu0
        %v783 = vadd.f32 0.0, %v782
        %v784 = vpop.f32.mrb[0].mxu0
        %785 = vmatprep.mubr.bf16.mxu0 0
        %786 = vmatmul.mubr.bf16.gmra.mrb[0].mxu0 %v474
        %v787 = vpop.f32.mrb[0].mxu0
        %v788 = vadd.f32 0.0, %v787
        %v789 = vpop.f32.mrb[0].mxu0
        %v790 = vpop.f32.mrb[0].mxu0
        %v791 = vadd.f32 0.0, %v790
        %v792 = vpop.f32.mrb[0].mxu0
        %793 = vmatprep.mubr.bf16.mxu0 0
        %794 = vmatmul.mubr.bf16.gmra.mrb[0].mxu0 %v477
        %v795 = vpop.f32.mrb[0].mxu0
        %v796 = vadd.f32 0.0, %v795
        %v797 = vpop.f32.mrb[0].mxu0
        %v798 = vpop.f32.mrb[0].mxu0
        %v799 = vadd.f32 0.0, %v798
        %v800 = vpop.f32.mrb[0].mxu0
        %801 = vmatprep.mubr.bf16.mxu0 0
        %802 = vmatmul.mubr.bf16.gmra.mrb[0].mxu0 %v480
        %v803 = vpop.f32.mrb[0].mxu0
        %v804 = vadd.f32 0.0, %v803
        %v805 = vpop.f32.mrb[0].mxu0
        %v806 = vpop.f32.mrb[0].mxu0
        %v807 = vadd.f32 0.0, %v806
        %v808 = vpop.f32.mrb[0].mxu0
        %809 = vmatprep.mubr.bf16.mxu0 0
        %810 = vmatmul.mubr.bf16.gmra.mrb[0].mxu0 %v483
        %v811 = vpop.f32.mrb[0].mxu0
        %v812 = vadd.f32 0.0, %v811
        %v813 = vpop.f32.mrb[0].mxu0
        %v814 = vpop.f32.mrb[0].mxu0
        %v815 = vadd.f32 0.0, %v814
        %v816 = vpop.f32.mrb[0].mxu0
        %817 = vmatprep.mubr.bf16.mxu0 0
        %818 = vmatmul.mubr.bf16.gmra.mrb[0].mxu0 %v486
        %v819 = vpop.f32.mrb[0].mxu0
        %v820 = vadd.f32 0.0, %v819
        %v821 = vpop.f32.mrb[0].mxu0
        %v822 = vpop.f32.mrb[0].mxu0
        %v823 = vadd.f32 0.0, %v822
        %v824 = vpop.f32.mrb[0].mxu0
        %825 = vdwg.mxu0
        %v826 = vpack.c.bf16 %v526, %v523
        %v827 = vpack.c.bf16 %v534, %v531
        %v828 = vpack.c.bf16 %v542, %v539
        %v829 = vpack.c.bf16 %v550, %v547
        %v830 = vpack.c.bf16 %v558, %v555
        %v831 = vpack.c.bf16 %v566, %v563
        %v832 = vpack.c.bf16 %v574, %v571
        %v833 = vpack.c.bf16 %v582, %v579
        %v834 = vpack.c.bf16 %v590, %v587
        %v835 = vpack.c.bf16 %v598, %v595
        %v836 = vpack.c.bf16 %v606, %v603
        %v837 = vpack.c.bf16 %v614, %v611
        %v838 = vpack.c.bf16 %v622, %v619
        %v839 = vpack.c.bf16 %v630, %v627
        %v840 = vpack.c.bf16 %v638, %v635
        %v841 = vpack.c.bf16 %v646, %v643
        %v858 = vunpack.c.l.b16 %v826
        %v859 = vunpack.c.h.b16 %v826
        %v860 = vunpack.c.l.b16 %v827
        %v861 = vunpack.c.h.b16 %v827
        %v862 = vunpack.c.l.b16 %v828
        %v863 = vunpack.c.h.b16 %v828
        %v864 = vunpack.c.l.b16 %v829
        %v865 = vunpack.c.h.b16 %v829
        %v866 = vunpack.c.l.b16 %v830
        %v867 = vunpack.c.h.b16 %v830
        %v868 = vunpack.c.l.b16 %v831
        %v869 = vunpack.c.h.b16 %v831
        %v870 = vunpack.c.l.b16 %v832
        %v871 = vunpack.c.h.b16 %v832
        %v872 = vunpack.c.l.b16 %v833
        %v873 = vunpack.c.h.b16 %v833
        %v874 = vunpack.c.l.b16 %v834
        %v875 = vunpack.c.h.b16 %v834
        %v876 = vunpack.c.l.b16 %v835
        %v877 = vunpack.c.h.b16 %v835
        %v878 = vunpack.c.l.b16 %v836
        %v879 = vunpack.c.h.b16 %v836
        %v880 = vunpack.c.l.b16 %v837
        %v881 = vunpack.c.h.b16 %v837
        %v882 = vunpack.c.l.b16 %v838
        %v883 = vunpack.c.h.b16 %v838
        %v884 = vunpack.c.l.b16 %v839
        %v885 = vunpack.c.h.b16 %v839
        %v886 = vunpack.c.l.b16 %v840
        %v887 = vunpack.c.h.b16 %v840
        %v888 = vunpack.c.l.b16 %v841
        %v889 = vunpack.c.h.b16 %v841
        %v890 = vpack.c.b16 %v858, %v858
        %v891 = vpack.c.b16 %v859, %v859
        %v892 = vpack.c.b16 %v860, %v860
        %v893 = vpack.c.b16 %v861, %v861
        %v894 = vpack.c.b16 %v862, %v862
        %v895 = vpack.c.b16 %v863, %v863
        %v896 = vpack.c.b16 %v864, %v864
        %v897 = vpack.c.b16 %v865, %v865
        %v898 = vpack.c.b16 %v866, %v866
        %v899 = vpack.c.b16 %v867, %v867
        %v900 = vpack.c.b16 %v868, %v868
        %v901 = vpack.c.b16 %v869, %v869
        %v902 = vpack.c.b16 %v870, %v870
        %v903 = vpack.c.b16 %v871, %v871
        %v904 = vpack.c.b16 %v872, %v872
        %v905 = vpack.c.b16 %v873, %v873
        %v906 = vpack.c.b16 %v874, %v874
        %v907 = vpack.c.b16 %v875, %v875
        %v908 = vpack.c.b16 %v876, %v876
        %v909 = vpack.c.b16 %v877, %v877
        %v910 = vpack.c.b16 %v878, %v878
        %v911 = vpack.c.b16 %v879, %v879
        %v912 = vpack.c.b16 %v880, %v880
        %v913 = vpack.c.b16 %v881, %v881
        %v914 = vpack.c.b16 %v882, %v882
        %v915 = vpack.c.b16 %v883, %v883
        %v916 = vpack.c.b16 %v884, %v884
        %v917 = vpack.c.b16 %v885, %v885
        %v918 = vpack.c.b16 %v886, %v886
        %v919 = vpack.c.b16 %v887, %v887
        %v920 = vpack.c.b16 %v888, %v888
        %v921 = vpack.c.b16 %v889, %v889
        %vm954 = vcmask 60416
        %955 = vst.msk [vmem:[%s354] sm:$0xf] %vm954, %v890
        %956 = vst.msk [vmem:[%s354 + $0x4] sm:$0xf] %vm954, %v891
        %957 = vst.msk [vmem:[%s354 + $0x8] sm:$0xf] %vm954, %v892
        %958 = vst.msk [vmem:[%s354 + $0xc] sm:$0xf] %vm954, %v893
        %959 = vst.msk [vmem:[%s354 + $0x10] sm:$0xf] %vm954, %v894
        %960 = vst.msk [vmem:[%s354 + $0x14] sm:$0xf] %vm954, %v895
        %961 = vst.msk [vmem:[%s354 + $0x18] sm:$0xf] %vm954, %v896
        %962 = vst.msk [vmem:[%s354 + $0x1c] sm:$0xf] %vm954, %v897
        %963 = vst.msk [vmem:[%s354 + $0x20] sm:$0xf] %vm954, %v898
        %964 = vst.msk [vmem:[%s354 + $0x24] sm:$0xf] %vm954, %v899
        %965 = vst.msk [vmem:[%s354 + $0x28] sm:$0xf] %vm954, %v900
        %966 = vst.msk [vmem:[%s354 + $0x2c] sm:$0xf] %vm954, %v901
        %967 = vst.msk [vmem:[%s354 + $0x30] sm:$0xf] %vm954, %v902
        %968 = vst.msk [vmem:[%s354 + $0x34] sm:$0xf] %vm954, %v903
        %969 = vst.msk [vmem:[%s354 + $0x38] sm:$0xf] %vm954, %v904
        %970 = vst.msk [vmem:[%s354 + $0x3c] sm:$0xf] %vm954, %v905
        %971 = vst.msk [vmem:[%s354 + $0x40] sm:$0xf] %vm954, %v906
        %972 = vst.msk [vmem:[%s354 + $0x44] sm:$0xf] %vm954, %v907
        %973 = vst.msk [vmem:[%s354 + $0x48] sm:$0xf] %vm954, %v908
        %974 = vst.msk [vmem:[%s354 + $0x4c] sm:$0xf] %vm954, %v909
        %975 = vst.msk [vmem:[%s354 + $0x50] sm:$0xf] %vm954, %v910
        %976 = vst.msk [vmem:[%s354 + $0x54] sm:$0xf] %vm954, %v911
        %977 = vst.msk [vmem:[%s354 + $0x58] sm:$0xf] %vm954, %v912
        %978 = vst.msk [vmem:[%s354 + $0x5c] sm:$0xf] %vm954, %v913
        %979 = vst.msk [vmem:[%s354 + $0x60] sm:$0xf] %vm954, %v914
        %980 = vst.msk [vmem:[%s354 + $0x64] sm:$0xf] %vm954, %v915
        %981 = vst.msk [vmem:[%s354 + $0x68] sm:$0xf] %vm954, %v916
        %982 = vst.msk [vmem:[%s354 + $0x6c] sm:$0xf] %vm954, %v917
        %983 = vst.msk [vmem:[%s354 + $0x70] sm:$0xf] %vm954, %v918
        %984 = vst.msk [vmem:[%s354 + $0x74] sm:$0xf] %vm954, %v919
        %985 = vst.msk [vmem:[%s354 + $0x78] sm:$0xf] %vm954, %v920
        %986 = vst.msk [vmem:[%s354 + $0x7c] sm:$0xf] %vm954, %v921
        %v987 = vpack.c.bf16 %v703, %v700
        %v988 = vpack.c.bf16 %v711, %v708
        %v989 = vpack.c.bf16 %v719, %v716
        %v990 = vpack.c.bf16 %v727, %v724
        %v991 = vpack.c.bf16 %v735, %v732
        %v992 = vpack.c.bf16 %v743, %v740
        %v993 = vpack.c.bf16 %v751, %v748
        %v994 = vpack.c.bf16 %v759, %v756
        %v995 = vpack.c.bf16 %v767, %v764
        %v996 = vpack.c.bf16 %v775, %v772
        %v997 = vpack.c.bf16 %v783, %v780
        %v998 = vpack.c.bf16 %v791, %v788
        %v999 = vpack.c.bf16 %v799, %v796
        %v1000 = vpack.c.bf16 %v807, %v804
        %v1001 = vpack.c.bf16 %v815, %v812
        %v1002 = vpack.c.bf16 %v823, %v820
        %v1019 = vunpack.c.l.b16 %v987
        %v1020 = vunpack.c.h.b16 %v987
        %v1021 = vunpack.c.l.b16 %v988
        %v1022 = vunpack.c.h.b16 %v988
        %v1023 = vunpack.c.l.b16 %v989
        %v1024 = vunpack.c.h.b16 %v989
        %v1025 = vunpack.c.l.b16 %v990
        %v1026 = vunpack.c.h.b16 %v990
        %v1027 = vunpack.c.l.b16 %v991
        %v1028 = vunpack.c.h.b16 %v991
        %v1029 = vunpack.c.l.b16 %v992
        %v1030 = vunpack.c.h.b16 %v992
        %v1031 = vunpack.c.l.b16 %v993
        %v1032 = vunpack.c.h.b16 %v993
        %v1033 = vunpack.c.l.b16 %v994
        %v1034 = vunpack.c.h.b16 %v994
        %v1035 = vunpack.c.l.b16 %v995
        %v1036 = vunpack.c.h.b16 %v995
        %v1037 = vunpack.c.l.b16 %v996
        %v1038 = vunpack.c.h.b16 %v996
        %v1039 = vunpack.c.l.b16 %v997
        %v1040 = vunpack.c.h.b16 %v997
        %v1041 = vunpack.c.l.b16 %v998
        %v1042 = vunpack.c.h.b16 %v998
        %v1043 = vunpack.c.l.b16 %v999
        %v1044 = vunpack.c.h.b16 %v999
        %v1045 = vunpack.c.l.b16 %v1000
        %v1046 = vunpack.c.h.b16 %v1000
        %v1047 = vunpack.c.l.b16 %v1001
        %v1048 = vunpack.c.h.b16 %v1001
        %v1049 = vunpack.c.l.b16 %v1002
        %v1050 = vunpack.c.h.b16 %v1002
        %v1051 = vpack.c.b16 %v1019, %v1019
        %v1052 = vpack.c.b16 %v1020, %v1020
        %v1053 = vpack.c.b16 %v1021, %v1021
        %v1054 = vpack.c.b16 %v1022, %v1022
        %v1055 = vpack.c.b16 %v1023, %v1023
        %v1056 = vpack.c.b16 %v1024, %v1024
        %v1057 = vpack.c.b16 %v1025, %v1025
        %v1058 = vpack.c.b16 %v1026, %v1026
        %v1059 = vpack.c.b16 %v1027, %v1027
        %v1060 = vpack.c.b16 %v1028, %v1028
        %v1061 = vpack.c.b16 %v1029, %v1029
        %v1062 = vpack.c.b16 %v1030, %v1030
        %v1063 = vpack.c.b16 %v1031, %v1031
        %v1064 = vpack.c.b16 %v1032, %v1032
        %v1065 = vpack.c.b16 %v1033, %v1033
        %v1066 = vpack.c.b16 %v1034, %v1034
        %v1067 = vpack.c.b16 %v1035, %v1035
        %v1068 = vpack.c.b16 %v1036, %v1036
        %v1069 = vpack.c.b16 %v1037, %v1037
        %v1070 = vpack.c.b16 %v1038, %v1038
        %v1071 = vpack.c.b16 %v1039, %v1039
        %v1072 = vpack.c.b16 %v1040, %v1040
        %v1073 = vpack.c.b16 %v1041, %v1041
        %v1074 = vpack.c.b16 %v1042, %v1042
        %v1075 = vpack.c.b16 %v1043, %v1043
        %v1076 = vpack.c.b16 %v1044, %v1044
        %v1077 = vpack.c.b16 %v1045, %v1045
        %v1078 = vpack.c.b16 %v1046, %v1046
        %v1079 = vpack.c.b16 %v1047, %v1047
        %v1080 = vpack.c.b16 %v1048, %v1048
        %v1081 = vpack.c.b16 %v1049, %v1049
        %v1082 = vpack.c.b16 %v1050, %v1050
        %vm1115 = vcmask 257024
        %1116 = vst.msk [vmem:[%s360] sm:$0xf] %vm1115, %v1051
        %1117 = vst.msk [vmem:[%s360 + $0x4] sm:$0xf] %vm1115, %v1052
        %1118 = vst.msk [vmem:[%s360 + $0x8] sm:$0xf] %vm1115, %v1053
        %1119 = vst.msk [vmem:[%s360 + $0xc] sm:$0xf] %vm1115, %v1054
        %1120 = vst.msk [vmem:[%s360 + $0x10] sm:$0xf] %vm1115, %v1055
        %1121 = vst.msk [vmem:[%s360 + $0x14] sm:$0xf] %vm1115, %v1056
        %1122 = vst.msk [vmem:[%s360 + $0x18] sm:$0xf] %vm1115, %v1057
        %1123 = vst.msk [vmem:[%s360 + $0x1c] sm:$0xf] %vm1115, %v1058
        %1124 = vst.msk [vmem:[%s360 + $0x20] sm:$0xf] %vm1115, %v1059
        %1125 = vst.msk [vmem:[%s360 + $0x24] sm:$0xf] %vm1115, %v1060
        %1126 = vst.msk [vmem:[%s360 + $0x28] sm:$0xf] %vm1115, %v1061
        %1127 = vst.msk [vmem:[%s360 + $0x2c] sm:$0xf] %vm1115, %v1062
        %1128 = vst.msk [vmem:[%s360 + $0x30] sm:$0xf] %vm1115, %v1063
        %1129 = vst.msk [vmem:[%s360 + $0x34] sm:$0xf] %vm1115, %v1064
        %1130 = vst.msk [vmem:[%s360 + $0x38] sm:$0xf] %vm1115, %v1065
        %1131 = vst.msk [vmem:[%s360 + $0x3c] sm:$0xf] %vm1115, %v1066
        %1132 = vst.msk [vmem:[%s360 + $0x40] sm:$0xf] %vm1115, %v1067
        %1133 = vst.msk [vmem:[%s360 + $0x44] sm:$0xf] %vm1115, %v1068
        %1134 = vst.msk [vmem:[%s360 + $0x48] sm:$0xf] %vm1115, %v1069
        %1135 = vst.msk [vmem:[%s360 + $0x4c] sm:$0xf] %vm1115, %v1070
        %1136 = vst.msk [vmem:[%s360 + $0x50] sm:$0xf] %vm1115, %v1071
        %1137 = vst.msk [vmem:[%s360 + $0x54] sm:$0xf] %vm1115, %v1072
        %1138 = vst.msk [vmem:[%s360 + $0x58] sm:$0xf] %vm1115, %v1073
        %1139 = vst.msk [vmem:[%s360 + $0x5c] sm:$0xf] %vm1115, %v1074
        %1140 = vst.msk [vmem:[%s360 + $0x60] sm:$0xf] %vm1115, %v1075
        %1141 = vst.msk [vmem:[%s360 + $0x64] sm:$0xf] %vm1115, %v1076
        %1142 = vst.msk [vmem:[%s360 + $0x68] sm:$0xf] %vm1115, %v1077
        %1143 = vst.msk [vmem:[%s360 + $0x6c] sm:$0xf] %vm1115, %v1078
        %1144 = vst.msk [vmem:[%s360 + $0x70] sm:$0xf] %vm1115, %v1079
        %1145 = vst.msk [vmem:[%s360 + $0x74] sm:$0xf] %vm1115, %v1080
        %1146 = vst.msk [vmem:[%s360 + $0x78] sm:$0xf] %vm1115, %v1081
        %1147 = vst.msk [vmem:[%s360 + $0x7c] sm:$0xf] %vm1115, %v1082
        %vm1148 = vcmask 64512
        %v1149 = vsel %vm1148, %v523, 0.0
        %v1150 = vsel %vm1148, %v526, 0.0
        %v1151 = vadd.f32 %v1149, %v1150
        %v1152 = vsel %vm1148, %v531, 0.0
        %v1153 = vadd.f32 %v1151, %v1152
        %v1154 = vsel %vm1148, %v534, 0.0
        %v1155 = vadd.f32 %v1153, %v1154
        %v1156 = vsel %vm1148, %v539, 0.0
        %v1157 = vadd.f32 %v1155, %v1156
        %v1158 = vsel %vm1148, %v542, 0.0
        %v1159 = vadd.f32 %v1157, %v1158
        %v1160 = vsel %vm1148, %v547, 0.0
        %v1161 = vadd.f32 %v1159, %v1160
        %v1162 = vsel %vm1148, %v550, 0.0
        %v1163 = vadd.f32 %v1161, %v1162
        %v1164 = vsel %vm1148, %v555, 0.0
        %v1165 = vadd.f32 %v1163, %v1164
        %v1166 = vsel %vm1148, %v558, 0.0
        %v1167 = vadd.f32 %v1165, %v1166
        %v1168 = vsel %vm1148, %v563, 0.0
        %v1169 = vadd.f32 %v1167, %v1168
        %v1170 = vsel %vm1148, %v566, 0.0
        %v1171 = vadd.f32 %v1169, %v1170
        %v1172 = vsel %vm1148, %v571, 0.0
        %v1173 = vadd.f32 %v1171, %v1172
        %v1174 = vsel %vm1148, %v574, 0.0
        %v1175 = vadd.f32 %v1173, %v1174
        %v1176 = vsel %vm1148, %v579, 0.0
        %v1177 = vadd.f32 %v1175, %v1176
        %v1178 = vsel %vm1148, %v582, 0.0
        %v1179 = vadd.f32 %v1177, %v1178
        %v1180 = vsel %vm1148, %v587, 0.0
        %v1181 = vadd.f32 %v1179, %v1180
        %v1182 = vsel %vm1148, %v590, 0.0
        %v1183 = vadd.f32 %v1181, %v1182
        %v1184 = vsel %vm1148, %v595, 0.0
        %v1185 = vadd.f32 %v1183, %v1184
        %v1186 = vsel %vm1148, %v598, 0.0
        %v1187 = vadd.f32 %v1185, %v1186
        %v1188 = vsel %vm1148, %v603, 0.0
        %v1189 = vadd.f32 %v1187, %v1188
        %v1190 = vsel %vm1148, %v606, 0.0
        %v1191 = vadd.f32 %v1189, %v1190
        %v1192 = vsel %vm1148, %v611, 0.0
        %v1193 = vadd.f32 %v1191, %v1192
        %v1194 = vsel %vm1148, %v614, 0.0
        %v1195 = vadd.f32 %v1193, %v1194
        %v1196 = vsel %vm1148, %v619, 0.0
        %v1197 = vadd.f32 %v1195, %v1196
        %v1198 = vsel %vm1148, %v622, 0.0
        %v1199 = vadd.f32 %v1197, %v1198
        %v1200 = vsel %vm1148, %v627, 0.0
        %v1201 = vadd.f32 %v1199, %v1200
        %v1202 = vsel %vm1148, %v630, 0.0
        %v1203 = vadd.f32 %v1201, %v1202
        %v1204 = vsel %vm1148, %v635, 0.0
        %v1205 = vadd.f32 %v1203, %v1204
        %v1206 = vsel %vm1148, %v638, 0.0
        %v1207 = vadd.f32 %v1205, %v1206
        %v1208 = vsel %vm1148, %v643, 0.0
        %v1209 = vadd.f32 %v1207, %v1208
        %v1210 = vsel %vm1148, %v646, 0.0
        %v1211 = vadd.f32 %v1209, %v1210
        %v1212 = vrot.slane %v1211, 4
        %v1213 = vadd.f32 %v1211, %v1212
        %v1214 = vrot.slane %v1213, 2
        %v1215 = vadd.f32 %v1213, %v1214
        %v1216 = vrot.slane %v1215, 1
        %v1217 = vadd.f32 %v1215, %v1216
        %vm1218 = vcmask 57344
        %1219 = vst.msk [vmem:[%s364] sm:$0x1] %vm1218, %v1217
        %v1220 = vmul.f32 %v523, %v523
        %v1221 = vmul.f32 %v526, %v526
        %v1222 = vmul.f32 %v531, %v531
        %v1223 = vmul.f32 %v534, %v534
        %v1224 = vmul.f32 %v539, %v539
        %v1225 = vmul.f32 %v542, %v542
        %v1226 = vmul.f32 %v547, %v547
        %v1227 = vmul.f32 %v550, %v550
        %v1228 = vmul.f32 %v555, %v555
        %v1229 = vmul.f32 %v558, %v558
        %v1230 = vmul.f32 %v563, %v563
        %v1231 = vmul.f32 %v566, %v566
        %v1232 = vmul.f32 %v571, %v571
        %v1233 = vmul.f32 %v574, %v574
        %v1234 = vmul.f32 %v579, %v579
        %v1235 = vmul.f32 %v582, %v582
        %v1236 = vmul.f32 %v587, %v587
        %v1237 = vmul.f32 %v590, %v590
        %v1238 = vmul.f32 %v595, %v595
        %v1239 = vmul.f32 %v598, %v598
        %v1240 = vmul.f32 %v603, %v603
        %v1241 = vmul.f32 %v606, %v606
        %v1242 = vmul.f32 %v611, %v611
        %v1243 = vmul.f32 %v614, %v614
        %v1244 = vmul.f32 %v619, %v619
        %v1245 = vmul.f32 %v622, %v622
        %v1246 = vmul.f32 %v627, %v627
        %v1247 = vmul.f32 %v630, %v630
        %v1248 = vmul.f32 %v635, %v635
        %v1249 = vmul.f32 %v638, %v638
        %v1250 = vmul.f32 %v643, %v643
        %v1251 = vmul.f32 %v646, %v646
        %v1252 = vsel %vm1148, %v1220, 0.0
        %v1253 = vsel %vm1148, %v1221, 0.0
        %v1254 = vadd.f32 %v1252, %v1253
        %v1255 = vsel %vm1148, %v1222, 0.0
        %v1256 = vadd.f32 %v1254, %v1255
        %v1257 = vsel %vm1148, %v1223, 0.0
        %v1258 = vadd.f32 %v1256, %v1257
        %v1259 = vsel %vm1148, %v1224, 0.0
        %v1260 = vadd.f32 %v1258, %v1259
        %v1261 = vsel %vm1148, %v1225, 0.0
        %v1262 = vadd.f32 %v1260, %v1261
        %v1263 = vsel %vm1148, %v1226, 0.0
        %v1264 = vadd.f32 %v1262, %v1263
        %v1265 = vsel %vm1148, %v1227, 0.0
        %v1266 = vadd.f32 %v1264, %v1265
        %v1267 = vsel %vm1148, %v1228, 0.0
        %v1268 = vadd.f32 %v1266, %v1267
        %v1269 = vsel %vm1148, %v1229, 0.0
        %v1270 = vadd.f32 %v1268, %v1269
        %v1271 = vsel %vm1148, %v1230, 0.0
        %v1272 = vadd.f32 %v1270, %v1271
        %v1273 = vsel %vm1148, %v1231, 0.0
        %v1274 = vadd.f32 %v1272, %v1273
        %v1275 = vsel %vm1148, %v1232, 0.0
        %v1276 = vadd.f32 %v1274, %v1275
        %v1277 = vsel %vm1148, %v1233, 0.0
        %v1278 = vadd.f32 %v1276, %v1277
        %v1279 = vsel %vm1148, %v1234, 0.0
        %v1280 = vadd.f32 %v1278, %v1279
        %v1281 = vsel %vm1148, %v1235, 0.0
        %v1282 = vadd.f32 %v1280, %v1281
        %v1283 = vsel %vm1148, %v1236, 0.0
        %v1284 = vadd.f32 %v1282, %v1283
        %v1285 = vsel %vm1148, %v1237, 0.0
        %v1286 = vadd.f32 %v1284, %v1285
        %v1287 = vsel %vm1148, %v1238, 0.0
        %v1288 = vadd.f32 %v1286, %v1287
        %v1289 = vsel %vm1148, %v1239, 0.0
        %v1290 = vadd.f32 %v1288, %v1289
        %v1291 = vsel %vm1148, %v1240, 0.0
        %v1292 = vadd.f32 %v1290, %v1291
        %v1293 = vsel %vm1148, %v1241, 0.0
        %v1294 = vadd.f32 %v1292, %v1293
        %v1295 = vsel %vm1148, %v1242, 0.0
        %v1296 = vadd.f32 %v1294, %v1295
        %v1297 = vsel %vm1148, %v1243, 0.0
        %v1298 = vadd.f32 %v1296, %v1297
        %v1299 = vsel %vm1148, %v1244, 0.0
        %v1300 = vadd.f32 %v1298, %v1299
        %v1301 = vsel %vm1148, %v1245, 0.0
        %v1302 = vadd.f32 %v1300, %v1301
        %v1303 = vsel %vm1148, %v1246, 0.0
        %v1304 = vadd.f32 %v1302, %v1303
        %v1305 = vsel %vm1148, %v1247, 0.0
        %v1306 = vadd.f32 %v1304, %v1305
        %v1307 = vsel %vm1148, %v1248, 0.0
        %v1308 = vadd.f32 %v1306, %v1307
        %v1309 = vsel %vm1148, %v1249, 0.0
        %v1310 = vadd.f32 %v1308, %v1309
        %v1311 = vsel %vm1148, %v1250, 0.0
        %v1312 = vadd.f32 %v1310, %v1311
        %v1313 = vsel %vm1148, %v1251, 0.0
        %v1314 = vadd.f32 %v1312, %v1313
        %v1315 = vrot.slane %v1314, 4
        %v1316 = vadd.f32 %v1314, %v1315
        %v1317 = vrot.slane %v1316, 2
        %v1318 = vadd.f32 %v1316, %v1317
        %v1319 = vrot.slane %v1318, 1
        %v1320 = vadd.f32 %v1318, %v1319
        %1321 = vst.msk [vmem:[%s367] sm:$0x1] %vm1218, %v1320
        %v1322 = vsel %vm439, %v700, 0.0
        %v1323 = vsel %vm439, %v703, 0.0
        %v1324 = vadd.f32 %v1322, %v1323
        %v1325 = vsel %vm439, %v708, 0.0
        %v1326 = vadd.f32 %v1324, %v1325
        %v1327 = vsel %vm439, %v711, 0.0
        %v1328 = vadd.f32 %v1326, %v1327
        %v1329 = vsel %vm439, %v716, 0.0
        %v1330 = vadd.f32 %v1328, %v1329
        %v1331 = vsel %vm439, %v719, 0.0
        %v1332 = vadd.f32 %v1330, %v1331
        %v1333 = vsel %vm439, %v724, 0.0
        %v1334 = vadd.f32 %v1332, %v1333
        %v1335 = vsel %vm439, %v727, 0.0
        %v1336 = vadd.f32 %v1334, %v1335
        %v1337 = vsel %vm439, %v732, 0.0
        %v1338 = vadd.f32 %v1336, %v1337
        %v1339 = vsel %vm439, %v735, 0.0
        %v1340 = vadd.f32 %v1338, %v1339
        %v1341 = vsel %vm439, %v740, 0.0
        %v1342 = vadd.f32 %v1340, %v1341
        %v1343 = vsel %vm439, %v743, 0.0
        %v1344 = vadd.f32 %v1342, %v1343
        %v1345 = vsel %vm439, %v748, 0.0
        %v1346 = vadd.f32 %v1344, %v1345
        %v1347 = vsel %vm439, %v751, 0.0
        %v1348 = vadd.f32 %v1346, %v1347
        %v1349 = vsel %vm439, %v756, 0.0
        %v1350 = vadd.f32 %v1348, %v1349
        %v1351 = vsel %vm439, %v759, 0.0
        %v1352 = vadd.f32 %v1350, %v1351
        %v1353 = vsel %vm439, %v764, 0.0
        %v1354 = vadd.f32 %v1352, %v1353
        %v1355 = vsel %vm439, %v767, 0.0
        %v1356 = vadd.f32 %v1354, %v1355
        %v1357 = vsel %vm439, %v772, 0.0
        %v1358 = vadd.f32 %v1356, %v1357
        %v1359 = vsel %vm439, %v775, 0.0
        %v1360 = vadd.f32 %v1358, %v1359
        %v1361 = vsel %vm439, %v780, 0.0
        %v1362 = vadd.f32 %v1360, %v1361
        %v1363 = vsel %vm439, %v783, 0.0
        %v1364 = vadd.f32 %v1362, %v1363
        %v1365 = vsel %vm439, %v788, 0.0
        %v1366 = vadd.f32 %v1364, %v1365
        %v1367 = vsel %vm439, %v791, 0.0
        %v1368 = vadd.f32 %v1366, %v1367
        %v1369 = vsel %vm439, %v796, 0.0
        %v1370 = vadd.f32 %v1368, %v1369
        %v1371 = vsel %vm439, %v799, 0.0
        %v1372 = vadd.f32 %v1370, %v1371
        %v1373 = vsel %vm439, %v804, 0.0
        %v1374 = vadd.f32 %v1372, %v1373
        %v1375 = vsel %vm439, %v807, 0.0
        %v1376 = vadd.f32 %v1374, %v1375
        %v1377 = vsel %vm439, %v812, 0.0
        %v1378 = vadd.f32 %v1376, %v1377
        %v1379 = vsel %vm439, %v815, 0.0
        %v1380 = vadd.f32 %v1378, %v1379
        %v1381 = vsel %vm439, %v820, 0.0
        %v1382 = vadd.f32 %v1380, %v1381
        %v1383 = vsel %vm439, %v823, 0.0
        %v1384 = vadd.f32 %v1382, %v1383
        %v1385 = vrot.slane %v1384, 4
        %v1386 = vadd.f32 %v1384, %v1385
        %v1387 = vrot.slane %v1386, 2
        %v1388 = vadd.f32 %v1386, %v1387
        %v1389 = vrot.slane %v1388, 1
        %v1390 = vadd.f32 %v1388, %v1389
        %vm1391 = vcmask 253952
        %1392 = vst.msk [vmem:[%s370] sm:$0x1] %vm1391, %v1390
        %v1393 = vmul.f32 %v700, %v700
        %v1394 = vmul.f32 %v703, %v703
        %v1395 = vmul.f32 %v708, %v708
        %v1396 = vmul.f32 %v711, %v711
        %v1397 = vmul.f32 %v716, %v716
        %v1398 = vmul.f32 %v719, %v719
        %v1399 = vmul.f32 %v724, %v724
        %v1400 = vmul.f32 %v727, %v727
        %v1401 = vmul.f32 %v732, %v732
        %v1402 = vmul.f32 %v735, %v735
        %v1403 = vmul.f32 %v740, %v740
        %v1404 = vmul.f32 %v743, %v743
        %v1405 = vmul.f32 %v748, %v748
        %v1406 = vmul.f32 %v751, %v751
        %v1407 = vmul.f32 %v756, %v756
        %v1408 = vmul.f32 %v759, %v759
        %v1409 = vmul.f32 %v764, %v764
        %v1410 = vmul.f32 %v767, %v767
        %v1411 = vmul.f32 %v772, %v772
        %v1412 = vmul.f32 %v775, %v775
        %v1413 = vmul.f32 %v780, %v780
        %v1414 = vmul.f32 %v783, %v783
        %v1415 = vmul.f32 %v788, %v788
        %v1416 = vmul.f32 %v791, %v791
        %v1417 = vmul.f32 %v796, %v796
        %v1418 = vmul.f32 %v799, %v799
        %v1419 = vmul.f32 %v804, %v804
        %v1420 = vmul.f32 %v807, %v807
        %v1421 = vmul.f32 %v812, %v812
        %v1422 = vmul.f32 %v815, %v815
        %v1423 = vmul.f32 %v820, %v820
        %v1424 = vmul.f32 %v823, %v823
        %v1425 = vsel %vm439, %v1393, 0.0
        %v1426 = vsel %vm439, %v1394, 0.0
        %v1427 = vadd.f32 %v1425, %v1426
        %v1428 = vsel %vm439, %v1395, 0.0
        %v1429 = vadd.f32 %v1427, %v1428
        %v1430 = vsel %vm439, %v1396, 0.0
        %v1431 = vadd.f32 %v1429, %v1430
        %v1432 = vsel %vm439, %v1397, 0.0
        %v1433 = vadd.f32 %v1431, %v1432
        %v1434 = vsel %vm439, %v1398, 0.0
        %v1435 = vadd.f32 %v1433, %v1434
        %v1436 = vsel %vm439, %v1399, 0.0
        %v1437 = vadd.f32 %v1435, %v1436
        %v1438 = vsel %vm439, %v1400, 0.0
        %v1439 = vadd.f32 %v1437, %v1438
        %v1440 = vsel %vm439, %v1401, 0.0
        %v1441 = vadd.f32 %v1439, %v1440
        %v1442 = vsel %vm439, %v1402, 0.0
        %v1443 = vadd.f32 %v1441, %v1442
        %v1444 = vsel %vm439, %v1403, 0.0
        %v1445 = vadd.f32 %v1443, %v1444
        %v1446 = vsel %vm439, %v1404, 0.0
        %v1447 = vadd.f32 %v1445, %v1446
        %v1448 = vsel %vm439, %v1405, 0.0
        %v1449 = vadd.f32 %v1447, %v1448
        %v1450 = vsel %vm439, %v1406, 0.0
        %v1451 = vadd.f32 %v1449, %v1450
        %v1452 = vsel %vm439, %v1407, 0.0
        %v1453 = vadd.f32 %v1451, %v1452
        %v1454 = vsel %vm439, %v1408, 0.0
        %v1455 = vadd.f32 %v1453, %v1454
        %v1456 = vsel %vm439, %v1409, 0.0
        %v1457 = vadd.f32 %v1455, %v1456
        %v1458 = vsel %vm439, %v1410, 0.0
        %v1459 = vadd.f32 %v1457, %v1458
        %v1460 = vsel %vm439, %v1411, 0.0
        %v1461 = vadd.f32 %v1459, %v1460
        %v1462 = vsel %vm439, %v1412, 0.0
        %v1463 = vadd.f32 %v1461, %v1462
        %v1464 = vsel %vm439, %v1413, 0.0
        %v1465 = vadd.f32 %v1463, %v1464
        %v1466 = vsel %vm439, %v1414, 0.0
        %v1467 = vadd.f32 %v1465, %v1466
        %v1468 = vsel %vm439, %v1415, 0.0
        %v1469 = vadd.f32 %v1467, %v1468
        %v1470 = vsel %vm439, %v1416, 0.0
        %v1471 = vadd.f32 %v1469, %v1470
        %v1472 = vsel %vm439, %v1417, 0.0
        %v1473 = vadd.f32 %v1471, %v1472
        %v1474 = vsel %vm439, %v1418, 0.0
        %v1475 = vadd.f32 %v1473, %v1474
        %v1476 = vsel %vm439, %v1419, 0.0
        %v1477 = vadd.f32 %v1475, %v1476
        %v1478 = vsel %vm439, %v1420, 0.0
        %v1479 = vadd.f32 %v1477, %v1478
        %v1480 = vsel %vm439, %v1421, 0.0
        %v1481 = vadd.f32 %v1479, %v1480
        %v1482 = vsel %vm439, %v1422, 0.0
        %v1483 = vadd.f32 %v1481, %v1482
        %v1484 = vsel %vm439, %v1423, 0.0
        %v1485 = vadd.f32 %v1483, %v1484
        %v1486 = vsel %vm439, %v1424, 0.0
        %v1487 = vadd.f32 %v1485, %v1486
        %v1488 = vrot.slane %v1487, 4
        %v1489 = vadd.f32 %v1487, %v1488
        %v1490 = vrot.slane %v1489, 2
        %v1491 = vadd.f32 %v1489, %v1490
        %v1492 = vrot.slane %v1491, 1
        %v1493 = vadd.f32 %v1491, %v1492
        %1494 = vst.msk [vmem:[%s373] sm:$0x1] %vm1391, %v1493
        %s1495 = smul.u32 32, %s23
        %p1496 = scmp.lt.s32.totalorder %s1495, 63
        %s1497 = scalar_select %p1496, %s1495, 63
        %s1498 = smul.addr %s1497, 4
        %s1499 = scalar_lea.vmem %s3, %s1498
        %s1500 = smul.u32 32, %s23
        %p1501 = scmp.lt.s32.totalorder %s1500, 63
        %s1502 = scalar_select %p1501, %s1500, 63
        %s1503 = smul.addr %s1502, 4
        %s1504 = scalar_lea.vmem %s4, %s1503
        %p1505 = scmp.lt.s32.totalorder %s23, 1
        %s1506 = scalar_select %p1505, %s23, 1
        %s1507 = scalar_lea.vmem %s5, %s1506
        %p1508 = scmp.lt.s32.totalorder %s23, 1
        %s1509 = scalar_select %p1508, %s23, 1
        %s1510 = scalar_lea.vmem %s6, %s1509
        %p1511 = scmp.lt.s32.totalorder %s23, 1
        %s1512 = scalar_select %p1511, %s23, 1
        %s1513 = scalar_lea.vmem %s7, %s1512
        %p1514 = scmp.lt.s32.totalorder %s23, 1
        %s1515 = scalar_select %p1514, %s23, 1
        %s1516 = scalar_lea.vmem %s8, %s1515
        // Predicated region
        $region37: #{resnet_bottleneck_block_nhwc.4} parent=31 // pred_check
          %p1517 = pneg %p109
        $region38: #{resnet_bottleneck_block_nhwc.4} parent=31 // pred_check_branch
          %1519 = sbr.rel (%p1517) target = $region40
        $region39: #{resnet_bottleneck_block_nhwc.4} parent=31 // pred_region
          %s1520 = smul.u32 32, %s23
        $region40: #{resnet_bottleneck_block_nhwc.4} parent=31 // pred_fallthru
          _
        // Predicated region
        $region41: #{resnet_bottleneck_block_nhwc.4} parent=31 // pred_check
          %p1521 = pneg %p135
        $region42: #{resnet_bottleneck_block_nhwc.4} parent=31 // pred_check_branch
          %1523 = sbr.rel (%p1521) target = $region44
        $region43: #{resnet_bottleneck_block_nhwc.4} parent=31 // pred_region
          %s1524 = smul.u32 32, %s23
        $region44: #{resnet_bottleneck_block_nhwc.4} parent=31 // pred_fallthru
          _
        // Predicated region
        $region45: #{resnet_bottleneck_block_nhwc.4} parent=31 // pred_check
          %p1525 = pneg %p161
        $region46: #{resnet_bottleneck_block_nhwc.4} parent=31 // pred_check_branch
          %1527 = sbr.rel (%p1525) target = $region48
        $region47: #{resnet_bottleneck_block_nhwc.4} parent=31 // pred_region
          _
        $region48: #{resnet_bottleneck_block_nhwc.4} parent=31 // pred_fallthru
          _
        // Predicated region
        $region49: #{resnet_bottleneck_block_nhwc.4} parent=31 // pred_check
          %p1528 = pneg %p187
        $region50: #{resnet_bottleneck_block_nhwc.4} parent=31 // pred_check_branch
          %1530 = sbr.rel (%p1528) target = $region52
        $region51: #{resnet_bottleneck_block_nhwc.4} parent=31 // pred_region
          _
        $region52: #{resnet_bottleneck_block_nhwc.4} parent=31 // pred_fallthru
          _
        // Predicated region
        $region53: #{resnet_bottleneck_block_nhwc.4} parent=31 // pred_check
          %p1531 = pneg %p213
        $region54: #{resnet_bottleneck_block_nhwc.4} parent=31 // pred_check_branch
          %1533 = sbr.rel (%p1531) target = $region56
        $region55: #{resnet_bottleneck_block_nhwc.4} parent=31 // pred_region
          _
        $region56: #{resnet_bottleneck_block_nhwc.4} parent=31 // pred_fallthru
          _
        // Predicated region
        $region57: #{resnet_bottleneck_block_nhwc.4} parent=31 // pred_check
          %p1534 = pneg %p239
        $region58: #{resnet_bottleneck_block_nhwc.4} parent=31 // pred_check_branch
          %1536 = sbr.rel (%p1534) target = $region60
        $region59: #{resnet_bottleneck_block_nhwc.4} parent=31 // pred_region
          _
        $region60: #{resnet_bottleneck_block_nhwc.4} parent=31 // pred_fallthru
          _
      $region32: #{resnet_bottleneck_block_nhwc.4} parent=5 // pred_fallthru
        _
      %p1537 = scmp.le.s32.totalorder 2, %s18
      // Predicated region
      $region61: #{resnet_bottleneck_block_nhwc.4} parent=5 // pred_check
        %p1538 = pneg %p1537
      $region62: #{resnet_bottleneck_block_nhwc.4} parent=5 // pred_check_branch
        %1540 = sbr.rel (%p1538) target = $region64
      $region63: #{resnet_bottleneck_block_nhwc.4} parent=5 // pred_region
        %s1541 = ssub.s32 %s18, 2
        // Predicated region
        $region65: #{resnet_bottleneck_block_nhwc.4} parent=63 // pred_check
          %p1542 = pneg %p115
        $region66: #{resnet_bottleneck_block_nhwc.4} parent=63 // pred_check_branch
          %1544 = sbr.rel (%p1542) target = $region68
        $region67: #{resnet_bottleneck_block_nhwc.4} parent=63 // pred_region
          %s1545 = smul.u32 32, %s24
          %p1546 = scmp.lt.s32.totalorder %s1545, 63
          %s1547 = scalar_select %p1546, %s1545, 63
          %s1548 = smul.addr %s1547, 4
          %s1549 = scalar_lea.vmem %s3, %s1548
        $region68: #{resnet_bottleneck_block_nhwc.4} parent=63 // pred_fallthru
          _
        // Predicated region
        $region69: #{resnet_bottleneck_block_nhwc.4} parent=63 // pred_check
          %p1550 = pneg %p141
        $region70: #{resnet_bottleneck_block_nhwc.4} parent=63 // pred_check_branch
          %1552 = sbr.rel (%p1550) target = $region72
        $region71: #{resnet_bottleneck_block_nhwc.4} parent=63 // pred_region
          %s1553 = smul.u32 32, %s24
          %p1554 = scmp.lt.s32.totalorder %s1553, 63
          %s1555 = scalar_select %p1554, %s1553, 63
          %s1556 = smul.addr %s1555, 4
          %s1557 = scalar_lea.vmem %s4, %s1556
        $region72: #{resnet_bottleneck_block_nhwc.4} parent=63 // pred_fallthru
          _
        // Predicated region
        $region73: #{resnet_bottleneck_block_nhwc.4} parent=63 // pred_check
          %p1558 = pneg %p167
        $region74: #{resnet_bottleneck_block_nhwc.4} parent=63 // pred_check_branch
          %1560 = sbr.rel (%p1558) target = $region76
        $region75: #{resnet_bottleneck_block_nhwc.4} parent=63 // pred_region
          %p1561 = scmp.lt.s32.totalorder %s24, 1
          %s1562 = scalar_select %p1561, %s24, 1
          %s1563 = scalar_lea.vmem %s5, %s1562
        $region76: #{resnet_bottleneck_block_nhwc.4} parent=63 // pred_fallthru
          _
        // Predicated region
        $region77: #{resnet_bottleneck_block_nhwc.4} parent=63 // pred_check
          %p1564 = pneg %p193
        $region78: #{resnet_bottleneck_block_nhwc.4} parent=63 // pred_check_branch
          %1566 = sbr.rel (%p1564) target = $region80
        $region79: #{resnet_bottleneck_block_nhwc.4} parent=63 // pred_region
          %p1567 = scmp.lt.s32.totalorder %s24, 1
          %s1568 = scalar_select %p1567, %s24, 1
          %s1569 = scalar_lea.vmem %s6, %s1568
        $region80: #{resnet_bottleneck_block_nhwc.4} parent=63 // pred_fallthru
          _
        // Predicated region
        $region81: #{resnet_bottleneck_block_nhwc.4} parent=63 // pred_check
          %p1570 = pneg %p219
        $region82: #{resnet_bottleneck_block_nhwc.4} parent=63 // pred_check_branch
          %1572 = sbr.rel (%p1570) target = $region84
        $region83: #{resnet_bottleneck_block_nhwc.4} parent=63 // pred_region
          %p1573 = scmp.lt.s32.totalorder %s24, 1
          %s1574 = scalar_select %p1573, %s24, 1
          %s1575 = scalar_lea.vmem %s7, %s1574
        $region84: #{resnet_bottleneck_block_nhwc.4} parent=63 // pred_fallthru
          _
        // Predicated region
        $region85: #{resnet_bottleneck_block_nhwc.4} parent=63 // pred_check
          %p1576 = pneg %p245
        $region86: #{resnet_bottleneck_block_nhwc.4} parent=63 // pred_check_branch
          %1578 = sbr.rel (%p1576) target = $region88
        $region87: #{resnet_bottleneck_block_nhwc.4} parent=63 // pred_region
          %p1579 = scmp.lt.s32.totalorder %s24, 1
          %s1580 = scalar_select %p1579, %s24, 1
          %s1581 = scalar_lea.vmem %s8, %s1580
        $region88: #{resnet_bottleneck_block_nhwc.4} parent=63 // pred_fallthru
          _
      $region64: #{resnet_bottleneck_block_nhwc.4} parent=5 // pred_fallthru
        _
    $region6: #{resnet_bottleneck_block_nhwc.4} parent=1 // loop_footer
      %s22 = sadd.s32 1, %s18
    $region7: #{resnet_bottleneck_block_nhwc.4} parent=1 // loop_footer_branch
      %17 = sbr.rel target = $region3
    $region8: #{resnet_bottleneck_block_nhwc.4} parent=1 // loop_exit
      _
    %1582 = vsyncpa [#allocation3], 1
    %s1583 = scalar_lea.sflag [#allocation3], 1
    %1584 = vsyncpa %s1583, 1

// kernel: resnet_bottleneck_block_nhwc.5
$region0: #{resnet_bottleneck_block_nhwc.5}
  #allocation0 [shape = 'u32[]', space=smem, size = 0x4, offset = 0x4, fixed_abs, tag = 'smem constant byte address 0x4 - core index']
  #allocation1 [shape = 'u32[144,128]{1,0:T(1,128)}', space=vmem, size = 0x12000, scoped, tag = 'internal scratch']
  %s0 = inlined_call_operand.vmem [shape: bf16[2,16,16,8], index: 0, kind: input, shape index: {}]
  %s1 = inlined_call_operand.vmem [shape: f32[1,8], index: 1, kind: input, shape index: {}]
  %s2 = inlined_call_operand.vmem [shape: f32[1,8], index: 2, kind: input, shape index: {}]
  %s3 = inlined_call_operand.vmem [shape: bf16[3,24,8], index: 3, kind: input, shape index: {}]
  %s4 = inlined_call_operand.vmem [shape: bf16[2,16,16,8], index: 4, kind: output, shape index: {0}]
  %s5 = inlined_call_operand.vmem [shape: f32[2,1,8], index: 5, kind: output, shape index: {1}]
  %s6 = inlined_call_operand.vmem [shape: f32[2,1,8], index: 6, kind: output, shape index: {2}]
  %7 = xla_tuple %s4, %s5, %s6
  %s8 = sld [smem:[#allocation0]]
  $region65: #{resnet_bottleneck_block_nhwc.5} parent=0
    _
  %s10 = ssub.s32 1, %s8
  %s11 = scalar_select 0, %s10, %s8
  loop: start=0, step=1, limit=4
  $region2: #{resnet_bottleneck_block_nhwc.5} parent=0 // loop_pre_header
    _
  $region3: #{resnet_bottleneck_block_nhwc.5} parent=0 // loop_header
    %s13 = sphi 0, %s17
    %p14 = scmp.ge.s32.totalorder %s13, 4
    %s23 = sphi 0, %s25
    %s26 = sphi 0, %s23
    %s27 = sphi 0, %s26
    %s43 = sphi 0, %s27
    %s47 = sphi 0, %s47
    %s49 = sphi 0, %s47
    %s50 = sphi 0, %s49
    %s64 = sphi 0, %s50
    %s68 = sphi 0, %s68
    %s70 = sphi 0, %s68
    %s71 = sphi 0, %s70
    %s85 = sphi 0, %s71
    %s89 = sphi 0, %s89
    %s91 = sphi 0, %s89
    %s92 = sphi 0, %s91
    %s106 = sphi 0, %s92
    %s112 = sphi 0, %s114
    %s115 = sphi 0, %s112
    %s116 = sphi 0, %s115
    %s132 = sphi 0, %s116
    %s138 = sphi 0, %s140
    %s141 = sphi 0, %s138
    %s142 = sphi 0, %s141
    %s158 = sphi 0, %s142
    %s164 = sphi 0, %s166
    %s167 = sphi 0, %s164
    %s168 = sphi 0, %s167
    %s184 = sphi 0, %s168
  $region4: #{resnet_bottleneck_block_nhwc.5} parent=0 // loop_header_branch
    %16 = sbr.rel (%p14) target = $region8
  $region5: #{resnet_bottleneck_block_nhwc.5} parent=0 // loop_body
    %s18 = ssub.s32 %s13, 1
    %s19 = ssub.s32 %s13, 2
    %s20 = sadd.s32 %s13, 1
    %s21 = ssub.s32 %s13, %s20
    %p22 = scmp.eq.s32.totalorder %s21, 0
    %s24 = sadd.s32 %s23, 1
    %s25 = scalar_select %p22, %s23, %s24
    %p28 = pneg %p22
    %p29 = scmp.eq.s32.totalorder %s13, 1
    %p30 = por %p28, %p29
    %p31 = scmp.ne.s32.totalorder %s23, %s26
    %p32 = scmp.eq.s32.totalorder %s13, 0
    %p33 = por %p31, %p32
    %p34 = scmp.ne.s32.totalorder %s23, %s26
    %p35 = scmp.eq.s32.totalorder %s18, 1
    %p36 = por %p34, %p35
    %p37 = scmp.ne.s32.totalorder %s26, %s27
    %p38 = scmp.eq.s32.totalorder %s18, 0
    %p39 = por %p37, %p38
    %p40 = scmp.ne.s32.totalorder %s26, %s27
    %p41 = scmp.eq.s32.totalorder %s19, 1
    %p42 = por %p40, %p41
    %p44 = scmp.ne.s32.totalorder %s27, %s43
    %p45 = scmp.eq.s32.totalorder %s19, 0
    %p46 = por %p44, %p45
    %s48 = sadd.s32 %s47, 1
    %p51 = scmp.eq.s32.totalorder %s13, 1
    %p52 = scmp.ne.s32.totalorder %s47, %s49
    %p53 = scmp.eq.s32.totalorder %s13, 0
    %p54 = por %p52, %p53
    %p55 = scmp.ne.s32.totalorder %s47, %s49
    %p56 = scmp.eq.s32.totalorder %s18, 1
    %p57 = por %p55, %p56
    %p58 = scmp.ne.s32.totalorder %s49, %s50
    %p59 = scmp.eq.s32.totalorder %s18, 0
    %p60 = por %p58, %p59
    %p61 = scmp.ne.s32.totalorder %s49, %s50
    %p62 = scmp.eq.s32.totalorder %s19, 1
    %p63 = por %p61, %p62
    %p65 = scmp.ne.s32.totalorder %s50, %s64
    %p66 = scmp.eq.s32.totalorder %s19, 0
    %p67 = por %p65, %p66
    %s69 = sadd.s32 %s68, 1
    %p72 = scmp.eq.s32.totalorder %s13, 1
    %p73 = scmp.ne.s32.totalorder %s68, %s70
    %p74 = scmp.eq.s32.totalorder %s13, 0
    %p75 = por %p73, %p74
    %p76 = scmp.ne.s32.totalorder %s68, %s70
    %p77 = scmp.eq.s32.totalorder %s18, 1
    %p78 = por %p76, %p77
    %p79 = scmp.ne.s32.totalorder %s70, %s71
    %p80 = scmp.eq.s32.totalorder %s18, 0
    %p81 = por %p79, %p80
    %p82 = scmp.ne.s32.totalorder %s70, %s71
    %p83 = scmp.eq.s32.totalorder %s19, 1
    %p84 = por %p82, %p83
    %p86 = scmp.ne.s32.totalorder %s71, %s85
    %p87 = scmp.eq.s32.totalorder %s19, 0
    %p88 = por %p86, %p87
    %s90 = sadd.s32 %s89, 1
    %p93 = scmp.eq.s32.totalorder %s13, 1
    %p94 = scmp.ne.s32.totalorder %s89, %s91
    %p95 = scmp.eq.s32.totalorder %s13, 0
    %p96 = por %p94, %p95
    %p97 = scmp.ne.s32.totalorder %s89, %s91
    %p98 = scmp.eq.s32.totalorder %s18, 1
    %p99 = por %p97, %p98
    %p100 = scmp.ne.s32.totalorder %s91, %s92
    %p101 = scmp.eq.s32.totalorder %s18, 0
    %p102 = por %p100, %p101
    %p103 = scmp.ne.s32.totalorder %s91, %s92
    %p104 = scmp.eq.s32.totalorder %s19, 1
    %p105 = por %p103, %p104
    %p107 = scmp.ne.s32.totalorder %s92, %s106
    %p108 = scmp.eq.s32.totalorder %s19, 0
    %p109 = por %p107, %p108
    %s110 = ssub.s32 %s13, %s20
    %p111 = scmp.eq.s32.totalorder %s110, 0
    %s113 = sadd.s32 %s112, 1
    %s114 = scalar_select %p111, %s112, %s113
    %p117 = pneg %p111
    %p118 = scmp.eq.s32.totalorder %s13, 1
    %p119 = por %p117, %p118
    %p120 = scmp.ne.s32.totalorder %s112, %s115
    %p121 = scmp.eq.s32.totalorder %s13, 0
    %p122 = por %p120, %p121
    %p123 = scmp.ne.s32.totalorder %s112, %s115
    %p124 = scmp.eq.s32.totalorder %s18, 1
    %p125 = por %p123, %p124
    %p126 = scmp.ne.s32.totalorder %s115, %s116
    %p127 = scmp.eq.s32.totalorder %s18, 0
    %p128 = por %p126, %p127
    %p129 = scmp.ne.s32.totalorder %s115, %s116
    %p130 = scmp.eq.s32.totalorder %s19, 1
    %p131 = por %p129, %p130
    %p133 = scmp.ne.s32.totalorder %s116, %s132
    %p134 = scmp.eq.s32.totalorder %s19, 0
    %p135 = por %p133, %p134
    %s136 = ssub.s32 %s13, %s20
    %p137 = scmp.eq.s32.totalorder %s136, 0
    %s139 = sadd.s32 %s138, 1
    %s140 = scalar_select %p137, %s138, %s139
    %p143 = pneg %p137
    %p144 = scmp.eq.s32.totalorder %s13, 1
    %p145 = por %p143, %p144
    %p146 = scmp.ne.s32.totalorder %s138, %s141
    %p147 = scmp.eq.s32.totalorder %s13, 0
    %p148 = por %p146, %p147
    %p149 = scmp.ne.s32.totalorder %s138, %s141
    %p150 = scmp.eq.s32.totalorder %s18, 1
    %p151 = por %p149, %p150
    %p152 = scmp.ne.s32.totalorder %s141, %s142
    %p153 = scmp.eq.s32.totalorder %s18, 0
    %p154 = por %p152, %p153
    %p155 = scmp.ne.s32.totalorder %s141, %s142
    %p156 = scmp.eq.s32.totalorder %s19, 1
    %p157 = por %p155, %p156
    %p159 = scmp.ne.s32.totalorder %s142, %s158
    %p160 = scmp.eq.s32.totalorder %s19, 0
    %p161 = por %p159, %p160
    %s162 = ssub.s32 %s13, %s20
    %p163 = scmp.eq.s32.totalorder %s162, 0
    %s165 = sadd.s32 %s164, 1
    %s166 = scalar_select %p163, %s164, %s165
    %p169 = pneg %p163
    %p170 = scmp.eq.s32.totalorder %s13, 1
    %p171 = por %p169, %p170
    %p172 = scmp.ne.s32.totalorder %s164, %s167
    %p173 = scmp.eq.s32.totalorder %s13, 0
    %p174 = por %p172, %p173
    %p175 = scmp.ne.s32.totalorder %s164, %s167
    %p176 = scmp.eq.s32.totalorder %s18, 1
    %p177 = por %p175, %p176
    %p178 = scmp.ne.s32.totalorder %s167, %s168
    %p179 = scmp.eq.s32.totalorder %s18, 0
    %p180 = por %p178, %p179
    %p181 = scmp.ne.s32.totalorder %s167, %s168
    %p182 = scmp.eq.s32.totalorder %s19, 1
    %p183 = por %p181, %p182
    %p185 = scmp.ne.s32.totalorder %s168, %s184
    %p186 = scmp.eq.s32.totalorder %s19, 0
    %p187 = por %p185, %p186
    %p188 = scmp.le.s32.totalorder 1, %s13
    %p189 = scmp.lt.s32.totalorder %s13, 3
    %p190 = pnand %p188, %p189
    %p191 = pneg %p190
    // Predicated region
    $region9: #{resnet_bottleneck_block_nhwc.5} parent=5 // pred_check
      _
    $region10: #{resnet_bottleneck_block_nhwc.5} parent=5 // pred_check_branch
      %193 = sbr.rel (%p190) target = $region12
    $region11: #{resnet_bottleneck_block_nhwc.5} parent=5 // pred_region
      %s194 = ssub.s32 %s13, 1
      // Predicated region
      $region13: #{resnet_bottleneck_block_nhwc.5} parent=11 // pred_check
        %p195 = pneg %p60
      $region14: #{resnet_bottleneck_block_nhwc.5} parent=11 // pred_check_branch
        %197 = sbr.rel (%p195) target = $region16
      $region15: #{resnet_bottleneck_block_nhwc.5} parent=11 // pred_region
        _
      $region16: #{resnet_bottleneck_block_nhwc.5} parent=11 // pred_fallthru
        _
      // Predicated region
      $region17: #{resnet_bottleneck_block_nhwc.5} parent=11 // pred_check
        %p198 = pneg %p81
      $region18: #{resnet_bottleneck_block_nhwc.5} parent=11 // pred_check_branch
        %200 = sbr.rel (%p198) target = $region20
      $region19: #{resnet_bottleneck_block_nhwc.5} parent=11 // pred_region
        _
      $region20: #{resnet_bottleneck_block_nhwc.5} parent=11 // pred_fallthru
        _
      // Predicated region
      $region21: #{resnet_bottleneck_block_nhwc.5} parent=11 // pred_check
        %p201 = pneg %p102
      $region22: #{resnet_bottleneck_block_nhwc.5} parent=11 // pred_check_branch
        %203 = sbr.rel (%p201) target = $region24
      $region23: #{resnet_bottleneck_block_nhwc.5} parent=11 // pred_region
        _
      $region24: #{resnet_bottleneck_block_nhwc.5} parent=11 // pred_fallthru
        _
    $region12: #{resnet_bottleneck_block_nhwc.5} parent=5 // pred_fallthru
      _
    %p204 = scmp.lt.s32.totalorder %s13, 2
    // Predicated region
    $region25: #{resnet_bottleneck_block_nhwc.5} parent=5 // pred_check
      %p205 = pneg %p204
    $region26: #{resnet_bottleneck_block_nhwc.5} parent=5 // pred_check_branch
      %207 = sbr.rel (%p205) target = $region28
    $region27: #{resnet_bottleneck_block_nhwc.5} parent=5 // pred_region
      // Predicated region
      $region29: #{resnet_bottleneck_block_nhwc.5} parent=27 // pred_check
        %p208 = pneg %p33
      $region30: #{resnet_bottleneck_block_nhwc.5} parent=27 // pred_check_branch
        %210 = sbr.rel (%p208) target = $region32
      $region31: #{resnet_bottleneck_block_nhwc.5} parent=27 // pred_region
        %p211 = scmp.lt.s32.totalorder %s13, 1
        %s212 = scalar_select %p211, %s13, 1
        %s213 = smul.addr %s212, 32
        %s214 = smul.addr %s213, 4
        %s215 = scalar_lea.vmem %s0, %s214
      $region32: #{resnet_bottleneck_block_nhwc.5} parent=27 // pred_fallthru
        _
    $region28: #{resnet_bottleneck_block_nhwc.5} parent=5 // pred_fallthru
      _
    %p216 = scmp.le.s32.totalorder 1, %s13
    %p217 = scmp.lt.s32.totalorder %s13, 3
    %p218 = pnand %p216, %p217
    %p219 = pneg %p218
    // Predicated region
    $region33: #{resnet_bottleneck_block_nhwc.5} parent=5 // pred_check
      _
    $region34: #{resnet_bottleneck_block_nhwc.5} parent=5 // pred_check_branch
      %221 = sbr.rel (%p218) target = $region36
    $region35: #{resnet_bottleneck_block_nhwc.5} parent=5 // pred_region
      %s222 = ssub.s32 %s13, 1
      %p223 = scmp.lt.s32.totalorder %s18, 1
      %s224 = scalar_select %p223, %s18, 1
      %s225 = smul.addr %s224, 32
      %s226 = smul.addr %s225, 4
      %s227 = scalar_lea.vmem %s0, %s226
      %p228 = pneg %p39
      %p229 = pneg %p36
      %p230 = pneg %p60
      %p231 = pneg %p57
      %p232 = pneg %p81
      %p233 = pneg %p78
      %p234 = pneg %p102
      %p235 = pneg %p99
      %p236 = pneg %p128
      %p237 = pneg %p125
      %p238 = scmp.lt.s32.totalorder %s18, 1
      %s239 = scalar_select %p238, %s18, 1
      %s240 = smul.addr %s239, 32
      %s241 = smul.addr %s240, 4
      %s242 = scalar_lea.vmem %s4, %s241
      %p243 = pneg %p154
      %p244 = pneg %p151
      %p245 = scmp.lt.s32.totalorder %s18, 1
      %s246 = scalar_select %p245, %s18, 1
      %s247 = scalar_lea.vmem %s5, %s246
      %p248 = pneg %p180
      %p249 = pneg %p177
      %p250 = scmp.lt.s32.totalorder %s18, 1
      %s251 = scalar_select %p250, %s18, 1
      %s252 = scalar_lea.vmem %s6, %s251
      %p253 = scmp.lt.s32.totalorder %s18, 1
      %s254 = scalar_select %p253, %s18, 1
      %s255 = smul.addr %s254, 32
      %s256 = smul.addr %s255, 4
      %s257 = scalar_lea.vmem %s0, %s256
      %p258 = scmp.lt.s32.totalorder %s18, 1
      %s259 = scalar_select %p258, %s18, 1
      %s260 = smul.addr %s259, 32
      %s261 = smul.addr %s260, 4
      %s262 = scalar_lea.vmem %s4, %s261
      %p263 = scmp.lt.s32.totalorder %s18, 1
      %s264 = scalar_select %p263, %s18, 1
      %s265 = scalar_lea.vmem %s5, %s264
      %p266 = scmp.lt.s32.totalorder %s18, 1
      %s267 = scalar_select %p266, %s18, 1
      %s268 = scalar_lea.vmem %s6, %s267
      %v270 = vld [vmem:[%s257] sm:$0xf]
      %v271 = vld [vmem:[%s257 + $0x4] sm:$0xf]
      %v272 = vld [vmem:[%s257 + $0x8] sm:$0xf]
      %v273 = vld [vmem:[%s257 + $0xc] sm:$0xf]
      %v274 = vld [vmem:[%s257 + $0x10] sm:$0xf]
      %v275 = vld [vmem:[%s257 + $0x14] sm:$0xf]
      %v276 = vld [vmem:[%s257 + $0x18] sm:$0xf]
      %v277 = vld [vmem:[%s257 + $0x1c] sm:$0xf]
      %v278 = vld [vmem:[%s257 + $0x20] sm:$0xf]
      %v279 = vld [vmem:[%s257 + $0x24] sm:$0xf]
      %v280 = vld [vmem:[%s257 + $0x28] sm:$0xf]
      %v281 = vld [vmem:[%s257 + $0x2c] sm:$0xf]
      %v282 = vld [vmem:[%s257 + $0x30] sm:$0xf]
      %v283 = vld [vmem:[%s257 + $0x34] sm:$0xf]
      %v284 = vld [vmem:[%s257 + $0x38] sm:$0xf]
      %v285 = vld [vmem:[%s257 + $0x3c] sm:$0xf]
      %v286 = vld [vmem:[%s257 + $0x40] sm:$0xf]
      %v287 = vld [vmem:[%s257 + $0x44] sm:$0xf]
      %v288 = vld [vmem:[%s257 + $0x48] sm:$0xf]
      %v289 = vld [vmem:[%s257 + $0x4c] sm:$0xf]
      %v290 = vld [vmem:[%s257 + $0x50] sm:$0xf]
      %v291 = vld [vmem:[%s257 + $0x54] sm:$0xf]
      %v292 = vld [vmem:[%s257 + $0x58] sm:$0xf]
      %v293 = vld [vmem:[%s257 + $0x5c] sm:$0xf]
      %v294 = vld [vmem:[%s257 + $0x60] sm:$0xf]
      %v295 = vld [vmem:[%s257 + $0x64] sm:$0xf]
      %v296 = vld [vmem:[%s257 + $0x68] sm:$0xf]
      %v297 = vld [vmem:[%s257 + $0x6c] sm:$0xf]
      %v298 = vld [vmem:[%s257 + $0x70] sm:$0xf]
      %v299 = vld [vmem:[%s257 + $0x74] sm:$0xf]
      %v300 = vld [vmem:[%s257 + $0x78] sm:$0xf]
      %v301 = vld [vmem:[%s257 + $0x7c] sm:$0xf]
      %v302 = vunpack.c.l.bf16 %v270
      %v303 = vunpack.c.l.bf16 %v271
      %v304 = vunpack.c.l.bf16 %v272
      %v305 = vunpack.c.l.bf16 %v273
      %v306 = vunpack.c.l.bf16 %v274
      %v307 = vunpack.c.l.bf16 %v275
      %v308 = vunpack.c.l.bf16 %v276
      %v309 = vunpack.c.l.bf16 %v277
      %v310 = vunpack.c.l.bf16 %v278
      %v311 = vunpack.c.l.bf16 %v279
      %v312 = vunpack.c.l.bf16 %v280
      %v313 = vunpack.c.l.bf16 %v281
      %v314 = vunpack.c.l.bf16 %v282
      %v315 = vunpack.c.l.bf16 %v283
      %v316 = vunpack.c.l.bf16 %v284
      %v317 = vunpack.c.l.bf16 %v285
      %v318 = vunpack.c.l.bf16 %v286
      %v319 = vunpack.c.l.bf16 %v287
      %v320 = vunpack.c.l.bf16 %v288
      %v321 = vunpack.c.l.bf16 %v289
      %v322 = vunpack.c.l.bf16 %v290
      %v323 = vunpack.c.l.bf16 %v291
      %v324 = vunpack.c.l.bf16 %v292
      %v325 = vunpack.c.l.bf16 %v293
      %v326 = vunpack.c.l.bf16 %v294
      %v327 = vunpack.c.l.bf16 %v295
      %v328 = vunpack.c.l.bf16 %v296
      %v329 = vunpack.c.l.bf16 %v297
      %v330 = vunpack.c.l.bf16 %v298
      %v331 = vunpack.c.l.bf16 %v299
      %v332 = vunpack.c.l.bf16 %v300
      %v333 = vunpack.c.l.bf16 %v301
      %v334 = vld [vmem:[%s1] sm:$0x1]
      %v336 = vlaneseq
      %v337 = vshrl.u32 %v336, 7
      %v338 = vsub.s32 0, %v337
      %v339 = vrot.slane %v334, %v338
      %v341 = vmul.f32 %v302, %v339
      %v342 = vmul.f32 %v303, %v339
      %v343 = vmul.f32 %v304, %v339
      %v344 = vmul.f32 %v305, %v339
      %v345 = vmul.f32 %v306, %v339
      %v346 = vmul.f32 %v307, %v339
      %v347 = vmul.f32 %v308, %v339
      %v348 = vmul.f32 %v309, %v339
      %v349 = vmul.f32 %v310, %v339
      %v350 = vmul.f32 %v311, %v339
      %v351 = vmul.f32 %v312, %v339
      %v352 = vmul.f32 %v313, %v339
      %v353 = vmul.f32 %v314, %v339
      %v354 = vmul.f32 %v315, %v339
      %v355 = vmul.f32 %v316, %v339
      %v356 = vmul.f32 %v317, %v339
      %v357 = vmul.f32 %v318, %v339
      %v358 = vmul.f32 %v319, %v339
      %v359 = vmul.f32 %v320, %v339
      %v360 = vmul.f32 %v321, %v339
      %v361 = vmul.f32 %v322, %v339
      %v362 = vmul.f32 %v323, %v339
      %v363 = vmul.f32 %v324, %v339
      %v364 = vmul.f32 %v325, %v339
      %v365 = vmul.f32 %v326, %v339
      %v366 = vmul.f32 %v327, %v339
      %v367 = vmul.f32 %v328, %v339
      %v368 = vmul.f32 %v329, %v339
      %v369 = vmul.f32 %v330, %v339
      %v370 = vmul.f32 %v331, %v339
      %v371 = vmul.f32 %v332, %v339
      %v372 = vmul.f32 %v333, %v339
      %v373 = vld [vmem:[%s2] sm:$0x1]
      %v375 = vlaneseq
      %v376 = vshrl.u32 %v375, 7
      %v377 = vsub.s32 0, %v376
      %v378 = vrot.slane %v373, %v377
      %v380 = vadd.f32 %v341, %v378
      %v381 = vadd.f32 %v342, %v378
      %v382 = vadd.f32 %v343, %v378
      %v383 = vadd.f32 %v344, %v378
      %v384 = vadd.f32 %v345, %v378
      %v385 = vadd.f32 %v346, %v378
      %v386 = vadd.f32 %v347, %v378
      %v387 = vadd.f32 %v348, %v378
      %v388 = vadd.f32 %v349, %v378
      %v389 = vadd.f32 %v350, %v378
      %v390 = vadd.f32 %v351, %v378
      %v391 = vadd.f32 %v352, %v378
      %v392 = vadd.f32 %v353, %v378
      %v393 = vadd.f32 %v354, %v378
      %v394 = vadd.f32 %v355, %v378
      %v395 = vadd.f32 %v356, %v378
      %v396 = vadd.f32 %v357, %v378
      %v397 = vadd.f32 %v358, %v378
      %v398 = vadd.f32 %v359, %v378
      %v399 = vadd.f32 %v360, %v378
      %v400 = vadd.f32 %v361, %v378
      %v401 = vadd.f32 %v362, %v378
      %v402 = vadd.f32 %v363, %v378
      %v403 = vadd.f32 %v364, %v378
      %v404 = vadd.f32 %v365, %v378
      %v405 = vadd.f32 %v366, %v378
      %v406 = vadd.f32 %v367, %v378
      %v407 = vadd.f32 %v368, %v378
      %v408 = vadd.f32 %v369, %v378
      %v409 = vadd.f32 %v370, %v378
      %v410 = vadd.f32 %v371, %v378
      %v411 = vadd.f32 %v372, %v378
      %v412 = vmax.f32 %v380, 0.0
      %v413 = vmax.f32 %v381, 0.0
      %v414 = vmax.f32 %v382, 0.0
      %v415 = vmax.f32 %v383, 0.0
      %v416 = vmax.f32 %v384, 0.0
      %v417 = vmax.f32 %v385, 0.0
      %v418 = vmax.f32 %v386, 0.0
      %v419 = vmax.f32 %v387, 0.0
      %v420 = vmax.f32 %v388, 0.0
      %v421 = vmax.f32 %v389, 0.0
      %v422 = vmax.f32 %v390, 0.0
      %v423 = vmax.f32 %v391, 0.0
      %v424 = vmax.f32 %v392, 0.0
      %v425 = vmax.f32 %v393, 0.0
      %v426 = vmax.f32 %v394, 0.0
      %v427 = vmax.f32 %v395, 0.0
      %v428 = vmax.f32 %v396, 0.0
      %v429 = vmax.f32 %v397, 0.0
      %v430 = vmax.f32 %v398, 0.0
      %v431 = vmax.f32 %v399, 0.0
      %v432 = vmax.f32 %v400, 0.0
      %v433 = vmax.f32 %v401, 0.0
      %v434 = vmax.f32 %v402, 0.0
      %v435 = vmax.f32 %v403, 0.0
      %v436 = vmax.f32 %v404, 0.0
      %v437 = vmax.f32 %v405, 0.0
      %v438 = vmax.f32 %v406, 0.0
      %v439 = vmax.f32 %v407, 0.0
      %v440 = vmax.f32 %v408, 0.0
      %v441 = vmax.f32 %v409, 0.0
      %v442 = vmax.f32 %v410, 0.0
      %v443 = vmax.f32 %v411, 0.0
      %v444 = vpack.c.bf16 %v413, %v412
      %v445 = vpack.c.bf16 %v415, %v414
      %v446 = vpack.c.bf16 %v417, %v416
      %v447 = vpack.c.bf16 %v419, %v418
      %v448 = vpack.c.bf16 %v421, %v420
      %v449 = vpack.c.bf16 %v423, %v422
      %v450 = vpack.c.bf16 %v425, %v424
      %v451 = vpack.c.bf16 %v427, %v426
      %v452 = vpack.c.bf16 %v429, %v428
      %v453 = vpack.c.bf16 %v431, %v430
      %v454 = vpack.c.bf16 %v433, %v432
      %v455 = vpack.c.bf16 %v435, %v434
      %v456 = vpack.c.bf16 %v437, %v436
      %v457 = vpack.c.bf16 %v439, %v438
      %v458 = vpack.c.bf16 %v441, %v440
      %v459 = vpack.c.bf16 %v443, %v442
      %v461 = vshrl.u32 %v444, 16
      %v463 = vrot.slane %v461, 7
      %v464 = vshll.u32 %v444, 16
      %v466 = vor.u32 %v463, %v464
      %v468 = vshrl.u32 %v445, 16
      %v470 = vrot.slane %v468, 7
      %v471 = vshll.u32 %v445, 16
      %v473 = vor.u32 %v470, %v471
      %v475 = vshrl.u32 %v446, 16
      %v477 = vrot.slane %v475, 7
      %v478 = vshll.u32 %v446, 16
      %v480 = vor.u32 %v477, %v478
      %v482 = vshrl.u32 %v447, 16
      %v484 = vrot.slane %v482, 7
      %v485 = vshll.u32 %v447, 16
      %v487 = vor.u32 %v484, %v485
      %v489 = vshrl.u32 %v448, 16
      %v491 = vrot.slane %v489, 7
      %v492 = vshll.u32 %v448, 16
      %v494 = vor.u32 %v491, %v492
      %v496 = vshrl.u32 %v449, 16
      %v498 = vrot.slane %v496, 7
      %v499 = vshll.u32 %v449, 16
      %v501 = vor.u32 %v498, %v499
      %v503 = vshrl.u32 %v450, 16
      %v505 = vrot.slane %v503, 7
      %v506 = vshll.u32 %v450, 16
      %v508 = vor.u32 %v505, %v506
      %v510 = vshrl.u32 %v451, 16
      %v512 = vrot.slane %v510, 7
      %v513 = vshll.u32 %v451, 16
      %v515 = vor.u32 %v512, %v513
      %v517 = vshrl.u32 %v452, 16
      %v519 = vrot.slane %v517, 7
      %v520 = vshll.u32 %v452, 16
      %v522 = vor.u32 %v519, %v520
      %v524 = vshrl.u32 %v453, 16
      %v526 = vrot.slane %v524, 7
      %v527 = vshll.u32 %v453, 16
      %v529 = vor.u32 %v526, %v527
      %v531 = vshrl.u32 %v454, 16
      %v533 = vrot.slane %v531, 7
      %v534 = vshll.u32 %v454, 16
      %v536 = vor.u32 %v533, %v534
      %v538 = vshrl.u32 %v455, 16
      %v540 = vrot.slane %v538, 7
      %v541 = vshll.u32 %v455, 16
      %v543 = vor.u32 %v540, %v541
      %v545 = vshrl.u32 %v456, 16
      %v547 = vrot.slane %v545, 7
      %v548 = vshll.u32 %v456, 16
      %v550 = vor.u32 %v547, %v548
      %v552 = vshrl.u32 %v457, 16
      %v554 = vrot.slane %v552, 7
      %v555 = vshll.u32 %v457, 16
      %v557 = vor.u32 %v554, %v555
      %v559 = vshrl.u32 %v458, 16
      %v561 = vrot.slane %v559, 7
      %v562 = vshll.u32 %v458, 16
      %v564 = vor.u32 %v561, %v562
      %v566 = vshrl.u32 %v459, 16
      %v568 = vrot.slane %v566, 7
      %v569 = vshll.u32 %v459, 16
      %v571 = vor.u32 %v568, %v569
      %vm604 = vcmask 1040384
      %vm605 = vsmask.f32 256
      %vm606 = vmand %vm604, %vm605
      %v607 = vsel %vm606, 0, %v466
      %v608 = vsel %vm606, 0, %v473
      %v609 = vsel %vm606, 0, %v480
      %v610 = vsel %vm606, 0, %v487
      %v611 = vsel %vm606, 0, %v494
      %v612 = vsel %vm606, 0, %v501
      %v613 = vsel %vm606, 0, %v508
      %v614 = vsel %vm606, 0, %v515
      %v615 = vsel %vm606, 0, %v522
      %v616 = vsel %vm606, 0, %v529
      %v617 = vsel %vm606, 0, %v536
      %v618 = vsel %vm606, 0, %v543
      %v619 = vsel %vm606, 0, %v550
      %v620 = vsel %vm606, 0, %v557
      %v621 = vsel %vm606, 0, %v564
      %v622 = vsel %vm606, 0, %v571
      %v623 = vsel %vm606, %v463, 0
      %v624 = vsel %vm606, %v470, 0
      %v625 = vsel %vm606, %v477, 0
      %v626 = vsel %vm606, %v484, 0
      %v627 = vsel %vm606, %v491, 0
      %v628 = vsel %vm606, %v498, 0
      %v629 = vsel %vm606, %v505, 0
      %v630 = vsel %vm606, %v512, 0
      %v631 = vsel %vm606, %v519, 0
      %v632 = vsel %vm606, %v526, 0
      %v633 = vsel %vm606, %v533, 0
      %v634 = vsel %vm606, %v540, 0
      %v635 = vsel %vm606, %v547, 0
      %v636 = vsel %vm606, %v554, 0
      %v637 = vsel %vm606, %v561, 0
      %v638 = vsel %vm606, %v568, 0
      %v639 = vld [vmem:[%s3] sm:$0xf]
      %v640 = vld [vmem:[%s3 + $0x4] sm:$0xf]
      %v641 = vld [vmem:[%s3 + $0x8] sm:$0xf]
      %vm642 = vsmask.f32 7424
      %v644 = vshrl.u32 0, 16
      %v646 = vshll.u32 0, 16
      %v648 = vrot.slane %v646, 1
      %v649 = vor.u32 %v644, %v648
      %v650 = vsel %vm642, %v649, %v648
      %v652 = vshrl.u32 %v607, 16
      %v654 = vshll.u32 %v607, 16
      %v656 = vrot.slane %v654, 1
      %v657 = vor.u32 %v652, %v656
      %v659 = vshll.u32 %v623, 16
      %v661 = vrot.slane %v659, 1
      %v662 = vsel %vm642, %v657, %v661
      %v664 = vshrl.u32 %v608, 16
      %v666 = vshll.u32 %v608, 16
      %v668 = vrot.slane %v666, 1
      %v669 = vor.u32 %v664, %v668
      %v671 = vshll.u32 %v624, 16
      %v673 = vrot.slane %v671, 1
      %v674 = vsel %vm642, %v669, %v673
      %v676 = vshrl.u32 %v609, 16
      %v678 = vshll.u32 %v609, 16
      %v680 = vrot.slane %v678, 1
      %v681 = vor.u32 %v676, %v680
      %v683 = vshll.u32 %v625, 16
      %v685 = vrot.slane %v683, 1
      %v686 = vsel %vm642, %v681, %v685
      %v688 = vshrl.u32 %v610, 16
      %v690 = vshll.u32 %v610, 16
      %v692 = vrot.slane %v690, 1
      %v693 = vor.u32 %v688, %v692
      %v695 = vshll.u32 %v626, 16
      %v697 = vrot.slane %v695, 1
      %v698 = vsel %vm642, %v693, %v697
      %v700 = vshrl.u32 %v611, 16
      %v702 = vshll.u32 %v611, 16
      %v704 = vrot.slane %v702, 1
      %v705 = vor.u32 %v700, %v704
      %v707 = vshll.u32 %v627, 16
      %v709 = vrot.slane %v707, 1
      %v710 = vsel %vm642, %v705, %v709
      %v712 = vshrl.u32 %v612, 16
      %v714 = vshll.u32 %v612, 16
      %v716 = vrot.slane %v714, 1
      %v717 = vor.u32 %v712, %v716
      %v719 = vshll.u32 %v628, 16
      %v721 = vrot.slane %v719, 1
      %v722 = vsel %vm642, %v717, %v721
      %v724 = vshrl.u32 %v613, 16
      %v726 = vshll.u32 %v613, 16
      %v728 = vrot.slane %v726, 1
      %v729 = vor.u32 %v724, %v728
      %v731 = vshll.u32 %v629, 16
      %v733 = vrot.slane %v731, 1
      %v734 = vsel %vm642, %v729, %v733
      %v736 = vshrl.u32 %v614, 16
      %v738 = vshll.u32 %v614, 16
      %v740 = vrot.slane %v738, 1
      %v741 = vor.u32 %v736, %v740
      %v743 = vshll.u32 %v630, 16
      %v745 = vrot.slane %v743, 1
      %v746 = vsel %vm642, %v741, %v745
      %v748 = vshrl.u32 %v615, 16
      %v750 = vshll.u32 %v615, 16
      %v752 = vrot.slane %v750, 1
      %v753 = vor.u32 %v748, %v752
      %v755 = vshll.u32 %v631, 16
      %v757 = vrot.slane %v755, 1
      %v758 = vsel %vm642, %v753, %v757
      %v760 = vshrl.u32 %v616, 16
      %v762 = vshll.u32 %v616, 16
      %v764 = vrot.slane %v762, 1
      %v765 = vor.u32 %v760, %v764
      %v767 = vshll.u32 %v632, 16
      %v769 = vrot.slane %v767, 1
      %v770 = vsel %vm642, %v765, %v769
      %v772 = vshrl.u32 %v617, 16
      %v774 = vshll.u32 %v617, 16
      %v776 = vrot.slane %v774, 1
      %v777 = vor.u32 %v772, %v776
      %v779 = vshll.u32 %v633, 16
      %v781 = vrot.slane %v779, 1
      %v782 = vsel %vm642, %v777, %v781
      %v784 = vshrl.u32 %v618, 16
      %v786 = vshll.u32 %v618, 16
      %v788 = vrot.slane %v786, 1
      %v789 = vor.u32 %v784, %v788
      %v791 = vshll.u32 %v634, 16
      %v793 = vrot.slane %v791, 1
      %v794 = vsel %vm642, %v789, %v793
      %v796 = vshrl.u32 %v619, 16
      %v798 = vshll.u32 %v619, 16
      %v800 = vrot.slane %v798, 1
      %v801 = vor.u32 %v796, %v800
      %v803 = vshll.u32 %v635, 16
      %v805 = vrot.slane %v803, 1
      %v806 = vsel %vm642, %v801, %v805
      %v808 = vshrl.u32 %v620, 16
      %v810 = vshll.u32 %v620, 16
      %v812 = vrot.slane %v810, 1
      %v813 = vor.u32 %v808, %v812
      %v815 = vshll.u32 %v636, 16
      %v817 = vrot.slane %v815, 1
      %v818 = vsel %vm642, %v813, %v817
      %v820 = vshrl.u32 %v621, 16
      %v822 = vshll.u32 %v621, 16
      %v824 = vrot.slane %v822, 1
      %v825 = vor.u32 %v820, %v824
      %v827 = vshll.u32 %v637, 16
      %v829 = vrot.slane %v827, 1
      %v830 = vsel %vm642, %v825, %v829
      %vm831 = vcmask 64512
      %v833 = vsel %vm831, %v650, 0
      %v836 = vsel %vm831, %v662, 0
      %v839 = vsel %vm831, %v674, 0
      %v842 = vsel %vm831, %v686, 0
      %v845 = vsel %vm831, %v698, 0
      %v848 = vsel %vm831, %v710, 0
      %v851 = vsel %vm831, %v722, 0
      %v854 = vsel %vm831, %v734, 0
      %v857 = vsel %vm831, %v746, 0
      %v860 = vsel %vm831, %v758, 0
      %v863 = vsel %vm831, %v770, 0
      %v866 = vsel %vm831, %v782, 0
      %v869 = vsel %vm831, %v794, 0
      %v872 = vsel %vm831, %v806, 0
      %v875 = vsel %vm831, %v818, 0
      %v878 = vsel %vm831, %v830, 0
      %vm880 = vcmask 1043456
      %v882 = vsel %vm880, %v640, 0
      %884 = vmatprep.subr.bf16.mxu0 0
      %885 = vmatpush1.bf16.msra.mxu0 %v882
      %886 = vmatprep.subr.bf16.mxu0 0
      %887 = vmatpush1.bf16.msra.mxu0 0
      %888 = vmatprep.subr.bf16.mxu0 0
      %889 = vmatpush1.bf16.msra.mxu0 0
      %890 = vmatprep.subr.bf16.mxu0 0
      %891 = vmatpush1.bf16.msra.mxu0 0
      %892 = vmatprep.subr.bf16.mxu0 0
      %893 = vmatpush1.bf16.msra.mxu0 0
      %894 = vmatprep.subr.bf16.mxu0 0
      %895 = vmatpush1.bf16.msra.mxu0 0
      %896 = vmatprep.subr.bf16.mxu0 0
      %897 = vmatpush1.bf16.msra.mxu0 0
      %898 = vmatprep.subr.bf16.mxu0 0
      %899 = vmatpush1.bf16.msra.mxu0 0
      %900 = vmatprep.subr.bf16.mxu0 0
      %901 = vmatpush1.bf16.msra.mxu0 0
      %902 = vmatprep.subr.bf16.mxu0 0
      %903 = vmatpush1.bf16.msra.mxu0 0
      %904 = vmatprep.subr.bf16.mxu0 0
      %905 = vmatpush1.bf16.msra.mxu0 0
      %906 = vmatprep.subr.bf16.mxu0 0
      %907 = vmatpush1.bf16.msra.mxu0 0
      %908 = vmatprep.subr.bf16.mxu0 0
      %909 = vmatpush1.bf16.msra.mxu0 0
      %910 = vmatprep.subr.bf16.mxu0 0
      %911 = vmatpush1.bf16.msra.mxu0 0
      %912 = vmatprep.subr.bf16.mxu0 0
      %913 = vmatpush1.bf16.msra.mxu0 0
      %914 = vmatprep.subr.bf16.mxu0 0
      %915 = vmatpush1.bf16.msra.mxu0 0
      %916 = vmatprep.mubr.bf16.mxu0 0
      %917 = vmatmul.mubr.bf16.gmra.mrb[0].mxu0 %v833
      %v918 = vpop.f32.mrb[0].mxu0
      %v919 = vadd.f32 0.0, %v918
      %v920 = vpop.f32.mrb[0].mxu0
      %v921 = vpop.f32.mrb[0].mxu0
      %v922 = vadd.f32 0.0, %v921
      %v923 = vpop.f32.mrb[0].mxu0
      %924 = vmatprep.mubr.bf16.mxu0 0
      %925 = vmatmul.mubr.bf16.gmra.mrb[0].mxu0 %v836
      %v926 = vpop.f32.mrb[0].mxu0
      %v927 = vadd.f32 0.0, %v926
      %v928 = vpop.f32.mrb[0].mxu0
      %v929 = vpop.f32.mrb[0].mxu0
      %v930 = vadd.f32 0.0, %v929
      %v931 = vpop.f32.mrb[0].mxu0
      %932 = vmatprep.mubr.bf16.mxu0 0
      %933 = vmatmul.mubr.bf16.gmra.mrb[0].mxu0 %v839
      %v934 = vpop.f32.mrb[0].mxu0
      %v935 = vadd.f32 0.0, %v934
      %v936 = vpop.f32.mrb[0].mxu0
      %v937 = vpop.f32.mrb[0].mxu0
      %v938 = vadd.f32 0.0, %v937
      %v939 = vpop.f32.mrb[0].mxu0
      %940 = vmatprep.mubr.bf16.mxu0 0
      %941 = vmatmul.mubr.bf16.gmra.mrb[0].mxu0 %v842
      %v942 = vpop.f32.mrb[0].mxu0
      %v943 = vadd.f32 0.0, %v942
      %v944 = vpop.f32.mrb[0].mxu0
      %v945 = vpop.f32.mrb[0].mxu0
      %v946 = vadd.f32 0.0, %v945
      %v947 = vpop.f32.mrb[0].mxu0
      %948 = vmatprep.mubr.bf16.mxu0 0
      %949 = vmatmul.mubr.bf16.gmra.mrb[0].mxu0 %v845
      %v950 = vpop.f32.mrb[0].mxu0
      %v951 = vadd.f32 0.0, %v950
      %v952 = vpop.f32.mrb[0].mxu0
      %v953 = vpop.f32.mrb[0].mxu0
      %v954 = vadd.f32 0.0, %v953
      %v955 = vpop.f32.mrb[0].mxu0
      %956 = vmatprep.mubr.bf16.mxu0 0
      %957 = vmatmul.mubr.bf16.gmra.mrb[0].mxu0 %v848
      %v958 = vpop.f32.mrb[0].mxu0
      %v959 = vadd.f32 0.0, %v958
      %v960 = vpop.f32.mrb[0].mxu0
      %v961 = vpop.f32.mrb[0].mxu0
      %v962 = vadd.f32 0.0, %v961
      %v963 = vpop.f32.mrb[0].mxu0
      %964 = vmatprep.mubr.bf16.mxu0 0
      %965 = vmatmul.mubr.bf16.gmra.mrb[0].mxu0 %v851
      %v966 = vpop.f32.mrb[0].mxu0
      %v967 = vadd.f32 0.0, %v966
      %v968 = vpop.f32.mrb[0].mxu0
      %v969 = vpop.f32.mrb[0].mxu0
      %v970 = vadd.f32 0.0, %v969
      %v971 = vpop.f32.mrb[0].mxu0
      %972 = vmatprep.mubr.bf16.mxu0 0
      %973 = vmatmul.mubr.bf16.gmra.mrb[0].mxu0 %v854
      %v974 = vpop.f32.mrb[0].mxu0
      %v975 = vadd.f32 0.0, %v974
      %v976 = vpop.f32.mrb[0].mxu0
      %v977 = vpop.f32.mrb[0].mxu0
      %v978 = vadd.f32 0.0, %v977
      %v979 = vpop.f32.mrb[0].mxu0
      %980 = vmatprep.mubr.bf16.mxu0 0
      %981 = vmatmul.mubr.bf16.gmra.mrb[0].mxu0 %v857
      %v982 = vpop.f32.mrb[0].mxu0
      %v983 = vadd.f32 0.0, %v982
      %v984 = vpop.f32.mrb[0].mxu0
      %v985 = vpop.f32.mrb[0].mxu0
      %v986 = vadd.f32 0.0, %v985
      %v987 = vpop.f32.mrb[0].mxu0
      %988 = vmatprep.mubr.bf16.mxu0 0
      %989 = vmatmul.mubr.bf16.gmra.mrb[0].mxu0 %v860
      %v990 = vpop.f32.mrb[0].mxu0
      %v991 = vadd.f32 0.0, %v990
      %v992 = vpop.f32.mrb[0].mxu0
      %v993 = vpop.f32.mrb[0].mxu0
      %v994 = vadd.f32 0.0, %v993
      %v995 = vpop.f32.mrb[0].mxu0
      %996 = vmatprep.mubr.bf16.mxu0 0
      %997 = vmatmul.mubr.bf16.gmra.mrb[0].mxu0 %v863
      %v998 = vpop.f32.mrb[0].mxu0
      %v999 = vadd.f32 0.0, %v998
      %v1000 = vpop.f32.mrb[0].mxu0
      %v1001 = vpop.f32.mrb[0].mxu0
      %v1002 = vadd.f32 0.0, %v1001
      %v1003 = vpop.f32.mrb[0].mxu0
      %1004 = vmatprep.mubr.bf16.mxu0 0
      %1005 = vmatmul.mubr.bf16.gmra.mrb[0].mxu0 %v866
      %v1006 = vpop.f32.mrb[0].mxu0
      %v1007 = vadd.f32 0.0, %v1006
      %v1008 = vpop.f32.mrb[0].mxu0
      %v1009 = vpop.f32.mrb[0].mxu0
      %v1010 = vadd.f32 0.0, %v1009
      %v1011 = vpop.f32.mrb[0].mxu0
      %1012 = vmatprep.mubr.bf16.mxu0 0
      %1013 = vmatmul.mubr.bf16.gmra.mrb[0].mxu0 %v869
      %v1014 = vpop.f32.mrb[0].mxu0
      %v1015 = vadd.f32 0.0, %v1014
      %v1016 = vpop.f32.mrb[0].mxu0
      %v1017 = vpop.f32.mrb[0].mxu0
      %v1018 = vadd.f32 0.0, %v1017
      %v1019 = vpop.f32.mrb[0].mxu0
      %1020 = vmatprep.mubr.bf16.mxu0 0
      %1021 = vmatmul.mubr.bf16.gmra.mrb[0].mxu0 %v872
      %v1022 = vpop.f32.mrb[0].mxu0
      %v1023 = vadd.f32 0.0, %v1022
      %v1024 = vpop.f32.mrb[0].mxu0
      %v1025 = vpop.f32.mrb[0].mxu0
      %v1026 = vadd.f32 0.0, %v1025
      %v1027 = vpop.f32.mrb[0].mxu0
      %1028 = vmatprep.mubr.bf16.mxu0 0
      %1029 = vmatmul.mubr.bf16.gmra.mrb[0].mxu0 %v875
      %v1030 = vpop.f32.mrb[0].mxu0
      %v1031 = vadd.f32 0.0, %v1030
      %v1032 = vpop.f32.mrb[0].mxu0
      %v1033 = vpop.f32.mrb[0].mxu0
      %v1034 = vadd.f32 0.0, %v1033
      %v1035 = vpop.f32.mrb[0].mxu0
      %1036 = vmatprep.mubr.bf16.mxu0 0
      %1037 = vmatmul.mubr.bf16.gmra.mrb[0].mxu0 %v878
      %v1038 = vpop.f32.mrb[0].mxu0
      %v1039 = vadd.f32 0.0, %v1038
      %v1040 = vpop.f32.mrb[0].mxu0
      %v1041 = vpop.f32.mrb[0].mxu0
      %v1042 = vadd.f32 0.0, %v1041
      %v1043 = vpop.f32.mrb[0].mxu0
      %1044 = vdwg.mxu0
      %v1045 = vsel %vm831, 0, 0
      %v1047 = vsel %vm831, %v607, 0
      %v1049 = vsel %vm831, %v608, 0
      %v1051 = vsel %vm831, %v609, 0
      %v1053 = vsel %vm831, %v610, 0
      %v1055 = vsel %vm831, %v611, 0
      %v1057 = vsel %vm831, %v612, 0
      %v1059 = vsel %vm831, %v613, 0
      %v1061 = vsel %vm831, %v614, 0
      %v1063 = vsel %vm831, %v615, 0
      %v1065 = vsel %vm831, %v616, 0
      %v1067 = vsel %vm831, %v617, 0
      %v1069 = vsel %vm831, %v618, 0
      %v1071 = vsel %vm831, %v619, 0
      %v1073 = vsel %vm831, %v620, 0
      %v1075 = vsel %vm831, %v621, 0
      %v1078 = vsel %vm880, %v639, 0
      %1080 = vmatprep.subr.bf16.mxu0 0
      %1081 = vmatpush1.bf16.msra.mxu0 %v1078
      %1082 = vmatprep.subr.bf16.mxu0 0
      %1083 = vmatpush1.bf16.msra.mxu0 0
      %1084 = vmatprep.subr.bf16.mxu0 0
      %1085 = vmatpush1.bf16.msra.mxu0 0
      %1086 = vmatprep.subr.bf16.mxu0 0
      %1087 = vmatpush1.bf16.msra.mxu0 0
      %1088 = vmatprep.subr.bf16.mxu0 0
      %1089 = vmatpush1.bf16.msra.mxu0 0
      %1090 = vmatprep.subr.bf16.mxu0 0
      %1091 = vmatpush1.bf16.msra.mxu0 0
      %1092 = vmatprep.subr.bf16.mxu0 0
      %1093 = vmatpush1.bf16.msra.mxu0 0
      %1094 = vmatprep.subr.bf16.mxu0 0
      %1095 = vmatpush1.bf16.msra.mxu0 0
      %1096 = vmatprep.subr.bf16.mxu0 0
      %1097 = vmatpush1.bf16.msra.mxu0 0
      %1098 = vmatprep.subr.bf16.mxu0 0
      %1099 = vmatpush1.bf16.msra.mxu0 0
      %1100 = vmatprep.subr.bf16.mxu0 0
      %1101 = vmatpush1.bf16.msra.mxu0 0
      %1102 = vmatprep.subr.bf16.mxu0 0
      %1103 = vmatpush1.bf16.msra.mxu0 0
      %1104 = vmatprep.subr.bf16.mxu0 0
      %1105 = vmatpush1.bf16.msra.mxu0 0
      %1106 = vmatprep.subr.bf16.mxu0 0
      %1107 = vmatpush1.bf16.msra.mxu0 0
      %1108 = vmatprep.subr.bf16.mxu0 0
      %1109 = vmatpush1.bf16.msra.mxu0 0
      %1110 = vmatprep.subr.bf16.mxu0 0
      %1111 = vmatpush1.bf16.msra.mxu0 0
      %1112 = vmatprep.mubr.bf16.mxu0 0
      %1113 = vmatmul.mubr.bf16.gmra.mrb[0].mxu0 %v1045
      %v1114 = vpop.f32.mrb[0].mxu0
      %v1115 = vadd.f32 %v919, %v1114
      %v1116 = vpop.f32.mrb[0].mxu0
      %v1117 = vpop.f32.mrb[0].mxu0
      %v1118 = vadd.f32 %v922, %v1117
      %v1119 = vpop.f32.mrb[0].mxu0
      %1120 = vmatprep.mubr.bf16.mxu0 0
      %1121 = vmatmul.mubr.bf16.gmra.mrb[0].mxu0 %v1047
      %v1122 = vpop.f32.mrb[0].mxu0
      %v1123 = vadd.f32 %v927, %v1122
      %v1124 = vpop.f32.mrb[0].mxu0
      %v1125 = vpop.f32.mrb[0].mxu0
      %v1126 = vadd.f32 %v930, %v1125
      %v1127 = vpop.f32.mrb[0].mxu0
      %1128 = vmatprep.mubr.bf16.mxu0 0
      %1129 = vmatmul.mubr.bf16.gmra.mrb[0].mxu0 %v1049
      %v1130 = vpop.f32.mrb[0].mxu0
      %v1131 = vadd.f32 %v935, %v1130
      %v1132 = vpop.f32.mrb[0].mxu0
      %v1133 = vpop.f32.mrb[0].mxu0
      %v1134 = vadd.f32 %v938, %v1133
      %v1135 = vpop.f32.mrb[0].mxu0
      %1136 = vmatprep.mubr.bf16.mxu0 0
      %1137 = vmatmul.mubr.bf16.gmra.mrb[0].mxu0 %v1051
      %v1138 = vpop.f32.mrb[0].mxu0
      %v1139 = vadd.f32 %v943, %v1138
      %v1140 = vpop.f32.mrb[0].mxu0
      %v1141 = vpop.f32.mrb[0].mxu0
      %v1142 = vadd.f32 %v946, %v1141
      %v1143 = vpop.f32.mrb[0].mxu0
      %1144 = vmatprep.mubr.bf16.mxu0 0
      %1145 = vmatmul.mubr.bf16.gmra.mrb[0].mxu0 %v1053
      %v1146 = vpop.f32.mrb[0].mxu0
      %v1147 = vadd.f32 %v951, %v1146
      %v1148 = vpop.f32.mrb[0].mxu0
      %v1149 = vpop.f32.mrb[0].mxu0
      %v1150 = vadd.f32 %v954, %v1149
      %v1151 = vpop.f32.mrb[0].mxu0
      %1152 = vmatprep.mubr.bf16.mxu0 0
      %1153 = vmatmul.mubr.bf16.gmra.mrb[0].mxu0 %v1055
      %v1154 = vpop.f32.mrb[0].mxu0
      %v1155 = vadd.f32 %v959, %v1154
      %v1156 = vpop.f32.mrb[0].mxu0
      %v1157 = vpop.f32.mrb[0].mxu0
      %v1158 = vadd.f32 %v962, %v1157
      %v1159 = vpop.f32.mrb[0].mxu0
      %1160 = vmatprep.mubr.bf16.mxu0 0
      %1161 = vmatmul.mubr.bf16.gmra.mrb[0].mxu0 %v1057
      %v1162 = vpop.f32.mrb[0].mxu0
      %v1163 = vadd.f32 %v967, %v1162
      %v1164 = vpop.f32.mrb[0].mxu0
      %v1165 = vpop.f32.mrb[0].mxu0
      %v1166 = vadd.f32 %v970, %v1165
      %v1167 = vpop.f32.mrb[0].mxu0
      %1168 = vmatprep.mubr.bf16.mxu0 0
      %1169 = vmatmul.mubr.bf16.gmra.mrb[0].mxu0 %v1059
      %v1170 = vpop.f32.mrb[0].mxu0
      %v1171 = vadd.f32 %v975, %v1170
      %v1172 = vpop.f32.mrb[0].mxu0
      %v1173 = vpop.f32.mrb[0].mxu0
      %v1174 = vadd.f32 %v978, %v1173
      %v1175 = vpop.f32.mrb[0].mxu0
      %1176 = vmatprep.mubr.bf16.mxu0 0
      %1177 = vmatmul.mubr.bf16.gmra.mrb[0].mxu0 %v1061
      %v1178 = vpop.f32.mrb[0].mxu0
      %v1179 = vadd.f32 %v983, %v1178
      %v1180 = vpop.f32.mrb[0].mxu0
      %v1181 = vpop.f32.mrb[0].mxu0
      %v1182 = vadd.f32 %v986, %v1181
      %v1183 = vpop.f32.mrb[0].mxu0
      %1184 = vmatprep.mubr.bf16.mxu0 0
      %1185 = vmatmul.mubr.bf16.gmra.mrb[0].mxu0 %v1063
      %v1186 = vpop.f32.mrb[0].mxu0
      %v1187 = vadd.f32 %v991, %v1186
      %v1188 = vpop.f32.mrb[0].mxu0
      %v1189 = vpop.f32.mrb[0].mxu0
      %v1190 = vadd.f32 %v994, %v1189
      %v1191 = vpop.f32.mrb[0].mxu0
      %1192 = vmatprep.mubr.bf16.mxu0 0
      %1193 = vmatmul.mubr.bf16.gmra.mrb[0].mxu0 %v1065
      %v1194 = vpop.f32.mrb[0].mxu0
      %v1195 = vadd.f32 %v999, %v1194
      %v1196 = vpop.f32.mrb[0].mxu0
      %v1197 = vpop.f32.mrb[0].mxu0
      %v1198 = vadd.f32 %v1002, %v1197
      %v1199 = vpop.f32.mrb[0].mxu0
      %1200 = vmatprep.mubr.bf16.mxu0 0
      %1201 = vmatmul.mubr.bf16.gmra.mrb[0].mxu0 %v1067
      %v1202 = vpop.f32.mrb[0].mxu0
      %v1203 = vadd.f32 %v1007, %v1202
      %v1204 = vpop.f32.mrb[0].mxu0
      %v1205 = vpop.f32.mrb[0].mxu0
      %v1206 = vadd.f32 %v1010, %v1205
      %v1207 = vpop.f32.mrb[0].mxu0
      %1208 = vmatprep.mubr.bf16.mxu0 0
      %1209 = vmatmul.mubr.bf16.gmra.mrb[0].mxu0 %v1069
      %v1210 = vpop.f32.mrb[0].mxu0
      %v1211 = vadd.f32 %v1015, %v1210
      %v1212 = vpop.f32.mrb[0].mxu0
      %v1213 = vpop.f32.mrb[0].mxu0
      %v1214 = vadd.f32 %v1018, %v1213
      %v1215 = vpop.f32.mrb[0].mxu0
      %1216 = vmatprep.mubr.bf16.mxu0 0
      %1217 = vmatmul.mubr.bf16.gmra.mrb[0].mxu0 %v1071
      %v1218 = vpop.f32.mrb[0].mxu0
      %v1219 = vadd.f32 %v1023, %v1218
      %v1220 = vpop.f32.mrb[0].mxu0
      %v1221 = vpop.f32.mrb[0].mxu0
      %v1222 = vadd.f32 %v1026, %v1221
      %v1223 = vpop.f32.mrb[0].mxu0
      %1224 = vmatprep.mubr.bf16.mxu0 0
      %1225 = vmatmul.mubr.bf16.gmra.mrb[0].mxu0 %v1073
      %v1226 = vpop.f32.mrb[0].mxu0
      %v1227 = vadd.f32 %v1031, %v1226
      %v1228 = vpop.f32.mrb[0].mxu0
      %v1229 = vpop.f32.mrb[0].mxu0
      %v1230 = vadd.f32 %v1034, %v1229
      %v1231 = vpop.f32.mrb[0].mxu0
      %1232 = vmatprep.mubr.bf16.mxu0 0
      %1233 = vmatmul.mubr.bf16.gmra.mrb[0].mxu0 %v1075
      %v1234 = vpop.f32.mrb[0].mxu0
      %v1235 = vadd.f32 %v1039, %v1234
      %v1236 = vpop.f32.mrb[0].mxu0
      %v1237 = vpop.f32.mrb[0].mxu0
      %v1238 = vadd.f32 %v1042, %v1237
      %v1239 = vpop.f32.mrb[0].mxu0
      %1240 = vdwg.mxu0
      %vm1272 = vcmask 1046528
      %v1273 = vrot.slane 0, 1
      %v1274 = vsel %vm1272, %v1273, %v1273
      %v1275 = vrot.slane %v607, 1
      %v1276 = vrot.slane %v623, 1
      %v1277 = vsel %vm1272, %v1275, %v1276
      %v1278 = vrot.slane %v608, 1
      %v1279 = vrot.slane %v624, 1
      %v1280 = vsel %vm1272, %v1278, %v1279
      %v1281 = vrot.slane %v609, 1
      %v1282 = vrot.slane %v625, 1
      %v1283 = vsel %vm1272, %v1281, %v1282
      %v1284 = vrot.slane %v610, 1
      %v1285 = vrot.slane %v626, 1
      %v1286 = vsel %vm1272, %v1284, %v1285
      %v1287 = vrot.slane %v611, 1
      %v1288 = vrot.slane %v627, 1
      %v1289 = vsel %vm1272, %v1287, %v1288
      %v1290 = vrot.slane %v612, 1
      %v1291 = vrot.slane %v628, 1
      %v1292 = vsel %vm1272, %v1290, %v1291
      %v1293 = vrot.slane %v613, 1
      %v1294 = vrot.slane %v629, 1
      %v1295 = vsel %vm1272, %v1293, %v1294
      %v1296 = vrot.slane %v614, 1
      %v1297 = vrot.slane %v630, 1
      %v1298 = vsel %vm1272, %v1296, %v1297
      %v1299 = vrot.slane %v615, 1
      %v1300 = vrot.slane %v631, 1
      %v1301 = vsel %vm1272, %v1299, %v1300
      %v1302 = vrot.slane %v616, 1
      %v1303 = vrot.slane %v632, 1
      %v1304 = vsel %vm1272, %v1302, %v1303
      %v1305 = vrot.slane %v617, 1
      %v1306 = vrot.slane %v633, 1
      %v1307 = vsel %vm1272, %v1305, %v1306
      %v1308 = vrot.slane %v618, 1
      %v1309 = vrot.slane %v634, 1
      %v1310 = vsel %vm1272, %v1308, %v1309
      %v1311 = vrot.slane %v619, 1
      %v1312 = vrot.slane %v635, 1
      %v1313 = vsel %vm1272, %v1311, %v1312
      %v1314 = vrot.slane %v620, 1
      %v1315 = vrot.slane %v636, 1
      %v1316 = vsel %vm1272, %v1314, %v1315
      %v1317 = vrot.slane %v621, 1
      %v1318 = vrot.slane %v637, 1
      %v1319 = vsel %vm1272, %v1317, %v1318
      %v1321 = vsel %vm831, %v1274, 0
      %v1324 = vsel %vm831, %v1277, 0
      %v1327 = vsel %vm831, %v1280, 0
      %v1330 = vsel %vm831, %v1283, 0
      %v1333 = vsel %vm831, %v1286, 0
      %v1336 = vsel %vm831, %v1289, 0
      %v1339 = vsel %vm831, %v1292, 0
      %v1342 = vsel %vm831, %v1295, 0
      %v1345 = vsel %vm831, %v1298, 0
      %v1348 = vsel %vm831, %v1301, 0
      %v1351 = vsel %vm831, %v1304, 0
      %v1354 = vsel %vm831, %v1307, 0
      %v1357 = vsel %vm831, %v1310, 0
      %v1360 = vsel %vm831, %v1313, 0
      %v1363 = vsel %vm831, %v1316, 0
      %v1366 = vsel %vm831, %v1319, 0
      %v1369 = vsel %vm880, %v641, 0
      %1371 = vmatprep.subr.bf16.mxu0 0
      %1372 = vmatpush1.bf16.msra.mxu0 %v1369
      %1373 = vmatprep.subr.bf16.mxu0 0
      %1374 = vmatpush1.bf16.msra.mxu0 0
      %1375 = vmatprep.subr.bf16.mxu0 0
      %1376 = vmatpush1.bf16.msra.mxu0 0
      %1377 = vmatprep.subr.bf16.mxu0 0
      %1378 = vmatpush1.bf16.msra.mxu0 0
      %1379 = vmatprep.subr.bf16.mxu0 0
      %1380 = vmatpush1.bf16.msra.mxu0 0
      %1381 = vmatprep.subr.bf16.mxu0 0
      %1382 = vmatpush1.bf16.msra.mxu0 0
      %1383 = vmatprep.subr.bf16.mxu0 0
      %1384 = vmatpush1.bf16.msra.mxu0 0
      %1385 = vmatprep.subr.bf16.mxu0 0
      %1386 = vmatpush1.bf16.msra.mxu0 0
      %1387 = vmatprep.subr.bf16.mxu0 0
      %1388 = vmatpush1.bf16.msra.mxu0 0
      %1389 = vmatprep.subr.bf16.mxu0 0
      %1390 = vmatpush1.bf16.msra.mxu0 0
      %1391 = vmatprep.subr.bf16.mxu0 0
      %1392 = vmatpush1.bf16.msra.mxu0 0
      %1393 = vmatprep.subr.bf16.mxu0 0
      %1394 = vmatpush1.bf16.msra.mxu0 0
      %1395 = vmatprep.subr.bf16.mxu0 0
      %1396 = vmatpush1.bf16.msra.mxu0 0
      %1397 = vmatprep.subr.bf16.mxu0 0
      %1398 = vmatpush1.bf16.msra.mxu0 0
      %1399 = vmatprep.subr.bf16.mxu0 0
      %1400 = vmatpush1.bf16.msra.mxu0 0
      %1401 = vmatprep.subr.bf16.mxu0 0
      %1402 = vmatpush1.bf16.msra.mxu0 0
      %1403 = vmatprep.mubr.bf16.mxu0 0
      %1404 = vmatmul.mubr.bf16.gmra.mrb[0].mxu0 %v1321
      %v1405 = vpop.f32.mrb[0].mxu0
      %v1406 = vadd.f32 0.0, %v1405
      %v1407 = vpop.f32.mrb[0].mxu0
      %v1408 = vpop.f32.mrb[0].mxu0
      %v1409 = vadd.f32 0.0, %v1408
      %v1410 = vpop.f32.mrb[0].mxu0
      %1411 = vmatprep.mubr.bf16.mxu0 0
      %1412 = vmatmul.mubr.bf16.gmra.mrb[0].mxu0 %v1324
      %v1413 = vpop.f32.mrb[0].mxu0
      %v1414 = vadd.f32 0.0, %v1413
      %v1415 = vpop.f32.mrb[0].mxu0
      %v1416 = vpop.f32.mrb[0].mxu0
      %v1417 = vadd.f32 0.0, %v1416
      %v1418 = vpop.f32.mrb[0].mxu0
      %1419 = vmatprep.mubr.bf16.mxu0 0
      %1420 = vmatmul.mubr.bf16.gmra.mrb[0].mxu0 %v1327
      %v1421 = vpop.f32.mrb[0].mxu0
      %v1422 = vadd.f32 0.0, %v1421
      %v1423 = vpop.f32.mrb[0].mxu0
      %v1424 = vpop.f32.mrb[0].mxu0
      %v1425 = vadd.f32 0.0, %v1424
      %v1426 = vpop.f32.mrb[0].mxu0
      %1427 = vmatprep.mubr.bf16.mxu0 0
      %1428 = vmatmul.mubr.bf16.gmra.mrb[0].mxu0 %v1330
      %v1429 = vpop.f32.mrb[0].mxu0
      %v1430 = vadd.f32 0.0, %v1429
      %v1431 = vpop.f32.mrb[0].mxu0
      %v1432 = vpop.f32.mrb[0].mxu0
      %v1433 = vadd.f32 0.0, %v1432
      %v1434 = vpop.f32.mrb[0].mxu0
      %1435 = vmatprep.mubr.bf16.mxu0 0
      %1436 = vmatmul.mubr.bf16.gmra.mrb[0].mxu0 %v1333
      %v1437 = vpop.f32.mrb[0].mxu0
      %v1438 = vadd.f32 0.0, %v1437
      %v1439 = vpop.f32.mrb[0].mxu0
      %v1440 = vpop.f32.mrb[0].mxu0
      %v1441 = vadd.f32 0.0, %v1440
      %v1442 = vpop.f32.mrb[0].mxu0
      %1443 = vmatprep.mubr.bf16.mxu0 0
      %1444 = vmatmul.mubr.bf16.gmra.mrb[0].mxu0 %v1336
      %v1445 = vpop.f32.mrb[0].mxu0
      %v1446 = vadd.f32 0.0, %v1445
      %v1447 = vpop.f32.mrb[0].mxu0
      %v1448 = vpop.f32.mrb[0].mxu0
      %v1449 = vadd.f32 0.0, %v1448
      %v1450 = vpop.f32.mrb[0].mxu0
      %1451 = vmatprep.mubr.bf16.mxu0 0
      %1452 = vmatmul.mubr.bf16.gmra.mrb[0].mxu0 %v1339
      %v1453 = vpop.f32.mrb[0].mxu0
      %v1454 = vadd.f32 0.0, %v1453
      %v1455 = vpop.f32.mrb[0].mxu0
      %v1456 = vpop.f32.mrb[0].mxu0
      %v1457 = vadd.f32 0.0, %v1456
      %v1458 = vpop.f32.mrb[0].mxu0
      %1459 = vmatprep.mubr.bf16.mxu0 0
      %1460 = vmatmul.mubr.bf16.gmra.mrb[0].mxu0 %v1342
      %v1461 = vpop.f32.mrb[0].mxu0
      %v1462 = vadd.f32 0.0, %v1461
      %v1463 = vpop.f32.mrb[0].mxu0
      %v1464 = vpop.f32.mrb[0].mxu0
      %v1465 = vadd.f32 0.0, %v1464
      %v1466 = vpop.f32.mrb[0].mxu0
      %1467 = vmatprep.mubr.bf16.mxu0 0
      %1468 = vmatmul.mubr.bf16.gmra.mrb[0].mxu0 %v1345
      %v1469 = vpop.f32.mrb[0].mxu0
      %v1470 = vadd.f32 0.0, %v1469
      %v1471 = vpop.f32.mrb[0].mxu0
      %v1472 = vpop.f32.mrb[0].mxu0
      %v1473 = vadd.f32 0.0, %v1472
      %v1474 = vpop.f32.mrb[0].mxu0
      %1475 = vmatprep.mubr.bf16.mxu0 0
      %1476 = vmatmul.mubr.bf16.gmra.mrb[0].mxu0 %v1348
      %v1477 = vpop.f32.mrb[0].mxu0
      %v1478 = vadd.f32 0.0, %v1477
      %v1479 = vpop.f32.mrb[0].mxu0
      %v1480 = vpop.f32.mrb[0].mxu0
      %v1481 = vadd.f32 0.0, %v1480
      %v1482 = vpop.f32.mrb[0].mxu0
      %1483 = vmatprep.mubr.bf16.mxu0 0
      %1484 = vmatmul.mubr.bf16.gmra.mrb[0].mxu0 %v1351
      %v1485 = vpop.f32.mrb[0].mxu0
      %v1486 = vadd.f32 0.0, %v1485
      %v1487 = vpop.f32.mrb[0].mxu0
      %v1488 = vpop.f32.mrb[0].mxu0
      %v1489 = vadd.f32 0.0, %v1488
      %v1490 = vpop.f32.mrb[0].mxu0
      %1491 = vmatprep.mubr.bf16.mxu0 0
      %1492 = vmatmul.mubr.bf16.gmra.mrb[0].mxu0 %v1354
      %v1493 = vpop.f32.mrb[0].mxu0
      %v1494 = vadd.f32 0.0, %v1493
      %v1495 = vpop.f32.mrb[0].mxu0
      %v1496 = vpop.f32.mrb[0].mxu0
      %v1497 = vadd.f32 0.0, %v1496
      %v1498 = vpop.f32.mrb[0].mxu0
      %1499 = vmatprep.mubr.bf16.mxu0 0
      %1500 = vmatmul.mubr.bf16.gmra.mrb[0].mxu0 %v1357
      %v1501 = vpop.f32.mrb[0].mxu0
      %v1502 = vadd.f32 0.0, %v1501
      %v1503 = vpop.f32.mrb[0].mxu0
      %v1504 = vpop.f32.mrb[0].mxu0
      %v1505 = vadd.f32 0.0, %v1504
      %v1506 = vpop.f32.mrb[0].mxu0
      %1507 = vmatprep.mubr.bf16.mxu0 0
      %1508 = vmatmul.mubr.bf16.gmra.mrb[0].mxu0 %v1360
      %v1509 = vpop.f32.mrb[0].mxu0
      %v1510 = vadd.f32 0.0, %v1509
      %v1511 = vpop.f32.mrb[0].mxu0
      %v1512 = vpop.f32.mrb[0].mxu0
      %v1513 = vadd.f32 0.0, %v1512
      %v1514 = vpop.f32.mrb[0].mxu0
      %1515 = vmatprep.mubr.bf16.mxu0 0
      %1516 = vmatmul.mubr.bf16.gmra.mrb[0].mxu0 %v1363
      %v1517 = vpop.f32.mrb[0].mxu0
      %v1518 = vadd.f32 0.0, %v1517
      %v1519 = vpop.f32.mrb[0].mxu0
      %v1520 = vpop.f32.mrb[0].mxu0
      %v1521 = vadd.f32 0.0, %v1520
      %v1522 = vpop.f32.mrb[0].mxu0
      %1523 = vmatprep.mubr.bf16.mxu0 0
      %1524 = vmatmul.mubr.bf16.gmra.mrb[0].mxu0 %v1366
      %v1525 = vpop.f32.mrb[0].mxu0
      %v1526 = vadd.f32 0.0, %v1525
      %v1527 = vpop.f32.mrb[0].mxu0
      %v1528 = vpop.f32.mrb[0].mxu0
      %v1529 = vadd.f32 0.0, %v1528
      %v1530 = vpop.f32.mrb[0].mxu0
      %1531 = vdwg.mxu0
      %v1532 = vadd.f32 %v1115, %v1406
      %v1533 = vadd.f32 %v1118, %v1409
      %v1534 = vadd.f32 %v1123, %v1414
      %v1535 = vadd.f32 %v1126, %v1417
      %v1536 = vadd.f32 %v1131, %v1422
      %v1537 = vadd.f32 %v1134, %v1425
      %v1538 = vadd.f32 %v1139, %v1430
      %v1539 = vadd.f32 %v1142, %v1433
      %v1540 = vadd.f32 %v1147, %v1438
      %v1541 = vadd.f32 %v1150, %v1441
      %v1542 = vadd.f32 %v1155, %v1446
      %v1543 = vadd.f32 %v1158, %v1449
      %v1544 = vadd.f32 %v1163, %v1454
      %v1545 = vadd.f32 %v1166, %v1457
      %v1546 = vadd.f32 %v1171, %v1462
      %v1547 = vadd.f32 %v1174, %v1465
      %v1548 = vadd.f32 %v1179, %v1470
      %v1549 = vadd.f32 %v1182, %v1473
      %v1550 = vadd.f32 %v1187, %v1478
      %v1551 = vadd.f32 %v1190, %v1481
      %v1552 = vadd.f32 %v1195, %v1486
      %v1553 = vadd.f32 %v1198, %v1489
      %v1554 = vadd.f32 %v1203, %v1494
      %v1555 = vadd.f32 %v1206, %v1497
      %v1556 = vadd.f32 %v1211, %v1502
      %v1557 = vadd.f32 %v1214, %v1505
      %v1558 = vadd.f32 %v1219, %v1510
      %v1559 = vadd.f32 %v1222, %v1513
      %v1560 = vadd.f32 %v1227, %v1518
      %v1561 = vadd.f32 %v1230, %v1521
      %v1562 = vadd.f32 %v1235, %v1526
      %v1563 = vadd.f32 %v1238, %v1529
      %s1564 = scalar_lea.vmem %s3, 12
      %v1565 = vld [vmem:[%s1564] sm:$0xf]
      %v1566 = vld [vmem:[%s1564 + $0x4] sm:$0xf]
      %v1567 = vld [vmem:[%s1564 + $0x8] sm:$0xf]
      %v1569 = vsel %vm831, %v622, 0
      %v1572 = vsel %vm880, %v1565, 0
      %1574 = vmatprep.subr.bf16.mxu0 0
      %1575 = vmatpush1.bf16.msra.mxu0 %v1572
      %1576 = vmatprep.subr.bf16.mxu0 0
      %1577 = vmatpush1.bf16.msra.mxu0 0
      %1578 = vmatprep.subr.bf16.mxu0 0
      %1579 = vmatpush1.bf16.msra.mxu0 0
      %1580 = vmatprep.subr.bf16.mxu0 0
      %1581 = vmatpush1.bf16.msra.mxu0 0
      %1582 = vmatprep.subr.bf16.mxu0 0
      %1583 = vmatpush1.bf16.msra.mxu0 0
      %1584 = vmatprep.subr.bf16.mxu0 0
      %1585 = vmatpush1.bf16.msra.mxu0 0
      %1586 = vmatprep.subr.bf16.mxu0 0
      %1587 = vmatpush1.bf16.msra.mxu0 0
      %1588 = vmatprep.subr.bf16.mxu0 0
      %1589 = vmatpush1.bf16.msra.mxu0 0
      %1590 = vmatprep.subr.bf16.mxu0 0
      %1591 = vmatpush1.bf16.msra.mxu0 0
      %1592 = vmatprep.subr.bf16.mxu0 0
      %1593 = vmatpush1.bf16.msra.mxu0 0
      %1594 = vmatprep.subr.bf16.mxu0 0
      %1595 = vmatpush1.bf16.msra.mxu0 0
      %1596 = vmatprep.subr.bf16.mxu0 0
      %1597 = vmatpush1.bf16.msra.mxu0 0
      %1598 = vmatprep.subr.bf16.mxu0 0
      %1599 = vmatpush1.bf16.msra.mxu0 0
      %1600 = vmatprep.subr.bf16.mxu0 0
      %1601 = vmatpush1.bf16.msra.mxu0 0
      %1602 = vmatprep.subr.bf16.mxu0 0
      %1603 = vmatpush1.bf16.msra.mxu0 0
      %1604 = vmatprep.subr.bf16.mxu0 0
      %1605 = vmatpush1.bf16.msra.mxu0 0
      %1606 = vmatprep.mubr.bf16.mxu0 0
      %1607 = vmatmul.mubr.bf16.gmra.mrb[0].mxu0 %v1047
      %v1608 = vpop.f32.mrb[0].mxu0
      %v1609 = vadd.f32 0.0, %v1608
      %v1610 = vpop.f32.mrb[0].mxu0
      %v1611 = vpop.f32.mrb[0].mxu0
      %v1612 = vadd.f32 0.0, %v1611
      %v1613 = vpop.f32.mrb[0].mxu0
      %1614 = vmatprep.mubr.bf16.mxu0 0
      %1615 = vmatmul.mubr.bf16.gmra.mrb[0].mxu0 %v1049
      %v1616 = vpop.f32.mrb[0].mxu0
      %v1617 = vadd.f32 0.0, %v1616
      %v1618 = vpop.f32.mrb[0].mxu0
      %v1619 = vpop.f32.mrb[0].mxu0
      %v1620 = vadd.f32 0.0, %v1619
      %v1621 = vpop.f32.mrb[0].mxu0
      %1622 = vmatprep.mubr.bf16.mxu0 0
      %1623 = vmatmul.mubr.bf16.gmra.mrb[0].mxu0 %v1051
      %v1624 = vpop.f32.mrb[0].mxu0
      %v1625 = vadd.f32 0.0, %v1624
      %v1626 = vpop.f32.mrb[0].mxu0
      %v1627 = vpop.f32.mrb[0].mxu0
      %v1628 = vadd.f32 0.0, %v1627
      %v1629 = vpop.f32.mrb[0].mxu0
      %1630 = vmatprep.mubr.bf16.mxu0 0
      %1631 = vmatmul.mubr.bf16.gmra.mrb[0].mxu0 %v1053
      %v1632 = vpop.f32.mrb[0].mxu0
      %v1633 = vadd.f32 0.0, %v1632
      %v1634 = vpop.f32.mrb[0].mxu0
      %v1635 = vpop.f32.mrb[0].mxu0
      %v1636 = vadd.f32 0.0, %v1635
      %v1637 = vpop.f32.mrb[0].mxu0
      %1638 = vmatprep.mubr.bf16.mxu0 0
      %1639 = vmatmul.mubr.bf16.gmra.mrb[0].mxu0 %v1055
      %v1640 = vpop.f32.mrb[0].mxu0
      %v1641 = vadd.f32 0.0, %v1640
      %v1642 = vpop.f32.mrb[0].mxu0
      %v1643 = vpop.f32.mrb[0].mxu0
      %v1644 = vadd.f32 0.0, %v1643
      %v1645 = vpop.f32.mrb[0].mxu0
      %1646 = vmatprep.mubr.bf16.mxu0 0
      %1647 = vmatmul.mubr.bf16.gmra.mrb[0].mxu0 %v1057
      %v1648 = vpop.f32.mrb[0].mxu0
      %v1649 = vadd.f32 0.0, %v1648
      %v1650 = vpop.f32.mrb[0].mxu0
      %v1651 = vpop.f32.mrb[0].mxu0
      %v1652 = vadd.f32 0.0, %v1651
      %v1653 = vpop.f32.mrb[0].mxu0
      %1654 = vmatprep.mubr.bf16.mxu0 0
      %1655 = vmatmul.mubr.bf16.gmra.mrb[0].mxu0 %v1059
      %v1656 = vpop.f32.mrb[0].mxu0
      %v1657 = vadd.f32 0.0, %v1656
      %v1658 = vpop.f32.mrb[0].mxu0
      %v1659 = vpop.f32.mrb[0].mxu0
      %v1660 = vadd.f32 0.0, %v1659
      %v1661 = vpop.f32.mrb[0].mxu0
      %1662 = vmatprep.mubr.bf16.mxu0 0
      %1663 = vmatmul.mubr.bf16.gmra.mrb[0].mxu0 %v1061
      %v1664 = vpop.f32.mrb[0].mxu0
      %v1665 = vadd.f32 0.0, %v1664
      %v1666 = vpop.f32.mrb[0].mxu0
      %v1667 = vpop.f32.mrb[0].mxu0
      %v1668 = vadd.f32 0.0, %v1667
      %v1669 = vpop.f32.mrb[0].mxu0
      %1670 = vmatprep.mubr.bf16.mxu0 0
      %1671 = vmatmul.mubr.bf16.gmra.mrb[0].mxu0 %v1063
      %v1672 = vpop.f32.mrb[0].mxu0
      %v1673 = vadd.f32 0.0, %v1672
      %v1674 = vpop.f32.mrb[0].mxu0
      %v1675 = vpop.f32.mrb[0].mxu0
      %v1676 = vadd.f32 0.0, %v1675
      %v1677 = vpop.f32.mrb[0].mxu0
      %1678 = vmatprep.mubr.bf16.mxu0 0
      %1679 = vmatmul.mubr.bf16.gmra.mrb[0].mxu0 %v1065
      %v1680 = vpop.f32.mrb[0].mxu0
      %v1681 = vadd.f32 0.0, %v1680
      %v1682 = vpop.f32.mrb[0].mxu0
      %v1683 = vpop.f32.mrb[0].mxu0
      %v1684 = vadd.f32 0.0, %v1683
      %v1685 = vpop.f32.mrb[0].mxu0
      %1686 = vmatprep.mubr.bf16.mxu0 0
      %1687 = vmatmul.mubr.bf16.gmra.mrb[0].mxu0 %v1067
      %v1688 = vpop.f32.mrb[0].mxu0
      %v1689 = vadd.f32 0.0, %v1688
      %v1690 = vpop.f32.mrb[0].mxu0
      %v1691 = vpop.f32.mrb[0].mxu0
      %v1692 = vadd.f32 0.0, %v1691
      %v1693 = vpop.f32.mrb[0].mxu0
      %1694 = vmatprep.mubr.bf16.mxu0 0
      %1695 = vmatmul.mubr.bf16.gmra.mrb[0].mxu0 %v1069
      %v1696 = vpop.f32.mrb[0].mxu0
      %v1697 = vadd.f32 0.0, %v1696
      %v1698 = vpop.f32.mrb[0].mxu0
      %v1699 = vpop.f32.mrb[0].mxu0
      %v1700 = vadd.f32 0.0, %v1699
      %v1701 = vpop.f32.mrb[0].mxu0
      %1702 = vmatprep.mubr.bf16.mxu0 0
      %1703 = vmatmul.mubr.bf16.gmra.mrb[0].mxu0 %v1071
      %v1704 = vpop.f32.mrb[0].mxu0
      %v1705 = vadd.f32 0.0, %v1704
      %v1706 = vpop.f32.mrb[0].mxu0
      %v1707 = vpop.f32.mrb[0].mxu0
      %v1708 = vadd.f32 0.0, %v1707
      %v1709 = vpop.f32.mrb[0].mxu0
      %1710 = vmatprep.mubr.bf16.mxu0 0
      %1711 = vmatmul.mubr.bf16.gmra.mrb[0].mxu0 %v1073
      %v1712 = vpop.f32.mrb[0].mxu0
      %v1713 = vadd.f32 0.0, %v1712
      %v1714 = vpop.f32.mrb[0].mxu0
      %v1715 = vpop.f32.mrb[0].mxu0
      %v1716 = vadd.f32 0.0, %v1715
      %v1717 = vpop.f32.mrb[0].mxu0
      %1718 = vmatprep.mubr.bf16.mxu0 0
      %1719 = vmatmul.mubr.bf16.gmra.mrb[0].mxu0 %v1075
      %v1720 = vpop.f32.mrb[0].mxu0
      %v1721 = vadd.f32 0.0, %v1720
      %v1722 = vpop.f32.mrb[0].mxu0
      %v1723 = vpop.f32.mrb[0].mxu0
      %v1724 = vadd.f32 0.0, %v1723
      %v1725 = vpop.f32.mrb[0].mxu0
      %1726 = vmatprep.mubr.bf16.mxu0 0
      %1727 = vmatmul.mubr.bf16.gmra.mrb[0].mxu0 %v1569
      %v1728 = vpop.f32.mrb[0].mxu0
      %v1729 = vadd.f32 0.0, %v1728
      %v1730 = vpop.f32.mrb[0].mxu0
      %v1731 = vpop.f32.mrb[0].mxu0
      %v1732 = vadd.f32 0.0, %v1731
      %v1733 = vpop.f32.mrb[0].mxu0
      %1734 = vdwg.mxu0
      %v1735 = vadd.f32 %v1532, %v1609
      %v1736 = vadd.f32 %v1533, %v1612
      %v1737 = vadd.f32 %v1534, %v1617
      %v1738 = vadd.f32 %v1535, %v1620
      %v1739 = vadd.f32 %v1536, %v1625
      %v1740 = vadd.f32 %v1537, %v1628
      %v1741 = vadd.f32 %v1538, %v1633
      %v1742 = vadd.f32 %v1539, %v1636
      %v1743 = vadd.f32 %v1540, %v1641
      %v1744 = vadd.f32 %v1541, %v1644
      %v1745 = vadd.f32 %v1542, %v1649
      %v1746 = vadd.f32 %v1543, %v1652
      %v1747 = vadd.f32 %v1544, %v1657
      %v1748 = vadd.f32 %v1545, %v1660
      %v1749 = vadd.f32 %v1546, %v1665
      %v1750 = vadd.f32 %v1547, %v1668
      %v1751 = vadd.f32 %v1548, %v1673
      %v1752 = vadd.f32 %v1549, %v1676
      %v1753 = vadd.f32 %v1550, %v1681
      %v1754 = vadd.f32 %v1551, %v1684
      %v1755 = vadd.f32 %v1552, %v1689
      %v1756 = vadd.f32 %v1553, %v1692
      %v1757 = vadd.f32 %v1554, %v1697
      %v1758 = vadd.f32 %v1555, %v1700
      %v1759 = vadd.f32 %v1556, %v1705
      %v1760 = vadd.f32 %v1557, %v1708
      %v1761 = vadd.f32 %v1558, %v1713
      %v1762 = vadd.f32 %v1559, %v1716
      %v1763 = vadd.f32 %v1560, %v1721
      %v1764 = vadd.f32 %v1561, %v1724
      %v1765 = vadd.f32 %v1562, %v1729
      %v1766 = vadd.f32 %v1563, %v1732
      %v1767 = vshrl.u32 %v622, 16
      %v1769 = vshll.u32 %v622, 16
      %v1771 = vrot.slane %v1769, 1
      %v1772 = vor.u32 %v1767, %v1771
      %v1774 = vshll.u32 %v638, 16
      %v1776 = vrot.slane %v1774, 1
      %v1777 = vsel %vm642, %v1772, %v1776
      %v1779 = vsel %vm831, %v1777, 0
      %v1782 = vsel %vm880, %v1566, 0
      %1784 = vmatprep.subr.bf16.mxu0 0
      %1785 = vmatpush1.bf16.msra.mxu0 %v1782
      %1786 = vmatprep.subr.bf16.mxu0 0
      %1787 = vmatpush1.bf16.msra.mxu0 0
      %1788 = vmatprep.subr.bf16.mxu0 0
      %1789 = vmatpush1.bf16.msra.mxu0 0
      %1790 = vmatprep.subr.bf16.mxu0 0
      %1791 = vmatpush1.bf16.msra.mxu0 0
      %1792 = vmatprep.subr.bf16.mxu0 0
      %1793 = vmatpush1.bf16.msra.mxu0 0
      %1794 = vmatprep.subr.bf16.mxu0 0
      %1795 = vmatpush1.bf16.msra.mxu0 0
      %1796 = vmatprep.subr.bf16.mxu0 0
      %1797 = vmatpush1.bf16.msra.mxu0 0
      %1798 = vmatprep.subr.bf16.mxu0 0
      %1799 = vmatpush1.bf16.msra.mxu0 0
      %1800 = vmatprep.subr.bf16.mxu0 0
      %1801 = vmatpush1.bf16.msra.mxu0 0
      %1802 = vmatprep.subr.bf16.mxu0 0
      %1803 = vmatpush1.bf16.msra.mxu0 0
      %1804 = vmatprep.subr.bf16.mxu0 0
      %1805 = vmatpush1.bf16.msra.mxu0 0
      %1806 = vmatprep.subr.bf16.mxu0 0
      %1807 = vmatpush1.bf16.msra.mxu0 0
      %1808 = vmatprep.subr.bf16.mxu0 0
      %1809 = vmatpush1.bf16.msra.mxu0 0
      %1810 = vmatprep.subr.bf16.mxu0 0
      %1811 = vmatpush1.bf16.msra.mxu0 0
      %1812 = vmatprep.subr.bf16.mxu0 0
      %1813 = vmatpush1.bf16.msra.mxu0 0
      %1814 = vmatprep.subr.bf16.mxu0 0
      %1815 = vmatpush1.bf16.msra.mxu0 0
      %1816 = vmatprep.mubr.bf16.mxu0 0
      %1817 = vmatmul.mubr.bf16.gmra.mrb[0].mxu0 %v836
      %v1818 = vpop.f32.mrb[0].mxu0
      %v1819 = vadd.f32 0.0, %v1818
      %v1820 = vpop.f32.mrb[0].mxu0
      %v1821 = vpop.f32.mrb[0].mxu0
      %v1822 = vadd.f32 0.0, %v1821
      %v1823 = vpop.f32.mrb[0].mxu0
      %1824 = vmatprep.mubr.bf16.mxu0 0
      %1825 = vmatmul.mubr.bf16.gmra.mrb[0].mxu0 %v839
      %v1826 = vpop.f32.mrb[0].mxu0
      %v1827 = vadd.f32 0.0, %v1826
      %v1828 = vpop.f32.mrb[0].mxu0
      %v1829 = vpop.f32.mrb[0].mxu0
      %v1830 = vadd.f32 0.0, %v1829
      %v1831 = vpop.f32.mrb[0].mxu0
      %1832 = vmatprep.mubr.bf16.mxu0 0
      %1833 = vmatmul.mubr.bf16.gmra.mrb[0].mxu0 %v842
      %v1834 = vpop.f32.mrb[0].mxu0
      %v1835 = vadd.f32 0.0, %v1834
      %v1836 = vpop.f32.mrb[0].mxu0
      %v1837 = vpop.f32.mrb[0].mxu0
      %v1838 = vadd.f32 0.0, %v1837
      %v1839 = vpop.f32.mrb[0].mxu0
      %1840 = vmatprep.mubr.bf16.mxu0 0
      %1841 = vmatmul.mubr.bf16.gmra.mrb[0].mxu0 %v845
      %v1842 = vpop.f32.mrb[0].mxu0
      %v1843 = vadd.f32 0.0, %v1842
      %v1844 = vpop.f32.mrb[0].mxu0
      %v1845 = vpop.f32.mrb[0].mxu0
      %v1846 = vadd.f32 0.0, %v1845
      %v1847 = vpop.f32.mrb[0].mxu0
      %1848 = vmatprep.mubr.bf16.mxu0 0
      %1849 = vmatmul.mubr.bf16.gmra.mrb[0].mxu0 %v848
      %v1850 = vpop.f32.mrb[0].mxu0
      %v1851 = vadd.f32 0.0, %v1850
      %v1852 = vpop.f32.mrb[0].mxu0
      %v1853 = vpop.f32.mrb[0].mxu0
      %v1854 = vadd.f32 0.0, %v1853
      %v1855 = vpop.f32.mrb[0].mxu0
      %1856 = vmatprep.mubr.bf16.mxu0 0
      %1857 = vmatmul.mubr.bf16.gmra.mrb[0].mxu0 %v851
      %v1858 = vpop.f32.mrb[0].mxu0
      %v1859 = vadd.f32 0.0, %v1858
      %v1860 = vpop.f32.mrb[0].mxu0
      %v1861 = vpop.f32.mrb[0].mxu0
      %v1862 = vadd.f32 0.0, %v1861
      %v1863 = vpop.f32.mrb[0].mxu0
      %1864 = vmatprep.mubr.bf16.mxu0 0
      %1865 = vmatmul.mubr.bf16.gmra.mrb[0].mxu0 %v854
      %v1866 = vpop.f32.mrb[0].mxu0
      %v1867 = vadd.f32 0.0, %v1866
      %v1868 = vpop.f32.mrb[0].mxu0
      %v1869 = vpop.f32.mrb[0].mxu0
      %v1870 = vadd.f32 0.0, %v1869
      %v1871 = vpop.f32.mrb[0].mxu0
      %1872 = vmatprep.mubr.bf16.mxu0 0
      %1873 = vmatmul.mubr.bf16.gmra.mrb[0].mxu0 %v857
      %v1874 = vpop.f32.mrb[0].mxu0
      %v1875 = vadd.f32 0.0, %v1874
      %v1876 = vpop.f32.mrb[0].mxu0
      %v1877 = vpop.f32.mrb[0].mxu0
      %v1878 = vadd.f32 0.0, %v1877
      %v1879 = vpop.f32.mrb[0].mxu0
      %1880 = vmatprep.mubr.bf16.mxu0 0
      %1881 = vmatmul.mubr.bf16.gmra.mrb[0].mxu0 %v860
      %v1882 = vpop.f32.mrb[0].mxu0
      %v1883 = vadd.f32 0.0, %v1882
      %v1884 = vpop.f32.mrb[0].mxu0
      %v1885 = vpop.f32.mrb[0].mxu0
      %v1886 = vadd.f32 0.0, %v1885
      %v1887 = vpop.f32.mrb[0].mxu0
      %1888 = vmatprep.mubr.bf16.mxu0 0
      %1889 = vmatmul.mubr.bf16.gmra.mrb[0].mxu0 %v863
      %v1890 = vpop.f32.mrb[0].mxu0
      %v1891 = vadd.f32 0.0, %v1890
      %v1892 = vpop.f32.mrb[0].mxu0
      %v1893 = vpop.f32.mrb[0].mxu0
      %v1894 = vadd.f32 0.0, %v1893
      %v1895 = vpop.f32.mrb[0].mxu0
      %1896 = vmatprep.mubr.bf16.mxu0 0
      %1897 = vmatmul.mubr.bf16.gmra.mrb[0].mxu0 %v866
      %v1898 = vpop.f32.mrb[0].mxu0
      %v1899 = vadd.f32 0.0, %v1898
      %v1900 = vpop.f32.mrb[0].mxu0
      %v1901 = vpop.f32.mrb[0].mxu0
      %v1902 = vadd.f32 0.0, %v1901
      %v1903 = vpop.f32.mrb[0].mxu0
      %1904 = vmatprep.mubr.bf16.mxu0 0
      %1905 = vmatmul.mubr.bf16.gmra.mrb[0].mxu0 %v869
      %v1906 = vpop.f32.mrb[0].mxu0
      %v1907 = vadd.f32 0.0, %v1906
      %v1908 = vpop.f32.mrb[0].mxu0
      %v1909 = vpop.f32.mrb[0].mxu0
      %v1910 = vadd.f32 0.0, %v1909
      %v1911 = vpop.f32.mrb[0].mxu0
      %1912 = vmatprep.mubr.bf16.mxu0 0
      %1913 = vmatmul.mubr.bf16.gmra.mrb[0].mxu0 %v872
      %v1914 = vpop.f32.mrb[0].mxu0
      %v1915 = vadd.f32 0.0, %v1914
      %v1916 = vpop.f32.mrb[0].mxu0
      %v1917 = vpop.f32.mrb[0].mxu0
      %v1918 = vadd.f32 0.0, %v1917
      %v1919 = vpop.f32.mrb[0].mxu0
      %1920 = vmatprep.mubr.bf16.mxu0 0
      %1921 = vmatmul.mubr.bf16.gmra.mrb[0].mxu0 %v875
      %v1922 = vpop.f32.mrb[0].mxu0
      %v1923 = vadd.f32 0.0, %v1922
      %v1924 = vpop.f32.mrb[0].mxu0
      %v1925 = vpop.f32.mrb[0].mxu0
      %v1926 = vadd.f32 0.0, %v1925
      %v1927 = vpop.f32.mrb[0].mxu0
      %1928 = vmatprep.mubr.bf16.mxu0 0
      %1929 = vmatmul.mubr.bf16.gmra.mrb[0].mxu0 %v878
      %v1930 = vpop.f32.mrb[0].mxu0
      %v1931 = vadd.f32 0.0, %v1930
      %v1932 = vpop.f32.mrb[0].mxu0
      %v1933 = vpop.f32.mrb[0].mxu0
      %v1934 = vadd.f32 0.0, %v1933
      %v1935 = vpop.f32.mrb[0].mxu0
      %1936 = vmatprep.mubr.bf16.mxu0 0
      %1937 = vmatmul.mubr.bf16.gmra.mrb[0].mxu0 %v1779
      %v1938 = vpop.f32.mrb[0].mxu0
      %v1939 = vadd.f32 0.0, %v1938
      %v1940 = vpop.f32.mrb[0].mxu0
      %v1941 = vpop.f32.mrb[0].mxu0
      %v1942 = vadd.f32 0.0, %v1941
      %v1943 = vpop.f32.mrb[0].mxu0
      %1944 = vdwg.mxu0
      %v1945 = vadd.f32 %v1735, %v1819
      %v1946 = vadd.f32 %v1736, %v1822
      %v1947 = vadd.f32 %v1737, %v1827
      %v1948 = vadd.f32 %v1738, %v1830
      %v1949 = vadd.f32 %v1739, %v1835
      %v1950 = vadd.f32 %v1740, %v1838
      %v1951 = vadd.f32 %v1741, %v1843
      %v1952 = vadd.f32 %v1742, %v1846
      %v1953 = vadd.f32 %v1743, %v1851
      %v1954 = vadd.f32 %v1744, %v1854
      %v1955 = vadd.f32 %v1745, %v1859
      %v1956 = vadd.f32 %v1746, %v1862
      %v1957 = vadd.f32 %v1747, %v1867
      %v1958 = vadd.f32 %v1748, %v1870
      %v1959 = vadd.f32 %v1749, %v1875
      %v1960 = vadd.f32 %v1750, %v1878
      %v1961 = vadd.f32 %v1751, %v1883
      %v1962 = vadd.f32 %v1752, %v1886
      %v1963 = vadd.f32 %v1753, %v1891
      %v1964 = vadd.f32 %v1754, %v1894
      %v1965 = vadd.f32 %v1755, %v1899
      %v1966 = vadd.f32 %v1756, %v1902
      %v1967 = vadd.f32 %v1757, %v1907
      %v1968 = vadd.f32 %v1758, %v1910
      %v1969 = vadd.f32 %v1759, %v1915
      %v1970 = vadd.f32 %v1760, %v1918
      %v1971 = vadd.f32 %v1761, %v1923
      %v1972 = vadd.f32 %v1762, %v1926
      %v1973 = vadd.f32 %v1763, %v1931
      %v1974 = vadd.f32 %v1764, %v1934
      %v1975 = vadd.f32 %v1765, %v1939
      %v1976 = vadd.f32 %v1766, %v1942
      %v1979 = vrot.slane %v622, 1
      %v1980 = vrot.slane %v638, 1
      %v1981 = vsel %vm1272, %v1979, %v1980
      %v1983 = vsel %vm831, %v1981, 0
      %v1986 = vsel %vm880, %v1567, 0
      %1988 = vmatprep.subr.bf16.mxu0 0
      %1989 = vmatpush1.bf16.msra.mxu0 %v1986
      %1990 = vmatprep.subr.bf16.mxu0 0
      %1991 = vmatpush1.bf16.msra.mxu0 0
      %1992 = vmatprep.subr.bf16.mxu0 0
      %1993 = vmatpush1.bf16.msra.mxu0 0
      %1994 = vmatprep.subr.bf16.mxu0 0
      %1995 = vmatpush1.bf16.msra.mxu0 0
      %1996 = vmatprep.subr.bf16.mxu0 0
      %1997 = vmatpush1.bf16.msra.mxu0 0
      %1998 = vmatprep.subr.bf16.mxu0 0
      %1999 = vmatpush1.bf16.msra.mxu0 0
      %2000 = vmatprep.subr.bf16.mxu0 0
      %2001 = vmatpush1.bf16.msra.mxu0 0
      %2002 = vmatprep.subr.bf16.mxu0 0
      %2003 = vmatpush1.bf16.msra.mxu0 0
      %2004 = vmatprep.subr.bf16.mxu0 0
      %2005 = vmatpush1.bf16.msra.mxu0 0
      %2006 = vmatprep.subr.bf16.mxu0 0
      %2007 = vmatpush1.bf16.msra.mxu0 0
      %2008 = vmatprep.subr.bf16.mxu0 0
      %2009 = vmatpush1.bf16.msra.mxu0 0
      %2010 = vmatprep.subr.bf16.mxu0 0
      %2011 = vmatpush1.bf16.msra.mxu0 0
      %2012 = vmatprep.subr.bf16.mxu0 0
      %2013 = vmatpush1.bf16.msra.mxu0 0
      %2014 = vmatprep.subr.bf16.mxu0 0
      %2015 = vmatpush1.bf16.msra.mxu0 0
      %2016 = vmatprep.subr.bf16.mxu0 0
      %2017 = vmatpush1.bf16.msra.mxu0 0
      %2018 = vmatprep.subr.bf16.mxu0 0
      %2019 = vmatpush1.bf16.msra.mxu0 0
      %2020 = vmatprep.mubr.bf16.mxu0 0
      %2021 = vmatmul.mubr.bf16.gmra.mrb[0].mxu0 %v1324
      %v2022 = vpop.f32.mrb[0].mxu0
      %v2023 = vadd.f32 0.0, %v2022
      %v2024 = vpop.f32.mrb[0].mxu0
      %v2025 = vpop.f32.mrb[0].mxu0
      %v2026 = vadd.f32 0.0, %v2025
      %v2027 = vpop.f32.mrb[0].mxu0
      %2028 = vmatprep.mubr.bf16.mxu0 0
      %2029 = vmatmul.mubr.bf16.gmra.mrb[0].mxu0 %v1327
      %v2030 = vpop.f32.mrb[0].mxu0
      %v2031 = vadd.f32 0.0, %v2030
      %v2032 = vpop.f32.mrb[0].mxu0
      %v2033 = vpop.f32.mrb[0].mxu0
      %v2034 = vadd.f32 0.0, %v2033
      %v2035 = vpop.f32.mrb[0].mxu0
      %2036 = vmatprep.mubr.bf16.mxu0 0
      %2037 = vmatmul.mubr.bf16.gmra.mrb[0].mxu0 %v1330
      %v2038 = vpop.f32.mrb[0].mxu0
      %v2039 = vadd.f32 0.0, %v2038
      %v2040 = vpop.f32.mrb[0].mxu0
      %v2041 = vpop.f32.mrb[0].mxu0
      %v2042 = vadd.f32 0.0, %v2041
      %v2043 = vpop.f32.mrb[0].mxu0
      %2044 = vmatprep.mubr.bf16.mxu0 0
      %2045 = vmatmul.mubr.bf16.gmra.mrb[0].mxu0 %v1333
      %v2046 = vpop.f32.mrb[0].mxu0
      %v2047 = vadd.f32 0.0, %v2046
      %v2048 = vpop.f32.mrb[0].mxu0
      %v2049 = vpop.f32.mrb[0].mxu0
      %v2050 = vadd.f32 0.0, %v2049
      %v2051 = vpop.f32.mrb[0].mxu0
      %2052 = vmatprep.mubr.bf16.mxu0 0
      %2053 = vmatmul.mubr.bf16.gmra.mrb[0].mxu0 %v1336
      %v2054 = vpop.f32.mrb[0].mxu0
      %v2055 = vadd.f32 0.0, %v2054
      %v2056 = vpop.f32.mrb[0].mxu0
      %v2057 = vpop.f32.mrb[0].mxu0
      %v2058 = vadd.f32 0.0, %v2057
      %v2059 = vpop.f32.mrb[0].mxu0
      %2060 = vmatprep.mubr.bf16.mxu0 0
      %2061 = vmatmul.mubr.bf16.gmra.mrb[0].mxu0 %v1339
      %v2062 = vpop.f32.mrb[0].mxu0
      %v2063 = vadd.f32 0.0, %v2062
      %v2064 = vpop.f32.mrb[0].mxu0
      %v2065 = vpop.f32.mrb[0].mxu0
      %v2066 = vadd.f32 0.0, %v2065
      %v2067 = vpop.f32.mrb[0].mxu0
      %2068 = vmatprep.mubr.bf16.mxu0 0
      %2069 = vmatmul.mubr.bf16.gmra.mrb[0].mxu0 %v1342
      %v2070 = vpop.f32.mrb[0].mxu0
      %v2071 = vadd.f32 0.0, %v2070
      %v2072 = vpop.f32.mrb[0].mxu0
      %v2073 = vpop.f32.mrb[0].mxu0
      %v2074 = vadd.f32 0.0, %v2073
      %v2075 = vpop.f32.mrb[0].mxu0
      %2076 = vmatprep.mubr.bf16.mxu0 0
      %2077 = vmatmul.mubr.bf16.gmra.mrb[0].mxu0 %v1345
      %v2078 = vpop.f32.mrb[0].mxu0
      %v2079 = vadd.f32 0.0, %v2078
      %v2080 = vpop.f32.mrb[0].mxu0
      %v2081 = vpop.f32.mrb[0].mxu0
      %v2082 = vadd.f32 0.0, %v2081
      %v2083 = vpop.f32.mrb[0].mxu0
      %2084 = vmatprep.mubr.bf16.mxu0 0
      %2085 = vmatmul.mubr.bf16.gmra.mrb[0].mxu0 %v1348
      %v2086 = vpop.f32.mrb[0].mxu0
      %v2087 = vadd.f32 0.0, %v2086
      %v2088 = vpop.f32.mrb[0].mxu0
      %v2089 = vpop.f32.mrb[0].mxu0
      %v2090 = vadd.f32 0.0, %v2089
      %v2091 = vpop.f32.mrb[0].mxu0
      %2092 = vmatprep.mubr.bf16.mxu0 0
      %2093 = vmatmul.mubr.bf16.gmra.mrb[0].mxu0 %v1351
      %v2094 = vpop.f32.mrb[0].mxu0
      %v2095 = vadd.f32 0.0, %v2094
      %v2096 = vpop.f32.mrb[0].mxu0
      %v2097 = vpop.f32.mrb[0].mxu0
      %v2098 = vadd.f32 0.0, %v2097
      %v2099 = vpop.f32.mrb[0].mxu0
      %2100 = vmatprep.mubr.bf16.mxu0 0
      %2101 = vmatmul.mubr.bf16.gmra.mrb[0].mxu0 %v1354
      %v2102 = vpop.f32.mrb[0].mxu0
      %v2103 = vadd.f32 0.0, %v2102
      %v2104 = vpop.f32.mrb[0].mxu0
      %v2105 = vpop.f32.mrb[0].mxu0
      %v2106 = vadd.f32 0.0, %v2105
      %v2107 = vpop.f32.mrb[0].mxu0
      %2108 = vmatprep.mubr.bf16.mxu0 0
      %2109 = vmatmul.mubr.bf16.gmra.mrb[0].mxu0 %v1357
      %v2110 = vpop.f32.mrb[0].mxu0
      %v2111 = vadd.f32 0.0, %v2110
      %v2112 = vpop.f32.mrb[0].mxu0
      %v2113 = vpop.f32.mrb[0].mxu0
      %v2114 = vadd.f32 0.0, %v2113
      %v2115 = vpop.f32.mrb[0].mxu0
      %2116 = vmatprep.mubr.bf16.mxu0 0
      %2117 = vmatmul.mubr.bf16.gmra.mrb[0].mxu0 %v1360
      %v2118 = vpop.f32.mrb[0].mxu0
      %v2119 = vadd.f32 0.0, %v2118
      %v2120 = vpop.f32.mrb[0].mxu0
      %v2121 = vpop.f32.mrb[0].mxu0
      %v2122 = vadd.f32 0.0, %v2121
      %v2123 = vpop.f32.mrb[0].mxu0
      %2124 = vmatprep.mubr.bf16.mxu0 0
      %2125 = vmatmul.mubr.bf16.gmra.mrb[0].mxu0 %v1363
      %v2126 = vpop.f32.mrb[0].mxu0
      %v2127 = vadd.f32 0.0, %v2126
      %v2128 = vpop.f32.mrb[0].mxu0
      %v2129 = vpop.f32.mrb[0].mxu0
      %v2130 = vadd.f32 0.0, %v2129
      %v2131 = vpop.f32.mrb[0].mxu0
      %2132 = vmatprep.mubr.bf16.mxu0 0
      %2133 = vmatmul.mubr.bf16.gmra.mrb[0].mxu0 %v1366
      %v2134 = vpop.f32.mrb[0].mxu0
      %v2135 = vadd.f32 0.0, %v2134
      %v2136 = vpop.f32.mrb[0].mxu0
      %v2137 = vpop.f32.mrb[0].mxu0
      %v2138 = vadd.f32 0.0, %v2137
      %v2139 = vpop.f32.mrb[0].mxu0
      %2140 = vmatprep.mubr.bf16.mxu0 0
      %2141 = vmatmul.mubr.bf16.gmra.mrb[0].mxu0 %v1983
      %v2142 = vpop.f32.mrb[0].mxu0
      %v2143 = vadd.f32 0.0, %v2142
      %v2144 = vpop.f32.mrb[0].mxu0
      %v2145 = vpop.f32.mrb[0].mxu0
      %v2146 = vadd.f32 0.0, %v2145
      %v2147 = vpop.f32.mrb[0].mxu0
      %2148 = vdwg.mxu0
      %v2149 = vadd.f32 %v1945, %v2023
      %v2150 = vadd.f32 %v1946, %v2026
      %v2151 = vadd.f32 %v1947, %v2031
      %v2152 = vadd.f32 %v1948, %v2034
      %v2153 = vadd.f32 %v1949, %v2039
      %v2154 = vadd.f32 %v1950, %v2042
      %v2155 = vadd.f32 %v1951, %v2047
      %v2156 = vadd.f32 %v1952, %v2050
      %v2157 = vadd.f32 %v1953, %v2055
      %v2158 = vadd.f32 %v1954, %v2058
      %v2159 = vadd.f32 %v1955, %v2063
      %v2160 = vadd.f32 %v1956, %v2066
      %v2161 = vadd.f32 %v1957, %v2071
      %v2162 = vadd.f32 %v1958, %v2074
      %v2163 = vadd.f32 %v1959, %v2079
      %v2164 = vadd.f32 %v1960, %v2082
      %v2165 = vadd.f32 %v1961, %v2087
      %v2166 = vadd.f32 %v1962, %v2090
      %v2167 = vadd.f32 %v1963, %v2095
      %v2168 = vadd.f32 %v1964, %v2098
      %v2169 = vadd.f32 %v1965, %v2103
      %v2170 = vadd.f32 %v1966, %v2106
      %v2171 = vadd.f32 %v1967, %v2111
      %v2172 = vadd.f32 %v1968, %v2114
      %v2173 = vadd.f32 %v1969, %v2119
      %v2174 = vadd.f32 %v1970, %v2122
      %v2175 = vadd.f32 %v1971, %v2127
      %v2176 = vadd.f32 %v1972, %v2130
      %v2177 = vadd.f32 %v1973, %v2135
      %v2178 = vadd.f32 %v1974, %v2138
      %v2179 = vadd.f32 %v1975, %v2143
      %v2180 = vadd.f32 %v1976, %v2146
      %s2181 = scalar_lea.vmem %s3, 24
      %v2182 = vld [vmem:[%s2181] sm:$0xf]
      %v2183 = vld [vmem:[%s2181 + $0x4] sm:$0xf]
      %v2184 = vld [vmem:[%s2181 + $0x8] sm:$0xf]
      %v2186 = vsel %vm880, %v2182, 0
      %2188 = vmatprep.subr.bf16.mxu0 0
      %2189 = vmatpush1.bf16.msra.mxu0 %v2186
      %2190 = vmatprep.subr.bf16.mxu0 0
      %2191 = vmatpush1.bf16.msra.mxu0 0
      %2192 = vmatprep.subr.bf16.mxu0 0
      %2193 = vmatpush1.bf16.msra.mxu0 0
      %2194 = vmatprep.subr.bf16.mxu0 0
      %2195 = vmatpush1.bf16.msra.mxu0 0
      %2196 = vmatprep.subr.bf16.mxu0 0
      %2197 = vmatpush1.bf16.msra.mxu0 0
      %2198 = vmatprep.subr.bf16.mxu0 0
      %2199 = vmatpush1.bf16.msra.mxu0 0
      %2200 = vmatprep.subr.bf16.mxu0 0
      %2201 = vmatpush1.bf16.msra.mxu0 0
      %2202 = vmatprep.subr.bf16.mxu0 0
      %2203 = vmatpush1.bf16.msra.mxu0 0
      %2204 = vmatprep.subr.bf16.mxu0 0
      %2205 = vmatpush1.bf16.msra.mxu0 0
      %2206 = vmatprep.subr.bf16.mxu0 0
      %2207 = vmatpush1.bf16.msra.mxu0 0
      %2208 = vmatprep.subr.bf16.mxu0 0
      %2209 = vmatpush1.bf16.msra.mxu0 0
      %2210 = vmatprep.subr.bf16.mxu0 0
      %2211 = vmatpush1.bf16.msra.mxu0 0
      %2212 = vmatprep.subr.bf16.mxu0 0
      %2213 = vmatpush1.bf16.msra.mxu0 0
      %2214 = vmatprep.subr.bf16.mxu0 0
      %2215 = vmatpush1.bf16.msra.mxu0 0
      %2216 = vmatprep.subr.bf16.mxu0 0
      %2217 = vmatpush1.bf16.msra.mxu0 0
      %2218 = vmatprep.subr.bf16.mxu0 0
      %2219 = vmatpush1.bf16.msra.mxu0 0
      %2220 = vmatprep.mubr.bf16.mxu0 0
      %2221 = vmatmul.mubr.bf16.gmra.mrb[0].mxu0 %v1049
      %v2222 = vpop.f32.mrb[0].mxu0
      %v2223 = vadd.f32 0.0, %v2222
      %v2224 = vpop.f32.mrb[0].mxu0
      %v2225 = vpop.f32.mrb[0].mxu0
      %v2226 = vadd.f32 0.0, %v2225
      %v2227 = vpop.f32.mrb[0].mxu0
      %2228 = vmatprep.mubr.bf16.mxu0 0
      %2229 = vmatmul.mubr.bf16.gmra.mrb[0].mxu0 %v1051
      %v2230 = vpop.f32.mrb[0].mxu0
      %v2231 = vadd.f32 0.0, %v2230
      %v2232 = vpop.f32.mrb[0].mxu0
      %v2233 = vpop.f32.mrb[0].mxu0
      %v2234 = vadd.f32 0.0, %v2233
      %v2235 = vpop.f32.mrb[0].mxu0
      %2236 = vmatprep.mubr.bf16.mxu0 0
      %2237 = vmatmul.mubr.bf16.gmra.mrb[0].mxu0 %v1053
      %v2238 = vpop.f32.mrb[0].mxu0
      %v2239 = vadd.f32 0.0, %v2238
      %v2240 = vpop.f32.mrb[0].mxu0
      %v2241 = vpop.f32.mrb[0].mxu0
      %v2242 = vadd.f32 0.0, %v2241
      %v2243 = vpop.f32.mrb[0].mxu0
      %2244 = vmatprep.mubr.bf16.mxu0 0
      %2245 = vmatmul.mubr.bf16.gmra.mrb[0].mxu0 %v1055
      %v2246 = vpop.f32.mrb[0].mxu0
      %v2247 = vadd.f32 0.0, %v2246
      %v2248 = vpop.f32.mrb[0].mxu0
      %v2249 = vpop.f32.mrb[0].mxu0
      %v2250 = vadd.f32 0.0, %v2249
      %v2251 = vpop.f32.mrb[0].mxu0
      %2252 = vmatprep.mubr.bf16.mxu0 0
      %2253 = vmatmul.mubr.bf16.gmra.mrb[0].mxu0 %v1057
      %v2254 = vpop.f32.mrb[0].mxu0
      %v2255 = vadd.f32 0.0, %v2254
      %v2256 = vpop.f32.mrb[0].mxu0
      %v2257 = vpop.f32.mrb[0].mxu0
      %v2258 = vadd.f32 0.0, %v2257
      %v2259 = vpop.f32.mrb[0].mxu0
      %2260 = vmatprep.mubr.bf16.mxu0 0
      %2261 = vmatmul.mubr.bf16.gmra.mrb[0].mxu0 %v1059
      %v2262 = vpop.f32.mrb[0].mxu0
      %v2263 = vadd.f32 0.0, %v2262
      %v2264 = vpop.f32.mrb[0].mxu0
      %v2265 = vpop.f32.mrb[0].mxu0
      %v2266 = vadd.f32 0.0, %v2265
      %v2267 = vpop.f32.mrb[0].mxu0
      %2268 = vmatprep.mubr.bf16.mxu0 0
      %2269 = vmatmul.mubr.bf16.gmra.mrb[0].mxu0 %v1061
      %v2270 = vpop.f32.mrb[0].mxu0
      %v2271 = vadd.f32 0.0, %v2270
      %v2272 = vpop.f32.mrb[0].mxu0
      %v2273 = vpop.f32.mrb[0].mxu0
      %v2274 = vadd.f32 0.0, %v2273
      %v2275 = vpop.f32.mrb[0].mxu0
      %2276 = vmatprep.mubr.bf16.mxu0 0
      %2277 = vmatmul.mubr.bf16.gmra.mrb[0].mxu0 %v1063
      %v2278 = vpop.f32.mrb[0].mxu0
      %v2279 = vadd.f32 0.0, %v2278
      %v2280 = vpop.f32.mrb[0].mxu0
      %v2281 = vpop.f32.mrb[0].mxu0
      %v2282 = vadd.f32 0.0, %v2281
      %v2283 = vpop.f32.mrb[0].mxu0
      %2284 = vmatprep.mubr.bf16.mxu0 0
      %2285 = vmatmul.mubr.bf16.gmra.mrb[0].mxu0 %v1065
      %v2286 = vpop.f32.mrb[0].mxu0
      %v2287 = vadd.f32 0.0, %v2286
      %v2288 = vpop.f32.mrb[0].mxu0
      %v2289 = vpop.f32.mrb[0].mxu0
      %v2290 = vadd.f32 0.0, %v2289
      %v2291 = vpop.f32.mrb[0].mxu0
      %2292 = vmatprep.mubr.bf16.mxu0 0
      %2293 = vmatmul.mubr.bf16.gmra.mrb[0].mxu0 %v1067
      %v2294 = vpop.f32.mrb[0].mxu0
      %v2295 = vadd.f32 0.0, %v2294
      %v2296 = vpop.f32.mrb[0].mxu0
      %v2297 = vpop.f32.mrb[0].mxu0
      %v2298 = vadd.f32 0.0, %v2297
      %v2299 = vpop.f32.mrb[0].mxu0
      %2300 = vmatprep.mubr.bf16.mxu0 0
      %2301 = vmatmul.mubr.bf16.gmra.mrb[0].mxu0 %v1069
      %v2302 = vpop.f32.mrb[0].mxu0
      %v2303 = vadd.f32 0.0, %v2302
      %v2304 = vpop.f32.mrb[0].mxu0
      %v2305 = vpop.f32.mrb[0].mxu0
      %v2306 = vadd.f32 0.0, %v2305
      %v2307 = vpop.f32.mrb[0].mxu0
      %2308 = vmatprep.mubr.bf16.mxu0 0
      %2309 = vmatmul.mubr.bf16.gmra.mrb[0].mxu0 %v1071
      %v2310 = vpop.f32.mrb[0].mxu0
      %v2311 = vadd.f32 0.0, %v2310
      %v2312 = vpop.f32.mrb[0].mxu0
      %v2313 = vpop.f32.mrb[0].mxu0
      %v2314 = vadd.f32 0.0, %v2313
      %v2315 = vpop.f32.mrb[0].mxu0
      %2316 = vmatprep.mubr.bf16.mxu0 0
      %2317 = vmatmul.mubr.bf16.gmra.mrb[0].mxu0 %v1073
      %v2318 = vpop.f32.mrb[0].mxu0
      %v2319 = vadd.f32 0.0, %v2318
      %v2320 = vpop.f32.mrb[0].mxu0
      %v2321 = vpop.f32.mrb[0].mxu0
      %v2322 = vadd.f32 0.0, %v2321
      %v2323 = vpop.f32.mrb[0].mxu0
      %2324 = vmatprep.mubr.bf16.mxu0 0
      %2325 = vmatmul.mubr.bf16.gmra.mrb[0].mxu0 %v1075
      %v2326 = vpop.f32.mrb[0].mxu0
      %v2327 = vadd.f32 0.0, %v2326
      %v2328 = vpop.f32.mrb[0].mxu0
      %v2329 = vpop.f32.mrb[0].mxu0
      %v2330 = vadd.f32 0.0, %v2329
      %v2331 = vpop.f32.mrb[0].mxu0
      %2332 = vmatprep.mubr.bf16.mxu0 0
      %2333 = vmatmul.mubr.bf16.gmra.mrb[0].mxu0 %v1569
      %v2334 = vpop.f32.mrb[0].mxu0
      %v2335 = vadd.f32 0.0, %v2334
      %v2336 = vpop.f32.mrb[0].mxu0
      %v2337 = vpop.f32.mrb[0].mxu0
      %v2338 = vadd.f32 0.0, %v2337
      %v2339 = vpop.f32.mrb[0].mxu0
      %2340 = vmatprep.mubr.bf16.mxu0 0
      %2341 = vmatmul.mubr.bf16.gmra.mrb[0].mxu0 %v1045
      %v2342 = vpop.f32.mrb[0].mxu0
      %v2343 = vadd.f32 0.0, %v2342
      %v2344 = vpop.f32.mrb[0].mxu0
      %v2345 = vpop.f32.mrb[0].mxu0
      %v2346 = vadd.f32 0.0, %v2345
      %v2347 = vpop.f32.mrb[0].mxu0
      %2348 = vdwg.mxu0
      %v2349 = vadd.f32 %v2149, %v2223
      %v2350 = vadd.f32 %v2150, %v2226
      %v2351 = vadd.f32 %v2151, %v2231
      %v2352 = vadd.f32 %v2152, %v2234
      %v2353 = vadd.f32 %v2153, %v2239
      %v2354 = vadd.f32 %v2154, %v2242
      %v2355 = vadd.f32 %v2155, %v2247
      %v2356 = vadd.f32 %v2156, %v2250
      %v2357 = vadd.f32 %v2157, %v2255
      %v2358 = vadd.f32 %v2158, %v2258
      %v2359 = vadd.f32 %v2159, %v2263
      %v2360 = vadd.f32 %v2160, %v2266
      %v2361 = vadd.f32 %v2161, %v2271
      %v2362 = vadd.f32 %v2162, %v2274
      %v2363 = vadd.f32 %v2163, %v2279
      %v2364 = vadd.f32 %v2164, %v2282
      %v2365 = vadd.f32 %v2165, %v2287
      %v2366 = vadd.f32 %v2166, %v2290
      %v2367 = vadd.f32 %v2167, %v2295
      %v2368 = vadd.f32 %v2168, %v2298
      %v2369 = vadd.f32 %v2169, %v2303
      %v2370 = vadd.f32 %v2170, %v2306
      %v2371 = vadd.f32 %v2171, %v2311
      %v2372 = vadd.f32 %v2172, %v2314
      %v2373 = vadd.f32 %v2173, %v2319
      %v2374 = vadd.f32 %v2174, %v2322
      %v2375 = vadd.f32 %v2175, %v2327
      %v2376 = vadd.f32 %v2176, %v2330
      %v2377 = vadd.f32 %v2177, %v2335
      %v2378 = vadd.f32 %v2178, %v2338
      %v2379 = vadd.f32 %v2179, %v2343
      %v2380 = vadd.f32 %v2180, %v2346
      %v2382 = vsel %vm880, %v2183, 0
      %2384 = vmatprep.subr.bf16.mxu0 0
      %2385 = vmatpush1.bf16.msra.mxu0 %v2382
      %2386 = vmatprep.subr.bf16.mxu0 0
      %2387 = vmatpush1.bf16.msra.mxu0 0
      %2388 = vmatprep.subr.bf16.mxu0 0
      %2389 = vmatpush1.bf16.msra.mxu0 0
      %2390 = vmatprep.subr.bf16.mxu0 0
      %2391 = vmatpush1.bf16.msra.mxu0 0
      %2392 = vmatprep.subr.bf16.mxu0 0
      %2393 = vmatpush1.bf16.msra.mxu0 0
      %2394 = vmatprep.subr.bf16.mxu0 0
      %2395 = vmatpush1.bf16.msra.mxu0 0
      %2396 = vmatprep.subr.bf16.mxu0 0
      %2397 = vmatpush1.bf16.msra.mxu0 0
      %2398 = vmatprep.subr.bf16.mxu0 0
      %2399 = vmatpush1.bf16.msra.mxu0 0
      %2400 = vmatprep.subr.bf16.mxu0 0
      %2401 = vmatpush1.bf16.msra.mxu0 0
      %2402 = vmatprep.subr.bf16.mxu0 0
      %2403 = vmatpush1.bf16.msra.mxu0 0
      %2404 = vmatprep.subr.bf16.mxu0 0
      %2405 = vmatpush1.bf16.msra.mxu0 0
      %2406 = vmatprep.subr.bf16.mxu0 0
      %2407 = vmatpush1.bf16.msra.mxu0 0
      %2408 = vmatprep.subr.bf16.mxu0 0
      %2409 = vmatpush1.bf16.msra.mxu0 0
      %2410 = vmatprep.subr.bf16.mxu0 0
      %2411 = vmatpush1.bf16.msra.mxu0 0
      %2412 = vmatprep.subr.bf16.mxu0 0
      %2413 = vmatpush1.bf16.msra.mxu0 0
      %2414 = vmatprep.subr.bf16.mxu0 0
      %2415 = vmatpush1.bf16.msra.mxu0 0
      %2416 = vmatprep.mubr.bf16.mxu0 0
      %2417 = vmatmul.mubr.bf16.gmra.mrb[0].mxu0 %v839
      %v2418 = vpop.f32.mrb[0].mxu0
      %v2419 = vadd.f32 0.0, %v2418
      %v2420 = vpop.f32.mrb[0].mxu0
      %v2421 = vpop.f32.mrb[0].mxu0
      %v2422 = vadd.f32 0.0, %v2421
      %v2423 = vpop.f32.mrb[0].mxu0
      %2424 = vmatprep.mubr.bf16.mxu0 0
      %2425 = vmatmul.mubr.bf16.gmra.mrb[0].mxu0 %v842
      %v2426 = vpop.f32.mrb[0].mxu0
      %v2427 = vadd.f32 0.0, %v2426
      %v2428 = vpop.f32.mrb[0].mxu0
      %v2429 = vpop.f32.mrb[0].mxu0
      %v2430 = vadd.f32 0.0, %v2429
      %v2431 = vpop.f32.mrb[0].mxu0
      %2432 = vmatprep.mubr.bf16.mxu0 0
      %2433 = vmatmul.mubr.bf16.gmra.mrb[0].mxu0 %v845
      %v2434 = vpop.f32.mrb[0].mxu0
      %v2435 = vadd.f32 0.0, %v2434
      %v2436 = vpop.f32.mrb[0].mxu0
      %v2437 = vpop.f32.mrb[0].mxu0
      %v2438 = vadd.f32 0.0, %v2437
      %v2439 = vpop.f32.mrb[0].mxu0
      %2440 = vmatprep.mubr.bf16.mxu0 0
      %2441 = vmatmul.mubr.bf16.gmra.mrb[0].mxu0 %v848
      %v2442 = vpop.f32.mrb[0].mxu0
      %v2443 = vadd.f32 0.0, %v2442
      %v2444 = vpop.f32.mrb[0].mxu0
      %v2445 = vpop.f32.mrb[0].mxu0
      %v2446 = vadd.f32 0.0, %v2445
      %v2447 = vpop.f32.mrb[0].mxu0
      %2448 = vmatprep.mubr.bf16.mxu0 0
      %2449 = vmatmul.mubr.bf16.gmra.mrb[0].mxu0 %v851
      %v2450 = vpop.f32.mrb[0].mxu0
      %v2451 = vadd.f32 0.0, %v2450
      %v2452 = vpop.f32.mrb[0].mxu0
      %v2453 = vpop.f32.mrb[0].mxu0
      %v2454 = vadd.f32 0.0, %v2453
      %v2455 = vpop.f32.mrb[0].mxu0
      %2456 = vmatprep.mubr.bf16.mxu0 0
      %2457 = vmatmul.mubr.bf16.gmra.mrb[0].mxu0 %v854
      %v2458 = vpop.f32.mrb[0].mxu0
      %v2459 = vadd.f32 0.0, %v2458
      %v2460 = vpop.f32.mrb[0].mxu0
      %v2461 = vpop.f32.mrb[0].mxu0
      %v2462 = vadd.f32 0.0, %v2461
      %v2463 = vpop.f32.mrb[0].mxu0
      %2464 = vmatprep.mubr.bf16.mxu0 0
      %2465 = vmatmul.mubr.bf16.gmra.mrb[0].mxu0 %v857
      %v2466 = vpop.f32.mrb[0].mxu0
      %v2467 = vadd.f32 0.0, %v2466
      %v2468 = vpop.f32.mrb[0].mxu0
      %v2469 = vpop.f32.mrb[0].mxu0
      %v2470 = vadd.f32 0.0, %v2469
      %v2471 = vpop.f32.mrb[0].mxu0
      %2472 = vmatprep.mubr.bf16.mxu0 0
      %2473 = vmatmul.mubr.bf16.gmra.mrb[0].mxu0 %v860
      %v2474 = vpop.f32.mrb[0].mxu0
      %v2475 = vadd.f32 0.0, %v2474
      %v2476 = vpop.f32.mrb[0].mxu0
      %v2477 = vpop.f32.mrb[0].mxu0
      %v2478 = vadd.f32 0.0, %v2477
      %v2479 = vpop.f32.mrb[0].mxu0
      %2480 = vmatprep.mubr.bf16.mxu0 0
      %2481 = vmatmul.mubr.bf16.gmra.mrb[0].mxu0 %v863
      %v2482 = vpop.f32.mrb[0].mxu0
      %v2483 = vadd.f32 0.0, %v2482
      %v2484 = vpop.f32.mrb[0].mxu0
      %v2485 = vpop.f32.mrb[0].mxu0
      %v2486 = vadd.f32 0.0, %v2485
      %v2487 = vpop.f32.mrb[0].mxu0
      %2488 = vmatprep.mubr.bf16.mxu0 0
      %2489 = vmatmul.mubr.bf16.gmra.mrb[0].mxu0 %v866
      %v2490 = vpop.f32.mrb[0].mxu0
      %v2491 = vadd.f32 0.0, %v2490
      %v2492 = vpop.f32.mrb[0].mxu0
      %v2493 = vpop.f32.mrb[0].mxu0
      %v2494 = vadd.f32 0.0, %v2493
      %v2495 = vpop.f32.mrb[0].mxu0
      %2496 = vmatprep.mubr.bf16.mxu0 0
      %2497 = vmatmul.mubr.bf16.gmra.mrb[0].mxu0 %v869
      %v2498 = vpop.f32.mrb[0].mxu0
      %v2499 = vadd.f32 0.0, %v2498
      %v2500 = vpop.f32.mrb[0].mxu0
      %v2501 = vpop.f32.mrb[0].mxu0
      %v2502 = vadd.f32 0.0, %v2501
      %v2503 = vpop.f32.mrb[0].mxu0
      %2504 = vmatprep.mubr.bf16.mxu0 0
      %2505 = vmatmul.mubr.bf16.gmra.mrb[0].mxu0 %v872
      %v2506 = vpop.f32.mrb[0].mxu0
      %v2507 = vadd.f32 0.0, %v2506
      %v2508 = vpop.f32.mrb[0].mxu0
      %v2509 = vpop.f32.mrb[0].mxu0
      %v2510 = vadd.f32 0.0, %v2509
      %v2511 = vpop.f32.mrb[0].mxu0
      %2512 = vmatprep.mubr.bf16.mxu0 0
      %2513 = vmatmul.mubr.bf16.gmra.mrb[0].mxu0 %v875
      %v2514 = vpop.f32.mrb[0].mxu0
      %v2515 = vadd.f32 0.0, %v2514
      %v2516 = vpop.f32.mrb[0].mxu0
      %v2517 = vpop.f32.mrb[0].mxu0
      %v2518 = vadd.f32 0.0, %v2517
      %v2519 = vpop.f32.mrb[0].mxu0
      %2520 = vmatprep.mubr.bf16.mxu0 0
      %2521 = vmatmul.mubr.bf16.gmra.mrb[0].mxu0 %v878
      %v2522 = vpop.f32.mrb[0].mxu0
      %v2523 = vadd.f32 0.0, %v2522
      %v2524 = vpop.f32.mrb[0].mxu0
      %v2525 = vpop.f32.mrb[0].mxu0
      %v2526 = vadd.f32 0.0, %v2525
      %v2527 = vpop.f32.mrb[0].mxu0
      %2528 = vmatprep.mubr.bf16.mxu0 0
      %2529 = vmatmul.mubr.bf16.gmra.mrb[0].mxu0 %v1779
      %v2530 = vpop.f32.mrb[0].mxu0
      %v2531 = vadd.f32 0.0, %v2530
      %v2532 = vpop.f32.mrb[0].mxu0
      %v2533 = vpop.f32.mrb[0].mxu0
      %v2534 = vadd.f32 0.0, %v2533
      %v2535 = vpop.f32.mrb[0].mxu0
      %2536 = vmatprep.mubr.bf16.mxu0 0
      %2537 = vmatmul.mubr.bf16.gmra.mrb[0].mxu0 %v833
      %v2538 = vpop.f32.mrb[0].mxu0
      %v2539 = vadd.f32 0.0, %v2538
      %v2540 = vpop.f32.mrb[0].mxu0
      %v2541 = vpop.f32.mrb[0].mxu0
      %v2542 = vadd.f32 0.0, %v2541
      %v2543 = vpop.f32.mrb[0].mxu0
      %2544 = vdwg.mxu0
      %v2545 = vadd.f32 %v2349, %v2419
      %v2546 = vadd.f32 %v2350, %v2422
      %v2547 = vadd.f32 %v2351, %v2427
      %v2548 = vadd.f32 %v2352, %v2430
      %v2549 = vadd.f32 %v2353, %v2435
      %v2550 = vadd.f32 %v2354, %v2438
      %v2551 = vadd.f32 %v2355, %v2443
      %v2552 = vadd.f32 %v2356, %v2446
      %v2553 = vadd.f32 %v2357, %v2451
      %v2554 = vadd.f32 %v2358, %v2454
      %v2555 = vadd.f32 %v2359, %v2459
      %v2556 = vadd.f32 %v2360, %v2462
      %v2557 = vadd.f32 %v2361, %v2467
      %v2558 = vadd.f32 %v2362, %v2470
      %v2559 = vadd.f32 %v2363, %v2475
      %v2560 = vadd.f32 %v2364, %v2478
      %v2561 = vadd.f32 %v2365, %v2483
      %v2562 = vadd.f32 %v2366, %v2486
      %v2563 = vadd.f32 %v2367, %v2491
      %v2564 = vadd.f32 %v2368, %v2494
      %v2565 = vadd.f32 %v2369, %v2499
      %v2566 = vadd.f32 %v2370, %v2502
      %v2567 = vadd.f32 %v2371, %v2507
      %v2568 = vadd.f32 %v2372, %v2510
      %v2569 = vadd.f32 %v2373, %v2515
      %v2570 = vadd.f32 %v2374, %v2518
      %v2571 = vadd.f32 %v2375, %v2523
      %v2572 = vadd.f32 %v2376, %v2526
      %v2573 = vadd.f32 %v2377, %v2531
      %v2574 = vadd.f32 %v2378, %v2534
      %v2575 = vadd.f32 %v2379, %v2539
      %v2576 = vadd.f32 %v2380, %v2542
      %v2578 = vsel %vm880, %v2184, 0
      %2580 = vmatprep.subr.bf16.mxu0 0
      %2581 = vmatpush1.bf16.msra.mxu0 %v2578
      %2582 = vmatprep.subr.bf16.mxu0 0
      %2583 = vmatpush1.bf16.msra.mxu0 0
      %2584 = vmatprep.subr.bf16.mxu0 0
      %2585 = vmatpush1.bf16.msra.mxu0 0
      %2586 = vmatprep.subr.bf16.mxu0 0
      %2587 = vmatpush1.bf16.msra.mxu0 0
      %2588 = vmatprep.subr.bf16.mxu0 0
      %2589 = vmatpush1.bf16.msra.mxu0 0
      %2590 = vmatprep.subr.bf16.mxu0 0
      %2591 = vmatpush1.bf16.msra.mxu0 0
      %2592 = vmatprep.subr.bf16.mxu0 0
      %2593 = vmatpush1.bf16.msra.mxu0 0
      %2594 = vmatprep.subr.bf16.mxu0 0
      %2595 = vmatpush1.bf16.msra.mxu0 0
      %2596 = vmatprep.subr.bf16.mxu0 0
      %2597 = vmatpush1.bf16.msra.mxu0 0
      %2598 = vmatprep.subr.bf16.mxu0 0
      %2599 = vmatpush1.bf16.msra.mxu0 0
      %2600 = vmatprep.subr.bf16.mxu0 0
      %2601 = vmatpush1.bf16.msra.mxu0 0
      %2602 = vmatprep.subr.bf16.mxu0 0
      %2603 = vmatpush1.bf16.msra.mxu0 0
      %2604 = vmatprep.subr.bf16.mxu0 0
      %2605 = vmatpush1.bf16.msra.mxu0 0
      %2606 = vmatprep.subr.bf16.mxu0 0
      %2607 = vmatpush1.bf16.msra.mxu0 0
      %2608 = vmatprep.subr.bf16.mxu0 0
      %2609 = vmatpush1.bf16.msra.mxu0 0
      %2610 = vmatprep.subr.bf16.mxu0 0
      %2611 = vmatpush1.bf16.msra.mxu0 0
      %2612 = vmatprep.mubr.bf16.mxu0 0
      %2613 = vmatmul.mubr.bf16.gmra.mrb[0].mxu0 %v1327
      %v2614 = vpop.f32.mrb[0].mxu0
      %v2615 = vadd.f32 0.0, %v2614
      %v2616 = vpop.f32.mrb[0].mxu0
      %v2617 = vpop.f32.mrb[0].mxu0
      %v2618 = vadd.f32 0.0, %v2617
      %v2619 = vpop.f32.mrb[0].mxu0
      %2620 = vmatprep.mubr.bf16.mxu0 0
      %2621 = vmatmul.mubr.bf16.gmra.mrb[0].mxu0 %v1330
      %v2622 = vpop.f32.mrb[0].mxu0
      %v2623 = vadd.f32 0.0, %v2622
      %v2624 = vpop.f32.mrb[0].mxu0
      %v2625 = vpop.f32.mrb[0].mxu0
      %v2626 = vadd.f32 0.0, %v2625
      %v2627 = vpop.f32.mrb[0].mxu0
      %2628 = vmatprep.mubr.bf16.mxu0 0
      %2629 = vmatmul.mubr.bf16.gmra.mrb[0].mxu0 %v1333
      %v2630 = vpop.f32.mrb[0].mxu0
      %v2631 = vadd.f32 0.0, %v2630
      %v2632 = vpop.f32.mrb[0].mxu0
      %v2633 = vpop.f32.mrb[0].mxu0
      %v2634 = vadd.f32 0.0, %v2633
      %v2635 = vpop.f32.mrb[0].mxu0
      %2636 = vmatprep.mubr.bf16.mxu0 0
      %2637 = vmatmul.mubr.bf16.gmra.mrb[0].mxu0 %v1336
      %v2638 = vpop.f32.mrb[0].mxu0
      %v2639 = vadd.f32 0.0, %v2638
      %v2640 = vpop.f32.mrb[0].mxu0
      %v2641 = vpop.f32.mrb[0].mxu0
      %v2642 = vadd.f32 0.0, %v2641
      %v2643 = vpop.f32.mrb[0].mxu0
      %2644 = vmatprep.mubr.bf16.mxu0 0
      %2645 = vmatmul.mubr.bf16.gmra.mrb[0].mxu0 %v1339
      %v2646 = vpop.f32.mrb[0].mxu0
      %v2647 = vadd.f32 0.0, %v2646
      %v2648 = vpop.f32.mrb[0].mxu0
      %v2649 = vpop.f32.mrb[0].mxu0
      %v2650 = vadd.f32 0.0, %v2649
      %v2651 = vpop.f32.mrb[0].mxu0
      %2652 = vmatprep.mubr.bf16.mxu0 0
      %2653 = vmatmul.mubr.bf16.gmra.mrb[0].mxu0 %v1342
      %v2654 = vpop.f32.mrb[0].mxu0
      %v2655 = vadd.f32 0.0, %v2654
      %v2656 = vpop.f32.mrb[0].mxu0
      %v2657 = vpop.f32.mrb[0].mxu0
      %v2658 = vadd.f32 0.0, %v2657
      %v2659 = vpop.f32.mrb[0].mxu0
      %2660 = vmatprep.mubr.bf16.mxu0 0
      %2661 = vmatmul.mubr.bf16.gmra.mrb[0].mxu0 %v1345
      %v2662 = vpop.f32.mrb[0].mxu0
      %v2663 = vadd.f32 0.0, %v2662
      %v2664 = vpop.f32.mrb[0].mxu0
      %v2665 = vpop.f32.mrb[0].mxu0
      %v2666 = vadd.f32 0.0, %v2665
      %v2667 = vpop.f32.mrb[0].mxu0
      %2668 = vmatprep.mubr.bf16.mxu0 0
      %2669 = vmatmul.mubr.bf16.gmra.mrb[0].mxu0 %v1348
      %v2670 = vpop.f32.mrb[0].mxu0
      %v2671 = vadd.f32 0.0, %v2670
      %v2672 = vpop.f32.mrb[0].mxu0
      %v2673 = vpop.f32.mrb[0].mxu0
      %v2674 = vadd.f32 0.0, %v2673
      %v2675 = vpop.f32.mrb[0].mxu0
      %2676 = vmatprep.mubr.bf16.mxu0 0
      %2677 = vmatmul.mubr.bf16.gmra.mrb[0].mxu0 %v1351
      %v2678 = vpop.f32.mrb[0].mxu0
      %v2679 = vadd.f32 0.0, %v2678
      %v2680 = vpop.f32.mrb[0].mxu0
      %v2681 = vpop.f32.mrb[0].mxu0
      %v2682 = vadd.f32 0.0, %v2681
      %v2683 = vpop.f32.mrb[0].mxu0
      %2684 = vmatprep.mubr.bf16.mxu0 0
      %2685 = vmatmul.mubr.bf16.gmra.mrb[0].mxu0 %v1354
      %v2686 = vpop.f32.mrb[0].mxu0
      %v2687 = vadd.f32 0.0, %v2686
      %v2688 = vpop.f32.mrb[0].mxu0
      %v2689 = vpop.f32.mrb[0].mxu0
      %v2690 = vadd.f32 0.0, %v2689
      %v2691 = vpop.f32.mrb[0].mxu0
      %2692 = vmatprep.mubr.bf16.mxu0 0
      %2693 = vmatmul.mubr.bf16.gmra.mrb[0].mxu0 %v1357
      %v2694 = vpop.f32.mrb[0].mxu0
      %v2695 = vadd.f32 0.0, %v2694
      %v2696 = vpop.f32.mrb[0].mxu0
      %v2697 = vpop.f32.mrb[0].mxu0
      %v2698 = vadd.f32 0.0, %v2697
      %v2699 = vpop.f32.mrb[0].mxu0
      %2700 = vmatprep.mubr.bf16.mxu0 0
      %2701 = vmatmul.mubr.bf16.gmra.mrb[0].mxu0 %v1360
      %v2702 = vpop.f32.mrb[0].mxu0
      %v2703 = vadd.f32 0.0, %v2702
      %v2704 = vpop.f32.mrb[0].mxu0
      %v2705 = vpop.f32.mrb[0].mxu0
      %v2706 = vadd.f32 0.0, %v2705
      %v2707 = vpop.f32.mrb[0].mxu0
      %2708 = vmatprep.mubr.bf16.mxu0 0
      %2709 = vmatmul.mubr.bf16.gmra.mrb[0].mxu0 %v1363
      %v2710 = vpop.f32.mrb[0].mxu0
      %v2711 = vadd.f32 0.0, %v2710
      %v2712 = vpop.f32.mrb[0].mxu0
      %v2713 = vpop.f32.mrb[0].mxu0
      %v2714 = vadd.f32 0.0, %v2713
      %v2715 = vpop.f32.mrb[0].mxu0
      %2716 = vmatprep.mubr.bf16.mxu0 0
      %2717 = vmatmul.mubr.bf16.gmra.mrb[0].mxu0 %v1366
      %v2718 = vpop.f32.mrb[0].mxu0
      %v2719 = vadd.f32 0.0, %v2718
      %v2720 = vpop.f32.mrb[0].mxu0
      %v2721 = vpop.f32.mrb[0].mxu0
      %v2722 = vadd.f32 0.0, %v2721
      %v2723 = vpop.f32.mrb[0].mxu0
      %2724 = vmatprep.mubr.bf16.mxu0 0
      %2725 = vmatmul.mubr.bf16.gmra.mrb[0].mxu0 %v1983
      %v2726 = vpop.f32.mrb[0].mxu0
      %v2727 = vadd.f32 0.0, %v2726
      %v2728 = vpop.f32.mrb[0].mxu0
      %v2729 = vpop.f32.mrb[0].mxu0
      %v2730 = vadd.f32 0.0, %v2729
      %v2731 = vpop.f32.mrb[0].mxu0
      %2732 = vmatprep.mubr.bf16.mxu0 0
      %2733 = vmatmul.mubr.bf16.gmra.mrb[0].mxu0 %v1321
      %v2734 = vpop.f32.mrb[0].mxu0
      %v2735 = vadd.f32 0.0, %v2734
      %v2736 = vpop.f32.mrb[0].mxu0
      %v2737 = vpop.f32.mrb[0].mxu0
      %v2738 = vadd.f32 0.0, %v2737
      %v2739 = vpop.f32.mrb[0].mxu0
      %2740 = vdwg.mxu0
      %v2741 = vadd.f32 %v2545, %v2615
      %v2742 = vadd.f32 %v2546, %v2618
      %v2743 = vadd.f32 %v2547, %v2623
      %v2744 = vadd.f32 %v2548, %v2626
      %v2745 = vadd.f32 %v2549, %v2631
      %v2746 = vadd.f32 %v2550, %v2634
      %v2747 = vadd.f32 %v2551, %v2639
      %v2748 = vadd.f32 %v2552, %v2642
      %v2749 = vadd.f32 %v2553, %v2647
      %v2750 = vadd.f32 %v2554, %v2650
      %v2751 = vadd.f32 %v2555, %v2655
      %v2752 = vadd.f32 %v2556, %v2658
      %v2753 = vadd.f32 %v2557, %v2663
      %v2754 = vadd.f32 %v2558, %v2666
      %v2755 = vadd.f32 %v2559, %v2671
      %v2756 = vadd.f32 %v2560, %v2674
      %v2757 = vadd.f32 %v2561, %v2679
      %v2758 = vadd.f32 %v2562, %v2682
      %v2759 = vadd.f32 %v2563, %v2687
      %v2760 = vadd.f32 %v2564, %v2690
      %v2761 = vadd.f32 %v2565, %v2695
      %v2762 = vadd.f32 %v2566, %v2698
      %v2763 = vadd.f32 %v2567, %v2703
      %v2764 = vadd.f32 %v2568, %v2706
      %v2765 = vadd.f32 %v2569, %v2711
      %v2766 = vadd.f32 %v2570, %v2714
      %v2767 = vadd.f32 %v2571, %v2719
      %v2768 = vadd.f32 %v2572, %v2722
      %v2769 = vadd.f32 %v2573, %v2727
      %v2770 = vadd.f32 %v2574, %v2730
      %v2771 = vadd.f32 %v2575, %v2735
      %v2772 = vadd.f32 %v2576, %v2738
      %v2773 = vpack.c.bf16 %v2742, %v2741
      %v2774 = vpack.c.bf16 %v2744, %v2743
      %v2775 = vpack.c.bf16 %v2746, %v2745
      %v2776 = vpack.c.bf16 %v2748, %v2747
      %v2777 = vpack.c.bf16 %v2750, %v2749
      %v2778 = vpack.c.bf16 %v2752, %v2751
      %v2779 = vpack.c.bf16 %v2754, %v2753
      %v2780 = vpack.c.bf16 %v2756, %v2755
      %v2781 = vpack.c.bf16 %v2758, %v2757
      %v2782 = vpack.c.bf16 %v2760, %v2759
      %v2783 = vpack.c.bf16 %v2762, %v2761
      %v2784 = vpack.c.bf16 %v2764, %v2763
      %v2785 = vpack.c.bf16 %v2766, %v2765
      %v2786 = vpack.c.bf16 %v2768, %v2767
      %v2787 = vpack.c.bf16 %v2770, %v2769
      %v2788 = vpack.c.bf16 %v2772, %v2771
      %v2805 = vunpack.c.l.b16 %v2773
      %v2806 = vunpack.c.h.b16 %v2773
      %v2807 = vunpack.c.l.b16 %v2774
      %v2808 = vunpack.c.h.b16 %v2774
      %v2809 = vunpack.c.l.b16 %v2775
      %v2810 = vunpack.c.h.b16 %v2775
      %v2811 = vunpack.c.l.b16 %v2776
      %v2812 = vunpack.c.h.b16 %v2776
      %v2813 = vunpack.c.l.b16 %v2777
      %v2814 = vunpack.c.h.b16 %v2777
      %v2815 = vunpack.c.l.b16 %v2778
      %v2816 = vunpack.c.h.b16 %v2778
      %v2817 = vunpack.c.l.b16 %v2779
      %v2818 = vunpack.c.h.b16 %v2779
      %v2819 = vunpack.c.l.b16 %v2780
      %v2820 = vunpack.c.h.b16 %v2780
      %v2821 = vunpack.c.l.b16 %v2781
      %v2822 = vunpack.c.h.b16 %v2781
      %v2823 = vunpack.c.l.b16 %v2782
      %v2824 = vunpack.c.h.b16 %v2782
      %v2825 = vunpack.c.l.b16 %v2783
      %v2826 = vunpack.c.h.b16 %v2783
      %v2827 = vunpack.c.l.b16 %v2784
      %v2828 = vunpack.c.h.b16 %v2784
      %v2829 = vunpack.c.l.b16 %v2785
      %v2830 = vunpack.c.h.b16 %v2785
      %v2831 = vunpack.c.l.b16 %v2786
      %v2832 = vunpack.c.h.b16 %v2786
      %v2833 = vunpack.c.l.b16 %v2787
      %v2834 = vunpack.c.h.b16 %v2787
      %v2835 = vunpack.c.l.b16 %v2788
      %v2836 = vunpack.c.h.b16 %v2788
      %v2837 = vpack.c.b16 %v2805, %v2805
      %v2838 = vpack.c.b16 %v2806, %v2806
      %v2839 = vpack.c.b16 %v2807, %v2807
      %v2840 = vpack.c.b16 %v2808, %v2808
      %v2841 = vpack.c.b16 %v2809, %v2809
      %v2842 = vpack.c.b16 %v2810, %v2810
      %v2843 = vpack.c.b16 %v2811, %v2811
      %v2844 = vpack.c.b16 %v2812, %v2812
      %v2845 = vpack.c.b16 %v2813, %v2813
      %v2846 = vpack.c.b16 %v2814, %v2814
      %v2847 = vpack.c.b16 %v2815, %v2815
      %v2848 = vpack.c.b16 %v2816, %v2816
      %v2849 = vpack.c.b16 %v2817, %v2817
      %v2850 = vpack.c.b16 %v2818, %v2818
      %v2851 = vpack.c.b16 %v2819, %v2819
      %v2852 = vpack.c.b16 %v2820, %v2820
      %v2853 = vpack.c.b16 %v2821, %v2821
      %v2854 = vpack.c.b16 %v2822, %v2822
      %v2855 = vpack.c.b16 %v2823, %v2823
      %v2856 = vpack.c.b16 %v2824, %v2824
      %v2857 = vpack.c.b16 %v2825, %v2825
      %v2858 = vpack.c.b16 %v2826, %v2826
      %v2859 = vpack.c.b16 %v2827, %v2827
      %v2860 = vpack.c.b16 %v2828, %v2828
      %v2861 = vpack.c.b16 %v2829, %v2829
      %v2862 = vpack.c.b16 %v2830, %v2830
      %v2863 = vpack.c.b16 %v2831, %v2831
      %v2864 = vpack.c.b16 %v2832, %v2832
      %v2865 = vpack.c.b16 %v2833, %v2833
      %v2866 = vpack.c.b16 %v2834, %v2834
      %v2867 = vpack.c.b16 %v2835, %v2835
      %v2868 = vpack.c.b16 %v2836, %v2836
      %vm2901 = vcmask 60416
      %2902 = vst.msk [vmem:[%s262] sm:$0xf] %vm2901, %v2837
      %2903 = vst.msk [vmem:[%s262 + $0x4] sm:$0xf] %vm2901, %v2838
      %2904 = vst.msk [vmem:[%s262 + $0x8] sm:$0xf] %vm2901, %v2839
      %2905 = vst.msk [vmem:[%s262 + $0xc] sm:$0xf] %vm2901, %v2840
      %2906 = vst.msk [vmem:[%s262 + $0x10] sm:$0xf] %vm2901, %v2841
      %2907 = vst.msk [vmem:[%s262 + $0x14] sm:$0xf] %vm2901, %v2842
      %2908 = vst.msk [vmem:[%s262 + $0x18] sm:$0xf] %vm2901, %v2843
      %2909 = vst.msk [vmem:[%s262 + $0x1c] sm:$0xf] %vm2901, %v2844
      %2910 = vst.msk [vmem:[%s262 + $0x20] sm:$0xf] %vm2901, %v2845
      %2911 = vst.msk [vmem:[%s262 + $0x24] sm:$0xf] %vm2901, %v2846
      %2912 = vst.msk [vmem:[%s262 + $0x28] sm:$0xf] %vm2901, %v2847
      %2913 = vst.msk [vmem:[%s262 + $0x2c] sm:$0xf] %vm2901, %v2848
      %2914 = vst.msk [vmem:[%s262 + $0x30] sm:$0xf] %vm2901, %v2849
      %2915 = vst.msk [vmem:[%s262 + $0x34] sm:$0xf] %vm2901, %v2850
      %2916 = vst.msk [vmem:[%s262 + $0x38] sm:$0xf] %vm2901, %v2851
      %2917 = vst.msk [vmem:[%s262 + $0x3c] sm:$0xf] %vm2901, %v2852
      %2918 = vst.msk [vmem:[%s262 + $0x40] sm:$0xf] %vm2901, %v2853
      %2919 = vst.msk [vmem:[%s262 + $0x44] sm:$0xf] %vm2901, %v2854
      %2920 = vst.msk [vmem:[%s262 + $0x48] sm:$0xf] %vm2901, %v2855
      %2921 = vst.msk [vmem:[%s262 + $0x4c] sm:$0xf] %vm2901, %v2856
      %2922 = vst.msk [vmem:[%s262 + $0x50] sm:$0xf] %vm2901, %v2857
      %2923 = vst.msk [vmem:[%s262 + $0x54] sm:$0xf] %vm2901, %v2858
      %2924 = vst.msk [vmem:[%s262 + $0x58] sm:$0xf] %vm2901, %v2859
      %2925 = vst.msk [vmem:[%s262 + $0x5c] sm:$0xf] %vm2901, %v2860
      %2926 = vst.msk [vmem:[%s262 + $0x60] sm:$0xf] %vm2901, %v2861
      %2927 = vst.msk [vmem:[%s262 + $0x64] sm:$0xf] %vm2901, %v2862
      %2928 = vst.msk [vmem:[%s262 + $0x68] sm:$0xf] %vm2901, %v2863
      %2929 = vst.msk [vmem:[%s262 + $0x6c] sm:$0xf] %vm2901, %v2864
      %2930 = vst.msk [vmem:[%s262 + $0x70] sm:$0xf] %vm2901, %v2865
      %2931 = vst.msk [vmem:[%s262 + $0x74] sm:$0xf] %vm2901, %v2866
      %2932 = vst.msk [vmem:[%s262 + $0x78] sm:$0xf] %vm2901, %v2867
      %2933 = vst.msk [vmem:[%s262 + $0x7c] sm:$0xf] %vm2901, %v2868
      %v2934 = vsel %vm831, %v2741, 0.0
      %v2935 = vsel %vm831, %v2742, 0.0
      %v2936 = vadd.f32 %v2934, %v2935
      %v2937 = vsel %vm831, %v2743, 0.0
      %v2938 = vadd.f32 %v2936, %v2937
      %v2939 = vsel %vm831, %v2744, 0.0
      %v2940 = vadd.f32 %v2938, %v2939
      %v2941 = vsel %vm831, %v2745, 0.0
      %v2942 = vadd.f32 %v2940, %v2941
      %v2943 = vsel %vm831, %v2746, 0.0
      %v2944 = vadd.f32 %v2942, %v2943
      %v2945 = vsel %vm831, %v2747, 0.0
      %v2946 = vadd.f32 %v2944, %v2945
      %v2947 = vsel %vm831, %v2748, 0.0
      %v2948 = vadd.f32 %v2946, %v2947
      %v2949 = vsel %vm831, %v2749, 0.0
      %v2950 = vadd.f32 %v2948, %v2949
      %v2951 = vsel %vm831, %v2750, 0.0
      %v2952 = vadd.f32 %v2950, %v2951
      %v2953 = vsel %vm831, %v2751, 0.0
      %v2954 = vadd.f32 %v2952, %v2953
      %v2955 = vsel %vm831, %v2752, 0.0
      %v2956 = vadd.f32 %v2954, %v2955
      %v2957 = vsel %vm831, %v2753, 0.0
      %v2958 = vadd.f32 %v2956, %v2957
      %v2959 = vsel %vm831, %v2754, 0.0
      %v2960 = vadd.f32 %v2958, %v2959
      %v2961 = vsel %vm831, %v2755, 0.0
      %v2962 = vadd.f32 %v2960, %v2961
      %v2963 = vsel %vm831, %v2756, 0.0
      %v2964 = vadd.f32 %v2962, %v2963
      %v2965 = vsel %vm831, %v2757, 0.0
      %v2966 = vadd.f32 %v2964, %v2965
      %v2967 = vsel %vm831, %v2758, 0.0
      %v2968 = vadd.f32 %v2966, %v2967
      %v2969 = vsel %vm831, %v2759, 0.0
      %v2970 = vadd.f32 %v2968, %v2969
      %v2971 = vsel %vm831, %v2760, 0.0
      %v2972 = vadd.f32 %v2970, %v2971
      %v2973 = vsel %vm831, %v2761, 0.0
      %v2974 = vadd.f32 %v2972, %v2973
      %v2975 = vsel %vm831, %v2762, 0.0
      %v2976 = vadd.f32 %v2974, %v2975
      %v2977 = vsel %vm831, %v2763, 0.0
      %v2978 = vadd.f32 %v2976, %v2977
      %v2979 = vsel %vm831, %v2764, 0.0
      %v2980 = vadd.f32 %v2978, %v2979
      %v2981 = vsel %vm831, %v2765, 0.0
      %v2982 = vadd.f32 %v2980, %v2981
      %v2983 = vsel %vm831, %v2766, 0.0
      %v2984 = vadd.f32 %v2982, %v2983
      %v2985 = vsel %vm831, %v2767, 0.0
      %v2986 = vadd.f32 %v2984, %v2985
      %v2987 = vsel %vm831, %v2768, 0.0
      %v2988 = vadd.f32 %v2986, %v2987
      %v2989 = vsel %vm831, %v2769, 0.0
      %v2990 = vadd.f32 %v2988, %v2989
      %v2991 = vsel %vm831, %v2770, 0.0
      %v2992 = vadd.f32 %v2990, %v2991
      %v2993 = vsel %vm831, %v2771, 0.0
      %v2994 = vadd.f32 %v2992, %v2993
      %v2995 = vsel %vm831, %v2772, 0.0
      %v2996 = vadd.f32 %v2994, %v2995
      %v2997 = vrot.slane %v2996, 4
      %v2998 = vadd.f32 %v2996, %v2997
      %v2999 = vrot.slane %v2998, 2
      %v3000 = vadd.f32 %v2998, %v2999
      %v3001 = vrot.slane %v3000, 1
      %v3002 = vadd.f32 %v3000, %v3001
      %vm3003 = vcmask 57344
      %3004 = vst.msk [vmem:[%s265] sm:$0x1] %vm3003, %v3002
      %v3005 = vmul.f32 %v2741, %v2741
      %v3006 = vmul.f32 %v2742, %v2742
      %v3007 = vmul.f32 %v2743, %v2743
      %v3008 = vmul.f32 %v2744, %v2744
      %v3009 = vmul.f32 %v2745, %v2745
      %v3010 = vmul.f32 %v2746, %v2746
      %v3011 = vmul.f32 %v2747, %v2747
      %v3012 = vmul.f32 %v2748, %v2748
      %v3013 = vmul.f32 %v2749, %v2749
      %v3014 = vmul.f32 %v2750, %v2750
      %v3015 = vmul.f32 %v2751, %v2751
      %v3016 = vmul.f32 %v2752, %v2752
      %v3017 = vmul.f32 %v2753, %v2753
      %v3018 = vmul.f32 %v2754, %v2754
      %v3019 = vmul.f32 %v2755, %v2755
      %v3020 = vmul.f32 %v2756, %v2756
      %v3021 = vmul.f32 %v2757, %v2757
      %v3022 = vmul.f32 %v2758, %v2758
      %v3023 = vmul.f32 %v2759, %v2759
      %v3024 = vmul.f32 %v2760, %v2760
      %v3025 = vmul.f32 %v2761, %v2761
      %v3026 = vmul.f32 %v2762, %v2762
      %v3027 = vmul.f32 %v2763, %v2763
      %v3028 = vmul.f32 %v2764, %v2764
      %v3029 = vmul.f32 %v2765, %v2765
      %v3030 = vmul.f32 %v2766, %v2766
      %v3031 = vmul.f32 %v2767, %v2767
      %v3032 = vmul.f32 %v2768, %v2768
      %v3033 = vmul.f32 %v2769, %v2769
      %v3034 = vmul.f32 %v2770, %v2770
      %v3035 = vmul.f32 %v2771, %v2771
      %v3036 = vmul.f32 %v2772, %v2772
      %v3037 = vsel %vm831, %v3005, 0.0
      %v3038 = vsel %vm831, %v3006, 0.0
      %v3039 = vadd.f32 %v3037, %v3038
      %v3040 = vsel %vm831, %v3007, 0.0
      %v3041 = vadd.f32 %v3039, %v3040
      %v3042 = vsel %vm831, %v3008, 0.0
      %v3043 = vadd.f32 %v3041, %v3042
      %v3044 = vsel %vm831, %v3009, 0.0
      %v3045 = vadd.f32 %v3043, %v3044
      %v3046 = vsel %vm831, %v3010, 0.0
      %v3047 = vadd.f32 %v3045, %v3046
      %v3048 = vsel %vm831, %v3011, 0.0
      %v3049 = vadd.f32 %v3047, %v3048
      %v3050 = vsel %vm831, %v3012, 0.0
      %v3051 = vadd.f32 %v3049, %v3050
      %v3052 = vsel %vm831, %v3013, 0.0
      %v3053 = vadd.f32 %v3051, %v3052
      %v3054 = vsel %vm831, %v3014, 0.0
      %v3055 = vadd.f32 %v3053, %v3054
      %v3056 = vsel %vm831, %v3015, 0.0
      %v3057 = vadd.f32 %v3055, %v3056
      %v3058 = vsel %vm831, %v3016, 0.0
      %v3059 = vadd.f32 %v3057, %v3058
      %v3060 = vsel %vm831, %v3017, 0.0
      %v3061 = vadd.f32 %v3059, %v3060
      %v3062 = vsel %vm831, %v3018, 0.0
      %v3063 = vadd.f32 %v3061, %v3062
      %v3064 = vsel %vm831, %v3019, 0.0
      %v3065 = vadd.f32 %v3063, %v3064
      %v3066 = vsel %vm831, %v3020, 0.0
      %v3067 = vadd.f32 %v3065, %v3066
      %v3068 = vsel %vm831, %v3021, 0.0
      %v3069 = vadd.f32 %v3067, %v3068
      %v3070 = vsel %vm831, %v3022, 0.0
      %v3071 = vadd.f32 %v3069, %v3070
      %v3072 = vsel %vm831, %v3023, 0.0
      %v3073 = vadd.f32 %v3071, %v3072
      %v3074 = vsel %vm831, %v3024, 0.0
      %v3075 = vadd.f32 %v3073, %v3074
      %v3076 = vsel %vm831, %v3025, 0.0
      %v3077 = vadd.f32 %v3075, %v3076
      %v3078 = vsel %vm831, %v3026, 0.0
      %v3079 = vadd.f32 %v3077, %v3078
      %v3080 = vsel %vm831, %v3027, 0.0
      %v3081 = vadd.f32 %v3079, %v3080
      %v3082 = vsel %vm831, %v3028, 0.0
      %v3083 = vadd.f32 %v3081, %v3082
      %v3084 = vsel %vm831, %v3029, 0.0
      %v3085 = vadd.f32 %v3083, %v3084
      %v3086 = vsel %vm831, %v3030, 0.0
      %v3087 = vadd.f32 %v3085, %v3086
      %v3088 = vsel %vm831, %v3031, 0.0
      %v3089 = vadd.f32 %v3087, %v3088
      %v3090 = vsel %vm831, %v3032, 0.0
      %v3091 = vadd.f32 %v3089, %v3090
      %v3092 = vsel %vm831, %v3033, 0.0
      %v3093 = vadd.f32 %v3091, %v3092
      %v3094 = vsel %vm831, %v3034, 0.0
      %v3095 = vadd.f32 %v3093, %v3094
      %v3096 = vsel %vm831, %v3035, 0.0
      %v3097 = vadd.f32 %v3095, %v3096
      %v3098 = vsel %vm831, %v3036, 0.0
      %v3099 = vadd.f32 %v3097, %v3098
      %v3100 = vrot.slane %v3099, 4
      %v3101 = vadd.f32 %v3099, %v3100
      %v3102 = vrot.slane %v3101, 2
      %v3103 = vadd.f32 %v3101, %v3102
      %v3104 = vrot.slane %v3103, 1
      %v3105 = vadd.f32 %v3103, %v3104
      %3106 = vst.msk [vmem:[%s268] sm:$0x1] %vm3003, %v3105
      %p3107 = scmp.lt.s32.totalorder %s18, 1
      %s3108 = scalar_select %p3107, %s18, 1
      %s3109 = smul.addr %s3108, 32
      %s3110 = smul.addr %s3109, 4
      %s3111 = scalar_lea.vmem %s4, %s3110
      %p3112 = scmp.lt.s32.totalorder %s18, 1
      %s3113 = scalar_select %p3112, %s18, 1
      %s3114 = scalar_lea.vmem %s5, %s3113
      %p3115 = scmp.lt.s32.totalorder %s18, 1
      %s3116 = scalar_select %p3115, %s18, 1
      %s3117 = scalar_lea.vmem %s6, %s3116
      // Predicated region
      $region37: #{resnet_bottleneck_block_nhwc.5} parent=35 // pred_check
        %p3118 = pneg %p125
      $region38: #{resnet_bottleneck_block_nhwc.5} parent=35 // pred_check_branch
        %3120 = sbr.rel (%p3118) target = $region40
      $region39: #{resnet_bottleneck_block_nhwc.5} parent=35 // pred_region
        _
      $region40: #{resnet_bottleneck_block_nhwc.5} parent=35 // pred_fallthru
        _
      // Predicated region
      $region41: #{resnet_bottleneck_block_nhwc.5} parent=35 // pred_check
        %p3121 = pneg %p151
      $region42: #{resnet_bottleneck_block_nhwc.5} parent=35 // pred_check_branch
        %3123 = sbr.rel (%p3121) target = $region44
      $region43: #{resnet_bottleneck_block_nhwc.5} parent=35 // pred_region
        _
      $region44: #{resnet_bottleneck_block_nhwc.5} parent=35 // pred_fallthru
        _
      // Predicated region
      $region45: #{resnet_bottleneck_block_nhwc.5} parent=35 // pred_check
        %p3124 = pneg %p177
      $region46: #{resnet_bottleneck_block_nhwc.5} parent=35 // pred_check_branch
        %3126 = sbr.rel (%p3124) target = $region48
      $region47: #{resnet_bottleneck_block_nhwc.5} parent=35 // pred_region
        _
      $region48: #{resnet_bottleneck_block_nhwc.5} parent=35 // pred_fallthru
        _
    $region36: #{resnet_bottleneck_block_nhwc.5} parent=5 // pred_fallthru
      _
    %p3127 = scmp.le.s32.totalorder 2, %s13
    // Predicated region
    $region49: #{resnet_bottleneck_block_nhwc.5} parent=5 // pred_check
      %p3128 = pneg %p3127
    $region50: #{resnet_bottleneck_block_nhwc.5} parent=5 // pred_check_branch
      %3130 = sbr.rel (%p3128) target = $region52
    $region51: #{resnet_bottleneck_block_nhwc.5} parent=5 // pred_region
      %s3131 = ssub.s32 %s13, 2
      // Predicated region
      $region53: #{resnet_bottleneck_block_nhwc.5} parent=51 // pred_check
        %p3132 = pneg %p131
      $region54: #{resnet_bottleneck_block_nhwc.5} parent=51 // pred_check_branch
        %3134 = sbr.rel (%p3132) target = $region56
      $region55: #{resnet_bottleneck_block_nhwc.5} parent=51 // pred_region
        %p3135 = scmp.lt.s32.totalorder %s19, 1
        %s3136 = scalar_select %p3135, %s19, 1
        %s3137 = smul.addr %s3136, 32
        %s3138 = smul.addr %s3137, 4
        %s3139 = scalar_lea.vmem %s4, %s3138
      $region56: #{resnet_bottleneck_block_nhwc.5} parent=51 // pred_fallthru
        _
      // Predicated region
      $region57: #{resnet_bottleneck_block_nhwc.5} parent=51 // pred_check
        %p3140 = pneg %p157
      $region58: #{resnet_bottleneck_block_nhwc.5} parent=51 // pred_check_branch
        %3142 = sbr.rel (%p3140) target = $region60
      $region59: #{resnet_bottleneck_block_nhwc.5} parent=51 // pred_region
        %p3143 = scmp.lt.s32.totalorder %s19, 1
        %s3144 = scalar_select %p3143, %s19, 1
        %s3145 = scalar_lea.vmem %s5, %s3144
      $region60: #{resnet_bottleneck_block_nhwc.5} parent=51 // pred_fallthru
        _
      // Predicated region
      $region61: #{resnet_bottleneck_block_nhwc.5} parent=51 // pred_check
        %p3146 = pneg %p183
      $region62: #{resnet_bottleneck_block_nhwc.5} parent=51 // pred_check_branch
        %3148 = sbr.rel (%p3146) target = $region64
      $region63: #{resnet_bottleneck_block_nhwc.5} parent=51 // pred_region
        %p3149 = scmp.lt.s32.totalorder %s19, 1
        %s3150 = scalar_select %p3149, %s19, 1
        %s3151 = scalar_lea.vmem %s6, %s3150
      $region64: #{resnet_bottleneck_block_nhwc.5} parent=51 // pred_fallthru
        _
    $region52: #{resnet_bottleneck_block_nhwc.5} parent=5 // pred_fallthru
      _
  $region6: #{resnet_bottleneck_block_nhwc.5} parent=0 // loop_footer
    %s17 = sadd.s32 1, %s13
  $region7: #{resnet_bottleneck_block_nhwc.5} parent=0 // loop_footer_branch
    %12 = sbr.rel target = $region3
  $region8: #{resnet_bottleneck_block_nhwc.5} parent=0 // loop_exit
    _

</llo_original>
